<compile_context>
chip_gen: v6e
topology: v6e:2x2x1
jax: 0.10.0
libtpu: 0.0.40
codegen_flags: <defaults>
</compile_context>

<pallas_src>
import math

import jax
import jax.numpy as jnp
from jax import lax
from jax.experimental import pallas as pl
from jax.experimental.pallas import tpu as pltpu

D_K = 64
D_V = 64
D_MODEL = 512
N_HEADS = 8
LN_EPS = 1e-5


def _mha_kernel(q_ref, k_ref, v_ref, mask_ref,
                wq_ref, bq_ref, wk_ref, bk_ref, wv_ref, bv_ref,
                wo_ref, bo_ref, gamma_ref, beta_ref,
                out_ref, attn_ref):
    """One batch element: QKV proj -> masked SDPA -> out proj -> add & norm."""
    f32 = jnp.float32
    q_in = q_ref[0].astype(f32)                       # [S, D_MODEL]
    k_in = k_ref[0].astype(f32)
    v_in = v_ref[0].astype(f32)
    s_len = q_in.shape[0]
    masked = mask_ref[0] != 0                         # [S, S]  True = mask out

    # ---- Q/K/V projections, batched over heads on the MXU -------------------
    # wq/wk/wv are [H, D_MODEL, d_k]; broadcasting activations over the head
    # axis keeps these plain batched dot_generals (no in-kernel reshapes).
    qb = jnp.broadcast_to(q_in[None], (N_HEADS, s_len, D_MODEL))
    kb = jnp.broadcast_to(k_in[None], (N_HEADS, s_len, D_MODEL))
    vb = jnp.broadcast_to(v_in[None], (N_HEADS, s_len, D_MODEL))
    qh = jnp.einsum('hsd,hdk->hsk', qb, wq_ref[...],
                    preferred_element_type=f32) + bq_ref[...]       # [H,S,d_k]
    kh = jnp.einsum('hsd,hdk->hsk', kb, wk_ref[...],
                    preferred_element_type=f32) + bk_ref[...]       # [H,S,d_k]
    vh = jnp.einsum('hsd,hdk->hsk', vb, wv_ref[...],
                    preferred_element_type=f32) + bv_ref[...]       # [H,S,d_v]

    # ---- Scaled dot-product attention (batched over heads) ------------------
    scores = jnp.einsum('hqd,hkd->hqk', qh, kh,
                        preferred_element_type=f32)                 # [H,S,S]
    scores = scores * f32(1.0 / math.sqrt(D_K))
    scores = jnp.where(masked[None, :, :], f32(-1e9), scores)

    m = jnp.max(scores, axis=-1, keepdims=True)
    e = jnp.exp(scores - m)
    attn = e / jnp.sum(e, axis=-1, keepdims=True)                   # [H,S,S]

    ctx = jnp.einsum('hqk,hkd->hqd', attn, vh,
                     preferred_element_type=f32)                    # [H,S,d_v]

    # ---- Output projection (sum over heads), residual, LayerNorm ------------
    out = q_in + bo_ref[...].astype(f32)            # residual + output bias
    for h in range(N_HEADS):                        # static, unrolled
        out = out + jnp.dot(ctx[h], wo_ref[h], preferred_element_type=f32)

    mu = jnp.mean(out, axis=-1, keepdims=True)
    xc = out - mu
    var = jnp.mean(xc * xc, axis=-1, keepdims=True)
    y = xc * lax.rsqrt(var + f32(LN_EPS))
    y = y * gamma_ref[...].astype(f32) + beta_ref[...].astype(f32)

    out_ref[0] = y.astype(out_ref.dtype)
    attn_ref[0] = attn.astype(attn_ref.dtype)


def multi_head_attention(Q, K, V, attn_mask,
                         wq, bq, wk, bk, wv, bv, wo, bo, gamma, beta):
    """Pallas forward of the PyTorch MultiHeadAttention module.

    Q/K/V: [B, S, d_model]; attn_mask: [B, S, S], nonzero/True = masked.
    Weights use the x @ W + b convention:
      wq/wk/wv: [d_model, n_heads*d_k], wo: [n_heads*d_v, d_model].
    Returns (output [B, S, d_model], attn [B, n_heads, S, S]).
    """
    B, S, Dm = Q.shape
    assert Dm == D_MODEL
    assert attn_mask.shape == (B, S, S)

    # One-time weight re-layout (wrapper glue): fold head split/merge into the
    # weight tensors so the kernel never reshapes activations.
    wq_h = wq.reshape(D_MODEL, N_HEADS, D_K).transpose(1, 0, 2)   # [H, D, d_k]
    wk_h = wk.reshape(D_MODEL, N_HEADS, D_K).transpose(1, 0, 2)
    wv_h = wv.reshape(D_MODEL, N_HEADS, D_V).transpose(1, 0, 2)
    bq_h = bq.reshape(N_HEADS, 1, D_K)
    bk_h = bk.reshape(N_HEADS, 1, D_K)
    bv_h = bv.reshape(N_HEADS, 1, D_V)
    wo_h = wo.reshape(N_HEADS, D_V, D_MODEL)                      # [H, d_v, D]
    bo_2d = bo.reshape(1, D_MODEL)
    gamma_2d = gamma.reshape(1, D_MODEL)
    beta_2d = beta.reshape(1, D_MODEL)
    mask_i32 = attn_mask.astype(jnp.int32)

    batch_spec3 = pl.BlockSpec((1, S, D_MODEL), lambda b: (b, 0, 0))
    rep3 = lambda b: (0, 0, 0)

    # TODO(synk): for long sequences, tile S with a flash-style online softmax
    # instead of whole-row blocks; at S=8 the whole row fits one sublane group.
    out, attn = pl.pallas_call(
        _mha_kernel,
        out_shape=(
            jax.ShapeDtypeStruct((B, S, D_MODEL), Q.dtype),
            jax.ShapeDtypeStruct((B, N_HEADS, S, S), jnp.float32),
        ),
        grid_spec=pltpu.PrefetchScalarGridSpec(
            num_scalar_prefetch=0,
            grid=(B,),
            in_specs=[
                batch_spec3,                                            # Q
                batch_spec3,                                            # K
                batch_spec3,                                            # V
                pl.BlockSpec((1, S, S), lambda b: (b, 0, 0)),           # mask
                pl.BlockSpec((N_HEADS, D_MODEL, D_K), rep3),            # W_Q
                pl.BlockSpec((N_HEADS, 1, D_K), rep3),                  # b_Q
                pl.BlockSpec((N_HEADS, D_MODEL, D_K), rep3),            # W_K
                pl.BlockSpec((N_HEADS, 1, D_K), rep3),                  # b_K
                pl.BlockSpec((N_HEADS, D_MODEL, D_V), rep3),            # W_V
                pl.BlockSpec((N_HEADS, 1, D_V), rep3),                  # b_V
                pl.BlockSpec((N_HEADS, D_V, D_MODEL), rep3),            # W_O
                pl.BlockSpec((1, D_MODEL), lambda b: (0, 0)),           # b_O
                pl.BlockSpec((1, D_MODEL), lambda b: (0, 0)),           # gamma
                pl.BlockSpec((1, D_MODEL), lambda b: (0, 0)),           # beta
            ],
            out_specs=(
                batch_spec3,                                            # output
                pl.BlockSpec((1, N_HEADS, S, S), lambda b: (b, 0, 0, 0)),  # attn
            ),
        ),
        compiler_params=pltpu.CompilerParams(
            dimension_semantics=("parallel",),
            vmem_limit_bytes=32 * 1024 * 1024,
        ),
    )(Q, K, V, mask_i32,
      wq_h, bq_h, wk_h, bk_h, wv_h, bv_h, wo_h, bo_2d, gamma_2d, beta_2d)
    return out, attn


def _mha_reference(Q, K, V, attn_mask,
                   wq, bq, wk, bk, wv, bv, wo, bo, gamma, beta):
    """Plain-JAX reference mirroring the PyTorch module's forward."""
    B, S, _ = Q.shape
    qs = (Q @ wq + bq).reshape(B, S, N_HEADS, D_K).transpose(0, 2, 1, 3)
    ks = (K @ wk + bk).reshape(B, S, N_HEADS, D_K).transpose(0, 2, 1, 3)
    vs = (V @ wv + bv).reshape(B, S, N_HEADS, D_V).transpose(0, 2, 1, 3)
    scores = jnp.einsum('bhqd,bhkd->bhqk', qs, ks) / math.sqrt(D_K)
    scores = jnp.where(attn_mask[:, None, :, :], -1e9, scores)
    attn = jax.nn.softmax(scores, axis=-1)
    ctx = jnp.einsum('bhqk,bhkd->bhqd', attn, vs)
    ctx = ctx.transpose(0, 2, 1, 3).reshape(B, S, N_HEADS * D_V)
    out = ctx @ wo + bo + Q
    mu = out.mean(-1, keepdims=True)
    var = ((out - mu) ** 2).mean(-1, keepdims=True)
    y = (out - mu) / jnp.sqrt(var + LN_EPS)
    return y * gamma + beta, attn


if __name__ == "__main__":
    # Small shapes consistent with the module: batch=2, seq=8, d_model=512 (fixed
    # by the module's constants), 8 heads of d_k = d_v = 64.
    B, S = 2, 8
    key = jax.random.PRNGKey(0)
    keys = jax.random.split(key, 13)

    Q = jax.random.normal(keys[0], (B, S, D_MODEL), jnp.float32)
    K = jax.random.normal(keys[1], (B, S, D_MODEL), jnp.float32)
    V = jax.random.normal(keys[2], (B, S, D_MODEL), jnp.float32)
    # Causal mask (True = masked out), broadcast over batch — shape [B, S, S].
    attn_mask = jnp.broadcast_to(
        jnp.triu(jnp.ones((S, S), dtype=bool), k=1), (B, S, S))

    s_in = 1.0 / math.sqrt(D_MODEL)
    s_out = 1.0 / math.sqrt(N_HEADS * D_V)
    wq = jax.random.normal(keys[3], (D_MODEL, N_HEADS * D_K), jnp.float32) * s_in
    wk = jax.random.normal(keys[4], (D_MODEL, N_HEADS * D_K), jnp.float32) * s_in
    wv = jax.random.normal(keys[5], (D_MODEL, N_HEADS * D_V), jnp.float32) * s_in
    wo = jax.random.normal(keys[6], (N_HEADS * D_V, D_MODEL), jnp.float32) * s_out
    bq = jax.random.normal(keys[7], (N_HEADS * D_K,), jnp.float32) * 0.1
    bk = jax.random.normal(keys[8], (N_HEADS * D_K,), jnp.float32) * 0.1
    bv = jax.random.normal(keys[9], (N_HEADS * D_V,), jnp.float32) * 0.1
    bo = jax.random.normal(keys[10], (D_MODEL,), jnp.float32) * 0.1
    gamma = 1.0 + 0.1 * jax.random.normal(keys[11], (D_MODEL,), jnp.float32)
    beta = 0.1 * jax.random.normal(keys[12], (D_MODEL,), jnp.float32)

    out, attn = multi_head_attention(Q, K, V, attn_mask,
                                     wq, bq, wk, bk, wv, bv, wo, bo, gamma, beta)
    out = jax.block_until_ready(out)
    attn = jax.block_until_ready(attn)
    assert out.shape == (B, S, D_MODEL)
    assert attn.shape == (B, N_HEADS, S, S)

    ref_out, ref_attn = _mha_reference(Q, K, V, attn_mask,
                                       wq, bq, wk, bk, wv, bv, wo, bo,
                                       gamma, beta)
    assert jnp.allclose(out, ref_out, atol=2e-3, rtol=2e-3), "output mismatch"
    assert jnp.allclose(attn, ref_attn, atol=2e-3, rtol=2e-3), "attention mismatch"

    print("KERNEL_OK")
</pallas_src>

<mosaic_0001>
module attributes {stable_mosaic.version = 11 : i64} {
  func.func @_mha_kernel(%arg0: i32, %arg1: memref<1x8x512xf32, #tpu.memory_space<vmem>>, %arg2: memref<1x8x512xf32, #tpu.memory_space<vmem>>, %arg3: memref<1x8x512xf32, #tpu.memory_space<vmem>>, %arg4: memref<1x8x8xi32, #tpu.memory_space<vmem>>, %arg5: memref<8x512x64xf32, #tpu.memory_space<vmem>>, %arg6: memref<8x1x64xf32, #tpu.memory_space<vmem>>, %arg7: memref<8x512x64xf32, #tpu.memory_space<vmem>>, %arg8: memref<8x1x64xf32, #tpu.memory_space<vmem>>, %arg9: memref<8x512x64xf32, #tpu.memory_space<vmem>>, %arg10: memref<8x1x64xf32, #tpu.memory_space<vmem>>, %arg11: memref<8x64x512xf32, #tpu.memory_space<vmem>>, %arg12: memref<1x512xf32, #tpu.memory_space<vmem>>, %arg13: memref<1x512xf32, #tpu.memory_space<vmem>>, %arg14: memref<1x512xf32, #tpu.memory_space<vmem>>, %arg15: memref<1x8x512xf32, #tpu.memory_space<vmem>>, %arg16: memref<1x8x8x8xf32, #tpu.memory_space<vmem>>) attributes {dimension_semantics = [#tpu.dimension_semantics<parallel>], iteration_bounds = array<i64: 2>, scalar_prefetch = 0 : i64, scratch_operands = 0 : i64, tpu.core_type = #tpu.core_type<tc>, window_params = [{transform_indices = @transform_0, window_bounds = array<i64: 1, 8, 512>}, {transform_indices = @transform_1, window_bounds = array<i64: 1, 8, 512>}, {transform_indices = @transform_2, window_bounds = array<i64: 1, 8, 512>}, {transform_indices = @transform_3, window_bounds = array<i64: 1, 8, 8>}, {pipeline_mode = #tpu.pipeline_mode<synchronous>, transform_indices = @transform_4, window_bounds = array<i64: 8, 512, 64>}, {pipeline_mode = #tpu.pipeline_mode<synchronous>, transform_indices = @transform_5, window_bounds = array<i64: 8, 1, 64>}, {pipeline_mode = #tpu.pipeline_mode<synchronous>, transform_indices = @transform_6, window_bounds = array<i64: 8, 512, 64>}, {pipeline_mode = #tpu.pipeline_mode<synchronous>, transform_indices = @transform_7, window_bounds = array<i64: 8, 1, 64>}, {pipeline_mode = #tpu.pipeline_mode<synchronous>, transform_indices = @transform_8, window_bounds = array<i64: 8, 512, 64>}, {pipeline_mode = #tpu.pipeline_mode<synchronous>, transform_indices = @transform_9, window_bounds = array<i64: 8, 1, 64>}, {pipeline_mode = #tpu.pipeline_mode<synchronous>, transform_indices = @transform_10, window_bounds = array<i64: 8, 64, 512>}, {pipeline_mode = #tpu.pipeline_mode<synchronous>, transform_indices = @transform_11, window_bounds = array<i64: 1, 512>}, {pipeline_mode = #tpu.pipeline_mode<synchronous>, transform_indices = @transform_12, window_bounds = array<i64: 1, 512>}, {pipeline_mode = #tpu.pipeline_mode<synchronous>, transform_indices = @transform_13, window_bounds = array<i64: 1, 512>}, {transform_indices = @transform_14, window_bounds = array<i64: 1, 8, 512>}, {transform_indices = @transform_15, window_bounds = array<i64: 1, 8, 8, 8>}]} {
    %c0 = arith.constant 0 : index
    %c0_0 = arith.constant 0 : index
    %c0_1 = arith.constant 0 : index
    %0 = vector.load %arg1[%c0, %c0_0, %c0_1] : memref<1x8x512xf32, #tpu.memory_space<vmem>>, vector<1x8x512xf32>
    %1 = vector.shape_cast %0 : vector<1x8x512xf32> to vector<8x512xf32>
    %c0_2 = arith.constant 0 : index
    %c0_3 = arith.constant 0 : index
    %c0_4 = arith.constant 0 : index
    %2 = vector.load %arg2[%c0_2, %c0_3, %c0_4] : memref<1x8x512xf32, #tpu.memory_space<vmem>>, vector<1x8x512xf32>
    %3 = vector.shape_cast %2 : vector<1x8x512xf32> to vector<8x512xf32>
    %c0_5 = arith.constant 0 : index
    %c0_6 = arith.constant 0 : index
    %c0_7 = arith.constant 0 : index
    %4 = vector.load %arg3[%c0_5, %c0_6, %c0_7] : memref<1x8x512xf32, #tpu.memory_space<vmem>>, vector<1x8x512xf32>
    %5 = vector.shape_cast %4 : vector<1x8x512xf32> to vector<8x512xf32>
    %c0_8 = arith.constant 0 : index
    %c0_9 = arith.constant 0 : index
    %c0_10 = arith.constant 0 : index
    %6 = vector.load %arg4[%c0_8, %c0_9, %c0_10] : memref<1x8x8xi32, #tpu.memory_space<vmem>>, vector<1x8x8xi32>
    %7 = vector.shape_cast %6 : vector<1x8x8xi32> to vector<8x8xi32>
    %c0_i32 = arith.constant 0 : i32
    %8 = vector.broadcast %c0_i32 : i32 to vector<8x8xi32>
    %9 = arith.cmpi ne, %7, %8 : vector<8x8xi32>
    %10 = vector.shape_cast %1 : vector<8x512xf32> to vector<1x8x512xf32>
    %11 = vector.shape_cast %10 : vector<1x8x512xf32> to vector<1x8x512xf32>
    %12 = vector.broadcast %11 : vector<1x8x512xf32> to vector<8x8x512xf32>
    %13 = vector.shape_cast %3 : vector<8x512xf32> to vector<1x8x512xf32>
    %14 = vector.shape_cast %13 : vector<1x8x512xf32> to vector<1x8x512xf32>
    %15 = vector.broadcast %14 : vector<1x8x512xf32> to vector<8x8x512xf32>
    %16 = vector.shape_cast %5 : vector<8x512xf32> to vector<1x8x512xf32>
    %17 = vector.shape_cast %16 : vector<1x8x512xf32> to vector<1x8x512xf32>
    %18 = vector.broadcast %17 : vector<1x8x512xf32> to vector<8x8x512xf32>
    %c0_11 = arith.constant 0 : index
    %c0_12 = arith.constant 0 : index
    %c0_13 = arith.constant 0 : index
    %19 = vector.load %arg5[%c0_11, %c0_12, %c0_13] : memref<8x512x64xf32, #tpu.memory_space<vmem>>, vector<8x512x64xf32>
    "tpu.trace_start"() <{level = 10 : i32, message = "hsd,hdk->hsk"}> : () -> ()
    %cst = arith.constant dense<0.000000e+00> : vector<8x8x64xf32>
    %20 = tpu.matmul %12, %19, %cst {dimension_numbers = #tpu.dot_dimension_numbers<[2], [1], [1], [2], [0, 0, 0, 1, 1, 2], [0], [0]>} : vector<8x8x512xf32>, vector<8x512x64xf32>, vector<8x8x64xf32> -> vector<8x8x64xf32>
    "tpu.trace_stop"() : () -> ()
    %c0_14 = arith.constant 0 : index
    %c0_15 = arith.constant 0 : index
    %c0_16 = arith.constant 0 : index
    %21 = vector.load %arg6[%c0_14, %c0_15, %c0_16] : memref<8x1x64xf32, #tpu.memory_space<vmem>>, vector<8x1x64xf32>
    %22 = vector.broadcast %21 : vector<8x1x64xf32> to vector<8x8x64xf32>
    %23 = arith.addf %20, %22 : vector<8x8x64xf32>
    %c0_17 = arith.constant 0 : index
    %c0_18 = arith.constant 0 : index
    %c0_19 = arith.constant 0 : index
    %24 = vector.load %arg7[%c0_17, %c0_18, %c0_19] : memref<8x512x64xf32, #tpu.memory_space<vmem>>, vector<8x512x64xf32>
    "tpu.trace_start"() <{level = 10 : i32, message = "hsd,hdk->hsk"}> : () -> ()
    %cst_20 = arith.constant dense<0.000000e+00> : vector<8x8x64xf32>
    %25 = tpu.matmul %15, %24, %cst_20 {dimension_numbers = #tpu.dot_dimension_numbers<[2], [1], [1], [2], [0, 0, 0, 1, 1, 2], [0], [0]>} : vector<8x8x512xf32>, vector<8x512x64xf32>, vector<8x8x64xf32> -> vector<8x8x64xf32>
    "tpu.trace_stop"() : () -> ()
    %c0_21 = arith.constant 0 : index
    %c0_22 = arith.constant 0 : index
    %c0_23 = arith.constant 0 : index
    %26 = vector.load %arg8[%c0_21, %c0_22, %c0_23] : memref<8x1x64xf32, #tpu.memory_space<vmem>>, vector<8x1x64xf32>
    %27 = vector.broadcast %26 : vector<8x1x64xf32> to vector<8x8x64xf32>
    %28 = arith.addf %25, %27 : vector<8x8x64xf32>
    %c0_24 = arith.constant 0 : index
    %c0_25 = arith.constant 0 : index
    %c0_26 = arith.constant 0 : index
    %29 = vector.load %arg9[%c0_24, %c0_25, %c0_26] : memref<8x512x64xf32, #tpu.memory_space<vmem>>, vector<8x512x64xf32>
    "tpu.trace_start"() <{level = 10 : i32, message = "hsd,hdk->hsk"}> : () -> ()
    %cst_27 = arith.constant dense<0.000000e+00> : vector<8x8x64xf32>
    %30 = tpu.matmul %18, %29, %cst_27 {dimension_numbers = #tpu.dot_dimension_numbers<[2], [1], [1], [2], [0, 0, 0, 1, 1, 2], [0], [0]>} : vector<8x8x512xf32>, vector<8x512x64xf32>, vector<8x8x64xf32> -> vector<8x8x64xf32>
    "tpu.trace_stop"() : () -> ()
    %c0_28 = arith.constant 0 : index
    %c0_29 = arith.constant 0 : index
    %c0_30 = arith.constant 0 : index
    %31 = vector.load %arg10[%c0_28, %c0_29, %c0_30] : memref<8x1x64xf32, #tpu.memory_space<vmem>>, vector<8x1x64xf32>
    %32 = vector.broadcast %31 : vector<8x1x64xf32> to vector<8x8x64xf32>
    %33 = arith.addf %30, %32 : vector<8x8x64xf32>
    "tpu.trace_start"() <{level = 10 : i32, message = "hqd,hkd->hqk"}> : () -> ()
    %cst_31 = arith.constant dense<0.000000e+00> : vector<8x8x8xf32>
    %34 = tpu.matmul %23, %28, %cst_31 {dimension_numbers = #tpu.dot_dimension_numbers<[2], [2], [1], [1], [0, 0, 0, 1, 1, 1], [0], [0]>} : vector<8x8x64xf32>, vector<8x8x64xf32>, vector<8x8x8xf32> -> vector<8x8x8xf32>
    "tpu.trace_stop"() : () -> ()
    %cst_32 = arith.constant 1.250000e-01 : f32
    %35 = vector.broadcast %cst_32 : f32 to vector<8x8x8xf32>
    %36 = arith.mulf %34, %35 : vector<8x8x8xf32>
    %37 = vector.shape_cast %9 : vector<8x8xi1> to vector<1x8x8xi1>
    %cst_33 = arith.constant -1.000000e+09 : f32
    %38 = vector.shape_cast %37 : vector<1x8x8xi1> to vector<1x8x8xi1>
    %39 = vector.broadcast %38 : vector<1x8x8xi1> to vector<8x8x8xi1>
    %40 = vector.broadcast %cst_33 : f32 to vector<8x8x8xf32>
    %41 = arith.select %39, %40, %36 : vector<8x8x8xi1>, vector<8x8x8xf32>
    %cst_34 = arith.constant dense<0xFF800000> : vector<8x8xf32>
    %42 = vector.multi_reduction <maximumf>, %41, %cst_34 [2] : vector<8x8x8xf32> to vector<8x8xf32>
    %43 = vector.shape_cast %42 : vector<8x8xf32> to vector<8x8x1xf32>
    %44 = vector.broadcast %43 : vector<8x8x1xf32> to vector<8x8x8xf32>
    %45 = arith.subf %41, %44 : vector<8x8x8xf32>
    %46 = math.exp %45 : vector<8x8x8xf32>
    %cst_35 = arith.constant dense<0.000000e+00> : vector<8x8xf32>
    %47 = vector.multi_reduction <add>, %46, %cst_35 [2] : vector<8x8x8xf32> to vector<8x8xf32>
    %48 = vector.shape_cast %47 : vector<8x8xf32> to vector<8x8x1xf32>
    %49 = vector.broadcast %48 : vector<8x8x1xf32> to vector<8x8x8xf32>
    %50 = arith.divf %46, %49 : vector<8x8x8xf32>
    "tpu.trace_start"() <{level = 10 : i32, message = "hqk,hkd->hqd"}> : () -> ()
    %cst_36 = arith.constant dense<0.000000e+00> : vector<8x8x64xf32>
    %51 = tpu.matmul %50, %33, %cst_36 {dimension_numbers = #tpu.dot_dimension_numbers<[2], [1], [1], [2], [0, 0, 0, 1, 1, 2], [0], [0]>} : vector<8x8x8xf32>, vector<8x8x64xf32>, vector<8x8x64xf32> -> vector<8x8x64xf32>
    "tpu.trace_stop"() : () -> ()
    %c0_37 = arith.constant 0 : index
    %c0_38 = arith.constant 0 : index
    %52 = vector.load %arg12[%c0_37, %c0_38] : memref<1x512xf32, #tpu.memory_space<vmem>>, vector<1x512xf32>
    %53 = vector.broadcast %52 : vector<1x512xf32> to vector<8x512xf32>
    %54 = arith.addf %1, %53 : vector<8x512xf32>
    %55 = vector.extract_strided_slice %51 {offsets = [0, 0, 0], sizes = [1, 8, 64], strides = [1, 1, 1]} : vector<8x8x64xf32> to vector<1x8x64xf32>
    %56 = vector.shape_cast %55 : vector<1x8x64xf32> to vector<8x64xf32>
    %c0_39 = arith.constant 0 : index
    %c0_40 = arith.constant 0 : index
    %c0_41 = arith.constant 0 : index
    %57 = vector.load %arg11[%c0_39, %c0_40, %c0_41] : memref<8x64x512xf32, #tpu.memory_space<vmem>>, vector<1x64x512xf32>
    %58 = vector.shape_cast %57 : vector<1x64x512xf32> to vector<64x512xf32>
    %cst_42 = arith.constant dense<0.000000e+00> : vector<8x512xf32>
    %59 = tpu.matmul %56, %58, %cst_42 {dimension_numbers = #tpu.dot_dimension_numbers<[1], [0], [0], [1], [0, 0, 1, 1], [], []>} : vector<8x64xf32>, vector<64x512xf32>, vector<8x512xf32> -> vector<8x512xf32>
    %60 = arith.addf %54, %59 : vector<8x512xf32>
    %61 = vector.extract_strided_slice %51 {offsets = [1, 0, 0], sizes = [1, 8, 64], strides = [1, 1, 1]} : vector<8x8x64xf32> to vector<1x8x64xf32>
    %62 = vector.shape_cast %61 : vector<1x8x64xf32> to vector<8x64xf32>
    %c1 = arith.constant 1 : index
    %c0_43 = arith.constant 0 : index
    %c0_44 = arith.constant 0 : index
    %63 = vector.load %arg11[%c1, %c0_43, %c0_44] : memref<8x64x512xf32, #tpu.memory_space<vmem>>, vector<1x64x512xf32>
    %64 = vector.shape_cast %63 : vector<1x64x512xf32> to vector<64x512xf32>
    %cst_45 = arith.constant dense<0.000000e+00> : vector<8x512xf32>
    %65 = tpu.matmul %62, %64, %cst_45 {dimension_numbers = #tpu.dot_dimension_numbers<[1], [0], [0], [1], [0, 0, 1, 1], [], []>} : vector<8x64xf32>, vector<64x512xf32>, vector<8x512xf32> -> vector<8x512xf32>
    %66 = arith.addf %60, %65 : vector<8x512xf32>
    %67 = vector.extract_strided_slice %51 {offsets = [2, 0, 0], sizes = [1, 8, 64], strides = [1, 1, 1]} : vector<8x8x64xf32> to vector<1x8x64xf32>
    %68 = vector.shape_cast %67 : vector<1x8x64xf32> to vector<8x64xf32>
    %c2 = arith.constant 2 : index
    %c0_46 = arith.constant 0 : index
    %c0_47 = arith.constant 0 : index
    %69 = vector.load %arg11[%c2, %c0_46, %c0_47] : memref<8x64x512xf32, #tpu.memory_space<vmem>>, vector<1x64x512xf32>
    %70 = vector.shape_cast %69 : vector<1x64x512xf32> to vector<64x512xf32>
    %cst_48 = arith.constant dense<0.000000e+00> : vector<8x512xf32>
    %71 = tpu.matmul %68, %70, %cst_48 {dimension_numbers = #tpu.dot_dimension_numbers<[1], [0], [0], [1], [0, 0, 1, 1], [], []>} : vector<8x64xf32>, vector<64x512xf32>, vector<8x512xf32> -> vector<8x512xf32>
    %72 = arith.addf %66, %71 : vector<8x512xf32>
    %73 = vector.extract_strided_slice %51 {offsets = [3, 0, 0], sizes = [1, 8, 64], strides = [1, 1, 1]} : vector<8x8x64xf32> to vector<1x8x64xf32>
    %74 = vector.shape_cast %73 : vector<1x8x64xf32> to vector<8x64xf32>
    %c3 = arith.constant 3 : index
    %c0_49 = arith.constant 0 : index
    %c0_50 = arith.constant 0 : index
    %75 = vector.load %arg11[%c3, %c0_49, %c0_50] : memref<8x64x512xf32, #tpu.memory_space<vmem>>, vector<1x64x512xf32>
    %76 = vector.shape_cast %75 : vector<1x64x512xf32> to vector<64x512xf32>
    %cst_51 = arith.constant dense<0.000000e+00> : vector<8x512xf32>
    %77 = tpu.matmul %74, %76, %cst_51 {dimension_numbers = #tpu.dot_dimension_numbers<[1], [0], [0], [1], [0, 0, 1, 1], [], []>} : vector<8x64xf32>, vector<64x512xf32>, vector<8x512xf32> -> vector<8x512xf32>
    %78 = arith.addf %72, %77 : vector<8x512xf32>
    %79 = vector.extract_strided_slice %51 {offsets = [4, 0, 0], sizes = [1, 8, 64], strides = [1, 1, 1]} : vector<8x8x64xf32> to vector<1x8x64xf32>
    %80 = vector.shape_cast %79 : vector<1x8x64xf32> to vector<8x64xf32>
    %c4 = arith.constant 4 : index
    %c0_52 = arith.constant 0 : index
    %c0_53 = arith.constant 0 : index
    %81 = vector.load %arg11[%c4, %c0_52, %c0_53] : memref<8x64x512xf32, #tpu.memory_space<vmem>>, vector<1x64x512xf32>
    %82 = vector.shape_cast %81 : vector<1x64x512xf32> to vector<64x512xf32>
    %cst_54 = arith.constant dense<0.000000e+00> : vector<8x512xf32>
    %83 = tpu.matmul %80, %82, %cst_54 {dimension_numbers = #tpu.dot_dimension_numbers<[1], [0], [0], [1], [0, 0, 1, 1], [], []>} : vector<8x64xf32>, vector<64x512xf32>, vector<8x512xf32> -> vector<8x512xf32>
    %84 = arith.addf %78, %83 : vector<8x512xf32>
    %85 = vector.extract_strided_slice %51 {offsets = [5, 0, 0], sizes = [1, 8, 64], strides = [1, 1, 1]} : vector<8x8x64xf32> to vector<1x8x64xf32>
    %86 = vector.shape_cast %85 : vector<1x8x64xf32> to vector<8x64xf32>
    %c5 = arith.constant 5 : index
    %c0_55 = arith.constant 0 : index
    %c0_56 = arith.constant 0 : index
    %87 = vector.load %arg11[%c5, %c0_55, %c0_56] : memref<8x64x512xf32, #tpu.memory_space<vmem>>, vector<1x64x512xf32>
    %88 = vector.shape_cast %87 : vector<1x64x512xf32> to vector<64x512xf32>
    %cst_57 = arith.constant dense<0.000000e+00> : vector<8x512xf32>
    %89 = tpu.matmul %86, %88, %cst_57 {dimension_numbers = #tpu.dot_dimension_numbers<[1], [0], [0], [1], [0, 0, 1, 1], [], []>} : vector<8x64xf32>, vector<64x512xf32>, vector<8x512xf32> -> vector<8x512xf32>
    %90 = arith.addf %84, %89 : vector<8x512xf32>
    %91 = vector.extract_strided_slice %51 {offsets = [6, 0, 0], sizes = [1, 8, 64], strides = [1, 1, 1]} : vector<8x8x64xf32> to vector<1x8x64xf32>
    %92 = vector.shape_cast %91 : vector<1x8x64xf32> to vector<8x64xf32>
    %c6 = arith.constant 6 : index
    %c0_58 = arith.constant 0 : index
    %c0_59 = arith.constant 0 : index
    %93 = vector.load %arg11[%c6, %c0_58, %c0_59] : memref<8x64x512xf32, #tpu.memory_space<vmem>>, vector<1x64x512xf32>
    %94 = vector.shape_cast %93 : vector<1x64x512xf32> to vector<64x512xf32>
    %cst_60 = arith.constant dense<0.000000e+00> : vector<8x512xf32>
    %95 = tpu.matmul %92, %94, %cst_60 {dimension_numbers = #tpu.dot_dimension_numbers<[1], [0], [0], [1], [0, 0, 1, 1], [], []>} : vector<8x64xf32>, vector<64x512xf32>, vector<8x512xf32> -> vector<8x512xf32>
    %96 = arith.addf %90, %95 : vector<8x512xf32>
    %97 = vector.extract_strided_slice %51 {offsets = [7, 0, 0], sizes = [1, 8, 64], strides = [1, 1, 1]} : vector<8x8x64xf32> to vector<1x8x64xf32>
    %98 = vector.shape_cast %97 : vector<1x8x64xf32> to vector<8x64xf32>
    %c7 = arith.constant 7 : index
    %c0_61 = arith.constant 0 : index
    %c0_62 = arith.constant 0 : index
    %99 = vector.load %arg11[%c7, %c0_61, %c0_62] : memref<8x64x512xf32, #tpu.memory_space<vmem>>, vector<1x64x512xf32>
    %100 = vector.shape_cast %99 : vector<1x64x512xf32> to vector<64x512xf32>
    %cst_63 = arith.constant dense<0.000000e+00> : vector<8x512xf32>
    %101 = tpu.matmul %98, %100, %cst_63 {dimension_numbers = #tpu.dot_dimension_numbers<[1], [0], [0], [1], [0, 0, 1, 1], [], []>} : vector<8x64xf32>, vector<64x512xf32>, vector<8x512xf32> -> vector<8x512xf32>
    %102 = arith.addf %96, %101 : vector<8x512xf32>
    %cst_64 = arith.constant dense<0.000000e+00> : vector<8xf32>
    %103 = vector.multi_reduction <add>, %102, %cst_64 [1] : vector<8x512xf32> to vector<8xf32>
    %104 = vector.shape_cast %103 : vector<8xf32> to vector<8x1xf32>
    %cst_65 = arith.constant 5.120000e+02 : f32
    %105 = vector.broadcast %cst_65 : f32 to vector<8x1xf32>
    %106 = arith.divf %104, %105 : vector<8x1xf32>
    %107 = vector.broadcast %106 : vector<8x1xf32> to vector<8x512xf32>
    %108 = arith.subf %102, %107 : vector<8x512xf32>
    %109 = arith.mulf %108, %108 : vector<8x512xf32>
    %cst_66 = arith.constant dense<0.000000e+00> : vector<8xf32>
    %110 = vector.multi_reduction <add>, %109, %cst_66 [1] : vector<8x512xf32> to vector<8xf32>
    %111 = vector.shape_cast %110 : vector<8xf32> to vector<8x1xf32>
    %cst_67 = arith.constant 5.120000e+02 : f32
    %112 = vector.broadcast %cst_67 : f32 to vector<8x1xf32>
    %113 = arith.divf %111, %112 : vector<8x1xf32>
    %cst_68 = arith.constant 9.99999974E-6 : f32
    %114 = vector.broadcast %cst_68 : f32 to vector<8x1xf32>
    %115 = arith.addf %113, %114 : vector<8x1xf32>
    %116 = math.rsqrt %115 : vector<8x1xf32>
    %117 = vector.broadcast %116 : vector<8x1xf32> to vector<8x512xf32>
    %118 = arith.mulf %108, %117 : vector<8x512xf32>
    %c0_69 = arith.constant 0 : index
    %c0_70 = arith.constant 0 : index
    %119 = vector.load %arg13[%c0_69, %c0_70] : memref<1x512xf32, #tpu.memory_space<vmem>>, vector<1x512xf32>
    %120 = vector.broadcast %119 : vector<1x512xf32> to vector<8x512xf32>
    %121 = arith.mulf %118, %120 : vector<8x512xf32>
    %c0_71 = arith.constant 0 : index
    %c0_72 = arith.constant 0 : index
    %122 = vector.load %arg14[%c0_71, %c0_72] : memref<1x512xf32, #tpu.memory_space<vmem>>, vector<1x512xf32>
    %123 = vector.broadcast %122 : vector<1x512xf32> to vector<8x512xf32>
    %124 = arith.addf %121, %123 : vector<8x512xf32>
    %c0_73 = arith.constant 0 : index
    %c0_74 = arith.constant 0 : index
    %c0_75 = arith.constant 0 : index
    %125 = vector.load %arg15[%c0_73, %c0_74, %c0_75] : memref<1x8x512xf32, #tpu.memory_space<vmem>>, vector<1x8x512xf32>
    %126 = vector.shape_cast %125 : vector<1x8x512xf32> to vector<8x512xf32>
    %127 = vector.shape_cast %124 : vector<8x512xf32> to vector<1x8x512xf32>
    tpu.vector_store %arg15[%c0_73, %c0_74, %c0_75], %127 {strides = array<i32>} : memref<1x8x512xf32, #tpu.memory_space<vmem>>, vector<1x8x512xf32>,
    %c0_76 = arith.constant 0 : index
    %c0_77 = arith.constant 0 : index
    %c0_78 = arith.constant 0 : index
    %c0_79 = arith.constant 0 : index
    %128 = vector.load %arg16[%c0_76, %c0_77, %c0_78, %c0_79] : memref<1x8x8x8xf32, #tpu.memory_space<vmem>>, vector<1x8x8x8xf32>
    %129 = vector.shape_cast %128 : vector<1x8x8x8xf32> to vector<8x8x8xf32>
    %130 = vector.shape_cast %50 : vector<8x8x8xf32> to vector<1x8x8x8xf32>
    tpu.vector_store %arg16[%c0_76, %c0_77, %c0_78, %c0_79], %130 {strides = array<i32>} : memref<1x8x8x8xf32, #tpu.memory_space<vmem>>, vector<1x8x8x8xf32>,
    return
  }
  func.func @transform_0(%arg0: i32) -> (i32, i32, i32) {
    %c0_i32 = arith.constant 0 : i32
    %c0_i32_0 = arith.constant 0 : i32
    %c0_i32_1 = arith.constant 0 : i32
    return %arg0, %c0_i32, %c0_i32_0 : i32, i32, i32
  }
  func.func @transform_1(%arg0: i32) -> (i32, i32, i32) {
    %c0_i32 = arith.constant 0 : i32
    %c0_i32_0 = arith.constant 0 : i32
    %c0_i32_1 = arith.constant 0 : i32
    return %arg0, %c0_i32, %c0_i32_0 : i32, i32, i32
  }
  func.func @transform_2(%arg0: i32) -> (i32, i32, i32) {
    %c0_i32 = arith.constant 0 : i32
    %c0_i32_0 = arith.constant 0 : i32
    %c0_i32_1 = arith.constant 0 : i32
    return %arg0, %c0_i32, %c0_i32_0 : i32, i32, i32
  }
  func.func @transform_3(%arg0: i32) -> (i32, i32, i32) {
    %c0_i32 = arith.constant 0 : i32
    %c0_i32_0 = arith.constant 0 : i32
    %c0_i32_1 = arith.constant 0 : i32
    return %arg0, %c0_i32, %c0_i32_0 : i32, i32, i32
  }
  func.func @transform_4(%arg0: i32) -> (i32, i32, i32) {
    %c0_i32 = arith.constant 0 : i32
    %c0_i32_0 = arith.constant 0 : i32
    %c0_i32_1 = arith.constant 0 : i32
    %c0_i32_2 = arith.constant 0 : i32
    return %c0_i32, %c0_i32_0, %c0_i32_1 : i32, i32, i32
  }
  func.func @transform_5(%arg0: i32) -> (i32, i32, i32) {
    %c0_i32 = arith.constant 0 : i32
    %c0_i32_0 = arith.constant 0 : i32
    %c0_i32_1 = arith.constant 0 : i32
    %c0_i32_2 = arith.constant 0 : i32
    return %c0_i32, %c0_i32_0, %c0_i32_1 : i32, i32, i32
  }
  func.func @transform_6(%arg0: i32) -> (i32, i32, i32) {
    %c0_i32 = arith.constant 0 : i32
    %c0_i32_0 = arith.constant 0 : i32
    %c0_i32_1 = arith.constant 0 : i32
    %c0_i32_2 = arith.constant 0 : i32
    return %c0_i32, %c0_i32_0, %c0_i32_1 : i32, i32, i32
  }
  func.func @transform_7(%arg0: i32) -> (i32, i32, i32) {
    %c0_i32 = arith.constant 0 : i32
    %c0_i32_0 = arith.constant 0 : i32
    %c0_i32_1 = arith.constant 0 : i32
    %c0_i32_2 = arith.constant 0 : i32
    return %c0_i32, %c0_i32_0, %c0_i32_1 : i32, i32, i32
  }
  func.func @transform_8(%arg0: i32) -> (i32, i32, i32) {
    %c0_i32 = arith.constant 0 : i32
    %c0_i32_0 = arith.constant 0 : i32
    %c0_i32_1 = arith.constant 0 : i32
    %c0_i32_2 = arith.constant 0 : i32
    return %c0_i32, %c0_i32_0, %c0_i32_1 : i32, i32, i32
  }
  func.func @transform_9(%arg0: i32) -> (i32, i32, i32) {
    %c0_i32 = arith.constant 0 : i32
    %c0_i32_0 = arith.constant 0 : i32
    %c0_i32_1 = arith.constant 0 : i32
    %c0_i32_2 = arith.constant 0 : i32
    return %c0_i32, %c0_i32_0, %c0_i32_1 : i32, i32, i32
  }
  func.func @transform_10(%arg0: i32) -> (i32, i32, i32) {
    %c0_i32 = arith.constant 0 : i32
    %c0_i32_0 = arith.constant 0 : i32
    %c0_i32_1 = arith.constant 0 : i32
    %c0_i32_2 = arith.constant 0 : i32
    return %c0_i32, %c0_i32_0, %c0_i32_1 : i32, i32, i32
  }
  func.func @transform_11(%arg0: i32) -> (i32, i32) {
    %c0_i32 = arith.constant 0 : i32
    %c0_i32_0 = arith.constant 0 : i32
    %c0_i32_1 = arith.constant 0 : i32
    return %c0_i32, %c0_i32_0 : i32, i32
  }
  func.func @transform_12(%arg0: i32) -> (i32, i32) {
    %c0_i32 = arith.constant 0 : i32
    %c0_i32_0 = arith.constant 0 : i32
    %c0_i32_1 = arith.constant 0 : i32
    return %c0_i32, %c0_i32_0 : i32, i32
  }
  func.func @transform_13(%arg0: i32) -> (i32, i32) {
    %c0_i32 = arith.constant 0 : i32
    %c0_i32_0 = arith.constant 0 : i32
    %c0_i32_1 = arith.constant 0 : i32
    return %c0_i32, %c0_i32_0 : i32, i32
  }
  func.func @transform_14(%arg0: i32) -> (i32, i32, i32) {
    %c0_i32 = arith.constant 0 : i32
    %c0_i32_0 = arith.constant 0 : i32
    %c0_i32_1 = arith.constant 0 : i32
    return %arg0, %c0_i32, %c0_i32_0 : i32, i32, i32
  }
  func.func @transform_15(%arg0: i32) -> (i32, i32, i32, i32) {
    %c0_i32 = arith.constant 0 : i32
    %c0_i32_0 = arith.constant 0 : i32
    %c0_i32_1 = arith.constant 0 : i32
    %c0_i32_2 = arith.constant 0 : i32
    return %arg0, %c0_i32, %c0_i32_0, %c0_i32_1 : i32, i32, i32, i32
  }
}

</mosaic_0001>

<llo_original>
// kernel: tpu_custom_call.1
$region0: #{tpu_custom_call.1}
  #allocation0 [shape = 'u32[]', space=smem, size = 0x4, offset = 0x4, fixed_abs, tag = 'smem constant byte address 0x4 - core index']
  #allocation1 [shape = 'u32[144,128]{1,0:T(1,128)}', space=vmem, size = 0x12000, scoped, tag = 'internal scratch']
  %s0 = inlined_call_operand.vmem [shape: f32[2,8,512], index: 0, kind: input, shape index: {}]
  %s1 = inlined_call_operand.vmem [shape: f32[2,8,512], index: 1, kind: input, shape index: {}]
  %s2 = inlined_call_operand.vmem [shape: f32[2,8,512], index: 2, kind: input, shape index: {}]
  %s3 = inlined_call_operand.vmem [shape: s32[2,8,8], index: 3, kind: input, shape index: {}]
  %s4 = inlined_call_operand.vmem [shape: f32[8,512,64], index: 4, kind: input, shape index: {}]
  %s5 = inlined_call_operand.vmem [shape: f32[8,1,64], index: 5, kind: input, shape index: {}]
  %s6 = inlined_call_operand.vmem [shape: f32[8,512,64], index: 6, kind: input, shape index: {}]
  %s7 = inlined_call_operand.vmem [shape: f32[8,1,64], index: 7, kind: input, shape index: {}]
  %s8 = inlined_call_operand.vmem [shape: f32[8,512,64], index: 8, kind: input, shape index: {}]
  %s9 = inlined_call_operand.vmem [shape: f32[8,1,64], index: 9, kind: input, shape index: {}]
  %s10 = inlined_call_operand.vmem [shape: f32[8,64,512], index: 10, kind: input, shape index: {}]
  %s11 = inlined_call_operand.vmem [shape: f32[1,512], index: 11, kind: input, shape index: {}]
  %s12 = inlined_call_operand.vmem [shape: f32[1,512], index: 12, kind: input, shape index: {}]
  %s13 = inlined_call_operand.vmem [shape: f32[1,512], index: 13, kind: input, shape index: {}]
  %s14 = inlined_call_operand.hbm [shape: f32[2,8,512], index: 14, kind: output, shape index: {0}]
  %s15 = inlined_call_operand.hbm [shape: f32[2,8,8,8], index: 15, kind: output, shape index: {1}]
  %16 = xla_tuple %s14, %s15
  %s17 = sld [smem:[#allocation0]]
  $region97: #{tpu_custom_call.1} parent=0
    _
  %s19 = ssub.s32 1, %s17
  %s20 = scalar_select 0, %s19, %s17
  $region1: #{tpu_custom_call.1} parent=0
    #allocation2 [shape = 'u8[32768]{0}', space=vmem, size = 0x8000, scoped, tag = 'output window, operand 0']
    #allocation3 [shape = 's32[2]{0}', space=sflag, size = 0x8, scoped, tag = 'scoped memory for tpu_custom_call.1']
    #allocation4 [shape = 'u8[65536]{0}', space=vmem, size = 0x10000, scoped, tag = 'output window, operand 1']
    #allocation5 [shape = 's32[2]{0}', space=sflag, size = 0x8, scoped, tag = 'scoped memory for tpu_custom_call.1']
    %21 = vsyncpa [#allocation3], 0
    %s22 = scalar_lea.sflag [#allocation3], 1
    %23 = vsyncpa %s22, 0
    %24 = vsyncpa [#allocation5], 0
    %s25 = scalar_lea.sflag [#allocation5], 1
    %26 = vsyncpa %s25, 0
    loop: start=0, step=1, limit=4
    $region2: #{tpu_custom_call.1} parent=1 // loop_pre_header
      _
    $region3: #{tpu_custom_call.1} parent=1 // loop_header
      %s28 = sphi 0, %s32
      %p29 = scmp.ge.s32.totalorder %s28, 4
      %s38 = sphi 0, %s40
      %s41 = sphi 0, %s38
      %s42 = sphi 0, %s41
      %s58 = sphi 0, %s42
      %s64 = sphi 0, %s66
      %s67 = sphi 0, %s64
      %s68 = sphi 0, %s67
      %s84 = sphi 0, %s68
      %s90 = sphi 0, %s92
      %s93 = sphi 0, %s90
      %s94 = sphi 0, %s93
      %s110 = sphi 0, %s94
      %s116 = sphi 0, %s118
      %s119 = sphi 0, %s116
      %s120 = sphi 0, %s119
      %s136 = sphi 0, %s120
      %s140 = sphi 0, %s140
      %s142 = sphi 0, %s140
      %s143 = sphi 0, %s142
      %s157 = sphi 0, %s143
      %s161 = sphi 0, %s161
      %s163 = sphi 0, %s161
      %s164 = sphi 0, %s163
      %s178 = sphi 0, %s164
      %s182 = sphi 0, %s182
      %s184 = sphi 0, %s182
      %s185 = sphi 0, %s184
      %s199 = sphi 0, %s185
      %s203 = sphi 0, %s203
      %s205 = sphi 0, %s203
      %s206 = sphi 0, %s205
      %s220 = sphi 0, %s206
      %s224 = sphi 0, %s224
      %s226 = sphi 0, %s224
      %s227 = sphi 0, %s226
      %s241 = sphi 0, %s227
      %s245 = sphi 0, %s245
      %s247 = sphi 0, %s245
      %s248 = sphi 0, %s247
      %s262 = sphi 0, %s248
      %s266 = sphi 0, %s266
      %s268 = sphi 0, %s266
      %s269 = sphi 0, %s268
      %s283 = sphi 0, %s269
      %s287 = sphi 0, %s287
      %s289 = sphi 0, %s287
      %s290 = sphi 0, %s289
      %s304 = sphi 0, %s290
      %s308 = sphi 0, %s308
      %s310 = sphi 0, %s308
      %s311 = sphi 0, %s310
      %s325 = sphi 0, %s311
      %s329 = sphi 0, %s329
      %s331 = sphi 0, %s329
      %s332 = sphi 0, %s331
      %s346 = sphi 0, %s332
      %s352 = sphi 0, %s354
      %s355 = sphi 0, %s352
      %s356 = sphi 0, %s355
      %s372 = sphi 0, %s356
      %s378 = sphi 0, %s380
      %s381 = sphi 0, %s378
      %s382 = sphi 0, %s381
      %s398 = sphi 0, %s382
    $region4: #{tpu_custom_call.1} parent=1 // loop_header_branch
      %31 = sbr.rel (%p29) target = $region8
    $region5: #{tpu_custom_call.1} parent=1 // loop_body
      %s33 = ssub.s32 %s28, 1
      %s34 = ssub.s32 %s28, 2
      %s35 = sadd.s32 %s28, 1
      %s36 = ssub.s32 %s28, %s35
      %p37 = scmp.eq.s32.totalorder %s36, 0
      %s39 = sadd.s32 %s38, 1
      %s40 = scalar_select %p37, %s38, %s39
      %p43 = pneg %p37
      %p44 = scmp.eq.s32.totalorder %s28, 1
      %p45 = por %p43, %p44
      %p46 = scmp.ne.s32.totalorder %s38, %s41
      %p47 = scmp.eq.s32.totalorder %s28, 0
      %p48 = por %p46, %p47
      %p49 = scmp.ne.s32.totalorder %s38, %s41
      %p50 = scmp.eq.s32.totalorder %s33, 1
      %p51 = por %p49, %p50
      %p52 = scmp.ne.s32.totalorder %s41, %s42
      %p53 = scmp.eq.s32.totalorder %s33, 0
      %p54 = por %p52, %p53
      %p55 = scmp.ne.s32.totalorder %s41, %s42
      %p56 = scmp.eq.s32.totalorder %s34, 1
      %p57 = por %p55, %p56
      %p59 = scmp.ne.s32.totalorder %s42, %s58
      %p60 = scmp.eq.s32.totalorder %s34, 0
      %p61 = por %p59, %p60
      %s62 = ssub.s32 %s28, %s35
      %p63 = scmp.eq.s32.totalorder %s62, 0
      %s65 = sadd.s32 %s64, 1
      %s66 = scalar_select %p63, %s64, %s65
      %p69 = pneg %p63
      %p70 = scmp.eq.s32.totalorder %s28, 1
      %p71 = por %p69, %p70
      %p72 = scmp.ne.s32.totalorder %s64, %s67
      %p73 = scmp.eq.s32.totalorder %s28, 0
      %p74 = por %p72, %p73
      %p75 = scmp.ne.s32.totalorder %s64, %s67
      %p76 = scmp.eq.s32.totalorder %s33, 1
      %p77 = por %p75, %p76
      %p78 = scmp.ne.s32.totalorder %s67, %s68
      %p79 = scmp.eq.s32.totalorder %s33, 0
      %p80 = por %p78, %p79
      %p81 = scmp.ne.s32.totalorder %s67, %s68
      %p82 = scmp.eq.s32.totalorder %s34, 1
      %p83 = por %p81, %p82
      %p85 = scmp.ne.s32.totalorder %s68, %s84
      %p86 = scmp.eq.s32.totalorder %s34, 0
      %p87 = por %p85, %p86
      %s88 = ssub.s32 %s28, %s35
      %p89 = scmp.eq.s32.totalorder %s88, 0
      %s91 = sadd.s32 %s90, 1
      %s92 = scalar_select %p89, %s90, %s91
      %p95 = pneg %p89
      %p96 = scmp.eq.s32.totalorder %s28, 1
      %p97 = por %p95, %p96
      %p98 = scmp.ne.s32.totalorder %s90, %s93
      %p99 = scmp.eq.s32.totalorder %s28, 0
      %p100 = por %p98, %p99
      %p101 = scmp.ne.s32.totalorder %s90, %s93
      %p102 = scmp.eq.s32.totalorder %s33, 1
      %p103 = por %p101, %p102
      %p104 = scmp.ne.s32.totalorder %s93, %s94
      %p105 = scmp.eq.s32.totalorder %s33, 0
      %p106 = por %p104, %p105
      %p107 = scmp.ne.s32.totalorder %s93, %s94
      %p108 = scmp.eq.s32.totalorder %s34, 1
      %p109 = por %p107, %p108
      %p111 = scmp.ne.s32.totalorder %s94, %s110
      %p112 = scmp.eq.s32.totalorder %s34, 0
      %p113 = por %p111, %p112
      %s114 = ssub.s32 %s28, %s35
      %p115 = scmp.eq.s32.totalorder %s114, 0
      %s117 = sadd.s32 %s116, 1
      %s118 = scalar_select %p115, %s116, %s117
      %p121 = pneg %p115
      %p122 = scmp.eq.s32.totalorder %s28, 1
      %p123 = por %p121, %p122
      %p124 = scmp.ne.s32.totalorder %s116, %s119
      %p125 = scmp.eq.s32.totalorder %s28, 0
      %p126 = por %p124, %p125
      %p127 = scmp.ne.s32.totalorder %s116, %s119
      %p128 = scmp.eq.s32.totalorder %s33, 1
      %p129 = por %p127, %p128
      %p130 = scmp.ne.s32.totalorder %s119, %s120
      %p131 = scmp.eq.s32.totalorder %s33, 0
      %p132 = por %p130, %p131
      %p133 = scmp.ne.s32.totalorder %s119, %s120
      %p134 = scmp.eq.s32.totalorder %s34, 1
      %p135 = por %p133, %p134
      %p137 = scmp.ne.s32.totalorder %s120, %s136
      %p138 = scmp.eq.s32.totalorder %s34, 0
      %p139 = por %p137, %p138
      %s141 = sadd.s32 %s140, 1
      %p144 = scmp.eq.s32.totalorder %s28, 1
      %p145 = scmp.ne.s32.totalorder %s140, %s142
      %p146 = scmp.eq.s32.totalorder %s28, 0
      %p147 = por %p145, %p146
      %p148 = scmp.ne.s32.totalorder %s140, %s142
      %p149 = scmp.eq.s32.totalorder %s33, 1
      %p150 = por %p148, %p149
      %p151 = scmp.ne.s32.totalorder %s142, %s143
      %p152 = scmp.eq.s32.totalorder %s33, 0
      %p153 = por %p151, %p152
      %p154 = scmp.ne.s32.totalorder %s142, %s143
      %p155 = scmp.eq.s32.totalorder %s34, 1
      %p156 = por %p154, %p155
      %p158 = scmp.ne.s32.totalorder %s143, %s157
      %p159 = scmp.eq.s32.totalorder %s34, 0
      %p160 = por %p158, %p159
      %s162 = sadd.s32 %s161, 1
      %p165 = scmp.eq.s32.totalorder %s28, 1
      %p166 = scmp.ne.s32.totalorder %s161, %s163
      %p167 = scmp.eq.s32.totalorder %s28, 0
      %p168 = por %p166, %p167
      %p169 = scmp.ne.s32.totalorder %s161, %s163
      %p170 = scmp.eq.s32.totalorder %s33, 1
      %p171 = por %p169, %p170
      %p172 = scmp.ne.s32.totalorder %s163, %s164
      %p173 = scmp.eq.s32.totalorder %s33, 0
      %p174 = por %p172, %p173
      %p175 = scmp.ne.s32.totalorder %s163, %s164
      %p176 = scmp.eq.s32.totalorder %s34, 1
      %p177 = por %p175, %p176
      %p179 = scmp.ne.s32.totalorder %s164, %s178
      %p180 = scmp.eq.s32.totalorder %s34, 0
      %p181 = por %p179, %p180
      %s183 = sadd.s32 %s182, 1
      %p186 = scmp.eq.s32.totalorder %s28, 1
      %p187 = scmp.ne.s32.totalorder %s182, %s184
      %p188 = scmp.eq.s32.totalorder %s28, 0
      %p189 = por %p187, %p188
      %p190 = scmp.ne.s32.totalorder %s182, %s184
      %p191 = scmp.eq.s32.totalorder %s33, 1
      %p192 = por %p190, %p191
      %p193 = scmp.ne.s32.totalorder %s184, %s185
      %p194 = scmp.eq.s32.totalorder %s33, 0
      %p195 = por %p193, %p194
      %p196 = scmp.ne.s32.totalorder %s184, %s185
      %p197 = scmp.eq.s32.totalorder %s34, 1
      %p198 = por %p196, %p197
      %p200 = scmp.ne.s32.totalorder %s185, %s199
      %p201 = scmp.eq.s32.totalorder %s34, 0
      %p202 = por %p200, %p201
      %s204 = sadd.s32 %s203, 1
      %p207 = scmp.eq.s32.totalorder %s28, 1
      %p208 = scmp.ne.s32.totalorder %s203, %s205
      %p209 = scmp.eq.s32.totalorder %s28, 0
      %p210 = por %p208, %p209
      %p211 = scmp.ne.s32.totalorder %s203, %s205
      %p212 = scmp.eq.s32.totalorder %s33, 1
      %p213 = por %p211, %p212
      %p214 = scmp.ne.s32.totalorder %s205, %s206
      %p215 = scmp.eq.s32.totalorder %s33, 0
      %p216 = por %p214, %p215
      %p217 = scmp.ne.s32.totalorder %s205, %s206
      %p218 = scmp.eq.s32.totalorder %s34, 1
      %p219 = por %p217, %p218
      %p221 = scmp.ne.s32.totalorder %s206, %s220
      %p222 = scmp.eq.s32.totalorder %s34, 0
      %p223 = por %p221, %p222
      %s225 = sadd.s32 %s224, 1
      %p228 = scmp.eq.s32.totalorder %s28, 1
      %p229 = scmp.ne.s32.totalorder %s224, %s226
      %p230 = scmp.eq.s32.totalorder %s28, 0
      %p231 = por %p229, %p230
      %p232 = scmp.ne.s32.totalorder %s224, %s226
      %p233 = scmp.eq.s32.totalorder %s33, 1
      %p234 = por %p232, %p233
      %p235 = scmp.ne.s32.totalorder %s226, %s227
      %p236 = scmp.eq.s32.totalorder %s33, 0
      %p237 = por %p235, %p236
      %p238 = scmp.ne.s32.totalorder %s226, %s227
      %p239 = scmp.eq.s32.totalorder %s34, 1
      %p240 = por %p238, %p239
      %p242 = scmp.ne.s32.totalorder %s227, %s241
      %p243 = scmp.eq.s32.totalorder %s34, 0
      %p244 = por %p242, %p243
      %s246 = sadd.s32 %s245, 1
      %p249 = scmp.eq.s32.totalorder %s28, 1
      %p250 = scmp.ne.s32.totalorder %s245, %s247
      %p251 = scmp.eq.s32.totalorder %s28, 0
      %p252 = por %p250, %p251
      %p253 = scmp.ne.s32.totalorder %s245, %s247
      %p254 = scmp.eq.s32.totalorder %s33, 1
      %p255 = por %p253, %p254
      %p256 = scmp.ne.s32.totalorder %s247, %s248
      %p257 = scmp.eq.s32.totalorder %s33, 0
      %p258 = por %p256, %p257
      %p259 = scmp.ne.s32.totalorder %s247, %s248
      %p260 = scmp.eq.s32.totalorder %s34, 1
      %p261 = por %p259, %p260
      %p263 = scmp.ne.s32.totalorder %s248, %s262
      %p264 = scmp.eq.s32.totalorder %s34, 0
      %p265 = por %p263, %p264
      %s267 = sadd.s32 %s266, 1
      %p270 = scmp.eq.s32.totalorder %s28, 1
      %p271 = scmp.ne.s32.totalorder %s266, %s268
      %p272 = scmp.eq.s32.totalorder %s28, 0
      %p273 = por %p271, %p272
      %p274 = scmp.ne.s32.totalorder %s266, %s268
      %p275 = scmp.eq.s32.totalorder %s33, 1
      %p276 = por %p274, %p275
      %p277 = scmp.ne.s32.totalorder %s268, %s269
      %p278 = scmp.eq.s32.totalorder %s33, 0
      %p279 = por %p277, %p278
      %p280 = scmp.ne.s32.totalorder %s268, %s269
      %p281 = scmp.eq.s32.totalorder %s34, 1
      %p282 = por %p280, %p281
      %p284 = scmp.ne.s32.totalorder %s269, %s283
      %p285 = scmp.eq.s32.totalorder %s34, 0
      %p286 = por %p284, %p285
      %s288 = sadd.s32 %s287, 1
      %p291 = scmp.eq.s32.totalorder %s28, 1
      %p292 = scmp.ne.s32.totalorder %s287, %s289
      %p293 = scmp.eq.s32.totalorder %s28, 0
      %p294 = por %p292, %p293
      %p295 = scmp.ne.s32.totalorder %s287, %s289
      %p296 = scmp.eq.s32.totalorder %s33, 1
      %p297 = por %p295, %p296
      %p298 = scmp.ne.s32.totalorder %s289, %s290
      %p299 = scmp.eq.s32.totalorder %s33, 0
      %p300 = por %p298, %p299
      %p301 = scmp.ne.s32.totalorder %s289, %s290
      %p302 = scmp.eq.s32.totalorder %s34, 1
      %p303 = por %p301, %p302
      %p305 = scmp.ne.s32.totalorder %s290, %s304
      %p306 = scmp.eq.s32.totalorder %s34, 0
      %p307 = por %p305, %p306
      %s309 = sadd.s32 %s308, 1
      %p312 = scmp.eq.s32.totalorder %s28, 1
      %p313 = scmp.ne.s32.totalorder %s308, %s310
      %p314 = scmp.eq.s32.totalorder %s28, 0
      %p315 = por %p313, %p314
      %p316 = scmp.ne.s32.totalorder %s308, %s310
      %p317 = scmp.eq.s32.totalorder %s33, 1
      %p318 = por %p316, %p317
      %p319 = scmp.ne.s32.totalorder %s310, %s311
      %p320 = scmp.eq.s32.totalorder %s33, 0
      %p321 = por %p319, %p320
      %p322 = scmp.ne.s32.totalorder %s310, %s311
      %p323 = scmp.eq.s32.totalorder %s34, 1
      %p324 = por %p322, %p323
      %p326 = scmp.ne.s32.totalorder %s311, %s325
      %p327 = scmp.eq.s32.totalorder %s34, 0
      %p328 = por %p326, %p327
      %s330 = sadd.s32 %s329, 1
      %p333 = scmp.eq.s32.totalorder %s28, 1
      %p334 = scmp.ne.s32.totalorder %s329, %s331
      %p335 = scmp.eq.s32.totalorder %s28, 0
      %p336 = por %p334, %p335
      %p337 = scmp.ne.s32.totalorder %s329, %s331
      %p338 = scmp.eq.s32.totalorder %s33, 1
      %p339 = por %p337, %p338
      %p340 = scmp.ne.s32.totalorder %s331, %s332
      %p341 = scmp.eq.s32.totalorder %s33, 0
      %p342 = por %p340, %p341
      %p343 = scmp.ne.s32.totalorder %s331, %s332
      %p344 = scmp.eq.s32.totalorder %s34, 1
      %p345 = por %p343, %p344
      %p347 = scmp.ne.s32.totalorder %s332, %s346
      %p348 = scmp.eq.s32.totalorder %s34, 0
      %p349 = por %p347, %p348
      %s350 = ssub.s32 %s28, %s35
      %p351 = scmp.eq.s32.totalorder %s350, 0
      %s353 = sadd.s32 %s352, 1
      %s354 = scalar_select %p351, %s352, %s353
      %p357 = pneg %p351
      %p358 = scmp.eq.s32.totalorder %s28, 1
      %p359 = por %p357, %p358
      %p360 = scmp.ne.s32.totalorder %s352, %s355
      %p361 = scmp.eq.s32.totalorder %s28, 0
      %p362 = por %p360, %p361
      %p363 = scmp.ne.s32.totalorder %s352, %s355
      %p364 = scmp.eq.s32.totalorder %s33, 1
      %p365 = por %p363, %p364
      %p366 = scmp.ne.s32.totalorder %s355, %s356
      %p367 = scmp.eq.s32.totalorder %s33, 0
      %p368 = por %p366, %p367
      %p369 = scmp.ne.s32.totalorder %s355, %s356
      %p370 = scmp.eq.s32.totalorder %s34, 1
      %p371 = por %p369, %p370
      %p373 = scmp.ne.s32.totalorder %s356, %s372
      %p374 = scmp.eq.s32.totalorder %s34, 0
      %p375 = por %p373, %p374
      %s376 = ssub.s32 %s28, %s35
      %p377 = scmp.eq.s32.totalorder %s376, 0
      %s379 = sadd.s32 %s378, 1
      %s380 = scalar_select %p377, %s378, %s379
      %p383 = pneg %p377
      %p384 = scmp.eq.s32.totalorder %s28, 1
      %p385 = por %p383, %p384
      %p386 = scmp.ne.s32.totalorder %s378, %s381
      %p387 = scmp.eq.s32.totalorder %s28, 0
      %p388 = por %p386, %p387
      %p389 = scmp.ne.s32.totalorder %s378, %s381
      %p390 = scmp.eq.s32.totalorder %s33, 1
      %p391 = por %p389, %p390
      %p392 = scmp.ne.s32.totalorder %s381, %s382
      %p393 = scmp.eq.s32.totalorder %s33, 0
      %p394 = por %p392, %p393
      %p395 = scmp.ne.s32.totalorder %s381, %s382
      %p396 = scmp.eq.s32.totalorder %s34, 1
      %p397 = por %p395, %p396
      %p399 = scmp.ne.s32.totalorder %s382, %s398
      %p400 = scmp.eq.s32.totalorder %s34, 0
      %p401 = por %p399, %p400
      %p402 = scmp.le.s32.totalorder 1, %s28
      %p403 = scmp.lt.s32.totalorder %s28, 3
      %p404 = pnand %p402, %p403
      %p405 = pneg %p404
      // Predicated region
      $region9: #{tpu_custom_call.1} parent=5 // pred_check
        _
      $region10: #{tpu_custom_call.1} parent=5 // pred_check_branch
        %407 = sbr.rel (%p404) target = $region12
      $region11: #{tpu_custom_call.1} parent=5 // pred_region
        %s408 = ssub.s32 %s28, 1
        // Predicated region
        $region13: #{tpu_custom_call.1} parent=11 // pred_check
          %p409 = pneg %p153
        $region14: #{tpu_custom_call.1} parent=11 // pred_check_branch
          %411 = sbr.rel (%p409) target = $region16
        $region15: #{tpu_custom_call.1} parent=11 // pred_region
          _
        $region16: #{tpu_custom_call.1} parent=11 // pred_fallthru
          _
        // Predicated region
        $region17: #{tpu_custom_call.1} parent=11 // pred_check
          %p412 = pneg %p174
        $region18: #{tpu_custom_call.1} parent=11 // pred_check_branch
          %414 = sbr.rel (%p412) target = $region20
        $region19: #{tpu_custom_call.1} parent=11 // pred_region
          _
        $region20: #{tpu_custom_call.1} parent=11 // pred_fallthru
          _
        // Predicated region
        $region21: #{tpu_custom_call.1} parent=11 // pred_check
          %p415 = pneg %p195
        $region22: #{tpu_custom_call.1} parent=11 // pred_check_branch
          %417 = sbr.rel (%p415) target = $region24
        $region23: #{tpu_custom_call.1} parent=11 // pred_region
          _
        $region24: #{tpu_custom_call.1} parent=11 // pred_fallthru
          _
        // Predicated region
        $region25: #{tpu_custom_call.1} parent=11 // pred_check
          %p418 = pneg %p216
        $region26: #{tpu_custom_call.1} parent=11 // pred_check_branch
          %420 = sbr.rel (%p418) target = $region28
        $region27: #{tpu_custom_call.1} parent=11 // pred_region
          _
        $region28: #{tpu_custom_call.1} parent=11 // pred_fallthru
          _
        // Predicated region
        $region29: #{tpu_custom_call.1} parent=11 // pred_check
          %p421 = pneg %p237
        $region30: #{tpu_custom_call.1} parent=11 // pred_check_branch
          %423 = sbr.rel (%p421) target = $region32
        $region31: #{tpu_custom_call.1} parent=11 // pred_region
          _
        $region32: #{tpu_custom_call.1} parent=11 // pred_fallthru
          _
        // Predicated region
        $region33: #{tpu_custom_call.1} parent=11 // pred_check
          %p424 = pneg %p258
        $region34: #{tpu_custom_call.1} parent=11 // pred_check_branch
          %426 = sbr.rel (%p424) target = $region36
        $region35: #{tpu_custom_call.1} parent=11 // pred_region
          _
        $region36: #{tpu_custom_call.1} parent=11 // pred_fallthru
          _
        // Predicated region
        $region37: #{tpu_custom_call.1} parent=11 // pred_check
          %p427 = pneg %p279
        $region38: #{tpu_custom_call.1} parent=11 // pred_check_branch
          %429 = sbr.rel (%p427) target = $region40
        $region39: #{tpu_custom_call.1} parent=11 // pred_region
          _
        $region40: #{tpu_custom_call.1} parent=11 // pred_fallthru
          _
        // Predicated region
        $region41: #{tpu_custom_call.1} parent=11 // pred_check
          %p430 = pneg %p300
        $region42: #{tpu_custom_call.1} parent=11 // pred_check_branch
          %432 = sbr.rel (%p430) target = $region44
        $region43: #{tpu_custom_call.1} parent=11 // pred_region
          _
        $region44: #{tpu_custom_call.1} parent=11 // pred_fallthru
          _
        // Predicated region
        $region45: #{tpu_custom_call.1} parent=11 // pred_check
          %p433 = pneg %p321
        $region46: #{tpu_custom_call.1} parent=11 // pred_check_branch
          %435 = sbr.rel (%p433) target = $region48
        $region47: #{tpu_custom_call.1} parent=11 // pred_region
          _
        $region48: #{tpu_custom_call.1} parent=11 // pred_fallthru
          _
        // Predicated region
        $region49: #{tpu_custom_call.1} parent=11 // pred_check
          %p436 = pneg %p342
        $region50: #{tpu_custom_call.1} parent=11 // pred_check_branch
          %438 = sbr.rel (%p436) target = $region52
        $region51: #{tpu_custom_call.1} parent=11 // pred_region
          _
        $region52: #{tpu_custom_call.1} parent=11 // pred_fallthru
          _
      $region12: #{tpu_custom_call.1} parent=5 // pred_fallthru
        _
      %p439 = scmp.lt.s32.totalorder %s28, 2
      // Predicated region
      $region53: #{tpu_custom_call.1} parent=5 // pred_check
        %p440 = pneg %p439
      $region54: #{tpu_custom_call.1} parent=5 // pred_check_branch
        %442 = sbr.rel (%p440) target = $region56
      $region55: #{tpu_custom_call.1} parent=5 // pred_region
        // Predicated region
        $region57: #{tpu_custom_call.1} parent=55 // pred_check
          %p443 = pneg %p48
        $region58: #{tpu_custom_call.1} parent=55 // pred_check_branch
          %445 = sbr.rel (%p443) target = $region60
        $region59: #{tpu_custom_call.1} parent=55 // pred_region
          %p446 = scmp.lt.s32.totalorder %s28, 1
          %s447 = scalar_select %p446, %s28, 1
          %s448 = smul.addr %s447, 4
          %s449 = smul.addr %s448, 8
          %s450 = scalar_lea.vmem %s0, %s449
        $region60: #{tpu_custom_call.1} parent=55 // pred_fallthru
          _
        // Predicated region
        $region61: #{tpu_custom_call.1} parent=55 // pred_check
          %p451 = pneg %p74
        $region62: #{tpu_custom_call.1} parent=55 // pred_check_branch
          %453 = sbr.rel (%p451) target = $region64
        $region63: #{tpu_custom_call.1} parent=55 // pred_region
          %p454 = scmp.lt.s32.totalorder %s28, 1
          %s455 = scalar_select %p454, %s28, 1
          %s456 = smul.addr %s455, 4
          %s457 = smul.addr %s456, 8
          %s458 = scalar_lea.vmem %s1, %s457
        $region64: #{tpu_custom_call.1} parent=55 // pred_fallthru
          _
        // Predicated region
        $region65: #{tpu_custom_call.1} parent=55 // pred_check
          %p459 = pneg %p100
        $region66: #{tpu_custom_call.1} parent=55 // pred_check_branch
          %461 = sbr.rel (%p459) target = $region68
        $region67: #{tpu_custom_call.1} parent=55 // pred_region
          %p462 = scmp.lt.s32.totalorder %s28, 1
          %s463 = scalar_select %p462, %s28, 1
          %s464 = smul.addr %s463, 4
          %s465 = smul.addr %s464, 8
          %s466 = scalar_lea.vmem %s2, %s465
        $region68: #{tpu_custom_call.1} parent=55 // pred_fallthru
          _
        // Predicated region
        $region69: #{tpu_custom_call.1} parent=55 // pred_check
          %p467 = pneg %p126
        $region70: #{tpu_custom_call.1} parent=55 // pred_check_branch
          %469 = sbr.rel (%p467) target = $region72
        $region71: #{tpu_custom_call.1} parent=55 // pred_region
          %p470 = scmp.lt.s32.totalorder %s28, 1
          %s471 = scalar_select %p470, %s28, 1
          %s472 = smul.addr %s471, 8
          %s473 = scalar_lea.vmem %s3, %s472
        $region72: #{tpu_custom_call.1} parent=55 // pred_fallthru
          _
      $region56: #{tpu_custom_call.1} parent=5 // pred_fallthru
        _
      %p474 = scmp.le.s32.totalorder 1, %s28
      %p475 = scmp.lt.s32.totalorder %s28, 3
      %p476 = pnand %p474, %p475
      %p477 = pneg %p476
      // Predicated region
      $region73: #{tpu_custom_call.1} parent=5 // pred_check
        _
      $region74: #{tpu_custom_call.1} parent=5 // pred_check_branch
        %479 = sbr.rel (%p476) target = $region76
      $region75: #{tpu_custom_call.1} parent=5 // pred_region
        %s480 = ssub.s32 %s28, 1
        %p481 = scmp.lt.s32.totalorder %s33, 1
        %s482 = scalar_select %p481, %s33, 1
        %s483 = smul.addr %s482, 4
        %s484 = smul.addr %s483, 8
        %s485 = scalar_lea.vmem %s0, %s484
        %p486 = pneg %p54
        %p487 = pneg %p51
        %p488 = scmp.lt.s32.totalorder %s33, 1
        %s489 = scalar_select %p488, %s33, 1
        %s490 = smul.addr %s489, 4
        %s491 = smul.addr %s490, 8
        %s492 = scalar_lea.vmem %s1, %s491
        %p493 = pneg %p80
        %p494 = pneg %p77
        %p495 = scmp.lt.s32.totalorder %s33, 1
        %s496 = scalar_select %p495, %s33, 1
        %s497 = smul.addr %s496, 4
        %s498 = smul.addr %s497, 8
        %s499 = scalar_lea.vmem %s2, %s498
        %p500 = pneg %p106
        %p501 = pneg %p103
        %p502 = scmp.lt.s32.totalorder %s33, 1
        %s503 = scalar_select %p502, %s33, 1
        %s504 = smul.addr %s503, 8
        %s505 = scalar_lea.vmem %s3, %s504
        %p506 = pneg %p132
        %p507 = pneg %p129
        %p508 = pneg %p153
        %p509 = pneg %p150
        %p510 = pneg %p174
        %p511 = pneg %p171
        %p512 = pneg %p195
        %p513 = pneg %p192
        %p514 = pneg %p216
        %p515 = pneg %p213
        %p516 = pneg %p237
        %p517 = pneg %p234
        %p518 = pneg %p258
        %p519 = pneg %p255
        %p520 = pneg %p279
        %p521 = pneg %p276
        %p522 = pneg %p300
        %p523 = pneg %p297
        %p524 = pneg %p321
        %p525 = pneg %p318
        %p526 = pneg %p342
        %p527 = pneg %p339
        %p528 = pneg %p368
        %p529 = pneg %p365
        %s530 = sand.u32 %s355, 1
        %s531 = scalar_lea.sflag [#allocation3], %s530
        %s532 = sand.u32 %s355, 1
        %s533 = smul.addr %s532, 32
        %s534 = scalar_lea.vmem [#allocation2], %s533
        %p535 = pneg %p394
        %p536 = pneg %p391
        %s537 = sand.u32 %s381, 1
        %s538 = scalar_lea.sflag [#allocation5], %s537
        %s539 = sand.u32 %s381, 1
        %s540 = smul.addr %s539, 64
        %s541 = scalar_lea.vmem [#allocation4], %s540
        %p542 = scmp.lt.s32.totalorder %s33, 1
        %s543 = scalar_select %p542, %s33, 1
        %s544 = smul.addr %s543, 4
        %s545 = smul.addr %s544, 8
        %s546 = scalar_lea.vmem %s0, %s545
        %p547 = scmp.lt.s32.totalorder %s33, 1
        %s548 = scalar_select %p547, %s33, 1
        %s549 = smul.addr %s548, 4
        %s550 = smul.addr %s549, 8
        %s551 = scalar_lea.vmem %s1, %s550
        %p552 = scmp.lt.s32.totalorder %s33, 1
        %s553 = scalar_select %p552, %s33, 1
        %s554 = smul.addr %s553, 4
        %s555 = smul.addr %s554, 8
        %s556 = scalar_lea.vmem %s2, %s555
        %p557 = scmp.lt.s32.totalorder %s33, 1
        %s558 = scalar_select %p557, %s33, 1
        %s559 = smul.addr %s558, 8
        %s560 = scalar_lea.vmem %s3, %s559
        %v561 = vld [vmem:[%s546] sm:$0xff]
        %v562 = vld [vmem:[%s546 + $0x8] sm:$0xff]
        %v563 = vld [vmem:[%s546 + $0x10] sm:$0xff]
        %v564 = vld [vmem:[%s546 + $0x18] sm:$0xff]
        %v565 = vld [vmem:[%s551] sm:$0xff]
        %v566 = vld [vmem:[%s551 + $0x8] sm:$0xff]
        %v567 = vld [vmem:[%s551 + $0x10] sm:$0xff]
        %v568 = vld [vmem:[%s551 + $0x18] sm:$0xff]
        %v569 = vld [vmem:[%s556] sm:$0xff]
        %v570 = vld [vmem:[%s556 + $0x8] sm:$0xff]
        %v571 = vld [vmem:[%s556 + $0x10] sm:$0xff]
        %v572 = vld [vmem:[%s556 + $0x18] sm:$0xff]
        %v573 = vld [vmem:[%s560] sm:$0xff]
        %vm574 = vcmp.ne.s32.totalorder %v573, 0
        %v575 = vld [vmem:[%s4] sm:$0xff]
        %v576 = vld [vmem:[%s4 + $0x8] sm:$0xff]
        %v577 = vld [vmem:[%s4 + $0x10] sm:$0xff]
        %v578 = vld [vmem:[%s4 + $0x18] sm:$0xff]
        %v579 = vld [vmem:[%s4 + $0x20] sm:$0xff]
        %v580 = vld [vmem:[%s4 + $0x28] sm:$0xff]
        %v581 = vld [vmem:[%s4 + $0x30] sm:$0xff]
        %v582 = vld [vmem:[%s4 + $0x38] sm:$0xff]
        %v583 = vld [vmem:[%s4 + $0x40] sm:$0xff]
        %v584 = vld [vmem:[%s4 + $0x48] sm:$0xff]
        %v585 = vld [vmem:[%s4 + $0x50] sm:$0xff]
        %v586 = vld [vmem:[%s4 + $0x58] sm:$0xff]
        %v587 = vld [vmem:[%s4 + $0x60] sm:$0xff]
        %v588 = vld [vmem:[%s4 + $0x68] sm:$0xff]
        %v589 = vld [vmem:[%s4 + $0x70] sm:$0xff]
        %v590 = vld [vmem:[%s4 + $0x78] sm:$0xff]
        %v591 = vld [vmem:[%s4 + $0x80] sm:$0xff]
        %v592 = vld [vmem:[%s4 + $0x88] sm:$0xff]
        %v593 = vld [vmem:[%s4 + $0x90] sm:$0xff]
        %v594 = vld [vmem:[%s4 + $0x98] sm:$0xff]
        %v595 = vld [vmem:[%s4 + $0xa0] sm:$0xff]
        %v596 = vld [vmem:[%s4 + $0xa8] sm:$0xff]
        %v597 = vld [vmem:[%s4 + $0xb0] sm:$0xff]
        %v598 = vld [vmem:[%s4 + $0xb8] sm:$0xff]
        %v599 = vld [vmem:[%s4 + $0xc0] sm:$0xff]
        %v600 = vld [vmem:[%s4 + $0xc8] sm:$0xff]
        %v601 = vld [vmem:[%s4 + $0xd0] sm:$0xff]
        %v602 = vld [vmem:[%s4 + $0xd8] sm:$0xff]
        %v603 = vld [vmem:[%s4 + $0xe0] sm:$0xff]
        %v604 = vld [vmem:[%s4 + $0xe8] sm:$0xff]
        %v605 = vld [vmem:[%s4 + $0xf0] sm:$0xff]
        %v606 = vld [vmem:[%s4 + $0xf8] sm:$0xff]
        %v607 = vld [vmem:[%s4 + $0x100] sm:$0xff]
        %v608 = vld [vmem:[%s4 + $0x108] sm:$0xff]
        %v609 = vld [vmem:[%s4 + $0x110] sm:$0xff]
        %v610 = vld [vmem:[%s4 + $0x118] sm:$0xff]
        %v611 = vld [vmem:[%s4 + $0x120] sm:$0xff]
        %v612 = vld [vmem:[%s4 + $0x128] sm:$0xff]
        %v613 = vld [vmem:[%s4 + $0x130] sm:$0xff]
        %v614 = vld [vmem:[%s4 + $0x138] sm:$0xff]
        %v615 = vld [vmem:[%s4 + $0x140] sm:$0xff]
        %v616 = vld [vmem:[%s4 + $0x148] sm:$0xff]
        %v617 = vld [vmem:[%s4 + $0x150] sm:$0xff]
        %v618 = vld [vmem:[%s4 + $0x158] sm:$0xff]
        %v619 = vld [vmem:[%s4 + $0x160] sm:$0xff]
        %v620 = vld [vmem:[%s4 + $0x168] sm:$0xff]
        %v621 = vld [vmem:[%s4 + $0x170] sm:$0xff]
        %v622 = vld [vmem:[%s4 + $0x178] sm:$0xff]
        %v623 = vld [vmem:[%s4 + $0x180] sm:$0xff]
        %v624 = vld [vmem:[%s4 + $0x188] sm:$0xff]
        %v625 = vld [vmem:[%s4 + $0x190] sm:$0xff]
        %v626 = vld [vmem:[%s4 + $0x198] sm:$0xff]
        %v627 = vld [vmem:[%s4 + $0x1a0] sm:$0xff]
        %v628 = vld [vmem:[%s4 + $0x1a8] sm:$0xff]
        %v629 = vld [vmem:[%s4 + $0x1b0] sm:$0xff]
        %v630 = vld [vmem:[%s4 + $0x1b8] sm:$0xff]
        %v631 = vld [vmem:[%s4 + $0x1c0] sm:$0xff]
        %v632 = vld [vmem:[%s4 + $0x1c8] sm:$0xff]
        %v633 = vld [vmem:[%s4 + $0x1d0] sm:$0xff]
        %v634 = vld [vmem:[%s4 + $0x1d8] sm:$0xff]
        %v635 = vld [vmem:[%s4 + $0x1e0] sm:$0xff]
        %v636 = vld [vmem:[%s4 + $0x1e8] sm:$0xff]
        %v637 = vld [vmem:[%s4 + $0x1f0] sm:$0xff]
        %v638 = vld [vmem:[%s4 + $0x1f8] sm:$0xff]
        %v639 = vld [vmem:[%s4 + $0x200] sm:$0xff]
        %v640 = vld [vmem:[%s4 + $0x208] sm:$0xff]
        %v641 = vld [vmem:[%s4 + $0x210] sm:$0xff]
        %v642 = vld [vmem:[%s4 + $0x218] sm:$0xff]
        %v643 = vld [vmem:[%s4 + $0x220] sm:$0xff]
        %v644 = vld [vmem:[%s4 + $0x228] sm:$0xff]
        %v645 = vld [vmem:[%s4 + $0x230] sm:$0xff]
        %v646 = vld [vmem:[%s4 + $0x238] sm:$0xff]
        %v647 = vld [vmem:[%s4 + $0x240] sm:$0xff]
        %v648 = vld [vmem:[%s4 + $0x248] sm:$0xff]
        %v649 = vld [vmem:[%s4 + $0x250] sm:$0xff]
        %v650 = vld [vmem:[%s4 + $0x258] sm:$0xff]
        %v651 = vld [vmem:[%s4 + $0x260] sm:$0xff]
        %v652 = vld [vmem:[%s4 + $0x268] sm:$0xff]
        %v653 = vld [vmem:[%s4 + $0x270] sm:$0xff]
        %v654 = vld [vmem:[%s4 + $0x278] sm:$0xff]
        %v655 = vld [vmem:[%s4 + $0x280] sm:$0xff]
        %v656 = vld [vmem:[%s4 + $0x288] sm:$0xff]
        %v657 = vld [vmem:[%s4 + $0x290] sm:$0xff]
        %v658 = vld [vmem:[%s4 + $0x298] sm:$0xff]
        %v659 = vld [vmem:[%s4 + $0x2a0] sm:$0xff]
        %v660 = vld [vmem:[%s4 + $0x2a8] sm:$0xff]
        %v661 = vld [vmem:[%s4 + $0x2b0] sm:$0xff]
        %v662 = vld [vmem:[%s4 + $0x2b8] sm:$0xff]
        %v663 = vld [vmem:[%s4 + $0x2c0] sm:$0xff]
        %v664 = vld [vmem:[%s4 + $0x2c8] sm:$0xff]
        %v665 = vld [vmem:[%s4 + $0x2d0] sm:$0xff]
        %v666 = vld [vmem:[%s4 + $0x2d8] sm:$0xff]
        %v667 = vld [vmem:[%s4 + $0x2e0] sm:$0xff]
        %v668 = vld [vmem:[%s4 + $0x2e8] sm:$0xff]
        %v669 = vld [vmem:[%s4 + $0x2f0] sm:$0xff]
        %v670 = vld [vmem:[%s4 + $0x2f8] sm:$0xff]
        %v671 = vld [vmem:[%s4 + $0x300] sm:$0xff]
        %v672 = vld [vmem:[%s4 + $0x308] sm:$0xff]
        %v673 = vld [vmem:[%s4 + $0x310] sm:$0xff]
        %v674 = vld [vmem:[%s4 + $0x318] sm:$0xff]
        %v675 = vld [vmem:[%s4 + $0x320] sm:$0xff]
        %v676 = vld [vmem:[%s4 + $0x328] sm:$0xff]
        %v677 = vld [vmem:[%s4 + $0x330] sm:$0xff]
        %v678 = vld [vmem:[%s4 + $0x338] sm:$0xff]
        %v679 = vld [vmem:[%s4 + $0x340] sm:$0xff]
        %v680 = vld [vmem:[%s4 + $0x348] sm:$0xff]
        %v681 = vld [vmem:[%s4 + $0x350] sm:$0xff]
        %v682 = vld [vmem:[%s4 + $0x358] sm:$0xff]
        %v683 = vld [vmem:[%s4 + $0x360] sm:$0xff]
        %v684 = vld [vmem:[%s4 + $0x368] sm:$0xff]
        %v685 = vld [vmem:[%s4 + $0x370] sm:$0xff]
        %v686 = vld [vmem:[%s4 + $0x378] sm:$0xff]
        %v687 = vld [vmem:[%s4 + $0x380] sm:$0xff]
        %v688 = vld [vmem:[%s4 + $0x388] sm:$0xff]
        %v689 = vld [vmem:[%s4 + $0x390] sm:$0xff]
        %v690 = vld [vmem:[%s4 + $0x398] sm:$0xff]
        %v691 = vld [vmem:[%s4 + $0x3a0] sm:$0xff]
        %v692 = vld [vmem:[%s4 + $0x3a8] sm:$0xff]
        %v693 = vld [vmem:[%s4 + $0x3b0] sm:$0xff]
        %v694 = vld [vmem:[%s4 + $0x3b8] sm:$0xff]
        %v695 = vld [vmem:[%s4 + $0x3c0] sm:$0xff]
        %v696 = vld [vmem:[%s4 + $0x3c8] sm:$0xff]
        %v697 = vld [vmem:[%s4 + $0x3d0] sm:$0xff]
        %v698 = vld [vmem:[%s4 + $0x3d8] sm:$0xff]
        %v699 = vld [vmem:[%s4 + $0x3e0] sm:$0xff]
        %v700 = vld [vmem:[%s4 + $0x3e8] sm:$0xff]
        %v701 = vld [vmem:[%s4 + $0x3f0] sm:$0xff]
        %v702 = vld [vmem:[%s4 + $0x3f8] sm:$0xff]
        %v703 = vld [vmem:[%s4 + $0x400] sm:$0xff]
        %v704 = vld [vmem:[%s4 + $0x408] sm:$0xff]
        %v705 = vld [vmem:[%s4 + $0x410] sm:$0xff]
        %v706 = vld [vmem:[%s4 + $0x418] sm:$0xff]
        %v707 = vld [vmem:[%s4 + $0x420] sm:$0xff]
        %v708 = vld [vmem:[%s4 + $0x428] sm:$0xff]
        %v709 = vld [vmem:[%s4 + $0x430] sm:$0xff]
        %v710 = vld [vmem:[%s4 + $0x438] sm:$0xff]
        %v711 = vld [vmem:[%s4 + $0x440] sm:$0xff]
        %v712 = vld [vmem:[%s4 + $0x448] sm:$0xff]
        %v713 = vld [vmem:[%s4 + $0x450] sm:$0xff]
        %v714 = vld [vmem:[%s4 + $0x458] sm:$0xff]
        %v715 = vld [vmem:[%s4 + $0x460] sm:$0xff]
        %v716 = vld [vmem:[%s4 + $0x468] sm:$0xff]
        %v717 = vld [vmem:[%s4 + $0x470] sm:$0xff]
        %v718 = vld [vmem:[%s4 + $0x478] sm:$0xff]
        %v719 = vld [vmem:[%s4 + $0x480] sm:$0xff]
        %v720 = vld [vmem:[%s4 + $0x488] sm:$0xff]
        %v721 = vld [vmem:[%s4 + $0x490] sm:$0xff]
        %v722 = vld [vmem:[%s4 + $0x498] sm:$0xff]
        %v723 = vld [vmem:[%s4 + $0x4a0] sm:$0xff]
        %v724 = vld [vmem:[%s4 + $0x4a8] sm:$0xff]
        %v725 = vld [vmem:[%s4 + $0x4b0] sm:$0xff]
        %v726 = vld [vmem:[%s4 + $0x4b8] sm:$0xff]
        %v727 = vld [vmem:[%s4 + $0x4c0] sm:$0xff]
        %v728 = vld [vmem:[%s4 + $0x4c8] sm:$0xff]
        %v729 = vld [vmem:[%s4 + $0x4d0] sm:$0xff]
        %v730 = vld [vmem:[%s4 + $0x4d8] sm:$0xff]
        %v731 = vld [vmem:[%s4 + $0x4e0] sm:$0xff]
        %v732 = vld [vmem:[%s4 + $0x4e8] sm:$0xff]
        %v733 = vld [vmem:[%s4 + $0x4f0] sm:$0xff]
        %v734 = vld [vmem:[%s4 + $0x4f8] sm:$0xff]
        %v735 = vld [vmem:[%s4 + $0x500] sm:$0xff]
        %v736 = vld [vmem:[%s4 + $0x508] sm:$0xff]
        %v737 = vld [vmem:[%s4 + $0x510] sm:$0xff]
        %v738 = vld [vmem:[%s4 + $0x518] sm:$0xff]
        %v739 = vld [vmem:[%s4 + $0x520] sm:$0xff]
        %v740 = vld [vmem:[%s4 + $0x528] sm:$0xff]
        %v741 = vld [vmem:[%s4 + $0x530] sm:$0xff]
        %v742 = vld [vmem:[%s4 + $0x538] sm:$0xff]
        %v743 = vld [vmem:[%s4 + $0x540] sm:$0xff]
        %v744 = vld [vmem:[%s4 + $0x548] sm:$0xff]
        %v745 = vld [vmem:[%s4 + $0x550] sm:$0xff]
        %v746 = vld [vmem:[%s4 + $0x558] sm:$0xff]
        %v747 = vld [vmem:[%s4 + $0x560] sm:$0xff]
        %v748 = vld [vmem:[%s4 + $0x568] sm:$0xff]
        %v749 = vld [vmem:[%s4 + $0x570] sm:$0xff]
        %v750 = vld [vmem:[%s4 + $0x578] sm:$0xff]
        %v751 = vld [vmem:[%s4 + $0x580] sm:$0xff]
        %v752 = vld [vmem:[%s4 + $0x588] sm:$0xff]
        %v753 = vld [vmem:[%s4 + $0x590] sm:$0xff]
        %v754 = vld [vmem:[%s4 + $0x598] sm:$0xff]
        %v755 = vld [vmem:[%s4 + $0x5a0] sm:$0xff]
        %v756 = vld [vmem:[%s4 + $0x5a8] sm:$0xff]
        %v757 = vld [vmem:[%s4 + $0x5b0] sm:$0xff]
        %v758 = vld [vmem:[%s4 + $0x5b8] sm:$0xff]
        %v759 = vld [vmem:[%s4 + $0x5c0] sm:$0xff]
        %v760 = vld [vmem:[%s4 + $0x5c8] sm:$0xff]
        %v761 = vld [vmem:[%s4 + $0x5d0] sm:$0xff]
        %v762 = vld [vmem:[%s4 + $0x5d8] sm:$0xff]
        %v763 = vld [vmem:[%s4 + $0x5e0] sm:$0xff]
        %v764 = vld [vmem:[%s4 + $0x5e8] sm:$0xff]
        %v765 = vld [vmem:[%s4 + $0x5f0] sm:$0xff]
        %v766 = vld [vmem:[%s4 + $0x5f8] sm:$0xff]
        %v767 = vld [vmem:[%s4 + $0x600] sm:$0xff]
        %v768 = vld [vmem:[%s4 + $0x608] sm:$0xff]
        %v769 = vld [vmem:[%s4 + $0x610] sm:$0xff]
        %v770 = vld [vmem:[%s4 + $0x618] sm:$0xff]
        %v771 = vld [vmem:[%s4 + $0x620] sm:$0xff]
        %v772 = vld [vmem:[%s4 + $0x628] sm:$0xff]
        %v773 = vld [vmem:[%s4 + $0x630] sm:$0xff]
        %v774 = vld [vmem:[%s4 + $0x638] sm:$0xff]
        %v775 = vld [vmem:[%s4 + $0x640] sm:$0xff]
        %v776 = vld [vmem:[%s4 + $0x648] sm:$0xff]
        %v777 = vld [vmem:[%s4 + $0x650] sm:$0xff]
        %v778 = vld [vmem:[%s4 + $0x658] sm:$0xff]
        %v779 = vld [vmem:[%s4 + $0x660] sm:$0xff]
        %v780 = vld [vmem:[%s4 + $0x668] sm:$0xff]
        %v781 = vld [vmem:[%s4 + $0x670] sm:$0xff]
        %v782 = vld [vmem:[%s4 + $0x678] sm:$0xff]
        %v783 = vld [vmem:[%s4 + $0x680] sm:$0xff]
        %v784 = vld [vmem:[%s4 + $0x688] sm:$0xff]
        %v785 = vld [vmem:[%s4 + $0x690] sm:$0xff]
        %v786 = vld [vmem:[%s4 + $0x698] sm:$0xff]
        %v787 = vld [vmem:[%s4 + $0x6a0] sm:$0xff]
        %v788 = vld [vmem:[%s4 + $0x6a8] sm:$0xff]
        %v789 = vld [vmem:[%s4 + $0x6b0] sm:$0xff]
        %v790 = vld [vmem:[%s4 + $0x6b8] sm:$0xff]
        %v791 = vld [vmem:[%s4 + $0x6c0] sm:$0xff]
        %v792 = vld [vmem:[%s4 + $0x6c8] sm:$0xff]
        %v793 = vld [vmem:[%s4 + $0x6d0] sm:$0xff]
        %v794 = vld [vmem:[%s4 + $0x6d8] sm:$0xff]
        %v795 = vld [vmem:[%s4 + $0x6e0] sm:$0xff]
        %v796 = vld [vmem:[%s4 + $0x6e8] sm:$0xff]
        %v797 = vld [vmem:[%s4 + $0x6f0] sm:$0xff]
        %v798 = vld [vmem:[%s4 + $0x6f8] sm:$0xff]
        %v799 = vld [vmem:[%s4 + $0x700] sm:$0xff]
        %v800 = vld [vmem:[%s4 + $0x708] sm:$0xff]
        %v801 = vld [vmem:[%s4 + $0x710] sm:$0xff]
        %v802 = vld [vmem:[%s4 + $0x718] sm:$0xff]
        %v803 = vld [vmem:[%s4 + $0x720] sm:$0xff]
        %v804 = vld [vmem:[%s4 + $0x728] sm:$0xff]
        %v805 = vld [vmem:[%s4 + $0x730] sm:$0xff]
        %v806 = vld [vmem:[%s4 + $0x738] sm:$0xff]
        %v807 = vld [vmem:[%s4 + $0x740] sm:$0xff]
        %v808 = vld [vmem:[%s4 + $0x748] sm:$0xff]
        %v809 = vld [vmem:[%s4 + $0x750] sm:$0xff]
        %v810 = vld [vmem:[%s4 + $0x758] sm:$0xff]
        %v811 = vld [vmem:[%s4 + $0x760] sm:$0xff]
        %v812 = vld [vmem:[%s4 + $0x768] sm:$0xff]
        %v813 = vld [vmem:[%s4 + $0x770] sm:$0xff]
        %v814 = vld [vmem:[%s4 + $0x778] sm:$0xff]
        %v815 = vld [vmem:[%s4 + $0x780] sm:$0xff]
        %v816 = vld [vmem:[%s4 + $0x788] sm:$0xff]
        %v817 = vld [vmem:[%s4 + $0x790] sm:$0xff]
        %v818 = vld [vmem:[%s4 + $0x798] sm:$0xff]
        %v819 = vld [vmem:[%s4 + $0x7a0] sm:$0xff]
        %v820 = vld [vmem:[%s4 + $0x7a8] sm:$0xff]
        %v821 = vld [vmem:[%s4 + $0x7b0] sm:$0xff]
        %v822 = vld [vmem:[%s4 + $0x7b8] sm:$0xff]
        %v823 = vld [vmem:[%s4 + $0x7c0] sm:$0xff]
        %v824 = vld [vmem:[%s4 + $0x7c8] sm:$0xff]
        %v825 = vld [vmem:[%s4 + $0x7d0] sm:$0xff]
        %v826 = vld [vmem:[%s4 + $0x7d8] sm:$0xff]
        %v827 = vld [vmem:[%s4 + $0x7e0] sm:$0xff]
        %v828 = vld [vmem:[%s4 + $0x7e8] sm:$0xff]
        %v829 = vld [vmem:[%s4 + $0x7f0] sm:$0xff]
        %v830 = vld [vmem:[%s4 + $0x7f8] sm:$0xff]
        %v831 = vld [vmem:[%s4 + $0x800] sm:$0xff]
        %v832 = vld [vmem:[%s4 + $0x808] sm:$0xff]
        %v833 = vld [vmem:[%s4 + $0x810] sm:$0xff]
        %v834 = vld [vmem:[%s4 + $0x818] sm:$0xff]
        %v835 = vld [vmem:[%s4 + $0x820] sm:$0xff]
        %v836 = vld [vmem:[%s4 + $0x828] sm:$0xff]
        %v837 = vld [vmem:[%s4 + $0x830] sm:$0xff]
        %v838 = vld [vmem:[%s4 + $0x838] sm:$0xff]
        %v839 = vld [vmem:[%s4 + $0x840] sm:$0xff]
        %v840 = vld [vmem:[%s4 + $0x848] sm:$0xff]
        %v841 = vld [vmem:[%s4 + $0x850] sm:$0xff]
        %v842 = vld [vmem:[%s4 + $0x858] sm:$0xff]
        %v843 = vld [vmem:[%s4 + $0x860] sm:$0xff]
        %v844 = vld [vmem:[%s4 + $0x868] sm:$0xff]
        %v845 = vld [vmem:[%s4 + $0x870] sm:$0xff]
        %v846 = vld [vmem:[%s4 + $0x878] sm:$0xff]
        %v847 = vld [vmem:[%s4 + $0x880] sm:$0xff]
        %v848 = vld [vmem:[%s4 + $0x888] sm:$0xff]
        %v849 = vld [vmem:[%s4 + $0x890] sm:$0xff]
        %v850 = vld [vmem:[%s4 + $0x898] sm:$0xff]
        %v851 = vld [vmem:[%s4 + $0x8a0] sm:$0xff]
        %v852 = vld [vmem:[%s4 + $0x8a8] sm:$0xff]
        %v853 = vld [vmem:[%s4 + $0x8b0] sm:$0xff]
        %v854 = vld [vmem:[%s4 + $0x8b8] sm:$0xff]
        %v855 = vld [vmem:[%s4 + $0x8c0] sm:$0xff]
        %v856 = vld [vmem:[%s4 + $0x8c8] sm:$0xff]
        %v857 = vld [vmem:[%s4 + $0x8d0] sm:$0xff]
        %v858 = vld [vmem:[%s4 + $0x8d8] sm:$0xff]
        %v859 = vld [vmem:[%s4 + $0x8e0] sm:$0xff]
        %v860 = vld [vmem:[%s4 + $0x8e8] sm:$0xff]
        %v861 = vld [vmem:[%s4 + $0x8f0] sm:$0xff]
        %v862 = vld [vmem:[%s4 + $0x8f8] sm:$0xff]
        %v863 = vld [vmem:[%s4 + $0x900] sm:$0xff]
        %v864 = vld [vmem:[%s4 + $0x908] sm:$0xff]
        %v865 = vld [vmem:[%s4 + $0x910] sm:$0xff]
        %v866 = vld [vmem:[%s4 + $0x918] sm:$0xff]
        %v867 = vld [vmem:[%s4 + $0x920] sm:$0xff]
        %v868 = vld [vmem:[%s4 + $0x928] sm:$0xff]
        %v869 = vld [vmem:[%s4 + $0x930] sm:$0xff]
        %v870 = vld [vmem:[%s4 + $0x938] sm:$0xff]
        %v871 = vld [vmem:[%s4 + $0x940] sm:$0xff]
        %v872 = vld [vmem:[%s4 + $0x948] sm:$0xff]
        %v873 = vld [vmem:[%s4 + $0x950] sm:$0xff]
        %v874 = vld [vmem:[%s4 + $0x958] sm:$0xff]
        %v875 = vld [vmem:[%s4 + $0x960] sm:$0xff]
        %v876 = vld [vmem:[%s4 + $0x968] sm:$0xff]
        %v877 = vld [vmem:[%s4 + $0x970] sm:$0xff]
        %v878 = vld [vmem:[%s4 + $0x978] sm:$0xff]
        %v879 = vld [vmem:[%s4 + $0x980] sm:$0xff]
        %v880 = vld [vmem:[%s4 + $0x988] sm:$0xff]
        %v881 = vld [vmem:[%s4 + $0x990] sm:$0xff]
        %v882 = vld [vmem:[%s4 + $0x998] sm:$0xff]
        %v883 = vld [vmem:[%s4 + $0x9a0] sm:$0xff]
        %v884 = vld [vmem:[%s4 + $0x9a8] sm:$0xff]
        %v885 = vld [vmem:[%s4 + $0x9b0] sm:$0xff]
        %v886 = vld [vmem:[%s4 + $0x9b8] sm:$0xff]
        %v887 = vld [vmem:[%s4 + $0x9c0] sm:$0xff]
        %v888 = vld [vmem:[%s4 + $0x9c8] sm:$0xff]
        %v889 = vld [vmem:[%s4 + $0x9d0] sm:$0xff]
        %v890 = vld [vmem:[%s4 + $0x9d8] sm:$0xff]
        %v891 = vld [vmem:[%s4 + $0x9e0] sm:$0xff]
        %v892 = vld [vmem:[%s4 + $0x9e8] sm:$0xff]
        %v893 = vld [vmem:[%s4 + $0x9f0] sm:$0xff]
        %v894 = vld [vmem:[%s4 + $0x9f8] sm:$0xff]
        %v895 = vld [vmem:[%s4 + $0xa00] sm:$0xff]
        %v896 = vld [vmem:[%s4 + $0xa08] sm:$0xff]
        %v897 = vld [vmem:[%s4 + $0xa10] sm:$0xff]
        %v898 = vld [vmem:[%s4 + $0xa18] sm:$0xff]
        %v899 = vld [vmem:[%s4 + $0xa20] sm:$0xff]
        %v900 = vld [vmem:[%s4 + $0xa28] sm:$0xff]
        %v901 = vld [vmem:[%s4 + $0xa30] sm:$0xff]
        %v902 = vld [vmem:[%s4 + $0xa38] sm:$0xff]
        %v903 = vld [vmem:[%s4 + $0xa40] sm:$0xff]
        %v904 = vld [vmem:[%s4 + $0xa48] sm:$0xff]
        %v905 = vld [vmem:[%s4 + $0xa50] sm:$0xff]
        %v906 = vld [vmem:[%s4 + $0xa58] sm:$0xff]
        %v907 = vld [vmem:[%s4 + $0xa60] sm:$0xff]
        %v908 = vld [vmem:[%s4 + $0xa68] sm:$0xff]
        %v909 = vld [vmem:[%s4 + $0xa70] sm:$0xff]
        %v910 = vld [vmem:[%s4 + $0xa78] sm:$0xff]
        %v911 = vld [vmem:[%s4 + $0xa80] sm:$0xff]
        %v912 = vld [vmem:[%s4 + $0xa88] sm:$0xff]
        %v913 = vld [vmem:[%s4 + $0xa90] sm:$0xff]
        %v914 = vld [vmem:[%s4 + $0xa98] sm:$0xff]
        %v915 = vld [vmem:[%s4 + $0xaa0] sm:$0xff]
        %v916 = vld [vmem:[%s4 + $0xaa8] sm:$0xff]
        %v917 = vld [vmem:[%s4 + $0xab0] sm:$0xff]
        %v918 = vld [vmem:[%s4 + $0xab8] sm:$0xff]
        %v919 = vld [vmem:[%s4 + $0xac0] sm:$0xff]
        %v920 = vld [vmem:[%s4 + $0xac8] sm:$0xff]
        %v921 = vld [vmem:[%s4 + $0xad0] sm:$0xff]
        %v922 = vld [vmem:[%s4 + $0xad8] sm:$0xff]
        %v923 = vld [vmem:[%s4 + $0xae0] sm:$0xff]
        %v924 = vld [vmem:[%s4 + $0xae8] sm:$0xff]
        %v925 = vld [vmem:[%s4 + $0xaf0] sm:$0xff]
        %v926 = vld [vmem:[%s4 + $0xaf8] sm:$0xff]
        %v927 = vld [vmem:[%s4 + $0xb00] sm:$0xff]
        %v928 = vld [vmem:[%s4 + $0xb08] sm:$0xff]
        %v929 = vld [vmem:[%s4 + $0xb10] sm:$0xff]
        %v930 = vld [vmem:[%s4 + $0xb18] sm:$0xff]
        %v931 = vld [vmem:[%s4 + $0xb20] sm:$0xff]
        %v932 = vld [vmem:[%s4 + $0xb28] sm:$0xff]
        %v933 = vld [vmem:[%s4 + $0xb30] sm:$0xff]
        %v934 = vld [vmem:[%s4 + $0xb38] sm:$0xff]
        %v935 = vld [vmem:[%s4 + $0xb40] sm:$0xff]
        %v936 = vld [vmem:[%s4 + $0xb48] sm:$0xff]
        %v937 = vld [vmem:[%s4 + $0xb50] sm:$0xff]
        %v938 = vld [vmem:[%s4 + $0xb58] sm:$0xff]
        %v939 = vld [vmem:[%s4 + $0xb60] sm:$0xff]
        %v940 = vld [vmem:[%s4 + $0xb68] sm:$0xff]
        %v941 = vld [vmem:[%s4 + $0xb70] sm:$0xff]
        %v942 = vld [vmem:[%s4 + $0xb78] sm:$0xff]
        %v943 = vld [vmem:[%s4 + $0xb80] sm:$0xff]
        %v944 = vld [vmem:[%s4 + $0xb88] sm:$0xff]
        %v945 = vld [vmem:[%s4 + $0xb90] sm:$0xff]
        %v946 = vld [vmem:[%s4 + $0xb98] sm:$0xff]
        %v947 = vld [vmem:[%s4 + $0xba0] sm:$0xff]
        %v948 = vld [vmem:[%s4 + $0xba8] sm:$0xff]
        %v949 = vld [vmem:[%s4 + $0xbb0] sm:$0xff]
        %v950 = vld [vmem:[%s4 + $0xbb8] sm:$0xff]
        %v951 = vld [vmem:[%s4 + $0xbc0] sm:$0xff]
        %v952 = vld [vmem:[%s4 + $0xbc8] sm:$0xff]
        %v953 = vld [vmem:[%s4 + $0xbd0] sm:$0xff]
        %v954 = vld [vmem:[%s4 + $0xbd8] sm:$0xff]
        %v955 = vld [vmem:[%s4 + $0xbe0] sm:$0xff]
        %v956 = vld [vmem:[%s4 + $0xbe8] sm:$0xff]
        %v957 = vld [vmem:[%s4 + $0xbf0] sm:$0xff]
        %v958 = vld [vmem:[%s4 + $0xbf8] sm:$0xff]
        %v959 = vld [vmem:[%s4 + $0xc00] sm:$0xff]
        %v960 = vld [vmem:[%s4 + $0xc08] sm:$0xff]
        %v961 = vld [vmem:[%s4 + $0xc10] sm:$0xff]
        %v962 = vld [vmem:[%s4 + $0xc18] sm:$0xff]
        %v963 = vld [vmem:[%s4 + $0xc20] sm:$0xff]
        %v964 = vld [vmem:[%s4 + $0xc28] sm:$0xff]
        %v965 = vld [vmem:[%s4 + $0xc30] sm:$0xff]
        %v966 = vld [vmem:[%s4 + $0xc38] sm:$0xff]
        %v967 = vld [vmem:[%s4 + $0xc40] sm:$0xff]
        %v968 = vld [vmem:[%s4 + $0xc48] sm:$0xff]
        %v969 = vld [vmem:[%s4 + $0xc50] sm:$0xff]
        %v970 = vld [vmem:[%s4 + $0xc58] sm:$0xff]
        %v971 = vld [vmem:[%s4 + $0xc60] sm:$0xff]
        %v972 = vld [vmem:[%s4 + $0xc68] sm:$0xff]
        %v973 = vld [vmem:[%s4 + $0xc70] sm:$0xff]
        %v974 = vld [vmem:[%s4 + $0xc78] sm:$0xff]
        %v975 = vld [vmem:[%s4 + $0xc80] sm:$0xff]
        %v976 = vld [vmem:[%s4 + $0xc88] sm:$0xff]
        %v977 = vld [vmem:[%s4 + $0xc90] sm:$0xff]
        %v978 = vld [vmem:[%s4 + $0xc98] sm:$0xff]
        %v979 = vld [vmem:[%s4 + $0xca0] sm:$0xff]
        %v980 = vld [vmem:[%s4 + $0xca8] sm:$0xff]
        %v981 = vld [vmem:[%s4 + $0xcb0] sm:$0xff]
        %v982 = vld [vmem:[%s4 + $0xcb8] sm:$0xff]
        %v983 = vld [vmem:[%s4 + $0xcc0] sm:$0xff]
        %v984 = vld [vmem:[%s4 + $0xcc8] sm:$0xff]
        %v985 = vld [vmem:[%s4 + $0xcd0] sm:$0xff]
        %v986 = vld [vmem:[%s4 + $0xcd8] sm:$0xff]
        %v987 = vld [vmem:[%s4 + $0xce0] sm:$0xff]
        %v988 = vld [vmem:[%s4 + $0xce8] sm:$0xff]
        %v989 = vld [vmem:[%s4 + $0xcf0] sm:$0xff]
        %v990 = vld [vmem:[%s4 + $0xcf8] sm:$0xff]
        %v991 = vld [vmem:[%s4 + $0xd00] sm:$0xff]
        %v992 = vld [vmem:[%s4 + $0xd08] sm:$0xff]
        %v993 = vld [vmem:[%s4 + $0xd10] sm:$0xff]
        %v994 = vld [vmem:[%s4 + $0xd18] sm:$0xff]
        %v995 = vld [vmem:[%s4 + $0xd20] sm:$0xff]
        %v996 = vld [vmem:[%s4 + $0xd28] sm:$0xff]
        %v997 = vld [vmem:[%s4 + $0xd30] sm:$0xff]
        %v998 = vld [vmem:[%s4 + $0xd38] sm:$0xff]
        %v999 = vld [vmem:[%s4 + $0xd40] sm:$0xff]
        %v1000 = vld [vmem:[%s4 + $0xd48] sm:$0xff]
        %v1001 = vld [vmem:[%s4 + $0xd50] sm:$0xff]
        %v1002 = vld [vmem:[%s4 + $0xd58] sm:$0xff]
        %v1003 = vld [vmem:[%s4 + $0xd60] sm:$0xff]
        %v1004 = vld [vmem:[%s4 + $0xd68] sm:$0xff]
        %v1005 = vld [vmem:[%s4 + $0xd70] sm:$0xff]
        %v1006 = vld [vmem:[%s4 + $0xd78] sm:$0xff]
        %v1007 = vld [vmem:[%s4 + $0xd80] sm:$0xff]
        %v1008 = vld [vmem:[%s4 + $0xd88] sm:$0xff]
        %v1009 = vld [vmem:[%s4 + $0xd90] sm:$0xff]
        %v1010 = vld [vmem:[%s4 + $0xd98] sm:$0xff]
        %v1011 = vld [vmem:[%s4 + $0xda0] sm:$0xff]
        %v1012 = vld [vmem:[%s4 + $0xda8] sm:$0xff]
        %v1013 = vld [vmem:[%s4 + $0xdb0] sm:$0xff]
        %v1014 = vld [vmem:[%s4 + $0xdb8] sm:$0xff]
        %v1015 = vld [vmem:[%s4 + $0xdc0] sm:$0xff]
        %v1016 = vld [vmem:[%s4 + $0xdc8] sm:$0xff]
        %v1017 = vld [vmem:[%s4 + $0xdd0] sm:$0xff]
        %v1018 = vld [vmem:[%s4 + $0xdd8] sm:$0xff]
        %v1019 = vld [vmem:[%s4 + $0xde0] sm:$0xff]
        %v1020 = vld [vmem:[%s4 + $0xde8] sm:$0xff]
        %v1021 = vld [vmem:[%s4 + $0xdf0] sm:$0xff]
        %v1022 = vld [vmem:[%s4 + $0xdf8] sm:$0xff]
        %v1023 = vld [vmem:[%s4 + $0xe00] sm:$0xff]
        %v1024 = vld [vmem:[%s4 + $0xe08] sm:$0xff]
        %v1025 = vld [vmem:[%s4 + $0xe10] sm:$0xff]
        %v1026 = vld [vmem:[%s4 + $0xe18] sm:$0xff]
        %v1027 = vld [vmem:[%s4 + $0xe20] sm:$0xff]
        %v1028 = vld [vmem:[%s4 + $0xe28] sm:$0xff]
        %v1029 = vld [vmem:[%s4 + $0xe30] sm:$0xff]
        %v1030 = vld [vmem:[%s4 + $0xe38] sm:$0xff]
        %v1031 = vld [vmem:[%s4 + $0xe40] sm:$0xff]
        %v1032 = vld [vmem:[%s4 + $0xe48] sm:$0xff]
        %v1033 = vld [vmem:[%s4 + $0xe50] sm:$0xff]
        %v1034 = vld [vmem:[%s4 + $0xe58] sm:$0xff]
        %v1035 = vld [vmem:[%s4 + $0xe60] sm:$0xff]
        %v1036 = vld [vmem:[%s4 + $0xe68] sm:$0xff]
        %v1037 = vld [vmem:[%s4 + $0xe70] sm:$0xff]
        %v1038 = vld [vmem:[%s4 + $0xe78] sm:$0xff]
        %v1039 = vld [vmem:[%s4 + $0xe80] sm:$0xff]
        %v1040 = vld [vmem:[%s4 + $0xe88] sm:$0xff]
        %v1041 = vld [vmem:[%s4 + $0xe90] sm:$0xff]
        %v1042 = vld [vmem:[%s4 + $0xe98] sm:$0xff]
        %v1043 = vld [vmem:[%s4 + $0xea0] sm:$0xff]
        %v1044 = vld [vmem:[%s4 + $0xea8] sm:$0xff]
        %v1045 = vld [vmem:[%s4 + $0xeb0] sm:$0xff]
        %v1046 = vld [vmem:[%s4 + $0xeb8] sm:$0xff]
        %v1047 = vld [vmem:[%s4 + $0xec0] sm:$0xff]
        %v1048 = vld [vmem:[%s4 + $0xec8] sm:$0xff]
        %v1049 = vld [vmem:[%s4 + $0xed0] sm:$0xff]
        %v1050 = vld [vmem:[%s4 + $0xed8] sm:$0xff]
        %v1051 = vld [vmem:[%s4 + $0xee0] sm:$0xff]
        %v1052 = vld [vmem:[%s4 + $0xee8] sm:$0xff]
        %v1053 = vld [vmem:[%s4 + $0xef0] sm:$0xff]
        %v1054 = vld [vmem:[%s4 + $0xef8] sm:$0xff]
        %v1055 = vld [vmem:[%s4 + $0xf00] sm:$0xff]
        %v1056 = vld [vmem:[%s4 + $0xf08] sm:$0xff]
        %v1057 = vld [vmem:[%s4 + $0xf10] sm:$0xff]
        %v1058 = vld [vmem:[%s4 + $0xf18] sm:$0xff]
        %v1059 = vld [vmem:[%s4 + $0xf20] sm:$0xff]
        %v1060 = vld [vmem:[%s4 + $0xf28] sm:$0xff]
        %v1061 = vld [vmem:[%s4 + $0xf30] sm:$0xff]
        %v1062 = vld [vmem:[%s4 + $0xf38] sm:$0xff]
        %v1063 = vld [vmem:[%s4 + $0xf40] sm:$0xff]
        %v1064 = vld [vmem:[%s4 + $0xf48] sm:$0xff]
        %v1065 = vld [vmem:[%s4 + $0xf50] sm:$0xff]
        %v1066 = vld [vmem:[%s4 + $0xf58] sm:$0xff]
        %v1067 = vld [vmem:[%s4 + $0xf60] sm:$0xff]
        %v1068 = vld [vmem:[%s4 + $0xf68] sm:$0xff]
        %v1069 = vld [vmem:[%s4 + $0xf70] sm:$0xff]
        %v1070 = vld [vmem:[%s4 + $0xf78] sm:$0xff]
        %v1071 = vld [vmem:[%s4 + $0xf80] sm:$0xff]
        %v1072 = vld [vmem:[%s4 + $0xf88] sm:$0xff]
        %v1073 = vld [vmem:[%s4 + $0xf90] sm:$0xff]
        %v1074 = vld [vmem:[%s4 + $0xf98] sm:$0xff]
        %v1075 = vld [vmem:[%s4 + $0xfa0] sm:$0xff]
        %v1076 = vld [vmem:[%s4 + $0xfa8] sm:$0xff]
        %v1077 = vld [vmem:[%s4 + $0xfb0] sm:$0xff]
        %v1078 = vld [vmem:[%s4 + $0xfb8] sm:$0xff]
        %v1079 = vld [vmem:[%s4 + $0xfc0] sm:$0xff]
        %v1080 = vld [vmem:[%s4 + $0xfc8] sm:$0xff]
        %v1081 = vld [vmem:[%s4 + $0xfd0] sm:$0xff]
        %v1082 = vld [vmem:[%s4 + $0xfd8] sm:$0xff]
        %v1083 = vld [vmem:[%s4 + $0xfe0] sm:$0xff]
        %v1084 = vld [vmem:[%s4 + $0xfe8] sm:$0xff]
        %v1085 = vld [vmem:[%s4 + $0xff0] sm:$0xff]
        %v1086 = vld [vmem:[%s4 + $0xff8] sm:$0xff]
        %v1087 = vld [vmem:[%s5] sm:$0x1]
        %v1088 = vld [vmem:[%s5 + $0x1] sm:$0x1]
        %v1089 = vld [vmem:[%s5 + $0x2] sm:$0x1]
        %v1090 = vld [vmem:[%s5 + $0x3] sm:$0x1]
        %v1091 = vld [vmem:[%s5 + $0x4] sm:$0x1]
        %v1092 = vld [vmem:[%s5 + $0x5] sm:$0x1]
        %v1093 = vld [vmem:[%s5 + $0x6] sm:$0x1]
        %v1094 = vld [vmem:[%s5 + $0x7] sm:$0x1]
        %v1103 = vlaneseq
        %v1104 = vshrl.u32 %v1103, 7
        %v1105 = vsub.s32 0, %v1104
        %v1106 = vrot.slane %v1087, %v1105
        %v1107 = vlaneseq
        %v1108 = vshrl.u32 %v1107, 7
        %v1109 = vsub.s32 0, %v1108
        %v1110 = vrot.slane %v1088, %v1109
        %v1111 = vlaneseq
        %v1112 = vshrl.u32 %v1111, 7
        %v1113 = vsub.s32 0, %v1112
        %v1114 = vrot.slane %v1089, %v1113
        %v1115 = vlaneseq
        %v1116 = vshrl.u32 %v1115, 7
        %v1117 = vsub.s32 0, %v1116
        %v1118 = vrot.slane %v1090, %v1117
        %v1119 = vlaneseq
        %v1120 = vshrl.u32 %v1119, 7
        %v1121 = vsub.s32 0, %v1120
        %v1122 = vrot.slane %v1091, %v1121
        %v1123 = vlaneseq
        %v1124 = vshrl.u32 %v1123, 7
        %v1125 = vsub.s32 0, %v1124
        %v1126 = vrot.slane %v1092, %v1125
        %v1127 = vlaneseq
        %v1128 = vshrl.u32 %v1127, 7
        %v1129 = vsub.s32 0, %v1128
        %v1130 = vrot.slane %v1093, %v1129
        %v1131 = vlaneseq
        %v1132 = vshrl.u32 %v1131, 7
        %v1133 = vsub.s32 0, %v1132
        %v1134 = vrot.slane %v1094, %v1133
        %1143 = vmatprep.subr.mxu0 0.0
        %1144 = vmatpush1.msra.mxu0 %v590
        %1145 = vmatprep.subr.mxu0 0.0
        %1146 = vmatpush1.msra.mxu0 %v589
        %1147 = vmatprep.subr.mxu0 0.0
        %1148 = vmatpush1.msra.mxu0 %v588
        %1149 = vmatprep.subr.mxu0 0.0
        %1150 = vmatpush1.msra.mxu0 %v587
        %1151 = vmatprep.subr.mxu0 0.0
        %1152 = vmatpush1.msra.mxu0 %v586
        %1153 = vmatprep.subr.mxu0 0.0
        %1154 = vmatpush1.msra.mxu0 %v585
        %1155 = vmatprep.subr.mxu0 0.0
        %1156 = vmatpush1.msra.mxu0 %v584
        %1157 = vmatprep.subr.mxu0 0.0
        %1158 = vmatpush1.msra.mxu0 %v583
        %1159 = vmatprep.subr.mxu0 0.0
        %1160 = vmatpush1.msra.mxu0 %v582
        %1161 = vmatprep.subr.mxu0 0.0
        %1162 = vmatpush1.msra.mxu0 %v581
        %1163 = vmatprep.subr.mxu0 0.0
        %1164 = vmatpush1.msra.mxu0 %v580
        %1165 = vmatprep.subr.mxu0 0.0
        %1166 = vmatpush1.msra.mxu0 %v579
        %1167 = vmatprep.subr.mxu0 0.0
        %1168 = vmatpush1.msra.mxu0 %v578
        %1169 = vmatprep.subr.mxu0 0.0
        %1170 = vmatpush1.msra.mxu0 %v577
        %1171 = vmatprep.subr.mxu0 0.0
        %1172 = vmatpush1.msra.mxu0 %v576
        %1173 = vmatprep.subr.mxu0 0.0
        %1174 = vmatpush1.msra.mxu0 %v575
        %1175 = vmatprep.subr.mxu0 0.0
        %1176 = vmatpush2.msra.mxu0 %v606
        %1177 = vmatprep.subr.mxu0 0.0
        %1178 = vmatpush2.msra.mxu0 %v605
        %1179 = vmatprep.subr.mxu0 0.0
        %1180 = vmatpush2.msra.mxu0 %v604
        %1181 = vmatprep.subr.mxu0 0.0
        %1182 = vmatpush2.msra.mxu0 %v603
        %1183 = vmatprep.subr.mxu0 0.0
        %1184 = vmatpush2.msra.mxu0 %v602
        %1185 = vmatprep.subr.mxu0 0.0
        %1186 = vmatpush2.msra.mxu0 %v601
        %1187 = vmatprep.subr.mxu0 0.0
        %1188 = vmatpush2.msra.mxu0 %v600
        %1189 = vmatprep.subr.mxu0 0.0
        %1190 = vmatpush2.msra.mxu0 %v599
        %1191 = vmatprep.subr.mxu0 0.0
        %1192 = vmatpush2.msra.mxu0 %v598
        %1193 = vmatprep.subr.mxu0 0.0
        %1194 = vmatpush2.msra.mxu0 %v597
        %1195 = vmatprep.subr.mxu0 0.0
        %1196 = vmatpush2.msra.mxu0 %v596
        %1197 = vmatprep.subr.mxu0 0.0
        %1198 = vmatpush2.msra.mxu0 %v595
        %1199 = vmatprep.subr.mxu0 0.0
        %1200 = vmatpush2.msra.mxu0 %v594
        %1201 = vmatprep.subr.mxu0 0.0
        %1202 = vmatpush2.msra.mxu0 %v593
        %1203 = vmatprep.subr.mxu0 0.0
        %1204 = vmatpush2.msra.mxu0 %v592
        %1205 = vmatprep.subr.mxu0 0.0
        %1206 = vmatpush2.msra.mxu0 %v591
        %1207 = vmatprep.mubr.f32.mxu0 %v562
        %1208 = vmatmul.mubr.f32.gmra.mxu0 %v561
        %v1209 = vpop.f32.mrf.mxu0
        %v1210 = vadd.f32 %v1106, %v1209
        %v1211 = vpop.f32.mrf.mxu0
        %1212 = vdwg.mxu0
        %1213 = vmatprep.subr.mxu0 0.0
        %1214 = vmatpush1.msra.mxu0 %v622
        %1215 = vmatprep.subr.mxu0 0.0
        %1216 = vmatpush1.msra.mxu0 %v621
        %1217 = vmatprep.subr.mxu0 0.0
        %1218 = vmatpush1.msra.mxu0 %v620
        %1219 = vmatprep.subr.mxu0 0.0
        %1220 = vmatpush1.msra.mxu0 %v619
        %1221 = vmatprep.subr.mxu0 0.0
        %1222 = vmatpush1.msra.mxu0 %v618
        %1223 = vmatprep.subr.mxu0 0.0
        %1224 = vmatpush1.msra.mxu0 %v617
        %1225 = vmatprep.subr.mxu0 0.0
        %1226 = vmatpush1.msra.mxu0 %v616
        %1227 = vmatprep.subr.mxu0 0.0
        %1228 = vmatpush1.msra.mxu0 %v615
        %1229 = vmatprep.subr.mxu0 0.0
        %1230 = vmatpush1.msra.mxu0 %v614
        %1231 = vmatprep.subr.mxu0 0.0
        %1232 = vmatpush1.msra.mxu0 %v613
        %1233 = vmatprep.subr.mxu0 0.0
        %1234 = vmatpush1.msra.mxu0 %v612
        %1235 = vmatprep.subr.mxu0 0.0
        %1236 = vmatpush1.msra.mxu0 %v611
        %1237 = vmatprep.subr.mxu0 0.0
        %1238 = vmatpush1.msra.mxu0 %v610
        %1239 = vmatprep.subr.mxu0 0.0
        %1240 = vmatpush1.msra.mxu0 %v609
        %1241 = vmatprep.subr.mxu0 0.0
        %1242 = vmatpush1.msra.mxu0 %v608
        %1243 = vmatprep.subr.mxu0 0.0
        %1244 = vmatpush1.msra.mxu0 %v607
        %1245 = vmatprep.subr.mxu0 0.0
        %1246 = vmatpush2.msra.mxu0 %v638
        %1247 = vmatprep.subr.mxu0 0.0
        %1248 = vmatpush2.msra.mxu0 %v637
        %1249 = vmatprep.subr.mxu0 0.0
        %1250 = vmatpush2.msra.mxu0 %v636
        %1251 = vmatprep.subr.mxu0 0.0
        %1252 = vmatpush2.msra.mxu0 %v635
        %1253 = vmatprep.subr.mxu0 0.0
        %1254 = vmatpush2.msra.mxu0 %v634
        %1255 = vmatprep.subr.mxu0 0.0
        %1256 = vmatpush2.msra.mxu0 %v633
        %1257 = vmatprep.subr.mxu0 0.0
        %1258 = vmatpush2.msra.mxu0 %v632
        %1259 = vmatprep.subr.mxu0 0.0
        %1260 = vmatpush2.msra.mxu0 %v631
        %1261 = vmatprep.subr.mxu0 0.0
        %1262 = vmatpush2.msra.mxu0 %v630
        %1263 = vmatprep.subr.mxu0 0.0
        %1264 = vmatpush2.msra.mxu0 %v629
        %1265 = vmatprep.subr.mxu0 0.0
        %1266 = vmatpush2.msra.mxu0 %v628
        %1267 = vmatprep.subr.mxu0 0.0
        %1268 = vmatpush2.msra.mxu0 %v627
        %1269 = vmatprep.subr.mxu0 0.0
        %1270 = vmatpush2.msra.mxu0 %v626
        %1271 = vmatprep.subr.mxu0 0.0
        %1272 = vmatpush2.msra.mxu0 %v625
        %1273 = vmatprep.subr.mxu0 0.0
        %1274 = vmatpush2.msra.mxu0 %v624
        %1275 = vmatprep.subr.mxu0 0.0
        %1276 = vmatpush2.msra.mxu0 %v623
        %1277 = vmatprep.mubr.f32.mxu0 %v564
        %1278 = vmatmul.mubr.f32.gmra.mxu0 %v563
        %v1279 = vpop.f32.mrf.mxu0
        %v1280 = vadd.f32 %v1210, %v1279
        %v1281 = vpop.f32.mrf.mxu0
        %1282 = vdwg.mxu0
        %1283 = vmatprep.subr.mxu0 0.0
        %1284 = vmatpush1.msra.mxu0 %v654
        %1285 = vmatprep.subr.mxu0 0.0
        %1286 = vmatpush1.msra.mxu0 %v653
        %1287 = vmatprep.subr.mxu0 0.0
        %1288 = vmatpush1.msra.mxu0 %v652
        %1289 = vmatprep.subr.mxu0 0.0
        %1290 = vmatpush1.msra.mxu0 %v651
        %1291 = vmatprep.subr.mxu0 0.0
        %1292 = vmatpush1.msra.mxu0 %v650
        %1293 = vmatprep.subr.mxu0 0.0
        %1294 = vmatpush1.msra.mxu0 %v649
        %1295 = vmatprep.subr.mxu0 0.0
        %1296 = vmatpush1.msra.mxu0 %v648
        %1297 = vmatprep.subr.mxu0 0.0
        %1298 = vmatpush1.msra.mxu0 %v647
        %1299 = vmatprep.subr.mxu0 0.0
        %1300 = vmatpush1.msra.mxu0 %v646
        %1301 = vmatprep.subr.mxu0 0.0
        %1302 = vmatpush1.msra.mxu0 %v645
        %1303 = vmatprep.subr.mxu0 0.0
        %1304 = vmatpush1.msra.mxu0 %v644
        %1305 = vmatprep.subr.mxu0 0.0
        %1306 = vmatpush1.msra.mxu0 %v643
        %1307 = vmatprep.subr.mxu0 0.0
        %1308 = vmatpush1.msra.mxu0 %v642
        %1309 = vmatprep.subr.mxu0 0.0
        %1310 = vmatpush1.msra.mxu0 %v641
        %1311 = vmatprep.subr.mxu0 0.0
        %1312 = vmatpush1.msra.mxu0 %v640
        %1313 = vmatprep.subr.mxu0 0.0
        %1314 = vmatpush1.msra.mxu0 %v639
        %1315 = vmatprep.subr.mxu0 0.0
        %1316 = vmatpush2.msra.mxu0 %v670
        %1317 = vmatprep.subr.mxu0 0.0
        %1318 = vmatpush2.msra.mxu0 %v669
        %1319 = vmatprep.subr.mxu0 0.0
        %1320 = vmatpush2.msra.mxu0 %v668
        %1321 = vmatprep.subr.mxu0 0.0
        %1322 = vmatpush2.msra.mxu0 %v667
        %1323 = vmatprep.subr.mxu0 0.0
        %1324 = vmatpush2.msra.mxu0 %v666
        %1325 = vmatprep.subr.mxu0 0.0
        %1326 = vmatpush2.msra.mxu0 %v665
        %1327 = vmatprep.subr.mxu0 0.0
        %1328 = vmatpush2.msra.mxu0 %v664
        %1329 = vmatprep.subr.mxu0 0.0
        %1330 = vmatpush2.msra.mxu0 %v663
        %1331 = vmatprep.subr.mxu0 0.0
        %1332 = vmatpush2.msra.mxu0 %v662
        %1333 = vmatprep.subr.mxu0 0.0
        %1334 = vmatpush2.msra.mxu0 %v661
        %1335 = vmatprep.subr.mxu0 0.0
        %1336 = vmatpush2.msra.mxu0 %v660
        %1337 = vmatprep.subr.mxu0 0.0
        %1338 = vmatpush2.msra.mxu0 %v659
        %1339 = vmatprep.subr.mxu0 0.0
        %1340 = vmatpush2.msra.mxu0 %v658
        %1341 = vmatprep.subr.mxu0 0.0
        %1342 = vmatpush2.msra.mxu0 %v657
        %1343 = vmatprep.subr.mxu0 0.0
        %1344 = vmatpush2.msra.mxu0 %v656
        %1345 = vmatprep.subr.mxu0 0.0
        %1346 = vmatpush2.msra.mxu0 %v655
        %1347 = vmatprep.mubr.f32.mxu0 %v562
        %1348 = vmatmul.mubr.f32.gmra.mxu0 %v561
        %v1349 = vpop.f32.mrf.mxu0
        %v1350 = vadd.f32 %v1110, %v1349
        %v1351 = vpop.f32.mrf.mxu0
        %1352 = vdwg.mxu0
        %1353 = vmatprep.subr.mxu0 0.0
        %1354 = vmatpush1.msra.mxu0 %v686
        %1355 = vmatprep.subr.mxu0 0.0
        %1356 = vmatpush1.msra.mxu0 %v685
        %1357 = vmatprep.subr.mxu0 0.0
        %1358 = vmatpush1.msra.mxu0 %v684
        %1359 = vmatprep.subr.mxu0 0.0
        %1360 = vmatpush1.msra.mxu0 %v683
        %1361 = vmatprep.subr.mxu0 0.0
        %1362 = vmatpush1.msra.mxu0 %v682
        %1363 = vmatprep.subr.mxu0 0.0
        %1364 = vmatpush1.msra.mxu0 %v681
        %1365 = vmatprep.subr.mxu0 0.0
        %1366 = vmatpush1.msra.mxu0 %v680
        %1367 = vmatprep.subr.mxu0 0.0
        %1368 = vmatpush1.msra.mxu0 %v679
        %1369 = vmatprep.subr.mxu0 0.0
        %1370 = vmatpush1.msra.mxu0 %v678
        %1371 = vmatprep.subr.mxu0 0.0
        %1372 = vmatpush1.msra.mxu0 %v677
        %1373 = vmatprep.subr.mxu0 0.0
        %1374 = vmatpush1.msra.mxu0 %v676
        %1375 = vmatprep.subr.mxu0 0.0
        %1376 = vmatpush1.msra.mxu0 %v675
        %1377 = vmatprep.subr.mxu0 0.0
        %1378 = vmatpush1.msra.mxu0 %v674
        %1379 = vmatprep.subr.mxu0 0.0
        %1380 = vmatpush1.msra.mxu0 %v673
        %1381 = vmatprep.subr.mxu0 0.0
        %1382 = vmatpush1.msra.mxu0 %v672
        %1383 = vmatprep.subr.mxu0 0.0
        %1384 = vmatpush1.msra.mxu0 %v671
        %1385 = vmatprep.subr.mxu0 0.0
        %1386 = vmatpush2.msra.mxu0 %v702
        %1387 = vmatprep.subr.mxu0 0.0
        %1388 = vmatpush2.msra.mxu0 %v701
        %1389 = vmatprep.subr.mxu0 0.0
        %1390 = vmatpush2.msra.mxu0 %v700
        %1391 = vmatprep.subr.mxu0 0.0
        %1392 = vmatpush2.msra.mxu0 %v699
        %1393 = vmatprep.subr.mxu0 0.0
        %1394 = vmatpush2.msra.mxu0 %v698
        %1395 = vmatprep.subr.mxu0 0.0
        %1396 = vmatpush2.msra.mxu0 %v697
        %1397 = vmatprep.subr.mxu0 0.0
        %1398 = vmatpush2.msra.mxu0 %v696
        %1399 = vmatprep.subr.mxu0 0.0
        %1400 = vmatpush2.msra.mxu0 %v695
        %1401 = vmatprep.subr.mxu0 0.0
        %1402 = vmatpush2.msra.mxu0 %v694
        %1403 = vmatprep.subr.mxu0 0.0
        %1404 = vmatpush2.msra.mxu0 %v693
        %1405 = vmatprep.subr.mxu0 0.0
        %1406 = vmatpush2.msra.mxu0 %v692
        %1407 = vmatprep.subr.mxu0 0.0
        %1408 = vmatpush2.msra.mxu0 %v691
        %1409 = vmatprep.subr.mxu0 0.0
        %1410 = vmatpush2.msra.mxu0 %v690
        %1411 = vmatprep.subr.mxu0 0.0
        %1412 = vmatpush2.msra.mxu0 %v689
        %1413 = vmatprep.subr.mxu0 0.0
        %1414 = vmatpush2.msra.mxu0 %v688
        %1415 = vmatprep.subr.mxu0 0.0
        %1416 = vmatpush2.msra.mxu0 %v687
        %1417 = vmatprep.mubr.f32.mxu0 %v564
        %1418 = vmatmul.mubr.f32.gmra.mxu0 %v563
        %v1419 = vpop.f32.mrf.mxu0
        %v1420 = vadd.f32 %v1350, %v1419
        %v1421 = vpop.f32.mrf.mxu0
        %1422 = vdwg.mxu0
        %1423 = vmatprep.subr.mxu0 0.0
        %1424 = vmatpush1.msra.mxu0 %v718
        %1425 = vmatprep.subr.mxu0 0.0
        %1426 = vmatpush1.msra.mxu0 %v717
        %1427 = vmatprep.subr.mxu0 0.0
        %1428 = vmatpush1.msra.mxu0 %v716
        %1429 = vmatprep.subr.mxu0 0.0
        %1430 = vmatpush1.msra.mxu0 %v715
        %1431 = vmatprep.subr.mxu0 0.0
        %1432 = vmatpush1.msra.mxu0 %v714
        %1433 = vmatprep.subr.mxu0 0.0
        %1434 = vmatpush1.msra.mxu0 %v713
        %1435 = vmatprep.subr.mxu0 0.0
        %1436 = vmatpush1.msra.mxu0 %v712
        %1437 = vmatprep.subr.mxu0 0.0
        %1438 = vmatpush1.msra.mxu0 %v711
        %1439 = vmatprep.subr.mxu0 0.0
        %1440 = vmatpush1.msra.mxu0 %v710
        %1441 = vmatprep.subr.mxu0 0.0
        %1442 = vmatpush1.msra.mxu0 %v709
        %1443 = vmatprep.subr.mxu0 0.0
        %1444 = vmatpush1.msra.mxu0 %v708
        %1445 = vmatprep.subr.mxu0 0.0
        %1446 = vmatpush1.msra.mxu0 %v707
        %1447 = vmatprep.subr.mxu0 0.0
        %1448 = vmatpush1.msra.mxu0 %v706
        %1449 = vmatprep.subr.mxu0 0.0
        %1450 = vmatpush1.msra.mxu0 %v705
        %1451 = vmatprep.subr.mxu0 0.0
        %1452 = vmatpush1.msra.mxu0 %v704
        %1453 = vmatprep.subr.mxu0 0.0
        %1454 = vmatpush1.msra.mxu0 %v703
        %1455 = vmatprep.subr.mxu0 0.0
        %1456 = vmatpush2.msra.mxu0 %v734
        %1457 = vmatprep.subr.mxu0 0.0
        %1458 = vmatpush2.msra.mxu0 %v733
        %1459 = vmatprep.subr.mxu0 0.0
        %1460 = vmatpush2.msra.mxu0 %v732
        %1461 = vmatprep.subr.mxu0 0.0
        %1462 = vmatpush2.msra.mxu0 %v731
        %1463 = vmatprep.subr.mxu0 0.0
        %1464 = vmatpush2.msra.mxu0 %v730
        %1465 = vmatprep.subr.mxu0 0.0
        %1466 = vmatpush2.msra.mxu0 %v729
        %1467 = vmatprep.subr.mxu0 0.0
        %1468 = vmatpush2.msra.mxu0 %v728
        %1469 = vmatprep.subr.mxu0 0.0
        %1470 = vmatpush2.msra.mxu0 %v727
        %1471 = vmatprep.subr.mxu0 0.0
        %1472 = vmatpush2.msra.mxu0 %v726
        %1473 = vmatprep.subr.mxu0 0.0
        %1474 = vmatpush2.msra.mxu0 %v725
        %1475 = vmatprep.subr.mxu0 0.0
        %1476 = vmatpush2.msra.mxu0 %v724
        %1477 = vmatprep.subr.mxu0 0.0
        %1478 = vmatpush2.msra.mxu0 %v723
        %1479 = vmatprep.subr.mxu0 0.0
        %1480 = vmatpush2.msra.mxu0 %v722
        %1481 = vmatprep.subr.mxu0 0.0
        %1482 = vmatpush2.msra.mxu0 %v721
        %1483 = vmatprep.subr.mxu0 0.0
        %1484 = vmatpush2.msra.mxu0 %v720
        %1485 = vmatprep.subr.mxu0 0.0
        %1486 = vmatpush2.msra.mxu0 %v719
        %1487 = vmatprep.mubr.f32.mxu0 %v562
        %1488 = vmatmul.mubr.f32.gmra.mxu0 %v561
        %v1489 = vpop.f32.mrf.mxu0
        %v1490 = vadd.f32 %v1114, %v1489
        %v1491 = vpop.f32.mrf.mxu0
        %1492 = vdwg.mxu0
        %1493 = vmatprep.subr.mxu0 0.0
        %1494 = vmatpush1.msra.mxu0 %v750
        %1495 = vmatprep.subr.mxu0 0.0
        %1496 = vmatpush1.msra.mxu0 %v749
        %1497 = vmatprep.subr.mxu0 0.0
        %1498 = vmatpush1.msra.mxu0 %v748
        %1499 = vmatprep.subr.mxu0 0.0
        %1500 = vmatpush1.msra.mxu0 %v747
        %1501 = vmatprep.subr.mxu0 0.0
        %1502 = vmatpush1.msra.mxu0 %v746
        %1503 = vmatprep.subr.mxu0 0.0
        %1504 = vmatpush1.msra.mxu0 %v745
        %1505 = vmatprep.subr.mxu0 0.0
        %1506 = vmatpush1.msra.mxu0 %v744
        %1507 = vmatprep.subr.mxu0 0.0
        %1508 = vmatpush1.msra.mxu0 %v743
        %1509 = vmatprep.subr.mxu0 0.0
        %1510 = vmatpush1.msra.mxu0 %v742
        %1511 = vmatprep.subr.mxu0 0.0
        %1512 = vmatpush1.msra.mxu0 %v741
        %1513 = vmatprep.subr.mxu0 0.0
        %1514 = vmatpush1.msra.mxu0 %v740
        %1515 = vmatprep.subr.mxu0 0.0
        %1516 = vmatpush1.msra.mxu0 %v739
        %1517 = vmatprep.subr.mxu0 0.0
        %1518 = vmatpush1.msra.mxu0 %v738
        %1519 = vmatprep.subr.mxu0 0.0
        %1520 = vmatpush1.msra.mxu0 %v737
        %1521 = vmatprep.subr.mxu0 0.0
        %1522 = vmatpush1.msra.mxu0 %v736
        %1523 = vmatprep.subr.mxu0 0.0
        %1524 = vmatpush1.msra.mxu0 %v735
        %1525 = vmatprep.subr.mxu0 0.0
        %1526 = vmatpush2.msra.mxu0 %v766
        %1527 = vmatprep.subr.mxu0 0.0
        %1528 = vmatpush2.msra.mxu0 %v765
        %1529 = vmatprep.subr.mxu0 0.0
        %1530 = vmatpush2.msra.mxu0 %v764
        %1531 = vmatprep.subr.mxu0 0.0
        %1532 = vmatpush2.msra.mxu0 %v763
        %1533 = vmatprep.subr.mxu0 0.0
        %1534 = vmatpush2.msra.mxu0 %v762
        %1535 = vmatprep.subr.mxu0 0.0
        %1536 = vmatpush2.msra.mxu0 %v761
        %1537 = vmatprep.subr.mxu0 0.0
        %1538 = vmatpush2.msra.mxu0 %v760
        %1539 = vmatprep.subr.mxu0 0.0
        %1540 = vmatpush2.msra.mxu0 %v759
        %1541 = vmatprep.subr.mxu0 0.0
        %1542 = vmatpush2.msra.mxu0 %v758
        %1543 = vmatprep.subr.mxu0 0.0
        %1544 = vmatpush2.msra.mxu0 %v757
        %1545 = vmatprep.subr.mxu0 0.0
        %1546 = vmatpush2.msra.mxu0 %v756
        %1547 = vmatprep.subr.mxu0 0.0
        %1548 = vmatpush2.msra.mxu0 %v755
        %1549 = vmatprep.subr.mxu0 0.0
        %1550 = vmatpush2.msra.mxu0 %v754
        %1551 = vmatprep.subr.mxu0 0.0
        %1552 = vmatpush2.msra.mxu0 %v753
        %1553 = vmatprep.subr.mxu0 0.0
        %1554 = vmatpush2.msra.mxu0 %v752
        %1555 = vmatprep.subr.mxu0 0.0
        %1556 = vmatpush2.msra.mxu0 %v751
        %1557 = vmatprep.mubr.f32.mxu0 %v564
        %1558 = vmatmul.mubr.f32.gmra.mxu0 %v563
        %v1559 = vpop.f32.mrf.mxu0
        %v1560 = vadd.f32 %v1490, %v1559
        %v1561 = vpop.f32.mrf.mxu0
        %1562 = vdwg.mxu0
        %1563 = vmatprep.subr.mxu0 0.0
        %1564 = vmatpush1.msra.mxu0 %v782
        %1565 = vmatprep.subr.mxu0 0.0
        %1566 = vmatpush1.msra.mxu0 %v781
        %1567 = vmatprep.subr.mxu0 0.0
        %1568 = vmatpush1.msra.mxu0 %v780
        %1569 = vmatprep.subr.mxu0 0.0
        %1570 = vmatpush1.msra.mxu0 %v779
        %1571 = vmatprep.subr.mxu0 0.0
        %1572 = vmatpush1.msra.mxu0 %v778
        %1573 = vmatprep.subr.mxu0 0.0
        %1574 = vmatpush1.msra.mxu0 %v777
        %1575 = vmatprep.subr.mxu0 0.0
        %1576 = vmatpush1.msra.mxu0 %v776
        %1577 = vmatprep.subr.mxu0 0.0
        %1578 = vmatpush1.msra.mxu0 %v775
        %1579 = vmatprep.subr.mxu0 0.0
        %1580 = vmatpush1.msra.mxu0 %v774
        %1581 = vmatprep.subr.mxu0 0.0
        %1582 = vmatpush1.msra.mxu0 %v773
        %1583 = vmatprep.subr.mxu0 0.0
        %1584 = vmatpush1.msra.mxu0 %v772
        %1585 = vmatprep.subr.mxu0 0.0
        %1586 = vmatpush1.msra.mxu0 %v771
        %1587 = vmatprep.subr.mxu0 0.0
        %1588 = vmatpush1.msra.mxu0 %v770
        %1589 = vmatprep.subr.mxu0 0.0
        %1590 = vmatpush1.msra.mxu0 %v769
        %1591 = vmatprep.subr.mxu0 0.0
        %1592 = vmatpush1.msra.mxu0 %v768
        %1593 = vmatprep.subr.mxu0 0.0
        %1594 = vmatpush1.msra.mxu0 %v767
        %1595 = vmatprep.subr.mxu0 0.0
        %1596 = vmatpush2.msra.mxu0 %v798
        %1597 = vmatprep.subr.mxu0 0.0
        %1598 = vmatpush2.msra.mxu0 %v797
        %1599 = vmatprep.subr.mxu0 0.0
        %1600 = vmatpush2.msra.mxu0 %v796
        %1601 = vmatprep.subr.mxu0 0.0
        %1602 = vmatpush2.msra.mxu0 %v795
        %1603 = vmatprep.subr.mxu0 0.0
        %1604 = vmatpush2.msra.mxu0 %v794
        %1605 = vmatprep.subr.mxu0 0.0
        %1606 = vmatpush2.msra.mxu0 %v793
        %1607 = vmatprep.subr.mxu0 0.0
        %1608 = vmatpush2.msra.mxu0 %v792
        %1609 = vmatprep.subr.mxu0 0.0
        %1610 = vmatpush2.msra.mxu0 %v791
        %1611 = vmatprep.subr.mxu0 0.0
        %1612 = vmatpush2.msra.mxu0 %v790
        %1613 = vmatprep.subr.mxu0 0.0
        %1614 = vmatpush2.msra.mxu0 %v789
        %1615 = vmatprep.subr.mxu0 0.0
        %1616 = vmatpush2.msra.mxu0 %v788
        %1617 = vmatprep.subr.mxu0 0.0
        %1618 = vmatpush2.msra.mxu0 %v787
        %1619 = vmatprep.subr.mxu0 0.0
        %1620 = vmatpush2.msra.mxu0 %v786
        %1621 = vmatprep.subr.mxu0 0.0
        %1622 = vmatpush2.msra.mxu0 %v785
        %1623 = vmatprep.subr.mxu0 0.0
        %1624 = vmatpush2.msra.mxu0 %v784
        %1625 = vmatprep.subr.mxu0 0.0
        %1626 = vmatpush2.msra.mxu0 %v783
        %1627 = vmatprep.mubr.f32.mxu0 %v562
        %1628 = vmatmul.mubr.f32.gmra.mxu0 %v561
        %v1629 = vpop.f32.mrf.mxu0
        %v1630 = vadd.f32 %v1118, %v1629
        %v1631 = vpop.f32.mrf.mxu0
        %1632 = vdwg.mxu0
        %1633 = vmatprep.subr.mxu0 0.0
        %1634 = vmatpush1.msra.mxu0 %v814
        %1635 = vmatprep.subr.mxu0 0.0
        %1636 = vmatpush1.msra.mxu0 %v813
        %1637 = vmatprep.subr.mxu0 0.0
        %1638 = vmatpush1.msra.mxu0 %v812
        %1639 = vmatprep.subr.mxu0 0.0
        %1640 = vmatpush1.msra.mxu0 %v811
        %1641 = vmatprep.subr.mxu0 0.0
        %1642 = vmatpush1.msra.mxu0 %v810
        %1643 = vmatprep.subr.mxu0 0.0
        %1644 = vmatpush1.msra.mxu0 %v809
        %1645 = vmatprep.subr.mxu0 0.0
        %1646 = vmatpush1.msra.mxu0 %v808
        %1647 = vmatprep.subr.mxu0 0.0
        %1648 = vmatpush1.msra.mxu0 %v807
        %1649 = vmatprep.subr.mxu0 0.0
        %1650 = vmatpush1.msra.mxu0 %v806
        %1651 = vmatprep.subr.mxu0 0.0
        %1652 = vmatpush1.msra.mxu0 %v805
        %1653 = vmatprep.subr.mxu0 0.0
        %1654 = vmatpush1.msra.mxu0 %v804
        %1655 = vmatprep.subr.mxu0 0.0
        %1656 = vmatpush1.msra.mxu0 %v803
        %1657 = vmatprep.subr.mxu0 0.0
        %1658 = vmatpush1.msra.mxu0 %v802
        %1659 = vmatprep.subr.mxu0 0.0
        %1660 = vmatpush1.msra.mxu0 %v801
        %1661 = vmatprep.subr.mxu0 0.0
        %1662 = vmatpush1.msra.mxu0 %v800
        %1663 = vmatprep.subr.mxu0 0.0
        %1664 = vmatpush1.msra.mxu0 %v799
        %1665 = vmatprep.subr.mxu0 0.0
        %1666 = vmatpush2.msra.mxu0 %v830
        %1667 = vmatprep.subr.mxu0 0.0
        %1668 = vmatpush2.msra.mxu0 %v829
        %1669 = vmatprep.subr.mxu0 0.0
        %1670 = vmatpush2.msra.mxu0 %v828
        %1671 = vmatprep.subr.mxu0 0.0
        %1672 = vmatpush2.msra.mxu0 %v827
        %1673 = vmatprep.subr.mxu0 0.0
        %1674 = vmatpush2.msra.mxu0 %v826
        %1675 = vmatprep.subr.mxu0 0.0
        %1676 = vmatpush2.msra.mxu0 %v825
        %1677 = vmatprep.subr.mxu0 0.0
        %1678 = vmatpush2.msra.mxu0 %v824
        %1679 = vmatprep.subr.mxu0 0.0
        %1680 = vmatpush2.msra.mxu0 %v823
        %1681 = vmatprep.subr.mxu0 0.0
        %1682 = vmatpush2.msra.mxu0 %v822
        %1683 = vmatprep.subr.mxu0 0.0
        %1684 = vmatpush2.msra.mxu0 %v821
        %1685 = vmatprep.subr.mxu0 0.0
        %1686 = vmatpush2.msra.mxu0 %v820
        %1687 = vmatprep.subr.mxu0 0.0
        %1688 = vmatpush2.msra.mxu0 %v819
        %1689 = vmatprep.subr.mxu0 0.0
        %1690 = vmatpush2.msra.mxu0 %v818
        %1691 = vmatprep.subr.mxu0 0.0
        %1692 = vmatpush2.msra.mxu0 %v817
        %1693 = vmatprep.subr.mxu0 0.0
        %1694 = vmatpush2.msra.mxu0 %v816
        %1695 = vmatprep.subr.mxu0 0.0
        %1696 = vmatpush2.msra.mxu0 %v815
        %1697 = vmatprep.mubr.f32.mxu0 %v564
        %1698 = vmatmul.mubr.f32.gmra.mxu0 %v563
        %v1699 = vpop.f32.mrf.mxu0
        %v1700 = vadd.f32 %v1630, %v1699
        %v1701 = vpop.f32.mrf.mxu0
        %1702 = vdwg.mxu0
        %1703 = vmatprep.subr.mxu0 0.0
        %1704 = vmatpush1.msra.mxu0 %v846
        %1705 = vmatprep.subr.mxu0 0.0
        %1706 = vmatpush1.msra.mxu0 %v845
        %1707 = vmatprep.subr.mxu0 0.0
        %1708 = vmatpush1.msra.mxu0 %v844
        %1709 = vmatprep.subr.mxu0 0.0
        %1710 = vmatpush1.msra.mxu0 %v843
        %1711 = vmatprep.subr.mxu0 0.0
        %1712 = vmatpush1.msra.mxu0 %v842
        %1713 = vmatprep.subr.mxu0 0.0
        %1714 = vmatpush1.msra.mxu0 %v841
        %1715 = vmatprep.subr.mxu0 0.0
        %1716 = vmatpush1.msra.mxu0 %v840
        %1717 = vmatprep.subr.mxu0 0.0
        %1718 = vmatpush1.msra.mxu0 %v839
        %1719 = vmatprep.subr.mxu0 0.0
        %1720 = vmatpush1.msra.mxu0 %v838
        %1721 = vmatprep.subr.mxu0 0.0
        %1722 = vmatpush1.msra.mxu0 %v837
        %1723 = vmatprep.subr.mxu0 0.0
        %1724 = vmatpush1.msra.mxu0 %v836
        %1725 = vmatprep.subr.mxu0 0.0
        %1726 = vmatpush1.msra.mxu0 %v835
        %1727 = vmatprep.subr.mxu0 0.0
        %1728 = vmatpush1.msra.mxu0 %v834
        %1729 = vmatprep.subr.mxu0 0.0
        %1730 = vmatpush1.msra.mxu0 %v833
        %1731 = vmatprep.subr.mxu0 0.0
        %1732 = vmatpush1.msra.mxu0 %v832
        %1733 = vmatprep.subr.mxu0 0.0
        %1734 = vmatpush1.msra.mxu0 %v831
        %1735 = vmatprep.subr.mxu0 0.0
        %1736 = vmatpush2.msra.mxu0 %v862
        %1737 = vmatprep.subr.mxu0 0.0
        %1738 = vmatpush2.msra.mxu0 %v861
        %1739 = vmatprep.subr.mxu0 0.0
        %1740 = vmatpush2.msra.mxu0 %v860
        %1741 = vmatprep.subr.mxu0 0.0
        %1742 = vmatpush2.msra.mxu0 %v859
        %1743 = vmatprep.subr.mxu0 0.0
        %1744 = vmatpush2.msra.mxu0 %v858
        %1745 = vmatprep.subr.mxu0 0.0
        %1746 = vmatpush2.msra.mxu0 %v857
        %1747 = vmatprep.subr.mxu0 0.0
        %1748 = vmatpush2.msra.mxu0 %v856
        %1749 = vmatprep.subr.mxu0 0.0
        %1750 = vmatpush2.msra.mxu0 %v855
        %1751 = vmatprep.subr.mxu0 0.0
        %1752 = vmatpush2.msra.mxu0 %v854
        %1753 = vmatprep.subr.mxu0 0.0
        %1754 = vmatpush2.msra.mxu0 %v853
        %1755 = vmatprep.subr.mxu0 0.0
        %1756 = vmatpush2.msra.mxu0 %v852
        %1757 = vmatprep.subr.mxu0 0.0
        %1758 = vmatpush2.msra.mxu0 %v851
        %1759 = vmatprep.subr.mxu0 0.0
        %1760 = vmatpush2.msra.mxu0 %v850
        %1761 = vmatprep.subr.mxu0 0.0
        %1762 = vmatpush2.msra.mxu0 %v849
        %1763 = vmatprep.subr.mxu0 0.0
        %1764 = vmatpush2.msra.mxu0 %v848
        %1765 = vmatprep.subr.mxu0 0.0
        %1766 = vmatpush2.msra.mxu0 %v847
        %1767 = vmatprep.mubr.f32.mxu0 %v562
        %1768 = vmatmul.mubr.f32.gmra.mxu0 %v561
        %v1769 = vpop.f32.mrf.mxu0
        %v1770 = vadd.f32 %v1122, %v1769
        %v1771 = vpop.f32.mrf.mxu0
        %1772 = vdwg.mxu0
        %1773 = vmatprep.subr.mxu0 0.0
        %1774 = vmatpush1.msra.mxu0 %v878
        %1775 = vmatprep.subr.mxu0 0.0
        %1776 = vmatpush1.msra.mxu0 %v877
        %1777 = vmatprep.subr.mxu0 0.0
        %1778 = vmatpush1.msra.mxu0 %v876
        %1779 = vmatprep.subr.mxu0 0.0
        %1780 = vmatpush1.msra.mxu0 %v875
        %1781 = vmatprep.subr.mxu0 0.0
        %1782 = vmatpush1.msra.mxu0 %v874
        %1783 = vmatprep.subr.mxu0 0.0
        %1784 = vmatpush1.msra.mxu0 %v873
        %1785 = vmatprep.subr.mxu0 0.0
        %1786 = vmatpush1.msra.mxu0 %v872
        %1787 = vmatprep.subr.mxu0 0.0
        %1788 = vmatpush1.msra.mxu0 %v871
        %1789 = vmatprep.subr.mxu0 0.0
        %1790 = vmatpush1.msra.mxu0 %v870
        %1791 = vmatprep.subr.mxu0 0.0
        %1792 = vmatpush1.msra.mxu0 %v869
        %1793 = vmatprep.subr.mxu0 0.0
        %1794 = vmatpush1.msra.mxu0 %v868
        %1795 = vmatprep.subr.mxu0 0.0
        %1796 = vmatpush1.msra.mxu0 %v867
        %1797 = vmatprep.subr.mxu0 0.0
        %1798 = vmatpush1.msra.mxu0 %v866
        %1799 = vmatprep.subr.mxu0 0.0
        %1800 = vmatpush1.msra.mxu0 %v865
        %1801 = vmatprep.subr.mxu0 0.0
        %1802 = vmatpush1.msra.mxu0 %v864
        %1803 = vmatprep.subr.mxu0 0.0
        %1804 = vmatpush1.msra.mxu0 %v863
        %1805 = vmatprep.subr.mxu0 0.0
        %1806 = vmatpush2.msra.mxu0 %v894
        %1807 = vmatprep.subr.mxu0 0.0
        %1808 = vmatpush2.msra.mxu0 %v893
        %1809 = vmatprep.subr.mxu0 0.0
        %1810 = vmatpush2.msra.mxu0 %v892
        %1811 = vmatprep.subr.mxu0 0.0
        %1812 = vmatpush2.msra.mxu0 %v891
        %1813 = vmatprep.subr.mxu0 0.0
        %1814 = vmatpush2.msra.mxu0 %v890
        %1815 = vmatprep.subr.mxu0 0.0
        %1816 = vmatpush2.msra.mxu0 %v889
        %1817 = vmatprep.subr.mxu0 0.0
        %1818 = vmatpush2.msra.mxu0 %v888
        %1819 = vmatprep.subr.mxu0 0.0
        %1820 = vmatpush2.msra.mxu0 %v887
        %1821 = vmatprep.subr.mxu0 0.0
        %1822 = vmatpush2.msra.mxu0 %v886
        %1823 = vmatprep.subr.mxu0 0.0
        %1824 = vmatpush2.msra.mxu0 %v885
        %1825 = vmatprep.subr.mxu0 0.0
        %1826 = vmatpush2.msra.mxu0 %v884
        %1827 = vmatprep.subr.mxu0 0.0
        %1828 = vmatpush2.msra.mxu0 %v883
        %1829 = vmatprep.subr.mxu0 0.0
        %1830 = vmatpush2.msra.mxu0 %v882
        %1831 = vmatprep.subr.mxu0 0.0
        %1832 = vmatpush2.msra.mxu0 %v881
        %1833 = vmatprep.subr.mxu0 0.0
        %1834 = vmatpush2.msra.mxu0 %v880
        %1835 = vmatprep.subr.mxu0 0.0
        %1836 = vmatpush2.msra.mxu0 %v879
        %1837 = vmatprep.mubr.f32.mxu0 %v564
        %1838 = vmatmul.mubr.f32.gmra.mxu0 %v563
        %v1839 = vpop.f32.mrf.mxu0
        %v1840 = vadd.f32 %v1770, %v1839
        %v1841 = vpop.f32.mrf.mxu0
        %1842 = vdwg.mxu0
        %1843 = vmatprep.subr.mxu0 0.0
        %1844 = vmatpush1.msra.mxu0 %v910
        %1845 = vmatprep.subr.mxu0 0.0
        %1846 = vmatpush1.msra.mxu0 %v909
        %1847 = vmatprep.subr.mxu0 0.0
        %1848 = vmatpush1.msra.mxu0 %v908
        %1849 = vmatprep.subr.mxu0 0.0
        %1850 = vmatpush1.msra.mxu0 %v907
        %1851 = vmatprep.subr.mxu0 0.0
        %1852 = vmatpush1.msra.mxu0 %v906
        %1853 = vmatprep.subr.mxu0 0.0
        %1854 = vmatpush1.msra.mxu0 %v905
        %1855 = vmatprep.subr.mxu0 0.0
        %1856 = vmatpush1.msra.mxu0 %v904
        %1857 = vmatprep.subr.mxu0 0.0
        %1858 = vmatpush1.msra.mxu0 %v903
        %1859 = vmatprep.subr.mxu0 0.0
        %1860 = vmatpush1.msra.mxu0 %v902
        %1861 = vmatprep.subr.mxu0 0.0
        %1862 = vmatpush1.msra.mxu0 %v901
        %1863 = vmatprep.subr.mxu0 0.0
        %1864 = vmatpush1.msra.mxu0 %v900
        %1865 = vmatprep.subr.mxu0 0.0
        %1866 = vmatpush1.msra.mxu0 %v899
        %1867 = vmatprep.subr.mxu0 0.0
        %1868 = vmatpush1.msra.mxu0 %v898
        %1869 = vmatprep.subr.mxu0 0.0
        %1870 = vmatpush1.msra.mxu0 %v897
        %1871 = vmatprep.subr.mxu0 0.0
        %1872 = vmatpush1.msra.mxu0 %v896
        %1873 = vmatprep.subr.mxu0 0.0
        %1874 = vmatpush1.msra.mxu0 %v895
        %1875 = vmatprep.subr.mxu0 0.0
        %1876 = vmatpush2.msra.mxu0 %v926
        %1877 = vmatprep.subr.mxu0 0.0
        %1878 = vmatpush2.msra.mxu0 %v925
        %1879 = vmatprep.subr.mxu0 0.0
        %1880 = vmatpush2.msra.mxu0 %v924
        %1881 = vmatprep.subr.mxu0 0.0
        %1882 = vmatpush2.msra.mxu0 %v923
        %1883 = vmatprep.subr.mxu0 0.0
        %1884 = vmatpush2.msra.mxu0 %v922
        %1885 = vmatprep.subr.mxu0 0.0
        %1886 = vmatpush2.msra.mxu0 %v921
        %1887 = vmatprep.subr.mxu0 0.0
        %1888 = vmatpush2.msra.mxu0 %v920
        %1889 = vmatprep.subr.mxu0 0.0
        %1890 = vmatpush2.msra.mxu0 %v919
        %1891 = vmatprep.subr.mxu0 0.0
        %1892 = vmatpush2.msra.mxu0 %v918
        %1893 = vmatprep.subr.mxu0 0.0
        %1894 = vmatpush2.msra.mxu0 %v917
        %1895 = vmatprep.subr.mxu0 0.0
        %1896 = vmatpush2.msra.mxu0 %v916
        %1897 = vmatprep.subr.mxu0 0.0
        %1898 = vmatpush2.msra.mxu0 %v915
        %1899 = vmatprep.subr.mxu0 0.0
        %1900 = vmatpush2.msra.mxu0 %v914
        %1901 = vmatprep.subr.mxu0 0.0
        %1902 = vmatpush2.msra.mxu0 %v913
        %1903 = vmatprep.subr.mxu0 0.0
        %1904 = vmatpush2.msra.mxu0 %v912
        %1905 = vmatprep.subr.mxu0 0.0
        %1906 = vmatpush2.msra.mxu0 %v911
        %1907 = vmatprep.mubr.f32.mxu0 %v562
        %1908 = vmatmul.mubr.f32.gmra.mxu0 %v561
        %v1909 = vpop.f32.mrf.mxu0
        %v1910 = vadd.f32 %v1126, %v1909
        %v1911 = vpop.f32.mrf.mxu0
        %1912 = vdwg.mxu0
        %1913 = vmatprep.subr.mxu0 0.0
        %1914 = vmatpush1.msra.mxu0 %v942
        %1915 = vmatprep.subr.mxu0 0.0
        %1916 = vmatpush1.msra.mxu0 %v941
        %1917 = vmatprep.subr.mxu0 0.0
        %1918 = vmatpush1.msra.mxu0 %v940
        %1919 = vmatprep.subr.mxu0 0.0
        %1920 = vmatpush1.msra.mxu0 %v939
        %1921 = vmatprep.subr.mxu0 0.0
        %1922 = vmatpush1.msra.mxu0 %v938
        %1923 = vmatprep.subr.mxu0 0.0
        %1924 = vmatpush1.msra.mxu0 %v937
        %1925 = vmatprep.subr.mxu0 0.0
        %1926 = vmatpush1.msra.mxu0 %v936
        %1927 = vmatprep.subr.mxu0 0.0
        %1928 = vmatpush1.msra.mxu0 %v935
        %1929 = vmatprep.subr.mxu0 0.0
        %1930 = vmatpush1.msra.mxu0 %v934
        %1931 = vmatprep.subr.mxu0 0.0
        %1932 = vmatpush1.msra.mxu0 %v933
        %1933 = vmatprep.subr.mxu0 0.0
        %1934 = vmatpush1.msra.mxu0 %v932
        %1935 = vmatprep.subr.mxu0 0.0
        %1936 = vmatpush1.msra.mxu0 %v931
        %1937 = vmatprep.subr.mxu0 0.0
        %1938 = vmatpush1.msra.mxu0 %v930
        %1939 = vmatprep.subr.mxu0 0.0
        %1940 = vmatpush1.msra.mxu0 %v929
        %1941 = vmatprep.subr.mxu0 0.0
        %1942 = vmatpush1.msra.mxu0 %v928
        %1943 = vmatprep.subr.mxu0 0.0
        %1944 = vmatpush1.msra.mxu0 %v927
        %1945 = vmatprep.subr.mxu0 0.0
        %1946 = vmatpush2.msra.mxu0 %v958
        %1947 = vmatprep.subr.mxu0 0.0
        %1948 = vmatpush2.msra.mxu0 %v957
        %1949 = vmatprep.subr.mxu0 0.0
        %1950 = vmatpush2.msra.mxu0 %v956
        %1951 = vmatprep.subr.mxu0 0.0
        %1952 = vmatpush2.msra.mxu0 %v955
        %1953 = vmatprep.subr.mxu0 0.0
        %1954 = vmatpush2.msra.mxu0 %v954
        %1955 = vmatprep.subr.mxu0 0.0
        %1956 = vmatpush2.msra.mxu0 %v953
        %1957 = vmatprep.subr.mxu0 0.0
        %1958 = vmatpush2.msra.mxu0 %v952
        %1959 = vmatprep.subr.mxu0 0.0
        %1960 = vmatpush2.msra.mxu0 %v951
        %1961 = vmatprep.subr.mxu0 0.0
        %1962 = vmatpush2.msra.mxu0 %v950
        %1963 = vmatprep.subr.mxu0 0.0
        %1964 = vmatpush2.msra.mxu0 %v949
        %1965 = vmatprep.subr.mxu0 0.0
        %1966 = vmatpush2.msra.mxu0 %v948
        %1967 = vmatprep.subr.mxu0 0.0
        %1968 = vmatpush2.msra.mxu0 %v947
        %1969 = vmatprep.subr.mxu0 0.0
        %1970 = vmatpush2.msra.mxu0 %v946
        %1971 = vmatprep.subr.mxu0 0.0
        %1972 = vmatpush2.msra.mxu0 %v945
        %1973 = vmatprep.subr.mxu0 0.0
        %1974 = vmatpush2.msra.mxu0 %v944
        %1975 = vmatprep.subr.mxu0 0.0
        %1976 = vmatpush2.msra.mxu0 %v943
        %1977 = vmatprep.mubr.f32.mxu0 %v564
        %1978 = vmatmul.mubr.f32.gmra.mxu0 %v563
        %v1979 = vpop.f32.mrf.mxu0
        %v1980 = vadd.f32 %v1910, %v1979
        %v1981 = vpop.f32.mrf.mxu0
        %1982 = vdwg.mxu0
        %1983 = vmatprep.subr.mxu0 0.0
        %1984 = vmatpush1.msra.mxu0 %v974
        %1985 = vmatprep.subr.mxu0 0.0
        %1986 = vmatpush1.msra.mxu0 %v973
        %1987 = vmatprep.subr.mxu0 0.0
        %1988 = vmatpush1.msra.mxu0 %v972
        %1989 = vmatprep.subr.mxu0 0.0
        %1990 = vmatpush1.msra.mxu0 %v971
        %1991 = vmatprep.subr.mxu0 0.0
        %1992 = vmatpush1.msra.mxu0 %v970
        %1993 = vmatprep.subr.mxu0 0.0
        %1994 = vmatpush1.msra.mxu0 %v969
        %1995 = vmatprep.subr.mxu0 0.0
        %1996 = vmatpush1.msra.mxu0 %v968
        %1997 = vmatprep.subr.mxu0 0.0
        %1998 = vmatpush1.msra.mxu0 %v967
        %1999 = vmatprep.subr.mxu0 0.0
        %2000 = vmatpush1.msra.mxu0 %v966
        %2001 = vmatprep.subr.mxu0 0.0
        %2002 = vmatpush1.msra.mxu0 %v965
        %2003 = vmatprep.subr.mxu0 0.0
        %2004 = vmatpush1.msra.mxu0 %v964
        %2005 = vmatprep.subr.mxu0 0.0
        %2006 = vmatpush1.msra.mxu0 %v963
        %2007 = vmatprep.subr.mxu0 0.0
        %2008 = vmatpush1.msra.mxu0 %v962
        %2009 = vmatprep.subr.mxu0 0.0
        %2010 = vmatpush1.msra.mxu0 %v961
        %2011 = vmatprep.subr.mxu0 0.0
        %2012 = vmatpush1.msra.mxu0 %v960
        %2013 = vmatprep.subr.mxu0 0.0
        %2014 = vmatpush1.msra.mxu0 %v959
        %2015 = vmatprep.subr.mxu0 0.0
        %2016 = vmatpush2.msra.mxu0 %v990
        %2017 = vmatprep.subr.mxu0 0.0
        %2018 = vmatpush2.msra.mxu0 %v989
        %2019 = vmatprep.subr.mxu0 0.0
        %2020 = vmatpush2.msra.mxu0 %v988
        %2021 = vmatprep.subr.mxu0 0.0
        %2022 = vmatpush2.msra.mxu0 %v987
        %2023 = vmatprep.subr.mxu0 0.0
        %2024 = vmatpush2.msra.mxu0 %v986
        %2025 = vmatprep.subr.mxu0 0.0
        %2026 = vmatpush2.msra.mxu0 %v985
        %2027 = vmatprep.subr.mxu0 0.0
        %2028 = vmatpush2.msra.mxu0 %v984
        %2029 = vmatprep.subr.mxu0 0.0
        %2030 = vmatpush2.msra.mxu0 %v983
        %2031 = vmatprep.subr.mxu0 0.0
        %2032 = vmatpush2.msra.mxu0 %v982
        %2033 = vmatprep.subr.mxu0 0.0
        %2034 = vmatpush2.msra.mxu0 %v981
        %2035 = vmatprep.subr.mxu0 0.0
        %2036 = vmatpush2.msra.mxu0 %v980
        %2037 = vmatprep.subr.mxu0 0.0
        %2038 = vmatpush2.msra.mxu0 %v979
        %2039 = vmatprep.subr.mxu0 0.0
        %2040 = vmatpush2.msra.mxu0 %v978
        %2041 = vmatprep.subr.mxu0 0.0
        %2042 = vmatpush2.msra.mxu0 %v977
        %2043 = vmatprep.subr.mxu0 0.0
        %2044 = vmatpush2.msra.mxu0 %v976
        %2045 = vmatprep.subr.mxu0 0.0
        %2046 = vmatpush2.msra.mxu0 %v975
        %2047 = vmatprep.mubr.f32.mxu0 %v562
        %2048 = vmatmul.mubr.f32.gmra.mxu0 %v561
        %v2049 = vpop.f32.mrf.mxu0
        %v2050 = vadd.f32 %v1130, %v2049
        %v2051 = vpop.f32.mrf.mxu0
        %2052 = vdwg.mxu0
        %2053 = vmatprep.subr.mxu0 0.0
        %2054 = vmatpush1.msra.mxu0 %v1006
        %2055 = vmatprep.subr.mxu0 0.0
        %2056 = vmatpush1.msra.mxu0 %v1005
        %2057 = vmatprep.subr.mxu0 0.0
        %2058 = vmatpush1.msra.mxu0 %v1004
        %2059 = vmatprep.subr.mxu0 0.0
        %2060 = vmatpush1.msra.mxu0 %v1003
        %2061 = vmatprep.subr.mxu0 0.0
        %2062 = vmatpush1.msra.mxu0 %v1002
        %2063 = vmatprep.subr.mxu0 0.0
        %2064 = vmatpush1.msra.mxu0 %v1001
        %2065 = vmatprep.subr.mxu0 0.0
        %2066 = vmatpush1.msra.mxu0 %v1000
        %2067 = vmatprep.subr.mxu0 0.0
        %2068 = vmatpush1.msra.mxu0 %v999
        %2069 = vmatprep.subr.mxu0 0.0
        %2070 = vmatpush1.msra.mxu0 %v998
        %2071 = vmatprep.subr.mxu0 0.0
        %2072 = vmatpush1.msra.mxu0 %v997
        %2073 = vmatprep.subr.mxu0 0.0
        %2074 = vmatpush1.msra.mxu0 %v996
        %2075 = vmatprep.subr.mxu0 0.0
        %2076 = vmatpush1.msra.mxu0 %v995
        %2077 = vmatprep.subr.mxu0 0.0
        %2078 = vmatpush1.msra.mxu0 %v994
        %2079 = vmatprep.subr.mxu0 0.0
        %2080 = vmatpush1.msra.mxu0 %v993
        %2081 = vmatprep.subr.mxu0 0.0
        %2082 = vmatpush1.msra.mxu0 %v992
        %2083 = vmatprep.subr.mxu0 0.0
        %2084 = vmatpush1.msra.mxu0 %v991
        %2085 = vmatprep.subr.mxu0 0.0
        %2086 = vmatpush2.msra.mxu0 %v1022
        %2087 = vmatprep.subr.mxu0 0.0
        %2088 = vmatpush2.msra.mxu0 %v1021
        %2089 = vmatprep.subr.mxu0 0.0
        %2090 = vmatpush2.msra.mxu0 %v1020
        %2091 = vmatprep.subr.mxu0 0.0
        %2092 = vmatpush2.msra.mxu0 %v1019
        %2093 = vmatprep.subr.mxu0 0.0
        %2094 = vmatpush2.msra.mxu0 %v1018
        %2095 = vmatprep.subr.mxu0 0.0
        %2096 = vmatpush2.msra.mxu0 %v1017
        %2097 = vmatprep.subr.mxu0 0.0
        %2098 = vmatpush2.msra.mxu0 %v1016
        %2099 = vmatprep.subr.mxu0 0.0
        %2100 = vmatpush2.msra.mxu0 %v1015
        %2101 = vmatprep.subr.mxu0 0.0
        %2102 = vmatpush2.msra.mxu0 %v1014
        %2103 = vmatprep.subr.mxu0 0.0
        %2104 = vmatpush2.msra.mxu0 %v1013
        %2105 = vmatprep.subr.mxu0 0.0
        %2106 = vmatpush2.msra.mxu0 %v1012
        %2107 = vmatprep.subr.mxu0 0.0
        %2108 = vmatpush2.msra.mxu0 %v1011
        %2109 = vmatprep.subr.mxu0 0.0
        %2110 = vmatpush2.msra.mxu0 %v1010
        %2111 = vmatprep.subr.mxu0 0.0
        %2112 = vmatpush2.msra.mxu0 %v1009
        %2113 = vmatprep.subr.mxu0 0.0
        %2114 = vmatpush2.msra.mxu0 %v1008
        %2115 = vmatprep.subr.mxu0 0.0
        %2116 = vmatpush2.msra.mxu0 %v1007
        %2117 = vmatprep.mubr.f32.mxu0 %v564
        %2118 = vmatmul.mubr.f32.gmra.mxu0 %v563
        %v2119 = vpop.f32.mrf.mxu0
        %v2120 = vadd.f32 %v2050, %v2119
        %v2121 = vpop.f32.mrf.mxu0
        %2122 = vdwg.mxu0
        %2123 = vmatprep.subr.mxu0 0.0
        %2124 = vmatpush1.msra.mxu0 %v1038
        %2125 = vmatprep.subr.mxu0 0.0
        %2126 = vmatpush1.msra.mxu0 %v1037
        %2127 = vmatprep.subr.mxu0 0.0
        %2128 = vmatpush1.msra.mxu0 %v1036
        %2129 = vmatprep.subr.mxu0 0.0
        %2130 = vmatpush1.msra.mxu0 %v1035
        %2131 = vmatprep.subr.mxu0 0.0
        %2132 = vmatpush1.msra.mxu0 %v1034
        %2133 = vmatprep.subr.mxu0 0.0
        %2134 = vmatpush1.msra.mxu0 %v1033
        %2135 = vmatprep.subr.mxu0 0.0
        %2136 = vmatpush1.msra.mxu0 %v1032
        %2137 = vmatprep.subr.mxu0 0.0
        %2138 = vmatpush1.msra.mxu0 %v1031
        %2139 = vmatprep.subr.mxu0 0.0
        %2140 = vmatpush1.msra.mxu0 %v1030
        %2141 = vmatprep.subr.mxu0 0.0
        %2142 = vmatpush1.msra.mxu0 %v1029
        %2143 = vmatprep.subr.mxu0 0.0
        %2144 = vmatpush1.msra.mxu0 %v1028
        %2145 = vmatprep.subr.mxu0 0.0
        %2146 = vmatpush1.msra.mxu0 %v1027
        %2147 = vmatprep.subr.mxu0 0.0
        %2148 = vmatpush1.msra.mxu0 %v1026
        %2149 = vmatprep.subr.mxu0 0.0
        %2150 = vmatpush1.msra.mxu0 %v1025
        %2151 = vmatprep.subr.mxu0 0.0
        %2152 = vmatpush1.msra.mxu0 %v1024
        %2153 = vmatprep.subr.mxu0 0.0
        %2154 = vmatpush1.msra.mxu0 %v1023
        %2155 = vmatprep.subr.mxu0 0.0
        %2156 = vmatpush2.msra.mxu0 %v1054
        %2157 = vmatprep.subr.mxu0 0.0
        %2158 = vmatpush2.msra.mxu0 %v1053
        %2159 = vmatprep.subr.mxu0 0.0
        %2160 = vmatpush2.msra.mxu0 %v1052
        %2161 = vmatprep.subr.mxu0 0.0
        %2162 = vmatpush2.msra.mxu0 %v1051
        %2163 = vmatprep.subr.mxu0 0.0
        %2164 = vmatpush2.msra.mxu0 %v1050
        %2165 = vmatprep.subr.mxu0 0.0
        %2166 = vmatpush2.msra.mxu0 %v1049
        %2167 = vmatprep.subr.mxu0 0.0
        %2168 = vmatpush2.msra.mxu0 %v1048
        %2169 = vmatprep.subr.mxu0 0.0
        %2170 = vmatpush2.msra.mxu0 %v1047
        %2171 = vmatprep.subr.mxu0 0.0
        %2172 = vmatpush2.msra.mxu0 %v1046
        %2173 = vmatprep.subr.mxu0 0.0
        %2174 = vmatpush2.msra.mxu0 %v1045
        %2175 = vmatprep.subr.mxu0 0.0
        %2176 = vmatpush2.msra.mxu0 %v1044
        %2177 = vmatprep.subr.mxu0 0.0
        %2178 = vmatpush2.msra.mxu0 %v1043
        %2179 = vmatprep.subr.mxu0 0.0
        %2180 = vmatpush2.msra.mxu0 %v1042
        %2181 = vmatprep.subr.mxu0 0.0
        %2182 = vmatpush2.msra.mxu0 %v1041
        %2183 = vmatprep.subr.mxu0 0.0
        %2184 = vmatpush2.msra.mxu0 %v1040
        %2185 = vmatprep.subr.mxu0 0.0
        %2186 = vmatpush2.msra.mxu0 %v1039
        %2187 = vmatprep.mubr.f32.mxu0 %v562
        %2188 = vmatmul.mubr.f32.gmra.mxu0 %v561
        %v2189 = vpop.f32.mrf.mxu0
        %v2190 = vadd.f32 %v1134, %v2189
        %v2191 = vpop.f32.mrf.mxu0
        %2192 = vdwg.mxu0
        %2193 = vmatprep.subr.mxu0 0.0
        %2194 = vmatpush1.msra.mxu0 %v1070
        %2195 = vmatprep.subr.mxu0 0.0
        %2196 = vmatpush1.msra.mxu0 %v1069
        %2197 = vmatprep.subr.mxu0 0.0
        %2198 = vmatpush1.msra.mxu0 %v1068
        %2199 = vmatprep.subr.mxu0 0.0
        %2200 = vmatpush1.msra.mxu0 %v1067
        %2201 = vmatprep.subr.mxu0 0.0
        %2202 = vmatpush1.msra.mxu0 %v1066
        %2203 = vmatprep.subr.mxu0 0.0
        %2204 = vmatpush1.msra.mxu0 %v1065
        %2205 = vmatprep.subr.mxu0 0.0
        %2206 = vmatpush1.msra.mxu0 %v1064
        %2207 = vmatprep.subr.mxu0 0.0
        %2208 = vmatpush1.msra.mxu0 %v1063
        %2209 = vmatprep.subr.mxu0 0.0
        %2210 = vmatpush1.msra.mxu0 %v1062
        %2211 = vmatprep.subr.mxu0 0.0
        %2212 = vmatpush1.msra.mxu0 %v1061
        %2213 = vmatprep.subr.mxu0 0.0
        %2214 = vmatpush1.msra.mxu0 %v1060
        %2215 = vmatprep.subr.mxu0 0.0
        %2216 = vmatpush1.msra.mxu0 %v1059
        %2217 = vmatprep.subr.mxu0 0.0
        %2218 = vmatpush1.msra.mxu0 %v1058
        %2219 = vmatprep.subr.mxu0 0.0
        %2220 = vmatpush1.msra.mxu0 %v1057
        %2221 = vmatprep.subr.mxu0 0.0
        %2222 = vmatpush1.msra.mxu0 %v1056
        %2223 = vmatprep.subr.mxu0 0.0
        %2224 = vmatpush1.msra.mxu0 %v1055
        %2225 = vmatprep.subr.mxu0 0.0
        %2226 = vmatpush2.msra.mxu0 %v1086
        %2227 = vmatprep.subr.mxu0 0.0
        %2228 = vmatpush2.msra.mxu0 %v1085
        %2229 = vmatprep.subr.mxu0 0.0
        %2230 = vmatpush2.msra.mxu0 %v1084
        %2231 = vmatprep.subr.mxu0 0.0
        %2232 = vmatpush2.msra.mxu0 %v1083
        %2233 = vmatprep.subr.mxu0 0.0
        %2234 = vmatpush2.msra.mxu0 %v1082
        %2235 = vmatprep.subr.mxu0 0.0
        %2236 = vmatpush2.msra.mxu0 %v1081
        %2237 = vmatprep.subr.mxu0 0.0
        %2238 = vmatpush2.msra.mxu0 %v1080
        %2239 = vmatprep.subr.mxu0 0.0
        %2240 = vmatpush2.msra.mxu0 %v1079
        %2241 = vmatprep.subr.mxu0 0.0
        %2242 = vmatpush2.msra.mxu0 %v1078
        %2243 = vmatprep.subr.mxu0 0.0
        %2244 = vmatpush2.msra.mxu0 %v1077
        %2245 = vmatprep.subr.mxu0 0.0
        %2246 = vmatpush2.msra.mxu0 %v1076
        %2247 = vmatprep.subr.mxu0 0.0
        %2248 = vmatpush2.msra.mxu0 %v1075
        %2249 = vmatprep.subr.mxu0 0.0
        %2250 = vmatpush2.msra.mxu0 %v1074
        %2251 = vmatprep.subr.mxu0 0.0
        %2252 = vmatpush2.msra.mxu0 %v1073
        %2253 = vmatprep.subr.mxu0 0.0
        %2254 = vmatpush2.msra.mxu0 %v1072
        %2255 = vmatprep.subr.mxu0 0.0
        %2256 = vmatpush2.msra.mxu0 %v1071
        %2257 = vmatprep.mubr.f32.mxu0 %v564
        %2258 = vmatmul.mubr.f32.gmra.mxu0 %v563
        %v2259 = vpop.f32.mrf.mxu0
        %v2260 = vadd.f32 %v2190, %v2259
        %v2261 = vpop.f32.mrf.mxu0
        %2262 = vdwg.mxu0
        %v2263 = vld [vmem:[%s6] sm:$0xff]
        %v2264 = vld [vmem:[%s6 + $0x8] sm:$0xff]
        %v2265 = vld [vmem:[%s6 + $0x10] sm:$0xff]
        %v2266 = vld [vmem:[%s6 + $0x18] sm:$0xff]
        %v2267 = vld [vmem:[%s6 + $0x20] sm:$0xff]
        %v2268 = vld [vmem:[%s6 + $0x28] sm:$0xff]
        %v2269 = vld [vmem:[%s6 + $0x30] sm:$0xff]
        %v2270 = vld [vmem:[%s6 + $0x38] sm:$0xff]
        %v2271 = vld [vmem:[%s6 + $0x40] sm:$0xff]
        %v2272 = vld [vmem:[%s6 + $0x48] sm:$0xff]
        %v2273 = vld [vmem:[%s6 + $0x50] sm:$0xff]
        %v2274 = vld [vmem:[%s6 + $0x58] sm:$0xff]
        %v2275 = vld [vmem:[%s6 + $0x60] sm:$0xff]
        %v2276 = vld [vmem:[%s6 + $0x68] sm:$0xff]
        %v2277 = vld [vmem:[%s6 + $0x70] sm:$0xff]
        %v2278 = vld [vmem:[%s6 + $0x78] sm:$0xff]
        %v2279 = vld [vmem:[%s6 + $0x80] sm:$0xff]
        %v2280 = vld [vmem:[%s6 + $0x88] sm:$0xff]
        %v2281 = vld [vmem:[%s6 + $0x90] sm:$0xff]
        %v2282 = vld [vmem:[%s6 + $0x98] sm:$0xff]
        %v2283 = vld [vmem:[%s6 + $0xa0] sm:$0xff]
        %v2284 = vld [vmem:[%s6 + $0xa8] sm:$0xff]
        %v2285 = vld [vmem:[%s6 + $0xb0] sm:$0xff]
        %v2286 = vld [vmem:[%s6 + $0xb8] sm:$0xff]
        %v2287 = vld [vmem:[%s6 + $0xc0] sm:$0xff]
        %v2288 = vld [vmem:[%s6 + $0xc8] sm:$0xff]
        %v2289 = vld [vmem:[%s6 + $0xd0] sm:$0xff]
        %v2290 = vld [vmem:[%s6 + $0xd8] sm:$0xff]
        %v2291 = vld [vmem:[%s6 + $0xe0] sm:$0xff]
        %v2292 = vld [vmem:[%s6 + $0xe8] sm:$0xff]
        %v2293 = vld [vmem:[%s6 + $0xf0] sm:$0xff]
        %v2294 = vld [vmem:[%s6 + $0xf8] sm:$0xff]
        %v2295 = vld [vmem:[%s6 + $0x100] sm:$0xff]
        %v2296 = vld [vmem:[%s6 + $0x108] sm:$0xff]
        %v2297 = vld [vmem:[%s6 + $0x110] sm:$0xff]
        %v2298 = vld [vmem:[%s6 + $0x118] sm:$0xff]
        %v2299 = vld [vmem:[%s6 + $0x120] sm:$0xff]
        %v2300 = vld [vmem:[%s6 + $0x128] sm:$0xff]
        %v2301 = vld [vmem:[%s6 + $0x130] sm:$0xff]
        %v2302 = vld [vmem:[%s6 + $0x138] sm:$0xff]
        %v2303 = vld [vmem:[%s6 + $0x140] sm:$0xff]
        %v2304 = vld [vmem:[%s6 + $0x148] sm:$0xff]
        %v2305 = vld [vmem:[%s6 + $0x150] sm:$0xff]
        %v2306 = vld [vmem:[%s6 + $0x158] sm:$0xff]
        %v2307 = vld [vmem:[%s6 + $0x160] sm:$0xff]
        %v2308 = vld [vmem:[%s6 + $0x168] sm:$0xff]
        %v2309 = vld [vmem:[%s6 + $0x170] sm:$0xff]
        %v2310 = vld [vmem:[%s6 + $0x178] sm:$0xff]
        %v2311 = vld [vmem:[%s6 + $0x180] sm:$0xff]
        %v2312 = vld [vmem:[%s6 + $0x188] sm:$0xff]
        %v2313 = vld [vmem:[%s6 + $0x190] sm:$0xff]
        %v2314 = vld [vmem:[%s6 + $0x198] sm:$0xff]
        %v2315 = vld [vmem:[%s6 + $0x1a0] sm:$0xff]
        %v2316 = vld [vmem:[%s6 + $0x1a8] sm:$0xff]
        %v2317 = vld [vmem:[%s6 + $0x1b0] sm:$0xff]
        %v2318 = vld [vmem:[%s6 + $0x1b8] sm:$0xff]
        %v2319 = vld [vmem:[%s6 + $0x1c0] sm:$0xff]
        %v2320 = vld [vmem:[%s6 + $0x1c8] sm:$0xff]
        %v2321 = vld [vmem:[%s6 + $0x1d0] sm:$0xff]
        %v2322 = vld [vmem:[%s6 + $0x1d8] sm:$0xff]
        %v2323 = vld [vmem:[%s6 + $0x1e0] sm:$0xff]
        %v2324 = vld [vmem:[%s6 + $0x1e8] sm:$0xff]
        %v2325 = vld [vmem:[%s6 + $0x1f0] sm:$0xff]
        %v2326 = vld [vmem:[%s6 + $0x1f8] sm:$0xff]
        %v2327 = vld [vmem:[%s6 + $0x200] sm:$0xff]
        %v2328 = vld [vmem:[%s6 + $0x208] sm:$0xff]
        %v2329 = vld [vmem:[%s6 + $0x210] sm:$0xff]
        %v2330 = vld [vmem:[%s6 + $0x218] sm:$0xff]
        %v2331 = vld [vmem:[%s6 + $0x220] sm:$0xff]
        %v2332 = vld [vmem:[%s6 + $0x228] sm:$0xff]
        %v2333 = vld [vmem:[%s6 + $0x230] sm:$0xff]
        %v2334 = vld [vmem:[%s6 + $0x238] sm:$0xff]
        %v2335 = vld [vmem:[%s6 + $0x240] sm:$0xff]
        %v2336 = vld [vmem:[%s6 + $0x248] sm:$0xff]
        %v2337 = vld [vmem:[%s6 + $0x250] sm:$0xff]
        %v2338 = vld [vmem:[%s6 + $0x258] sm:$0xff]
        %v2339 = vld [vmem:[%s6 + $0x260] sm:$0xff]
        %v2340 = vld [vmem:[%s6 + $0x268] sm:$0xff]
        %v2341 = vld [vmem:[%s6 + $0x270] sm:$0xff]
        %v2342 = vld [vmem:[%s6 + $0x278] sm:$0xff]
        %v2343 = vld [vmem:[%s6 + $0x280] sm:$0xff]
        %v2344 = vld [vmem:[%s6 + $0x288] sm:$0xff]
        %v2345 = vld [vmem:[%s6 + $0x290] sm:$0xff]
        %v2346 = vld [vmem:[%s6 + $0x298] sm:$0xff]
        %v2347 = vld [vmem:[%s6 + $0x2a0] sm:$0xff]
        %v2348 = vld [vmem:[%s6 + $0x2a8] sm:$0xff]
        %v2349 = vld [vmem:[%s6 + $0x2b0] sm:$0xff]
        %v2350 = vld [vmem:[%s6 + $0x2b8] sm:$0xff]
        %v2351 = vld [vmem:[%s6 + $0x2c0] sm:$0xff]
        %v2352 = vld [vmem:[%s6 + $0x2c8] sm:$0xff]
        %v2353 = vld [vmem:[%s6 + $0x2d0] sm:$0xff]
        %v2354 = vld [vmem:[%s6 + $0x2d8] sm:$0xff]
        %v2355 = vld [vmem:[%s6 + $0x2e0] sm:$0xff]
        %v2356 = vld [vmem:[%s6 + $0x2e8] sm:$0xff]
        %v2357 = vld [vmem:[%s6 + $0x2f0] sm:$0xff]
        %v2358 = vld [vmem:[%s6 + $0x2f8] sm:$0xff]
        %v2359 = vld [vmem:[%s6 + $0x300] sm:$0xff]
        %v2360 = vld [vmem:[%s6 + $0x308] sm:$0xff]
        %v2361 = vld [vmem:[%s6 + $0x310] sm:$0xff]
        %v2362 = vld [vmem:[%s6 + $0x318] sm:$0xff]
        %v2363 = vld [vmem:[%s6 + $0x320] sm:$0xff]
        %v2364 = vld [vmem:[%s6 + $0x328] sm:$0xff]
        %v2365 = vld [vmem:[%s6 + $0x330] sm:$0xff]
        %v2366 = vld [vmem:[%s6 + $0x338] sm:$0xff]
        %v2367 = vld [vmem:[%s6 + $0x340] sm:$0xff]
        %v2368 = vld [vmem:[%s6 + $0x348] sm:$0xff]
        %v2369 = vld [vmem:[%s6 + $0x350] sm:$0xff]
        %v2370 = vld [vmem:[%s6 + $0x358] sm:$0xff]
        %v2371 = vld [vmem:[%s6 + $0x360] sm:$0xff]
        %v2372 = vld [vmem:[%s6 + $0x368] sm:$0xff]
        %v2373 = vld [vmem:[%s6 + $0x370] sm:$0xff]
        %v2374 = vld [vmem:[%s6 + $0x378] sm:$0xff]
        %v2375 = vld [vmem:[%s6 + $0x380] sm:$0xff]
        %v2376 = vld [vmem:[%s6 + $0x388] sm:$0xff]
        %v2377 = vld [vmem:[%s6 + $0x390] sm:$0xff]
        %v2378 = vld [vmem:[%s6 + $0x398] sm:$0xff]
        %v2379 = vld [vmem:[%s6 + $0x3a0] sm:$0xff]
        %v2380 = vld [vmem:[%s6 + $0x3a8] sm:$0xff]
        %v2381 = vld [vmem:[%s6 + $0x3b0] sm:$0xff]
        %v2382 = vld [vmem:[%s6 + $0x3b8] sm:$0xff]
        %v2383 = vld [vmem:[%s6 + $0x3c0] sm:$0xff]
        %v2384 = vld [vmem:[%s6 + $0x3c8] sm:$0xff]
        %v2385 = vld [vmem:[%s6 + $0x3d0] sm:$0xff]
        %v2386 = vld [vmem:[%s6 + $0x3d8] sm:$0xff]
        %v2387 = vld [vmem:[%s6 + $0x3e0] sm:$0xff]
        %v2388 = vld [vmem:[%s6 + $0x3e8] sm:$0xff]
        %v2389 = vld [vmem:[%s6 + $0x3f0] sm:$0xff]
        %v2390 = vld [vmem:[%s6 + $0x3f8] sm:$0xff]
        %v2391 = vld [vmem:[%s6 + $0x400] sm:$0xff]
        %v2392 = vld [vmem:[%s6 + $0x408] sm:$0xff]
        %v2393 = vld [vmem:[%s6 + $0x410] sm:$0xff]
        %v2394 = vld [vmem:[%s6 + $0x418] sm:$0xff]
        %v2395 = vld [vmem:[%s6 + $0x420] sm:$0xff]
        %v2396 = vld [vmem:[%s6 + $0x428] sm:$0xff]
        %v2397 = vld [vmem:[%s6 + $0x430] sm:$0xff]
        %v2398 = vld [vmem:[%s6 + $0x438] sm:$0xff]
        %v2399 = vld [vmem:[%s6 + $0x440] sm:$0xff]
        %v2400 = vld [vmem:[%s6 + $0x448] sm:$0xff]
        %v2401 = vld [vmem:[%s6 + $0x450] sm:$0xff]
        %v2402 = vld [vmem:[%s6 + $0x458] sm:$0xff]
        %v2403 = vld [vmem:[%s6 + $0x460] sm:$0xff]
        %v2404 = vld [vmem:[%s6 + $0x468] sm:$0xff]
        %v2405 = vld [vmem:[%s6 + $0x470] sm:$0xff]
        %v2406 = vld [vmem:[%s6 + $0x478] sm:$0xff]
        %v2407 = vld [vmem:[%s6 + $0x480] sm:$0xff]
        %v2408 = vld [vmem:[%s6 + $0x488] sm:$0xff]
        %v2409 = vld [vmem:[%s6 + $0x490] sm:$0xff]
        %v2410 = vld [vmem:[%s6 + $0x498] sm:$0xff]
        %v2411 = vld [vmem:[%s6 + $0x4a0] sm:$0xff]
        %v2412 = vld [vmem:[%s6 + $0x4a8] sm:$0xff]
        %v2413 = vld [vmem:[%s6 + $0x4b0] sm:$0xff]
        %v2414 = vld [vmem:[%s6 + $0x4b8] sm:$0xff]
        %v2415 = vld [vmem:[%s6 + $0x4c0] sm:$0xff]
        %v2416 = vld [vmem:[%s6 + $0x4c8] sm:$0xff]
        %v2417 = vld [vmem:[%s6 + $0x4d0] sm:$0xff]
        %v2418 = vld [vmem:[%s6 + $0x4d8] sm:$0xff]
        %v2419 = vld [vmem:[%s6 + $0x4e0] sm:$0xff]
        %v2420 = vld [vmem:[%s6 + $0x4e8] sm:$0xff]
        %v2421 = vld [vmem:[%s6 + $0x4f0] sm:$0xff]
        %v2422 = vld [vmem:[%s6 + $0x4f8] sm:$0xff]
        %v2423 = vld [vmem:[%s6 + $0x500] sm:$0xff]
        %v2424 = vld [vmem:[%s6 + $0x508] sm:$0xff]
        %v2425 = vld [vmem:[%s6 + $0x510] sm:$0xff]
        %v2426 = vld [vmem:[%s6 + $0x518] sm:$0xff]
        %v2427 = vld [vmem:[%s6 + $0x520] sm:$0xff]
        %v2428 = vld [vmem:[%s6 + $0x528] sm:$0xff]
        %v2429 = vld [vmem:[%s6 + $0x530] sm:$0xff]
        %v2430 = vld [vmem:[%s6 + $0x538] sm:$0xff]
        %v2431 = vld [vmem:[%s6 + $0x540] sm:$0xff]
        %v2432 = vld [vmem:[%s6 + $0x548] sm:$0xff]
        %v2433 = vld [vmem:[%s6 + $0x550] sm:$0xff]
        %v2434 = vld [vmem:[%s6 + $0x558] sm:$0xff]
        %v2435 = vld [vmem:[%s6 + $0x560] sm:$0xff]
        %v2436 = vld [vmem:[%s6 + $0x568] sm:$0xff]
        %v2437 = vld [vmem:[%s6 + $0x570] sm:$0xff]
        %v2438 = vld [vmem:[%s6 + $0x578] sm:$0xff]
        %v2439 = vld [vmem:[%s6 + $0x580] sm:$0xff]
        %v2440 = vld [vmem:[%s6 + $0x588] sm:$0xff]
        %v2441 = vld [vmem:[%s6 + $0x590] sm:$0xff]
        %v2442 = vld [vmem:[%s6 + $0x598] sm:$0xff]
        %v2443 = vld [vmem:[%s6 + $0x5a0] sm:$0xff]
        %v2444 = vld [vmem:[%s6 + $0x5a8] sm:$0xff]
        %v2445 = vld [vmem:[%s6 + $0x5b0] sm:$0xff]
        %v2446 = vld [vmem:[%s6 + $0x5b8] sm:$0xff]
        %v2447 = vld [vmem:[%s6 + $0x5c0] sm:$0xff]
        %v2448 = vld [vmem:[%s6 + $0x5c8] sm:$0xff]
        %v2449 = vld [vmem:[%s6 + $0x5d0] sm:$0xff]
        %v2450 = vld [vmem:[%s6 + $0x5d8] sm:$0xff]
        %v2451 = vld [vmem:[%s6 + $0x5e0] sm:$0xff]
        %v2452 = vld [vmem:[%s6 + $0x5e8] sm:$0xff]
        %v2453 = vld [vmem:[%s6 + $0x5f0] sm:$0xff]
        %v2454 = vld [vmem:[%s6 + $0x5f8] sm:$0xff]
        %v2455 = vld [vmem:[%s6 + $0x600] sm:$0xff]
        %v2456 = vld [vmem:[%s6 + $0x608] sm:$0xff]
        %v2457 = vld [vmem:[%s6 + $0x610] sm:$0xff]
        %v2458 = vld [vmem:[%s6 + $0x618] sm:$0xff]
        %v2459 = vld [vmem:[%s6 + $0x620] sm:$0xff]
        %v2460 = vld [vmem:[%s6 + $0x628] sm:$0xff]
        %v2461 = vld [vmem:[%s6 + $0x630] sm:$0xff]
        %v2462 = vld [vmem:[%s6 + $0x638] sm:$0xff]
        %v2463 = vld [vmem:[%s6 + $0x640] sm:$0xff]
        %v2464 = vld [vmem:[%s6 + $0x648] sm:$0xff]
        %v2465 = vld [vmem:[%s6 + $0x650] sm:$0xff]
        %v2466 = vld [vmem:[%s6 + $0x658] sm:$0xff]
        %v2467 = vld [vmem:[%s6 + $0x660] sm:$0xff]
        %v2468 = vld [vmem:[%s6 + $0x668] sm:$0xff]
        %v2469 = vld [vmem:[%s6 + $0x670] sm:$0xff]
        %v2470 = vld [vmem:[%s6 + $0x678] sm:$0xff]
        %v2471 = vld [vmem:[%s6 + $0x680] sm:$0xff]
        %v2472 = vld [vmem:[%s6 + $0x688] sm:$0xff]
        %v2473 = vld [vmem:[%s6 + $0x690] sm:$0xff]
        %v2474 = vld [vmem:[%s6 + $0x698] sm:$0xff]
        %v2475 = vld [vmem:[%s6 + $0x6a0] sm:$0xff]
        %v2476 = vld [vmem:[%s6 + $0x6a8] sm:$0xff]
        %v2477 = vld [vmem:[%s6 + $0x6b0] sm:$0xff]
        %v2478 = vld [vmem:[%s6 + $0x6b8] sm:$0xff]
        %v2479 = vld [vmem:[%s6 + $0x6c0] sm:$0xff]
        %v2480 = vld [vmem:[%s6 + $0x6c8] sm:$0xff]
        %v2481 = vld [vmem:[%s6 + $0x6d0] sm:$0xff]
        %v2482 = vld [vmem:[%s6 + $0x6d8] sm:$0xff]
        %v2483 = vld [vmem:[%s6 + $0x6e0] sm:$0xff]
        %v2484 = vld [vmem:[%s6 + $0x6e8] sm:$0xff]
        %v2485 = vld [vmem:[%s6 + $0x6f0] sm:$0xff]
        %v2486 = vld [vmem:[%s6 + $0x6f8] sm:$0xff]
        %v2487 = vld [vmem:[%s6 + $0x700] sm:$0xff]
        %v2488 = vld [vmem:[%s6 + $0x708] sm:$0xff]
        %v2489 = vld [vmem:[%s6 + $0x710] sm:$0xff]
        %v2490 = vld [vmem:[%s6 + $0x718] sm:$0xff]
        %v2491 = vld [vmem:[%s6 + $0x720] sm:$0xff]
        %v2492 = vld [vmem:[%s6 + $0x728] sm:$0xff]
        %v2493 = vld [vmem:[%s6 + $0x730] sm:$0xff]
        %v2494 = vld [vmem:[%s6 + $0x738] sm:$0xff]
        %v2495 = vld [vmem:[%s6 + $0x740] sm:$0xff]
        %v2496 = vld [vmem:[%s6 + $0x748] sm:$0xff]
        %v2497 = vld [vmem:[%s6 + $0x750] sm:$0xff]
        %v2498 = vld [vmem:[%s6 + $0x758] sm:$0xff]
        %v2499 = vld [vmem:[%s6 + $0x760] sm:$0xff]
        %v2500 = vld [vmem:[%s6 + $0x768] sm:$0xff]
        %v2501 = vld [vmem:[%s6 + $0x770] sm:$0xff]
        %v2502 = vld [vmem:[%s6 + $0x778] sm:$0xff]
        %v2503 = vld [vmem:[%s6 + $0x780] sm:$0xff]
        %v2504 = vld [vmem:[%s6 + $0x788] sm:$0xff]
        %v2505 = vld [vmem:[%s6 + $0x790] sm:$0xff]
        %v2506 = vld [vmem:[%s6 + $0x798] sm:$0xff]
        %v2507 = vld [vmem:[%s6 + $0x7a0] sm:$0xff]
        %v2508 = vld [vmem:[%s6 + $0x7a8] sm:$0xff]
        %v2509 = vld [vmem:[%s6 + $0x7b0] sm:$0xff]
        %v2510 = vld [vmem:[%s6 + $0x7b8] sm:$0xff]
        %v2511 = vld [vmem:[%s6 + $0x7c0] sm:$0xff]
        %v2512 = vld [vmem:[%s6 + $0x7c8] sm:$0xff]
        %v2513 = vld [vmem:[%s6 + $0x7d0] sm:$0xff]
        %v2514 = vld [vmem:[%s6 + $0x7d8] sm:$0xff]
        %v2515 = vld [vmem:[%s6 + $0x7e0] sm:$0xff]
        %v2516 = vld [vmem:[%s6 + $0x7e8] sm:$0xff]
        %v2517 = vld [vmem:[%s6 + $0x7f0] sm:$0xff]
        %v2518 = vld [vmem:[%s6 + $0x7f8] sm:$0xff]
        %v2519 = vld [vmem:[%s6 + $0x800] sm:$0xff]
        %v2520 = vld [vmem:[%s6 + $0x808] sm:$0xff]
        %v2521 = vld [vmem:[%s6 + $0x810] sm:$0xff]
        %v2522 = vld [vmem:[%s6 + $0x818] sm:$0xff]
        %v2523 = vld [vmem:[%s6 + $0x820] sm:$0xff]
        %v2524 = vld [vmem:[%s6 + $0x828] sm:$0xff]
        %v2525 = vld [vmem:[%s6 + $0x830] sm:$0xff]
        %v2526 = vld [vmem:[%s6 + $0x838] sm:$0xff]
        %v2527 = vld [vmem:[%s6 + $0x840] sm:$0xff]
        %v2528 = vld [vmem:[%s6 + $0x848] sm:$0xff]
        %v2529 = vld [vmem:[%s6 + $0x850] sm:$0xff]
        %v2530 = vld [vmem:[%s6 + $0x858] sm:$0xff]
        %v2531 = vld [vmem:[%s6 + $0x860] sm:$0xff]
        %v2532 = vld [vmem:[%s6 + $0x868] sm:$0xff]
        %v2533 = vld [vmem:[%s6 + $0x870] sm:$0xff]
        %v2534 = vld [vmem:[%s6 + $0x878] sm:$0xff]
        %v2535 = vld [vmem:[%s6 + $0x880] sm:$0xff]
        %v2536 = vld [vmem:[%s6 + $0x888] sm:$0xff]
        %v2537 = vld [vmem:[%s6 + $0x890] sm:$0xff]
        %v2538 = vld [vmem:[%s6 + $0x898] sm:$0xff]
        %v2539 = vld [vmem:[%s6 + $0x8a0] sm:$0xff]
        %v2540 = vld [vmem:[%s6 + $0x8a8] sm:$0xff]
        %v2541 = vld [vmem:[%s6 + $0x8b0] sm:$0xff]
        %v2542 = vld [vmem:[%s6 + $0x8b8] sm:$0xff]
        %v2543 = vld [vmem:[%s6 + $0x8c0] sm:$0xff]
        %v2544 = vld [vmem:[%s6 + $0x8c8] sm:$0xff]
        %v2545 = vld [vmem:[%s6 + $0x8d0] sm:$0xff]
        %v2546 = vld [vmem:[%s6 + $0x8d8] sm:$0xff]
        %v2547 = vld [vmem:[%s6 + $0x8e0] sm:$0xff]
        %v2548 = vld [vmem:[%s6 + $0x8e8] sm:$0xff]
        %v2549 = vld [vmem:[%s6 + $0x8f0] sm:$0xff]
        %v2550 = vld [vmem:[%s6 + $0x8f8] sm:$0xff]
        %v2551 = vld [vmem:[%s6 + $0x900] sm:$0xff]
        %v2552 = vld [vmem:[%s6 + $0x908] sm:$0xff]
        %v2553 = vld [vmem:[%s6 + $0x910] sm:$0xff]
        %v2554 = vld [vmem:[%s6 + $0x918] sm:$0xff]
        %v2555 = vld [vmem:[%s6 + $0x920] sm:$0xff]
        %v2556 = vld [vmem:[%s6 + $0x928] sm:$0xff]
        %v2557 = vld [vmem:[%s6 + $0x930] sm:$0xff]
        %v2558 = vld [vmem:[%s6 + $0x938] sm:$0xff]
        %v2559 = vld [vmem:[%s6 + $0x940] sm:$0xff]
        %v2560 = vld [vmem:[%s6 + $0x948] sm:$0xff]
        %v2561 = vld [vmem:[%s6 + $0x950] sm:$0xff]
        %v2562 = vld [vmem:[%s6 + $0x958] sm:$0xff]
        %v2563 = vld [vmem:[%s6 + $0x960] sm:$0xff]
        %v2564 = vld [vmem:[%s6 + $0x968] sm:$0xff]
        %v2565 = vld [vmem:[%s6 + $0x970] sm:$0xff]
        %v2566 = vld [vmem:[%s6 + $0x978] sm:$0xff]
        %v2567 = vld [vmem:[%s6 + $0x980] sm:$0xff]
        %v2568 = vld [vmem:[%s6 + $0x988] sm:$0xff]
        %v2569 = vld [vmem:[%s6 + $0x990] sm:$0xff]
        %v2570 = vld [vmem:[%s6 + $0x998] sm:$0xff]
        %v2571 = vld [vmem:[%s6 + $0x9a0] sm:$0xff]
        %v2572 = vld [vmem:[%s6 + $0x9a8] sm:$0xff]
        %v2573 = vld [vmem:[%s6 + $0x9b0] sm:$0xff]
        %v2574 = vld [vmem:[%s6 + $0x9b8] sm:$0xff]
        %v2575 = vld [vmem:[%s6 + $0x9c0] sm:$0xff]
        %v2576 = vld [vmem:[%s6 + $0x9c8] sm:$0xff]
        %v2577 = vld [vmem:[%s6 + $0x9d0] sm:$0xff]
        %v2578 = vld [vmem:[%s6 + $0x9d8] sm:$0xff]
        %v2579 = vld [vmem:[%s6 + $0x9e0] sm:$0xff]
        %v2580 = vld [vmem:[%s6 + $0x9e8] sm:$0xff]
        %v2581 = vld [vmem:[%s6 + $0x9f0] sm:$0xff]
        %v2582 = vld [vmem:[%s6 + $0x9f8] sm:$0xff]
        %v2583 = vld [vmem:[%s6 + $0xa00] sm:$0xff]
        %v2584 = vld [vmem:[%s6 + $0xa08] sm:$0xff]
        %v2585 = vld [vmem:[%s6 + $0xa10] sm:$0xff]
        %v2586 = vld [vmem:[%s6 + $0xa18] sm:$0xff]
        %v2587 = vld [vmem:[%s6 + $0xa20] sm:$0xff]
        %v2588 = vld [vmem:[%s6 + $0xa28] sm:$0xff]
        %v2589 = vld [vmem:[%s6 + $0xa30] sm:$0xff]
        %v2590 = vld [vmem:[%s6 + $0xa38] sm:$0xff]
        %v2591 = vld [vmem:[%s6 + $0xa40] sm:$0xff]
        %v2592 = vld [vmem:[%s6 + $0xa48] sm:$0xff]
        %v2593 = vld [vmem:[%s6 + $0xa50] sm:$0xff]
        %v2594 = vld [vmem:[%s6 + $0xa58] sm:$0xff]
        %v2595 = vld [vmem:[%s6 + $0xa60] sm:$0xff]
        %v2596 = vld [vmem:[%s6 + $0xa68] sm:$0xff]
        %v2597 = vld [vmem:[%s6 + $0xa70] sm:$0xff]
        %v2598 = vld [vmem:[%s6 + $0xa78] sm:$0xff]
        %v2599 = vld [vmem:[%s6 + $0xa80] sm:$0xff]
        %v2600 = vld [vmem:[%s6 + $0xa88] sm:$0xff]
        %v2601 = vld [vmem:[%s6 + $0xa90] sm:$0xff]
        %v2602 = vld [vmem:[%s6 + $0xa98] sm:$0xff]
        %v2603 = vld [vmem:[%s6 + $0xaa0] sm:$0xff]
        %v2604 = vld [vmem:[%s6 + $0xaa8] sm:$0xff]
        %v2605 = vld [vmem:[%s6 + $0xab0] sm:$0xff]
        %v2606 = vld [vmem:[%s6 + $0xab8] sm:$0xff]
        %v2607 = vld [vmem:[%s6 + $0xac0] sm:$0xff]
        %v2608 = vld [vmem:[%s6 + $0xac8] sm:$0xff]
        %v2609 = vld [vmem:[%s6 + $0xad0] sm:$0xff]
        %v2610 = vld [vmem:[%s6 + $0xad8] sm:$0xff]
        %v2611 = vld [vmem:[%s6 + $0xae0] sm:$0xff]
        %v2612 = vld [vmem:[%s6 + $0xae8] sm:$0xff]
        %v2613 = vld [vmem:[%s6 + $0xaf0] sm:$0xff]
        %v2614 = vld [vmem:[%s6 + $0xaf8] sm:$0xff]
        %v2615 = vld [vmem:[%s6 + $0xb00] sm:$0xff]
        %v2616 = vld [vmem:[%s6 + $0xb08] sm:$0xff]
        %v2617 = vld [vmem:[%s6 + $0xb10] sm:$0xff]
        %v2618 = vld [vmem:[%s6 + $0xb18] sm:$0xff]
        %v2619 = vld [vmem:[%s6 + $0xb20] sm:$0xff]
        %v2620 = vld [vmem:[%s6 + $0xb28] sm:$0xff]
        %v2621 = vld [vmem:[%s6 + $0xb30] sm:$0xff]
        %v2622 = vld [vmem:[%s6 + $0xb38] sm:$0xff]
        %v2623 = vld [vmem:[%s6 + $0xb40] sm:$0xff]
        %v2624 = vld [vmem:[%s6 + $0xb48] sm:$0xff]
        %v2625 = vld [vmem:[%s6 + $0xb50] sm:$0xff]
        %v2626 = vld [vmem:[%s6 + $0xb58] sm:$0xff]
        %v2627 = vld [vmem:[%s6 + $0xb60] sm:$0xff]
        %v2628 = vld [vmem:[%s6 + $0xb68] sm:$0xff]
        %v2629 = vld [vmem:[%s6 + $0xb70] sm:$0xff]
        %v2630 = vld [vmem:[%s6 + $0xb78] sm:$0xff]
        %v2631 = vld [vmem:[%s6 + $0xb80] sm:$0xff]
        %v2632 = vld [vmem:[%s6 + $0xb88] sm:$0xff]
        %v2633 = vld [vmem:[%s6 + $0xb90] sm:$0xff]
        %v2634 = vld [vmem:[%s6 + $0xb98] sm:$0xff]
        %v2635 = vld [vmem:[%s6 + $0xba0] sm:$0xff]
        %v2636 = vld [vmem:[%s6 + $0xba8] sm:$0xff]
        %v2637 = vld [vmem:[%s6 + $0xbb0] sm:$0xff]
        %v2638 = vld [vmem:[%s6 + $0xbb8] sm:$0xff]
        %v2639 = vld [vmem:[%s6 + $0xbc0] sm:$0xff]
        %v2640 = vld [vmem:[%s6 + $0xbc8] sm:$0xff]
        %v2641 = vld [vmem:[%s6 + $0xbd0] sm:$0xff]
        %v2642 = vld [vmem:[%s6 + $0xbd8] sm:$0xff]
        %v2643 = vld [vmem:[%s6 + $0xbe0] sm:$0xff]
        %v2644 = vld [vmem:[%s6 + $0xbe8] sm:$0xff]
        %v2645 = vld [vmem:[%s6 + $0xbf0] sm:$0xff]
        %v2646 = vld [vmem:[%s6 + $0xbf8] sm:$0xff]
        %v2647 = vld [vmem:[%s6 + $0xc00] sm:$0xff]
        %v2648 = vld [vmem:[%s6 + $0xc08] sm:$0xff]
        %v2649 = vld [vmem:[%s6 + $0xc10] sm:$0xff]
        %v2650 = vld [vmem:[%s6 + $0xc18] sm:$0xff]
        %v2651 = vld [vmem:[%s6 + $0xc20] sm:$0xff]
        %v2652 = vld [vmem:[%s6 + $0xc28] sm:$0xff]
        %v2653 = vld [vmem:[%s6 + $0xc30] sm:$0xff]
        %v2654 = vld [vmem:[%s6 + $0xc38] sm:$0xff]
        %v2655 = vld [vmem:[%s6 + $0xc40] sm:$0xff]
        %v2656 = vld [vmem:[%s6 + $0xc48] sm:$0xff]
        %v2657 = vld [vmem:[%s6 + $0xc50] sm:$0xff]
        %v2658 = vld [vmem:[%s6 + $0xc58] sm:$0xff]
        %v2659 = vld [vmem:[%s6 + $0xc60] sm:$0xff]
        %v2660 = vld [vmem:[%s6 + $0xc68] sm:$0xff]
        %v2661 = vld [vmem:[%s6 + $0xc70] sm:$0xff]
        %v2662 = vld [vmem:[%s6 + $0xc78] sm:$0xff]
        %v2663 = vld [vmem:[%s6 + $0xc80] sm:$0xff]
        %v2664 = vld [vmem:[%s6 + $0xc88] sm:$0xff]
        %v2665 = vld [vmem:[%s6 + $0xc90] sm:$0xff]
        %v2666 = vld [vmem:[%s6 + $0xc98] sm:$0xff]
        %v2667 = vld [vmem:[%s6 + $0xca0] sm:$0xff]
        %v2668 = vld [vmem:[%s6 + $0xca8] sm:$0xff]
        %v2669 = vld [vmem:[%s6 + $0xcb0] sm:$0xff]
        %v2670 = vld [vmem:[%s6 + $0xcb8] sm:$0xff]
        %v2671 = vld [vmem:[%s6 + $0xcc0] sm:$0xff]
        %v2672 = vld [vmem:[%s6 + $0xcc8] sm:$0xff]
        %v2673 = vld [vmem:[%s6 + $0xcd0] sm:$0xff]
        %v2674 = vld [vmem:[%s6 + $0xcd8] sm:$0xff]
        %v2675 = vld [vmem:[%s6 + $0xce0] sm:$0xff]
        %v2676 = vld [vmem:[%s6 + $0xce8] sm:$0xff]
        %v2677 = vld [vmem:[%s6 + $0xcf0] sm:$0xff]
        %v2678 = vld [vmem:[%s6 + $0xcf8] sm:$0xff]
        %v2679 = vld [vmem:[%s6 + $0xd00] sm:$0xff]
        %v2680 = vld [vmem:[%s6 + $0xd08] sm:$0xff]
        %v2681 = vld [vmem:[%s6 + $0xd10] sm:$0xff]
        %v2682 = vld [vmem:[%s6 + $0xd18] sm:$0xff]
        %v2683 = vld [vmem:[%s6 + $0xd20] sm:$0xff]
        %v2684 = vld [vmem:[%s6 + $0xd28] sm:$0xff]
        %v2685 = vld [vmem:[%s6 + $0xd30] sm:$0xff]
        %v2686 = vld [vmem:[%s6 + $0xd38] sm:$0xff]
        %v2687 = vld [vmem:[%s6 + $0xd40] sm:$0xff]
        %v2688 = vld [vmem:[%s6 + $0xd48] sm:$0xff]
        %v2689 = vld [vmem:[%s6 + $0xd50] sm:$0xff]
        %v2690 = vld [vmem:[%s6 + $0xd58] sm:$0xff]
        %v2691 = vld [vmem:[%s6 + $0xd60] sm:$0xff]
        %v2692 = vld [vmem:[%s6 + $0xd68] sm:$0xff]
        %v2693 = vld [vmem:[%s6 + $0xd70] sm:$0xff]
        %v2694 = vld [vmem:[%s6 + $0xd78] sm:$0xff]
        %v2695 = vld [vmem:[%s6 + $0xd80] sm:$0xff]
        %v2696 = vld [vmem:[%s6 + $0xd88] sm:$0xff]
        %v2697 = vld [vmem:[%s6 + $0xd90] sm:$0xff]
        %v2698 = vld [vmem:[%s6 + $0xd98] sm:$0xff]
        %v2699 = vld [vmem:[%s6 + $0xda0] sm:$0xff]
        %v2700 = vld [vmem:[%s6 + $0xda8] sm:$0xff]
        %v2701 = vld [vmem:[%s6 + $0xdb0] sm:$0xff]
        %v2702 = vld [vmem:[%s6 + $0xdb8] sm:$0xff]
        %v2703 = vld [vmem:[%s6 + $0xdc0] sm:$0xff]
        %v2704 = vld [vmem:[%s6 + $0xdc8] sm:$0xff]
        %v2705 = vld [vmem:[%s6 + $0xdd0] sm:$0xff]
        %v2706 = vld [vmem:[%s6 + $0xdd8] sm:$0xff]
        %v2707 = vld [vmem:[%s6 + $0xde0] sm:$0xff]
        %v2708 = vld [vmem:[%s6 + $0xde8] sm:$0xff]
        %v2709 = vld [vmem:[%s6 + $0xdf0] sm:$0xff]
        %v2710 = vld [vmem:[%s6 + $0xdf8] sm:$0xff]
        %v2711 = vld [vmem:[%s6 + $0xe00] sm:$0xff]
        %v2712 = vld [vmem:[%s6 + $0xe08] sm:$0xff]
        %v2713 = vld [vmem:[%s6 + $0xe10] sm:$0xff]
        %v2714 = vld [vmem:[%s6 + $0xe18] sm:$0xff]
        %v2715 = vld [vmem:[%s6 + $0xe20] sm:$0xff]
        %v2716 = vld [vmem:[%s6 + $0xe28] sm:$0xff]
        %v2717 = vld [vmem:[%s6 + $0xe30] sm:$0xff]
        %v2718 = vld [vmem:[%s6 + $0xe38] sm:$0xff]
        %v2719 = vld [vmem:[%s6 + $0xe40] sm:$0xff]
        %v2720 = vld [vmem:[%s6 + $0xe48] sm:$0xff]
        %v2721 = vld [vmem:[%s6 + $0xe50] sm:$0xff]
        %v2722 = vld [vmem:[%s6 + $0xe58] sm:$0xff]
        %v2723 = vld [vmem:[%s6 + $0xe60] sm:$0xff]
        %v2724 = vld [vmem:[%s6 + $0xe68] sm:$0xff]
        %v2725 = vld [vmem:[%s6 + $0xe70] sm:$0xff]
        %v2726 = vld [vmem:[%s6 + $0xe78] sm:$0xff]
        %v2727 = vld [vmem:[%s6 + $0xe80] sm:$0xff]
        %v2728 = vld [vmem:[%s6 + $0xe88] sm:$0xff]
        %v2729 = vld [vmem:[%s6 + $0xe90] sm:$0xff]
        %v2730 = vld [vmem:[%s6 + $0xe98] sm:$0xff]
        %v2731 = vld [vmem:[%s6 + $0xea0] sm:$0xff]
        %v2732 = vld [vmem:[%s6 + $0xea8] sm:$0xff]
        %v2733 = vld [vmem:[%s6 + $0xeb0] sm:$0xff]
        %v2734 = vld [vmem:[%s6 + $0xeb8] sm:$0xff]
        %v2735 = vld [vmem:[%s6 + $0xec0] sm:$0xff]
        %v2736 = vld [vmem:[%s6 + $0xec8] sm:$0xff]
        %v2737 = vld [vmem:[%s6 + $0xed0] sm:$0xff]
        %v2738 = vld [vmem:[%s6 + $0xed8] sm:$0xff]
        %v2739 = vld [vmem:[%s6 + $0xee0] sm:$0xff]
        %v2740 = vld [vmem:[%s6 + $0xee8] sm:$0xff]
        %v2741 = vld [vmem:[%s6 + $0xef0] sm:$0xff]
        %v2742 = vld [vmem:[%s6 + $0xef8] sm:$0xff]
        %v2743 = vld [vmem:[%s6 + $0xf00] sm:$0xff]
        %v2744 = vld [vmem:[%s6 + $0xf08] sm:$0xff]
        %v2745 = vld [vmem:[%s6 + $0xf10] sm:$0xff]
        %v2746 = vld [vmem:[%s6 + $0xf18] sm:$0xff]
        %v2747 = vld [vmem:[%s6 + $0xf20] sm:$0xff]
        %v2748 = vld [vmem:[%s6 + $0xf28] sm:$0xff]
        %v2749 = vld [vmem:[%s6 + $0xf30] sm:$0xff]
        %v2750 = vld [vmem:[%s6 + $0xf38] sm:$0xff]
        %v2751 = vld [vmem:[%s6 + $0xf40] sm:$0xff]
        %v2752 = vld [vmem:[%s6 + $0xf48] sm:$0xff]
        %v2753 = vld [vmem:[%s6 + $0xf50] sm:$0xff]
        %v2754 = vld [vmem:[%s6 + $0xf58] sm:$0xff]
        %v2755 = vld [vmem:[%s6 + $0xf60] sm:$0xff]
        %v2756 = vld [vmem:[%s6 + $0xf68] sm:$0xff]
        %v2757 = vld [vmem:[%s6 + $0xf70] sm:$0xff]
        %v2758 = vld [vmem:[%s6 + $0xf78] sm:$0xff]
        %v2759 = vld [vmem:[%s6 + $0xf80] sm:$0xff]
        %v2760 = vld [vmem:[%s6 + $0xf88] sm:$0xff]
        %v2761 = vld [vmem:[%s6 + $0xf90] sm:$0xff]
        %v2762 = vld [vmem:[%s6 + $0xf98] sm:$0xff]
        %v2763 = vld [vmem:[%s6 + $0xfa0] sm:$0xff]
        %v2764 = vld [vmem:[%s6 + $0xfa8] sm:$0xff]
        %v2765 = vld [vmem:[%s6 + $0xfb0] sm:$0xff]
        %v2766 = vld [vmem:[%s6 + $0xfb8] sm:$0xff]
        %v2767 = vld [vmem:[%s6 + $0xfc0] sm:$0xff]
        %v2768 = vld [vmem:[%s6 + $0xfc8] sm:$0xff]
        %v2769 = vld [vmem:[%s6 + $0xfd0] sm:$0xff]
        %v2770 = vld [vmem:[%s6 + $0xfd8] sm:$0xff]
        %v2771 = vld [vmem:[%s6 + $0xfe0] sm:$0xff]
        %v2772 = vld [vmem:[%s6 + $0xfe8] sm:$0xff]
        %v2773 = vld [vmem:[%s6 + $0xff0] sm:$0xff]
        %v2774 = vld [vmem:[%s6 + $0xff8] sm:$0xff]
        %v2775 = vld [vmem:[%s7] sm:$0x1]
        %v2776 = vld [vmem:[%s7 + $0x1] sm:$0x1]
        %v2777 = vld [vmem:[%s7 + $0x2] sm:$0x1]
        %v2778 = vld [vmem:[%s7 + $0x3] sm:$0x1]
        %v2779 = vld [vmem:[%s7 + $0x4] sm:$0x1]
        %v2780 = vld [vmem:[%s7 + $0x5] sm:$0x1]
        %v2781 = vld [vmem:[%s7 + $0x6] sm:$0x1]
        %v2782 = vld [vmem:[%s7 + $0x7] sm:$0x1]
        %v2791 = vlaneseq
        %v2792 = vshrl.u32 %v2791, 7
        %v2793 = vsub.s32 0, %v2792
        %v2794 = vrot.slane %v2775, %v2793
        %v2795 = vlaneseq
        %v2796 = vshrl.u32 %v2795, 7
        %v2797 = vsub.s32 0, %v2796
        %v2798 = vrot.slane %v2776, %v2797
        %v2799 = vlaneseq
        %v2800 = vshrl.u32 %v2799, 7
        %v2801 = vsub.s32 0, %v2800
        %v2802 = vrot.slane %v2777, %v2801
        %v2803 = vlaneseq
        %v2804 = vshrl.u32 %v2803, 7
        %v2805 = vsub.s32 0, %v2804
        %v2806 = vrot.slane %v2778, %v2805
        %v2807 = vlaneseq
        %v2808 = vshrl.u32 %v2807, 7
        %v2809 = vsub.s32 0, %v2808
        %v2810 = vrot.slane %v2779, %v2809
        %v2811 = vlaneseq
        %v2812 = vshrl.u32 %v2811, 7
        %v2813 = vsub.s32 0, %v2812
        %v2814 = vrot.slane %v2780, %v2813
        %v2815 = vlaneseq
        %v2816 = vshrl.u32 %v2815, 7
        %v2817 = vsub.s32 0, %v2816
        %v2818 = vrot.slane %v2781, %v2817
        %v2819 = vlaneseq
        %v2820 = vshrl.u32 %v2819, 7
        %v2821 = vsub.s32 0, %v2820
        %v2822 = vrot.slane %v2782, %v2821
        %2831 = vmatprep.subr.mxu0 0.0
        %2832 = vmatpush1.msra.mxu0 %v2278
        %2833 = vmatprep.subr.mxu0 0.0
        %2834 = vmatpush1.msra.mxu0 %v2277
        %2835 = vmatprep.subr.mxu0 0.0
        %2836 = vmatpush1.msra.mxu0 %v2276
        %2837 = vmatprep.subr.mxu0 0.0
        %2838 = vmatpush1.msra.mxu0 %v2275
        %2839 = vmatprep.subr.mxu0 0.0
        %2840 = vmatpush1.msra.mxu0 %v2274
        %2841 = vmatprep.subr.mxu0 0.0
        %2842 = vmatpush1.msra.mxu0 %v2273
        %2843 = vmatprep.subr.mxu0 0.0
        %2844 = vmatpush1.msra.mxu0 %v2272
        %2845 = vmatprep.subr.mxu0 0.0
        %2846 = vmatpush1.msra.mxu0 %v2271
        %2847 = vmatprep.subr.mxu0 0.0
        %2848 = vmatpush1.msra.mxu0 %v2270
        %2849 = vmatprep.subr.mxu0 0.0
        %2850 = vmatpush1.msra.mxu0 %v2269
        %2851 = vmatprep.subr.mxu0 0.0
        %2852 = vmatpush1.msra.mxu0 %v2268
        %2853 = vmatprep.subr.mxu0 0.0
        %2854 = vmatpush1.msra.mxu0 %v2267
        %2855 = vmatprep.subr.mxu0 0.0
        %2856 = vmatpush1.msra.mxu0 %v2266
        %2857 = vmatprep.subr.mxu0 0.0
        %2858 = vmatpush1.msra.mxu0 %v2265
        %2859 = vmatprep.subr.mxu0 0.0
        %2860 = vmatpush1.msra.mxu0 %v2264
        %2861 = vmatprep.subr.mxu0 0.0
        %2862 = vmatpush1.msra.mxu0 %v2263
        %2863 = vmatprep.subr.mxu0 0.0
        %2864 = vmatpush2.msra.mxu0 %v2294
        %2865 = vmatprep.subr.mxu0 0.0
        %2866 = vmatpush2.msra.mxu0 %v2293
        %2867 = vmatprep.subr.mxu0 0.0
        %2868 = vmatpush2.msra.mxu0 %v2292
        %2869 = vmatprep.subr.mxu0 0.0
        %2870 = vmatpush2.msra.mxu0 %v2291
        %2871 = vmatprep.subr.mxu0 0.0
        %2872 = vmatpush2.msra.mxu0 %v2290
        %2873 = vmatprep.subr.mxu0 0.0
        %2874 = vmatpush2.msra.mxu0 %v2289
        %2875 = vmatprep.subr.mxu0 0.0
        %2876 = vmatpush2.msra.mxu0 %v2288
        %2877 = vmatprep.subr.mxu0 0.0
        %2878 = vmatpush2.msra.mxu0 %v2287
        %2879 = vmatprep.subr.mxu0 0.0
        %2880 = vmatpush2.msra.mxu0 %v2286
        %2881 = vmatprep.subr.mxu0 0.0
        %2882 = vmatpush2.msra.mxu0 %v2285
        %2883 = vmatprep.subr.mxu0 0.0
        %2884 = vmatpush2.msra.mxu0 %v2284
        %2885 = vmatprep.subr.mxu0 0.0
        %2886 = vmatpush2.msra.mxu0 %v2283
        %2887 = vmatprep.subr.mxu0 0.0
        %2888 = vmatpush2.msra.mxu0 %v2282
        %2889 = vmatprep.subr.mxu0 0.0
        %2890 = vmatpush2.msra.mxu0 %v2281
        %2891 = vmatprep.subr.mxu0 0.0
        %2892 = vmatpush2.msra.mxu0 %v2280
        %2893 = vmatprep.subr.mxu0 0.0
        %2894 = vmatpush2.msra.mxu0 %v2279
        %2895 = vmatprep.mubr.f32.mxu0 %v566
        %2896 = vmatmul.mubr.f32.gmra.mxu0 %v565
        %v2897 = vpop.f32.mrf.mxu0
        %v2898 = vadd.f32 %v2794, %v2897
        %v2899 = vpop.f32.mrf.mxu0
        %2900 = vdwg.mxu0
        %2901 = vmatprep.subr.mxu0 0.0
        %2902 = vmatpush1.msra.mxu0 %v2310
        %2903 = vmatprep.subr.mxu0 0.0
        %2904 = vmatpush1.msra.mxu0 %v2309
        %2905 = vmatprep.subr.mxu0 0.0
        %2906 = vmatpush1.msra.mxu0 %v2308
        %2907 = vmatprep.subr.mxu0 0.0
        %2908 = vmatpush1.msra.mxu0 %v2307
        %2909 = vmatprep.subr.mxu0 0.0
        %2910 = vmatpush1.msra.mxu0 %v2306
        %2911 = vmatprep.subr.mxu0 0.0
        %2912 = vmatpush1.msra.mxu0 %v2305
        %2913 = vmatprep.subr.mxu0 0.0
        %2914 = vmatpush1.msra.mxu0 %v2304
        %2915 = vmatprep.subr.mxu0 0.0
        %2916 = vmatpush1.msra.mxu0 %v2303
        %2917 = vmatprep.subr.mxu0 0.0
        %2918 = vmatpush1.msra.mxu0 %v2302
        %2919 = vmatprep.subr.mxu0 0.0
        %2920 = vmatpush1.msra.mxu0 %v2301
        %2921 = vmatprep.subr.mxu0 0.0
        %2922 = vmatpush1.msra.mxu0 %v2300
        %2923 = vmatprep.subr.mxu0 0.0
        %2924 = vmatpush1.msra.mxu0 %v2299
        %2925 = vmatprep.subr.mxu0 0.0
        %2926 = vmatpush1.msra.mxu0 %v2298
        %2927 = vmatprep.subr.mxu0 0.0
        %2928 = vmatpush1.msra.mxu0 %v2297
        %2929 = vmatprep.subr.mxu0 0.0
        %2930 = vmatpush1.msra.mxu0 %v2296
        %2931 = vmatprep.subr.mxu0 0.0
        %2932 = vmatpush1.msra.mxu0 %v2295
        %2933 = vmatprep.subr.mxu0 0.0
        %2934 = vmatpush2.msra.mxu0 %v2326
        %2935 = vmatprep.subr.mxu0 0.0
        %2936 = vmatpush2.msra.mxu0 %v2325
        %2937 = vmatprep.subr.mxu0 0.0
        %2938 = vmatpush2.msra.mxu0 %v2324
        %2939 = vmatprep.subr.mxu0 0.0
        %2940 = vmatpush2.msra.mxu0 %v2323
        %2941 = vmatprep.subr.mxu0 0.0
        %2942 = vmatpush2.msra.mxu0 %v2322
        %2943 = vmatprep.subr.mxu0 0.0
        %2944 = vmatpush2.msra.mxu0 %v2321
        %2945 = vmatprep.subr.mxu0 0.0
        %2946 = vmatpush2.msra.mxu0 %v2320
        %2947 = vmatprep.subr.mxu0 0.0
        %2948 = vmatpush2.msra.mxu0 %v2319
        %2949 = vmatprep.subr.mxu0 0.0
        %2950 = vmatpush2.msra.mxu0 %v2318
        %2951 = vmatprep.subr.mxu0 0.0
        %2952 = vmatpush2.msra.mxu0 %v2317
        %2953 = vmatprep.subr.mxu0 0.0
        %2954 = vmatpush2.msra.mxu0 %v2316
        %2955 = vmatprep.subr.mxu0 0.0
        %2956 = vmatpush2.msra.mxu0 %v2315
        %2957 = vmatprep.subr.mxu0 0.0
        %2958 = vmatpush2.msra.mxu0 %v2314
        %2959 = vmatprep.subr.mxu0 0.0
        %2960 = vmatpush2.msra.mxu0 %v2313
        %2961 = vmatprep.subr.mxu0 0.0
        %2962 = vmatpush2.msra.mxu0 %v2312
        %2963 = vmatprep.subr.mxu0 0.0
        %2964 = vmatpush2.msra.mxu0 %v2311
        %2965 = vmatprep.mubr.f32.mxu0 %v568
        %2966 = vmatmul.mubr.f32.gmra.mxu0 %v567
        %v2967 = vpop.f32.mrf.mxu0
        %v2968 = vadd.f32 %v2898, %v2967
        %v2969 = vpop.f32.mrf.mxu0
        %2970 = vdwg.mxu0
        %2971 = vmatprep.subr.mxu0 0.0
        %2972 = vmatpush1.msra.mxu0 %v2342
        %2973 = vmatprep.subr.mxu0 0.0
        %2974 = vmatpush1.msra.mxu0 %v2341
        %2975 = vmatprep.subr.mxu0 0.0
        %2976 = vmatpush1.msra.mxu0 %v2340
        %2977 = vmatprep.subr.mxu0 0.0
        %2978 = vmatpush1.msra.mxu0 %v2339
        %2979 = vmatprep.subr.mxu0 0.0
        %2980 = vmatpush1.msra.mxu0 %v2338
        %2981 = vmatprep.subr.mxu0 0.0
        %2982 = vmatpush1.msra.mxu0 %v2337
        %2983 = vmatprep.subr.mxu0 0.0
        %2984 = vmatpush1.msra.mxu0 %v2336
        %2985 = vmatprep.subr.mxu0 0.0
        %2986 = vmatpush1.msra.mxu0 %v2335
        %2987 = vmatprep.subr.mxu0 0.0
        %2988 = vmatpush1.msra.mxu0 %v2334
        %2989 = vmatprep.subr.mxu0 0.0
        %2990 = vmatpush1.msra.mxu0 %v2333
        %2991 = vmatprep.subr.mxu0 0.0
        %2992 = vmatpush1.msra.mxu0 %v2332
        %2993 = vmatprep.subr.mxu0 0.0
        %2994 = vmatpush1.msra.mxu0 %v2331
        %2995 = vmatprep.subr.mxu0 0.0
        %2996 = vmatpush1.msra.mxu0 %v2330
        %2997 = vmatprep.subr.mxu0 0.0
        %2998 = vmatpush1.msra.mxu0 %v2329
        %2999 = vmatprep.subr.mxu0 0.0
        %3000 = vmatpush1.msra.mxu0 %v2328
        %3001 = vmatprep.subr.mxu0 0.0
        %3002 = vmatpush1.msra.mxu0 %v2327
        %3003 = vmatprep.subr.mxu0 0.0
        %3004 = vmatpush2.msra.mxu0 %v2358
        %3005 = vmatprep.subr.mxu0 0.0
        %3006 = vmatpush2.msra.mxu0 %v2357
        %3007 = vmatprep.subr.mxu0 0.0
        %3008 = vmatpush2.msra.mxu0 %v2356
        %3009 = vmatprep.subr.mxu0 0.0
        %3010 = vmatpush2.msra.mxu0 %v2355
        %3011 = vmatprep.subr.mxu0 0.0
        %3012 = vmatpush2.msra.mxu0 %v2354
        %3013 = vmatprep.subr.mxu0 0.0
        %3014 = vmatpush2.msra.mxu0 %v2353
        %3015 = vmatprep.subr.mxu0 0.0
        %3016 = vmatpush2.msra.mxu0 %v2352
        %3017 = vmatprep.subr.mxu0 0.0
        %3018 = vmatpush2.msra.mxu0 %v2351
        %3019 = vmatprep.subr.mxu0 0.0
        %3020 = vmatpush2.msra.mxu0 %v2350
        %3021 = vmatprep.subr.mxu0 0.0
        %3022 = vmatpush2.msra.mxu0 %v2349
        %3023 = vmatprep.subr.mxu0 0.0
        %3024 = vmatpush2.msra.mxu0 %v2348
        %3025 = vmatprep.subr.mxu0 0.0
        %3026 = vmatpush2.msra.mxu0 %v2347
        %3027 = vmatprep.subr.mxu0 0.0
        %3028 = vmatpush2.msra.mxu0 %v2346
        %3029 = vmatprep.subr.mxu0 0.0
        %3030 = vmatpush2.msra.mxu0 %v2345
        %3031 = vmatprep.subr.mxu0 0.0
        %3032 = vmatpush2.msra.mxu0 %v2344
        %3033 = vmatprep.subr.mxu0 0.0
        %3034 = vmatpush2.msra.mxu0 %v2343
        %3035 = vmatprep.mubr.f32.mxu0 %v566
        %3036 = vmatmul.mubr.f32.gmra.mxu0 %v565
        %v3037 = vpop.f32.mrf.mxu0
        %v3038 = vadd.f32 %v2798, %v3037
        %v3039 = vpop.f32.mrf.mxu0
        %3040 = vdwg.mxu0
        %3041 = vmatprep.subr.mxu0 0.0
        %3042 = vmatpush1.msra.mxu0 %v2374
        %3043 = vmatprep.subr.mxu0 0.0
        %3044 = vmatpush1.msra.mxu0 %v2373
        %3045 = vmatprep.subr.mxu0 0.0
        %3046 = vmatpush1.msra.mxu0 %v2372
        %3047 = vmatprep.subr.mxu0 0.0
        %3048 = vmatpush1.msra.mxu0 %v2371
        %3049 = vmatprep.subr.mxu0 0.0
        %3050 = vmatpush1.msra.mxu0 %v2370
        %3051 = vmatprep.subr.mxu0 0.0
        %3052 = vmatpush1.msra.mxu0 %v2369
        %3053 = vmatprep.subr.mxu0 0.0
        %3054 = vmatpush1.msra.mxu0 %v2368
        %3055 = vmatprep.subr.mxu0 0.0
        %3056 = vmatpush1.msra.mxu0 %v2367
        %3057 = vmatprep.subr.mxu0 0.0
        %3058 = vmatpush1.msra.mxu0 %v2366
        %3059 = vmatprep.subr.mxu0 0.0
        %3060 = vmatpush1.msra.mxu0 %v2365
        %3061 = vmatprep.subr.mxu0 0.0
        %3062 = vmatpush1.msra.mxu0 %v2364
        %3063 = vmatprep.subr.mxu0 0.0
        %3064 = vmatpush1.msra.mxu0 %v2363
        %3065 = vmatprep.subr.mxu0 0.0
        %3066 = vmatpush1.msra.mxu0 %v2362
        %3067 = vmatprep.subr.mxu0 0.0
        %3068 = vmatpush1.msra.mxu0 %v2361
        %3069 = vmatprep.subr.mxu0 0.0
        %3070 = vmatpush1.msra.mxu0 %v2360
        %3071 = vmatprep.subr.mxu0 0.0
        %3072 = vmatpush1.msra.mxu0 %v2359
        %3073 = vmatprep.subr.mxu0 0.0
        %3074 = vmatpush2.msra.mxu0 %v2390
        %3075 = vmatprep.subr.mxu0 0.0
        %3076 = vmatpush2.msra.mxu0 %v2389
        %3077 = vmatprep.subr.mxu0 0.0
        %3078 = vmatpush2.msra.mxu0 %v2388
        %3079 = vmatprep.subr.mxu0 0.0
        %3080 = vmatpush2.msra.mxu0 %v2387
        %3081 = vmatprep.subr.mxu0 0.0
        %3082 = vmatpush2.msra.mxu0 %v2386
        %3083 = vmatprep.subr.mxu0 0.0
        %3084 = vmatpush2.msra.mxu0 %v2385
        %3085 = vmatprep.subr.mxu0 0.0
        %3086 = vmatpush2.msra.mxu0 %v2384
        %3087 = vmatprep.subr.mxu0 0.0
        %3088 = vmatpush2.msra.mxu0 %v2383
        %3089 = vmatprep.subr.mxu0 0.0
        %3090 = vmatpush2.msra.mxu0 %v2382
        %3091 = vmatprep.subr.mxu0 0.0
        %3092 = vmatpush2.msra.mxu0 %v2381
        %3093 = vmatprep.subr.mxu0 0.0
        %3094 = vmatpush2.msra.mxu0 %v2380
        %3095 = vmatprep.subr.mxu0 0.0
        %3096 = vmatpush2.msra.mxu0 %v2379
        %3097 = vmatprep.subr.mxu0 0.0
        %3098 = vmatpush2.msra.mxu0 %v2378
        %3099 = vmatprep.subr.mxu0 0.0
        %3100 = vmatpush2.msra.mxu0 %v2377
        %3101 = vmatprep.subr.mxu0 0.0
        %3102 = vmatpush2.msra.mxu0 %v2376
        %3103 = vmatprep.subr.mxu0 0.0
        %3104 = vmatpush2.msra.mxu0 %v2375
        %3105 = vmatprep.mubr.f32.mxu0 %v568
        %3106 = vmatmul.mubr.f32.gmra.mxu0 %v567
        %v3107 = vpop.f32.mrf.mxu0
        %v3108 = vadd.f32 %v3038, %v3107
        %v3109 = vpop.f32.mrf.mxu0
        %3110 = vdwg.mxu0
        %3111 = vmatprep.subr.mxu0 0.0
        %3112 = vmatpush1.msra.mxu0 %v2406
        %3113 = vmatprep.subr.mxu0 0.0
        %3114 = vmatpush1.msra.mxu0 %v2405
        %3115 = vmatprep.subr.mxu0 0.0
        %3116 = vmatpush1.msra.mxu0 %v2404
        %3117 = vmatprep.subr.mxu0 0.0
        %3118 = vmatpush1.msra.mxu0 %v2403
        %3119 = vmatprep.subr.mxu0 0.0
        %3120 = vmatpush1.msra.mxu0 %v2402
        %3121 = vmatprep.subr.mxu0 0.0
        %3122 = vmatpush1.msra.mxu0 %v2401
        %3123 = vmatprep.subr.mxu0 0.0
        %3124 = vmatpush1.msra.mxu0 %v2400
        %3125 = vmatprep.subr.mxu0 0.0
        %3126 = vmatpush1.msra.mxu0 %v2399
        %3127 = vmatprep.subr.mxu0 0.0
        %3128 = vmatpush1.msra.mxu0 %v2398
        %3129 = vmatprep.subr.mxu0 0.0
        %3130 = vmatpush1.msra.mxu0 %v2397
        %3131 = vmatprep.subr.mxu0 0.0
        %3132 = vmatpush1.msra.mxu0 %v2396
        %3133 = vmatprep.subr.mxu0 0.0
        %3134 = vmatpush1.msra.mxu0 %v2395
        %3135 = vmatprep.subr.mxu0 0.0
        %3136 = vmatpush1.msra.mxu0 %v2394
        %3137 = vmatprep.subr.mxu0 0.0
        %3138 = vmatpush1.msra.mxu0 %v2393
        %3139 = vmatprep.subr.mxu0 0.0
        %3140 = vmatpush1.msra.mxu0 %v2392
        %3141 = vmatprep.subr.mxu0 0.0
        %3142 = vmatpush1.msra.mxu0 %v2391
        %3143 = vmatprep.subr.mxu0 0.0
        %3144 = vmatpush2.msra.mxu0 %v2422
        %3145 = vmatprep.subr.mxu0 0.0
        %3146 = vmatpush2.msra.mxu0 %v2421
        %3147 = vmatprep.subr.mxu0 0.0
        %3148 = vmatpush2.msra.mxu0 %v2420
        %3149 = vmatprep.subr.mxu0 0.0
        %3150 = vmatpush2.msra.mxu0 %v2419
        %3151 = vmatprep.subr.mxu0 0.0
        %3152 = vmatpush2.msra.mxu0 %v2418
        %3153 = vmatprep.subr.mxu0 0.0
        %3154 = vmatpush2.msra.mxu0 %v2417
        %3155 = vmatprep.subr.mxu0 0.0
        %3156 = vmatpush2.msra.mxu0 %v2416
        %3157 = vmatprep.subr.mxu0 0.0
        %3158 = vmatpush2.msra.mxu0 %v2415
        %3159 = vmatprep.subr.mxu0 0.0
        %3160 = vmatpush2.msra.mxu0 %v2414
        %3161 = vmatprep.subr.mxu0 0.0
        %3162 = vmatpush2.msra.mxu0 %v2413
        %3163 = vmatprep.subr.mxu0 0.0
        %3164 = vmatpush2.msra.mxu0 %v2412
        %3165 = vmatprep.subr.mxu0 0.0
        %3166 = vmatpush2.msra.mxu0 %v2411
        %3167 = vmatprep.subr.mxu0 0.0
        %3168 = vmatpush2.msra.mxu0 %v2410
        %3169 = vmatprep.subr.mxu0 0.0
        %3170 = vmatpush2.msra.mxu0 %v2409
        %3171 = vmatprep.subr.mxu0 0.0
        %3172 = vmatpush2.msra.mxu0 %v2408
        %3173 = vmatprep.subr.mxu0 0.0
        %3174 = vmatpush2.msra.mxu0 %v2407
        %3175 = vmatprep.mubr.f32.mxu0 %v566
        %3176 = vmatmul.mubr.f32.gmra.mxu0 %v565
        %v3177 = vpop.f32.mrf.mxu0
        %v3178 = vadd.f32 %v2802, %v3177
        %v3179 = vpop.f32.mrf.mxu0
        %3180 = vdwg.mxu0
        %3181 = vmatprep.subr.mxu0 0.0
        %3182 = vmatpush1.msra.mxu0 %v2438
        %3183 = vmatprep.subr.mxu0 0.0
        %3184 = vmatpush1.msra.mxu0 %v2437
        %3185 = vmatprep.subr.mxu0 0.0
        %3186 = vmatpush1.msra.mxu0 %v2436
        %3187 = vmatprep.subr.mxu0 0.0
        %3188 = vmatpush1.msra.mxu0 %v2435
        %3189 = vmatprep.subr.mxu0 0.0
        %3190 = vmatpush1.msra.mxu0 %v2434
        %3191 = vmatprep.subr.mxu0 0.0
        %3192 = vmatpush1.msra.mxu0 %v2433
        %3193 = vmatprep.subr.mxu0 0.0
        %3194 = vmatpush1.msra.mxu0 %v2432
        %3195 = vmatprep.subr.mxu0 0.0
        %3196 = vmatpush1.msra.mxu0 %v2431
        %3197 = vmatprep.subr.mxu0 0.0
        %3198 = vmatpush1.msra.mxu0 %v2430
        %3199 = vmatprep.subr.mxu0 0.0
        %3200 = vmatpush1.msra.mxu0 %v2429
        %3201 = vmatprep.subr.mxu0 0.0
        %3202 = vmatpush1.msra.mxu0 %v2428
        %3203 = vmatprep.subr.mxu0 0.0
        %3204 = vmatpush1.msra.mxu0 %v2427
        %3205 = vmatprep.subr.mxu0 0.0
        %3206 = vmatpush1.msra.mxu0 %v2426
        %3207 = vmatprep.subr.mxu0 0.0
        %3208 = vmatpush1.msra.mxu0 %v2425
        %3209 = vmatprep.subr.mxu0 0.0
        %3210 = vmatpush1.msra.mxu0 %v2424
        %3211 = vmatprep.subr.mxu0 0.0
        %3212 = vmatpush1.msra.mxu0 %v2423
        %3213 = vmatprep.subr.mxu0 0.0
        %3214 = vmatpush2.msra.mxu0 %v2454
        %3215 = vmatprep.subr.mxu0 0.0
        %3216 = vmatpush2.msra.mxu0 %v2453
        %3217 = vmatprep.subr.mxu0 0.0
        %3218 = vmatpush2.msra.mxu0 %v2452
        %3219 = vmatprep.subr.mxu0 0.0
        %3220 = vmatpush2.msra.mxu0 %v2451
        %3221 = vmatprep.subr.mxu0 0.0
        %3222 = vmatpush2.msra.mxu0 %v2450
        %3223 = vmatprep.subr.mxu0 0.0
        %3224 = vmatpush2.msra.mxu0 %v2449
        %3225 = vmatprep.subr.mxu0 0.0
        %3226 = vmatpush2.msra.mxu0 %v2448
        %3227 = vmatprep.subr.mxu0 0.0
        %3228 = vmatpush2.msra.mxu0 %v2447
        %3229 = vmatprep.subr.mxu0 0.0
        %3230 = vmatpush2.msra.mxu0 %v2446
        %3231 = vmatprep.subr.mxu0 0.0
        %3232 = vmatpush2.msra.mxu0 %v2445
        %3233 = vmatprep.subr.mxu0 0.0
        %3234 = vmatpush2.msra.mxu0 %v2444
        %3235 = vmatprep.subr.mxu0 0.0
        %3236 = vmatpush2.msra.mxu0 %v2443
        %3237 = vmatprep.subr.mxu0 0.0
        %3238 = vmatpush2.msra.mxu0 %v2442
        %3239 = vmatprep.subr.mxu0 0.0
        %3240 = vmatpush2.msra.mxu0 %v2441
        %3241 = vmatprep.subr.mxu0 0.0
        %3242 = vmatpush2.msra.mxu0 %v2440
        %3243 = vmatprep.subr.mxu0 0.0
        %3244 = vmatpush2.msra.mxu0 %v2439
        %3245 = vmatprep.mubr.f32.mxu0 %v568
        %3246 = vmatmul.mubr.f32.gmra.mxu0 %v567
        %v3247 = vpop.f32.mrf.mxu0
        %v3248 = vadd.f32 %v3178, %v3247
        %v3249 = vpop.f32.mrf.mxu0
        %3250 = vdwg.mxu0
        %3251 = vmatprep.subr.mxu0 0.0
        %3252 = vmatpush1.msra.mxu0 %v2470
        %3253 = vmatprep.subr.mxu0 0.0
        %3254 = vmatpush1.msra.mxu0 %v2469
        %3255 = vmatprep.subr.mxu0 0.0
        %3256 = vmatpush1.msra.mxu0 %v2468
        %3257 = vmatprep.subr.mxu0 0.0
        %3258 = vmatpush1.msra.mxu0 %v2467
        %3259 = vmatprep.subr.mxu0 0.0
        %3260 = vmatpush1.msra.mxu0 %v2466
        %3261 = vmatprep.subr.mxu0 0.0
        %3262 = vmatpush1.msra.mxu0 %v2465
        %3263 = vmatprep.subr.mxu0 0.0
        %3264 = vmatpush1.msra.mxu0 %v2464
        %3265 = vmatprep.subr.mxu0 0.0
        %3266 = vmatpush1.msra.mxu0 %v2463
        %3267 = vmatprep.subr.mxu0 0.0
        %3268 = vmatpush1.msra.mxu0 %v2462
        %3269 = vmatprep.subr.mxu0 0.0
        %3270 = vmatpush1.msra.mxu0 %v2461
        %3271 = vmatprep.subr.mxu0 0.0
        %3272 = vmatpush1.msra.mxu0 %v2460
        %3273 = vmatprep.subr.mxu0 0.0
        %3274 = vmatpush1.msra.mxu0 %v2459
        %3275 = vmatprep.subr.mxu0 0.0
        %3276 = vmatpush1.msra.mxu0 %v2458
        %3277 = vmatprep.subr.mxu0 0.0
        %3278 = vmatpush1.msra.mxu0 %v2457
        %3279 = vmatprep.subr.mxu0 0.0
        %3280 = vmatpush1.msra.mxu0 %v2456
        %3281 = vmatprep.subr.mxu0 0.0
        %3282 = vmatpush1.msra.mxu0 %v2455
        %3283 = vmatprep.subr.mxu0 0.0
        %3284 = vmatpush2.msra.mxu0 %v2486
        %3285 = vmatprep.subr.mxu0 0.0
        %3286 = vmatpush2.msra.mxu0 %v2485
        %3287 = vmatprep.subr.mxu0 0.0
        %3288 = vmatpush2.msra.mxu0 %v2484
        %3289 = vmatprep.subr.mxu0 0.0
        %3290 = vmatpush2.msra.mxu0 %v2483
        %3291 = vmatprep.subr.mxu0 0.0
        %3292 = vmatpush2.msra.mxu0 %v2482
        %3293 = vmatprep.subr.mxu0 0.0
        %3294 = vmatpush2.msra.mxu0 %v2481
        %3295 = vmatprep.subr.mxu0 0.0
        %3296 = vmatpush2.msra.mxu0 %v2480
        %3297 = vmatprep.subr.mxu0 0.0
        %3298 = vmatpush2.msra.mxu0 %v2479
        %3299 = vmatprep.subr.mxu0 0.0
        %3300 = vmatpush2.msra.mxu0 %v2478
        %3301 = vmatprep.subr.mxu0 0.0
        %3302 = vmatpush2.msra.mxu0 %v2477
        %3303 = vmatprep.subr.mxu0 0.0
        %3304 = vmatpush2.msra.mxu0 %v2476
        %3305 = vmatprep.subr.mxu0 0.0
        %3306 = vmatpush2.msra.mxu0 %v2475
        %3307 = vmatprep.subr.mxu0 0.0
        %3308 = vmatpush2.msra.mxu0 %v2474
        %3309 = vmatprep.subr.mxu0 0.0
        %3310 = vmatpush2.msra.mxu0 %v2473
        %3311 = vmatprep.subr.mxu0 0.0
        %3312 = vmatpush2.msra.mxu0 %v2472
        %3313 = vmatprep.subr.mxu0 0.0
        %3314 = vmatpush2.msra.mxu0 %v2471
        %3315 = vmatprep.mubr.f32.mxu0 %v566
        %3316 = vmatmul.mubr.f32.gmra.mxu0 %v565
        %v3317 = vpop.f32.mrf.mxu0
        %v3318 = vadd.f32 %v2806, %v3317
        %v3319 = vpop.f32.mrf.mxu0
        %3320 = vdwg.mxu0
        %3321 = vmatprep.subr.mxu0 0.0
        %3322 = vmatpush1.msra.mxu0 %v2502
        %3323 = vmatprep.subr.mxu0 0.0
        %3324 = vmatpush1.msra.mxu0 %v2501
        %3325 = vmatprep.subr.mxu0 0.0
        %3326 = vmatpush1.msra.mxu0 %v2500
        %3327 = vmatprep.subr.mxu0 0.0
        %3328 = vmatpush1.msra.mxu0 %v2499
        %3329 = vmatprep.subr.mxu0 0.0
        %3330 = vmatpush1.msra.mxu0 %v2498
        %3331 = vmatprep.subr.mxu0 0.0
        %3332 = vmatpush1.msra.mxu0 %v2497
        %3333 = vmatprep.subr.mxu0 0.0
        %3334 = vmatpush1.msra.mxu0 %v2496
        %3335 = vmatprep.subr.mxu0 0.0
        %3336 = vmatpush1.msra.mxu0 %v2495
        %3337 = vmatprep.subr.mxu0 0.0
        %3338 = vmatpush1.msra.mxu0 %v2494
        %3339 = vmatprep.subr.mxu0 0.0
        %3340 = vmatpush1.msra.mxu0 %v2493
        %3341 = vmatprep.subr.mxu0 0.0
        %3342 = vmatpush1.msra.mxu0 %v2492
        %3343 = vmatprep.subr.mxu0 0.0
        %3344 = vmatpush1.msra.mxu0 %v2491
        %3345 = vmatprep.subr.mxu0 0.0
        %3346 = vmatpush1.msra.mxu0 %v2490
        %3347 = vmatprep.subr.mxu0 0.0
        %3348 = vmatpush1.msra.mxu0 %v2489
        %3349 = vmatprep.subr.mxu0 0.0
        %3350 = vmatpush1.msra.mxu0 %v2488
        %3351 = vmatprep.subr.mxu0 0.0
        %3352 = vmatpush1.msra.mxu0 %v2487
        %3353 = vmatprep.subr.mxu0 0.0
        %3354 = vmatpush2.msra.mxu0 %v2518
        %3355 = vmatprep.subr.mxu0 0.0
        %3356 = vmatpush2.msra.mxu0 %v2517
        %3357 = vmatprep.subr.mxu0 0.0
        %3358 = vmatpush2.msra.mxu0 %v2516
        %3359 = vmatprep.subr.mxu0 0.0
        %3360 = vmatpush2.msra.mxu0 %v2515
        %3361 = vmatprep.subr.mxu0 0.0
        %3362 = vmatpush2.msra.mxu0 %v2514
        %3363 = vmatprep.subr.mxu0 0.0
        %3364 = vmatpush2.msra.mxu0 %v2513
        %3365 = vmatprep.subr.mxu0 0.0
        %3366 = vmatpush2.msra.mxu0 %v2512
        %3367 = vmatprep.subr.mxu0 0.0
        %3368 = vmatpush2.msra.mxu0 %v2511
        %3369 = vmatprep.subr.mxu0 0.0
        %3370 = vmatpush2.msra.mxu0 %v2510
        %3371 = vmatprep.subr.mxu0 0.0
        %3372 = vmatpush2.msra.mxu0 %v2509
        %3373 = vmatprep.subr.mxu0 0.0
        %3374 = vmatpush2.msra.mxu0 %v2508
        %3375 = vmatprep.subr.mxu0 0.0
        %3376 = vmatpush2.msra.mxu0 %v2507
        %3377 = vmatprep.subr.mxu0 0.0
        %3378 = vmatpush2.msra.mxu0 %v2506
        %3379 = vmatprep.subr.mxu0 0.0
        %3380 = vmatpush2.msra.mxu0 %v2505
        %3381 = vmatprep.subr.mxu0 0.0
        %3382 = vmatpush2.msra.mxu0 %v2504
        %3383 = vmatprep.subr.mxu0 0.0
        %3384 = vmatpush2.msra.mxu0 %v2503
        %3385 = vmatprep.mubr.f32.mxu0 %v568
        %3386 = vmatmul.mubr.f32.gmra.mxu0 %v567
        %v3387 = vpop.f32.mrf.mxu0
        %v3388 = vadd.f32 %v3318, %v3387
        %v3389 = vpop.f32.mrf.mxu0
        %3390 = vdwg.mxu0
        %3391 = vmatprep.subr.mxu0 0.0
        %3392 = vmatpush1.msra.mxu0 %v2534
        %3393 = vmatprep.subr.mxu0 0.0
        %3394 = vmatpush1.msra.mxu0 %v2533
        %3395 = vmatprep.subr.mxu0 0.0
        %3396 = vmatpush1.msra.mxu0 %v2532
        %3397 = vmatprep.subr.mxu0 0.0
        %3398 = vmatpush1.msra.mxu0 %v2531
        %3399 = vmatprep.subr.mxu0 0.0
        %3400 = vmatpush1.msra.mxu0 %v2530
        %3401 = vmatprep.subr.mxu0 0.0
        %3402 = vmatpush1.msra.mxu0 %v2529
        %3403 = vmatprep.subr.mxu0 0.0
        %3404 = vmatpush1.msra.mxu0 %v2528
        %3405 = vmatprep.subr.mxu0 0.0
        %3406 = vmatpush1.msra.mxu0 %v2527
        %3407 = vmatprep.subr.mxu0 0.0
        %3408 = vmatpush1.msra.mxu0 %v2526
        %3409 = vmatprep.subr.mxu0 0.0
        %3410 = vmatpush1.msra.mxu0 %v2525
        %3411 = vmatprep.subr.mxu0 0.0
        %3412 = vmatpush1.msra.mxu0 %v2524
        %3413 = vmatprep.subr.mxu0 0.0
        %3414 = vmatpush1.msra.mxu0 %v2523
        %3415 = vmatprep.subr.mxu0 0.0
        %3416 = vmatpush1.msra.mxu0 %v2522
        %3417 = vmatprep.subr.mxu0 0.0
        %3418 = vmatpush1.msra.mxu0 %v2521
        %3419 = vmatprep.subr.mxu0 0.0
        %3420 = vmatpush1.msra.mxu0 %v2520
        %3421 = vmatprep.subr.mxu0 0.0
        %3422 = vmatpush1.msra.mxu0 %v2519
        %3423 = vmatprep.subr.mxu0 0.0
        %3424 = vmatpush2.msra.mxu0 %v2550
        %3425 = vmatprep.subr.mxu0 0.0
        %3426 = vmatpush2.msra.mxu0 %v2549
        %3427 = vmatprep.subr.mxu0 0.0
        %3428 = vmatpush2.msra.mxu0 %v2548
        %3429 = vmatprep.subr.mxu0 0.0
        %3430 = vmatpush2.msra.mxu0 %v2547
        %3431 = vmatprep.subr.mxu0 0.0
        %3432 = vmatpush2.msra.mxu0 %v2546
        %3433 = vmatprep.subr.mxu0 0.0
        %3434 = vmatpush2.msra.mxu0 %v2545
        %3435 = vmatprep.subr.mxu0 0.0
        %3436 = vmatpush2.msra.mxu0 %v2544
        %3437 = vmatprep.subr.mxu0 0.0
        %3438 = vmatpush2.msra.mxu0 %v2543
        %3439 = vmatprep.subr.mxu0 0.0
        %3440 = vmatpush2.msra.mxu0 %v2542
        %3441 = vmatprep.subr.mxu0 0.0
        %3442 = vmatpush2.msra.mxu0 %v2541
        %3443 = vmatprep.subr.mxu0 0.0
        %3444 = vmatpush2.msra.mxu0 %v2540
        %3445 = vmatprep.subr.mxu0 0.0
        %3446 = vmatpush2.msra.mxu0 %v2539
        %3447 = vmatprep.subr.mxu0 0.0
        %3448 = vmatpush2.msra.mxu0 %v2538
        %3449 = vmatprep.subr.mxu0 0.0
        %3450 = vmatpush2.msra.mxu0 %v2537
        %3451 = vmatprep.subr.mxu0 0.0
        %3452 = vmatpush2.msra.mxu0 %v2536
        %3453 = vmatprep.subr.mxu0 0.0
        %3454 = vmatpush2.msra.mxu0 %v2535
        %3455 = vmatprep.mubr.f32.mxu0 %v566
        %3456 = vmatmul.mubr.f32.gmra.mxu0 %v565
        %v3457 = vpop.f32.mrf.mxu0
        %v3458 = vadd.f32 %v2810, %v3457
        %v3459 = vpop.f32.mrf.mxu0
        %3460 = vdwg.mxu0
        %3461 = vmatprep.subr.mxu0 0.0
        %3462 = vmatpush1.msra.mxu0 %v2566
        %3463 = vmatprep.subr.mxu0 0.0
        %3464 = vmatpush1.msra.mxu0 %v2565
        %3465 = vmatprep.subr.mxu0 0.0
        %3466 = vmatpush1.msra.mxu0 %v2564
        %3467 = vmatprep.subr.mxu0 0.0
        %3468 = vmatpush1.msra.mxu0 %v2563
        %3469 = vmatprep.subr.mxu0 0.0
        %3470 = vmatpush1.msra.mxu0 %v2562
        %3471 = vmatprep.subr.mxu0 0.0
        %3472 = vmatpush1.msra.mxu0 %v2561
        %3473 = vmatprep.subr.mxu0 0.0
        %3474 = vmatpush1.msra.mxu0 %v2560
        %3475 = vmatprep.subr.mxu0 0.0
        %3476 = vmatpush1.msra.mxu0 %v2559
        %3477 = vmatprep.subr.mxu0 0.0
        %3478 = vmatpush1.msra.mxu0 %v2558
        %3479 = vmatprep.subr.mxu0 0.0
        %3480 = vmatpush1.msra.mxu0 %v2557
        %3481 = vmatprep.subr.mxu0 0.0
        %3482 = vmatpush1.msra.mxu0 %v2556
        %3483 = vmatprep.subr.mxu0 0.0
        %3484 = vmatpush1.msra.mxu0 %v2555
        %3485 = vmatprep.subr.mxu0 0.0
        %3486 = vmatpush1.msra.mxu0 %v2554
        %3487 = vmatprep.subr.mxu0 0.0
        %3488 = vmatpush1.msra.mxu0 %v2553
        %3489 = vmatprep.subr.mxu0 0.0
        %3490 = vmatpush1.msra.mxu0 %v2552
        %3491 = vmatprep.subr.mxu0 0.0
        %3492 = vmatpush1.msra.mxu0 %v2551
        %3493 = vmatprep.subr.mxu0 0.0
        %3494 = vmatpush2.msra.mxu0 %v2582
        %3495 = vmatprep.subr.mxu0 0.0
        %3496 = vmatpush2.msra.mxu0 %v2581
        %3497 = vmatprep.subr.mxu0 0.0
        %3498 = vmatpush2.msra.mxu0 %v2580
        %3499 = vmatprep.subr.mxu0 0.0
        %3500 = vmatpush2.msra.mxu0 %v2579
        %3501 = vmatprep.subr.mxu0 0.0
        %3502 = vmatpush2.msra.mxu0 %v2578
        %3503 = vmatprep.subr.mxu0 0.0
        %3504 = vmatpush2.msra.mxu0 %v2577
        %3505 = vmatprep.subr.mxu0 0.0
        %3506 = vmatpush2.msra.mxu0 %v2576
        %3507 = vmatprep.subr.mxu0 0.0
        %3508 = vmatpush2.msra.mxu0 %v2575
        %3509 = vmatprep.subr.mxu0 0.0
        %3510 = vmatpush2.msra.mxu0 %v2574
        %3511 = vmatprep.subr.mxu0 0.0
        %3512 = vmatpush2.msra.mxu0 %v2573
        %3513 = vmatprep.subr.mxu0 0.0
        %3514 = vmatpush2.msra.mxu0 %v2572
        %3515 = vmatprep.subr.mxu0 0.0
        %3516 = vmatpush2.msra.mxu0 %v2571
        %3517 = vmatprep.subr.mxu0 0.0
        %3518 = vmatpush2.msra.mxu0 %v2570
        %3519 = vmatprep.subr.mxu0 0.0
        %3520 = vmatpush2.msra.mxu0 %v2569
        %3521 = vmatprep.subr.mxu0 0.0
        %3522 = vmatpush2.msra.mxu0 %v2568
        %3523 = vmatprep.subr.mxu0 0.0
        %3524 = vmatpush2.msra.mxu0 %v2567
        %3525 = vmatprep.mubr.f32.mxu0 %v568
        %3526 = vmatmul.mubr.f32.gmra.mxu0 %v567
        %v3527 = vpop.f32.mrf.mxu0
        %v3528 = vadd.f32 %v3458, %v3527
        %v3529 = vpop.f32.mrf.mxu0
        %3530 = vdwg.mxu0
        %3531 = vmatprep.subr.mxu0 0.0
        %3532 = vmatpush1.msra.mxu0 %v2598
        %3533 = vmatprep.subr.mxu0 0.0
        %3534 = vmatpush1.msra.mxu0 %v2597
        %3535 = vmatprep.subr.mxu0 0.0
        %3536 = vmatpush1.msra.mxu0 %v2596
        %3537 = vmatprep.subr.mxu0 0.0
        %3538 = vmatpush1.msra.mxu0 %v2595
        %3539 = vmatprep.subr.mxu0 0.0
        %3540 = vmatpush1.msra.mxu0 %v2594
        %3541 = vmatprep.subr.mxu0 0.0
        %3542 = vmatpush1.msra.mxu0 %v2593
        %3543 = vmatprep.subr.mxu0 0.0
        %3544 = vmatpush1.msra.mxu0 %v2592
        %3545 = vmatprep.subr.mxu0 0.0
        %3546 = vmatpush1.msra.mxu0 %v2591
        %3547 = vmatprep.subr.mxu0 0.0
        %3548 = vmatpush1.msra.mxu0 %v2590
        %3549 = vmatprep.subr.mxu0 0.0
        %3550 = vmatpush1.msra.mxu0 %v2589
        %3551 = vmatprep.subr.mxu0 0.0
        %3552 = vmatpush1.msra.mxu0 %v2588
        %3553 = vmatprep.subr.mxu0 0.0
        %3554 = vmatpush1.msra.mxu0 %v2587
        %3555 = vmatprep.subr.mxu0 0.0
        %3556 = vmatpush1.msra.mxu0 %v2586
        %3557 = vmatprep.subr.mxu0 0.0
        %3558 = vmatpush1.msra.mxu0 %v2585
        %3559 = vmatprep.subr.mxu0 0.0
        %3560 = vmatpush1.msra.mxu0 %v2584
        %3561 = vmatprep.subr.mxu0 0.0
        %3562 = vmatpush1.msra.mxu0 %v2583
        %3563 = vmatprep.subr.mxu0 0.0
        %3564 = vmatpush2.msra.mxu0 %v2614
        %3565 = vmatprep.subr.mxu0 0.0
        %3566 = vmatpush2.msra.mxu0 %v2613
        %3567 = vmatprep.subr.mxu0 0.0
        %3568 = vmatpush2.msra.mxu0 %v2612
        %3569 = vmatprep.subr.mxu0 0.0
        %3570 = vmatpush2.msra.mxu0 %v2611
        %3571 = vmatprep.subr.mxu0 0.0
        %3572 = vmatpush2.msra.mxu0 %v2610
        %3573 = vmatprep.subr.mxu0 0.0
        %3574 = vmatpush2.msra.mxu0 %v2609
        %3575 = vmatprep.subr.mxu0 0.0
        %3576 = vmatpush2.msra.mxu0 %v2608
        %3577 = vmatprep.subr.mxu0 0.0
        %3578 = vmatpush2.msra.mxu0 %v2607
        %3579 = vmatprep.subr.mxu0 0.0
        %3580 = vmatpush2.msra.mxu0 %v2606
        %3581 = vmatprep.subr.mxu0 0.0
        %3582 = vmatpush2.msra.mxu0 %v2605
        %3583 = vmatprep.subr.mxu0 0.0
        %3584 = vmatpush2.msra.mxu0 %v2604
        %3585 = vmatprep.subr.mxu0 0.0
        %3586 = vmatpush2.msra.mxu0 %v2603
        %3587 = vmatprep.subr.mxu0 0.0
        %3588 = vmatpush2.msra.mxu0 %v2602
        %3589 = vmatprep.subr.mxu0 0.0
        %3590 = vmatpush2.msra.mxu0 %v2601
        %3591 = vmatprep.subr.mxu0 0.0
        %3592 = vmatpush2.msra.mxu0 %v2600
        %3593 = vmatprep.subr.mxu0 0.0
        %3594 = vmatpush2.msra.mxu0 %v2599
        %3595 = vmatprep.mubr.f32.mxu0 %v566
        %3596 = vmatmul.mubr.f32.gmra.mxu0 %v565
        %v3597 = vpop.f32.mrf.mxu0
        %v3598 = vadd.f32 %v2814, %v3597
        %v3599 = vpop.f32.mrf.mxu0
        %3600 = vdwg.mxu0
        %3601 = vmatprep.subr.mxu0 0.0
        %3602 = vmatpush1.msra.mxu0 %v2630
        %3603 = vmatprep.subr.mxu0 0.0
        %3604 = vmatpush1.msra.mxu0 %v2629
        %3605 = vmatprep.subr.mxu0 0.0
        %3606 = vmatpush1.msra.mxu0 %v2628
        %3607 = vmatprep.subr.mxu0 0.0
        %3608 = vmatpush1.msra.mxu0 %v2627
        %3609 = vmatprep.subr.mxu0 0.0
        %3610 = vmatpush1.msra.mxu0 %v2626
        %3611 = vmatprep.subr.mxu0 0.0
        %3612 = vmatpush1.msra.mxu0 %v2625
        %3613 = vmatprep.subr.mxu0 0.0
        %3614 = vmatpush1.msra.mxu0 %v2624
        %3615 = vmatprep.subr.mxu0 0.0
        %3616 = vmatpush1.msra.mxu0 %v2623
        %3617 = vmatprep.subr.mxu0 0.0
        %3618 = vmatpush1.msra.mxu0 %v2622
        %3619 = vmatprep.subr.mxu0 0.0
        %3620 = vmatpush1.msra.mxu0 %v2621
        %3621 = vmatprep.subr.mxu0 0.0
        %3622 = vmatpush1.msra.mxu0 %v2620
        %3623 = vmatprep.subr.mxu0 0.0
        %3624 = vmatpush1.msra.mxu0 %v2619
        %3625 = vmatprep.subr.mxu0 0.0
        %3626 = vmatpush1.msra.mxu0 %v2618
        %3627 = vmatprep.subr.mxu0 0.0
        %3628 = vmatpush1.msra.mxu0 %v2617
        %3629 = vmatprep.subr.mxu0 0.0
        %3630 = vmatpush1.msra.mxu0 %v2616
        %3631 = vmatprep.subr.mxu0 0.0
        %3632 = vmatpush1.msra.mxu0 %v2615
        %3633 = vmatprep.subr.mxu0 0.0
        %3634 = vmatpush2.msra.mxu0 %v2646
        %3635 = vmatprep.subr.mxu0 0.0
        %3636 = vmatpush2.msra.mxu0 %v2645
        %3637 = vmatprep.subr.mxu0 0.0
        %3638 = vmatpush2.msra.mxu0 %v2644
        %3639 = vmatprep.subr.mxu0 0.0
        %3640 = vmatpush2.msra.mxu0 %v2643
        %3641 = vmatprep.subr.mxu0 0.0
        %3642 = vmatpush2.msra.mxu0 %v2642
        %3643 = vmatprep.subr.mxu0 0.0
        %3644 = vmatpush2.msra.mxu0 %v2641
        %3645 = vmatprep.subr.mxu0 0.0
        %3646 = vmatpush2.msra.mxu0 %v2640
        %3647 = vmatprep.subr.mxu0 0.0
        %3648 = vmatpush2.msra.mxu0 %v2639
        %3649 = vmatprep.subr.mxu0 0.0
        %3650 = vmatpush2.msra.mxu0 %v2638
        %3651 = vmatprep.subr.mxu0 0.0
        %3652 = vmatpush2.msra.mxu0 %v2637
        %3653 = vmatprep.subr.mxu0 0.0
        %3654 = vmatpush2.msra.mxu0 %v2636
        %3655 = vmatprep.subr.mxu0 0.0
        %3656 = vmatpush2.msra.mxu0 %v2635
        %3657 = vmatprep.subr.mxu0 0.0
        %3658 = vmatpush2.msra.mxu0 %v2634
        %3659 = vmatprep.subr.mxu0 0.0
        %3660 = vmatpush2.msra.mxu0 %v2633
        %3661 = vmatprep.subr.mxu0 0.0
        %3662 = vmatpush2.msra.mxu0 %v2632
        %3663 = vmatprep.subr.mxu0 0.0
        %3664 = vmatpush2.msra.mxu0 %v2631
        %3665 = vmatprep.mubr.f32.mxu0 %v568
        %3666 = vmatmul.mubr.f32.gmra.mxu0 %v567
        %v3667 = vpop.f32.mrf.mxu0
        %v3668 = vadd.f32 %v3598, %v3667
        %v3669 = vpop.f32.mrf.mxu0
        %3670 = vdwg.mxu0
        %3671 = vmatprep.subr.mxu0 0.0
        %3672 = vmatpush1.msra.mxu0 %v2662
        %3673 = vmatprep.subr.mxu0 0.0
        %3674 = vmatpush1.msra.mxu0 %v2661
        %3675 = vmatprep.subr.mxu0 0.0
        %3676 = vmatpush1.msra.mxu0 %v2660
        %3677 = vmatprep.subr.mxu0 0.0
        %3678 = vmatpush1.msra.mxu0 %v2659
        %3679 = vmatprep.subr.mxu0 0.0
        %3680 = vmatpush1.msra.mxu0 %v2658
        %3681 = vmatprep.subr.mxu0 0.0
        %3682 = vmatpush1.msra.mxu0 %v2657
        %3683 = vmatprep.subr.mxu0 0.0
        %3684 = vmatpush1.msra.mxu0 %v2656
        %3685 = vmatprep.subr.mxu0 0.0
        %3686 = vmatpush1.msra.mxu0 %v2655
        %3687 = vmatprep.subr.mxu0 0.0
        %3688 = vmatpush1.msra.mxu0 %v2654
        %3689 = vmatprep.subr.mxu0 0.0
        %3690 = vmatpush1.msra.mxu0 %v2653
        %3691 = vmatprep.subr.mxu0 0.0
        %3692 = vmatpush1.msra.mxu0 %v2652
        %3693 = vmatprep.subr.mxu0 0.0
        %3694 = vmatpush1.msra.mxu0 %v2651
        %3695 = vmatprep.subr.mxu0 0.0
        %3696 = vmatpush1.msra.mxu0 %v2650
        %3697 = vmatprep.subr.mxu0 0.0
        %3698 = vmatpush1.msra.mxu0 %v2649
        %3699 = vmatprep.subr.mxu0 0.0
        %3700 = vmatpush1.msra.mxu0 %v2648
        %3701 = vmatprep.subr.mxu0 0.0
        %3702 = vmatpush1.msra.mxu0 %v2647
        %3703 = vmatprep.subr.mxu0 0.0
        %3704 = vmatpush2.msra.mxu0 %v2678
        %3705 = vmatprep.subr.mxu0 0.0
        %3706 = vmatpush2.msra.mxu0 %v2677
        %3707 = vmatprep.subr.mxu0 0.0
        %3708 = vmatpush2.msra.mxu0 %v2676
        %3709 = vmatprep.subr.mxu0 0.0
        %3710 = vmatpush2.msra.mxu0 %v2675
        %3711 = vmatprep.subr.mxu0 0.0
        %3712 = vmatpush2.msra.mxu0 %v2674
        %3713 = vmatprep.subr.mxu0 0.0
        %3714 = vmatpush2.msra.mxu0 %v2673
        %3715 = vmatprep.subr.mxu0 0.0
        %3716 = vmatpush2.msra.mxu0 %v2672
        %3717 = vmatprep.subr.mxu0 0.0
        %3718 = vmatpush2.msra.mxu0 %v2671
        %3719 = vmatprep.subr.mxu0 0.0
        %3720 = vmatpush2.msra.mxu0 %v2670
        %3721 = vmatprep.subr.mxu0 0.0
        %3722 = vmatpush2.msra.mxu0 %v2669
        %3723 = vmatprep.subr.mxu0 0.0
        %3724 = vmatpush2.msra.mxu0 %v2668
        %3725 = vmatprep.subr.mxu0 0.0
        %3726 = vmatpush2.msra.mxu0 %v2667
        %3727 = vmatprep.subr.mxu0 0.0
        %3728 = vmatpush2.msra.mxu0 %v2666
        %3729 = vmatprep.subr.mxu0 0.0
        %3730 = vmatpush2.msra.mxu0 %v2665
        %3731 = vmatprep.subr.mxu0 0.0
        %3732 = vmatpush2.msra.mxu0 %v2664
        %3733 = vmatprep.subr.mxu0 0.0
        %3734 = vmatpush2.msra.mxu0 %v2663
        %3735 = vmatprep.mubr.f32.mxu0 %v566
        %3736 = vmatmul.mubr.f32.gmra.mxu0 %v565
        %v3737 = vpop.f32.mrf.mxu0
        %v3738 = vadd.f32 %v2818, %v3737
        %v3739 = vpop.f32.mrf.mxu0
        %3740 = vdwg.mxu0
        %3741 = vmatprep.subr.mxu0 0.0
        %3742 = vmatpush1.msra.mxu0 %v2694
        %3743 = vmatprep.subr.mxu0 0.0
        %3744 = vmatpush1.msra.mxu0 %v2693
        %3745 = vmatprep.subr.mxu0 0.0
        %3746 = vmatpush1.msra.mxu0 %v2692
        %3747 = vmatprep.subr.mxu0 0.0
        %3748 = vmatpush1.msra.mxu0 %v2691
        %3749 = vmatprep.subr.mxu0 0.0
        %3750 = vmatpush1.msra.mxu0 %v2690
        %3751 = vmatprep.subr.mxu0 0.0
        %3752 = vmatpush1.msra.mxu0 %v2689
        %3753 = vmatprep.subr.mxu0 0.0
        %3754 = vmatpush1.msra.mxu0 %v2688
        %3755 = vmatprep.subr.mxu0 0.0
        %3756 = vmatpush1.msra.mxu0 %v2687
        %3757 = vmatprep.subr.mxu0 0.0
        %3758 = vmatpush1.msra.mxu0 %v2686
        %3759 = vmatprep.subr.mxu0 0.0
        %3760 = vmatpush1.msra.mxu0 %v2685
        %3761 = vmatprep.subr.mxu0 0.0
        %3762 = vmatpush1.msra.mxu0 %v2684
        %3763 = vmatprep.subr.mxu0 0.0
        %3764 = vmatpush1.msra.mxu0 %v2683
        %3765 = vmatprep.subr.mxu0 0.0
        %3766 = vmatpush1.msra.mxu0 %v2682
        %3767 = vmatprep.subr.mxu0 0.0
        %3768 = vmatpush1.msra.mxu0 %v2681
        %3769 = vmatprep.subr.mxu0 0.0
        %3770 = vmatpush1.msra.mxu0 %v2680
        %3771 = vmatprep.subr.mxu0 0.0
        %3772 = vmatpush1.msra.mxu0 %v2679
        %3773 = vmatprep.subr.mxu0 0.0
        %3774 = vmatpush2.msra.mxu0 %v2710
        %3775 = vmatprep.subr.mxu0 0.0
        %3776 = vmatpush2.msra.mxu0 %v2709
        %3777 = vmatprep.subr.mxu0 0.0
        %3778 = vmatpush2.msra.mxu0 %v2708
        %3779 = vmatprep.subr.mxu0 0.0
        %3780 = vmatpush2.msra.mxu0 %v2707
        %3781 = vmatprep.subr.mxu0 0.0
        %3782 = vmatpush2.msra.mxu0 %v2706
        %3783 = vmatprep.subr.mxu0 0.0
        %3784 = vmatpush2.msra.mxu0 %v2705
        %3785 = vmatprep.subr.mxu0 0.0
        %3786 = vmatpush2.msra.mxu0 %v2704
        %3787 = vmatprep.subr.mxu0 0.0
        %3788 = vmatpush2.msra.mxu0 %v2703
        %3789 = vmatprep.subr.mxu0 0.0
        %3790 = vmatpush2.msra.mxu0 %v2702
        %3791 = vmatprep.subr.mxu0 0.0
        %3792 = vmatpush2.msra.mxu0 %v2701
        %3793 = vmatprep.subr.mxu0 0.0
        %3794 = vmatpush2.msra.mxu0 %v2700
        %3795 = vmatprep.subr.mxu0 0.0
        %3796 = vmatpush2.msra.mxu0 %v2699
        %3797 = vmatprep.subr.mxu0 0.0
        %3798 = vmatpush2.msra.mxu0 %v2698
        %3799 = vmatprep.subr.mxu0 0.0
        %3800 = vmatpush2.msra.mxu0 %v2697
        %3801 = vmatprep.subr.mxu0 0.0
        %3802 = vmatpush2.msra.mxu0 %v2696
        %3803 = vmatprep.subr.mxu0 0.0
        %3804 = vmatpush2.msra.mxu0 %v2695
        %3805 = vmatprep.mubr.f32.mxu0 %v568
        %3806 = vmatmul.mubr.f32.gmra.mxu0 %v567
        %v3807 = vpop.f32.mrf.mxu0
        %v3808 = vadd.f32 %v3738, %v3807
        %v3809 = vpop.f32.mrf.mxu0
        %3810 = vdwg.mxu0
        %3811 = vmatprep.subr.mxu0 0.0
        %3812 = vmatpush1.msra.mxu0 %v2726
        %3813 = vmatprep.subr.mxu0 0.0
        %3814 = vmatpush1.msra.mxu0 %v2725
        %3815 = vmatprep.subr.mxu0 0.0
        %3816 = vmatpush1.msra.mxu0 %v2724
        %3817 = vmatprep.subr.mxu0 0.0
        %3818 = vmatpush1.msra.mxu0 %v2723
        %3819 = vmatprep.subr.mxu0 0.0
        %3820 = vmatpush1.msra.mxu0 %v2722
        %3821 = vmatprep.subr.mxu0 0.0
        %3822 = vmatpush1.msra.mxu0 %v2721
        %3823 = vmatprep.subr.mxu0 0.0
        %3824 = vmatpush1.msra.mxu0 %v2720
        %3825 = vmatprep.subr.mxu0 0.0
        %3826 = vmatpush1.msra.mxu0 %v2719
        %3827 = vmatprep.subr.mxu0 0.0
        %3828 = vmatpush1.msra.mxu0 %v2718
        %3829 = vmatprep.subr.mxu0 0.0
        %3830 = vmatpush1.msra.mxu0 %v2717
        %3831 = vmatprep.subr.mxu0 0.0
        %3832 = vmatpush1.msra.mxu0 %v2716
        %3833 = vmatprep.subr.mxu0 0.0
        %3834 = vmatpush1.msra.mxu0 %v2715
        %3835 = vmatprep.subr.mxu0 0.0
        %3836 = vmatpush1.msra.mxu0 %v2714
        %3837 = vmatprep.subr.mxu0 0.0
        %3838 = vmatpush1.msra.mxu0 %v2713
        %3839 = vmatprep.subr.mxu0 0.0
        %3840 = vmatpush1.msra.mxu0 %v2712
        %3841 = vmatprep.subr.mxu0 0.0
        %3842 = vmatpush1.msra.mxu0 %v2711
        %3843 = vmatprep.subr.mxu0 0.0
        %3844 = vmatpush2.msra.mxu0 %v2742
        %3845 = vmatprep.subr.mxu0 0.0
        %3846 = vmatpush2.msra.mxu0 %v2741
        %3847 = vmatprep.subr.mxu0 0.0
        %3848 = vmatpush2.msra.mxu0 %v2740
        %3849 = vmatprep.subr.mxu0 0.0
        %3850 = vmatpush2.msra.mxu0 %v2739
        %3851 = vmatprep.subr.mxu0 0.0
        %3852 = vmatpush2.msra.mxu0 %v2738
        %3853 = vmatprep.subr.mxu0 0.0
        %3854 = vmatpush2.msra.mxu0 %v2737
        %3855 = vmatprep.subr.mxu0 0.0
        %3856 = vmatpush2.msra.mxu0 %v2736
        %3857 = vmatprep.subr.mxu0 0.0
        %3858 = vmatpush2.msra.mxu0 %v2735
        %3859 = vmatprep.subr.mxu0 0.0
        %3860 = vmatpush2.msra.mxu0 %v2734
        %3861 = vmatprep.subr.mxu0 0.0
        %3862 = vmatpush2.msra.mxu0 %v2733
        %3863 = vmatprep.subr.mxu0 0.0
        %3864 = vmatpush2.msra.mxu0 %v2732
        %3865 = vmatprep.subr.mxu0 0.0
        %3866 = vmatpush2.msra.mxu0 %v2731
        %3867 = vmatprep.subr.mxu0 0.0
        %3868 = vmatpush2.msra.mxu0 %v2730
        %3869 = vmatprep.subr.mxu0 0.0
        %3870 = vmatpush2.msra.mxu0 %v2729
        %3871 = vmatprep.subr.mxu0 0.0
        %3872 = vmatpush2.msra.mxu0 %v2728
        %3873 = vmatprep.subr.mxu0 0.0
        %3874 = vmatpush2.msra.mxu0 %v2727
        %3875 = vmatprep.mubr.f32.mxu0 %v566
        %3876 = vmatmul.mubr.f32.gmra.mxu0 %v565
        %v3877 = vpop.f32.mrf.mxu0
        %v3878 = vadd.f32 %v2822, %v3877
        %v3879 = vpop.f32.mrf.mxu0
        %3880 = vdwg.mxu0
        %3881 = vmatprep.subr.mxu0 0.0
        %3882 = vmatpush1.msra.mxu0 %v2758
        %3883 = vmatprep.subr.mxu0 0.0
        %3884 = vmatpush1.msra.mxu0 %v2757
        %3885 = vmatprep.subr.mxu0 0.0
        %3886 = vmatpush1.msra.mxu0 %v2756
        %3887 = vmatprep.subr.mxu0 0.0
        %3888 = vmatpush1.msra.mxu0 %v2755
        %3889 = vmatprep.subr.mxu0 0.0
        %3890 = vmatpush1.msra.mxu0 %v2754
        %3891 = vmatprep.subr.mxu0 0.0
        %3892 = vmatpush1.msra.mxu0 %v2753
        %3893 = vmatprep.subr.mxu0 0.0
        %3894 = vmatpush1.msra.mxu0 %v2752
        %3895 = vmatprep.subr.mxu0 0.0
        %3896 = vmatpush1.msra.mxu0 %v2751
        %3897 = vmatprep.subr.mxu0 0.0
        %3898 = vmatpush1.msra.mxu0 %v2750
        %3899 = vmatprep.subr.mxu0 0.0
        %3900 = vmatpush1.msra.mxu0 %v2749
        %3901 = vmatprep.subr.mxu0 0.0
        %3902 = vmatpush1.msra.mxu0 %v2748
        %3903 = vmatprep.subr.mxu0 0.0
        %3904 = vmatpush1.msra.mxu0 %v2747
        %3905 = vmatprep.subr.mxu0 0.0
        %3906 = vmatpush1.msra.mxu0 %v2746
        %3907 = vmatprep.subr.mxu0 0.0
        %3908 = vmatpush1.msra.mxu0 %v2745
        %3909 = vmatprep.subr.mxu0 0.0
        %3910 = vmatpush1.msra.mxu0 %v2744
        %3911 = vmatprep.subr.mxu0 0.0
        %3912 = vmatpush1.msra.mxu0 %v2743
        %3913 = vmatprep.subr.mxu0 0.0
        %3914 = vmatpush2.msra.mxu0 %v2774
        %3915 = vmatprep.subr.mxu0 0.0
        %3916 = vmatpush2.msra.mxu0 %v2773
        %3917 = vmatprep.subr.mxu0 0.0
        %3918 = vmatpush2.msra.mxu0 %v2772
        %3919 = vmatprep.subr.mxu0 0.0
        %3920 = vmatpush2.msra.mxu0 %v2771
        %3921 = vmatprep.subr.mxu0 0.0
        %3922 = vmatpush2.msra.mxu0 %v2770
        %3923 = vmatprep.subr.mxu0 0.0
        %3924 = vmatpush2.msra.mxu0 %v2769
        %3925 = vmatprep.subr.mxu0 0.0
        %3926 = vmatpush2.msra.mxu0 %v2768
        %3927 = vmatprep.subr.mxu0 0.0
        %3928 = vmatpush2.msra.mxu0 %v2767
        %3929 = vmatprep.subr.mxu0 0.0
        %3930 = vmatpush2.msra.mxu0 %v2766
        %3931 = vmatprep.subr.mxu0 0.0
        %3932 = vmatpush2.msra.mxu0 %v2765
        %3933 = vmatprep.subr.mxu0 0.0
        %3934 = vmatpush2.msra.mxu0 %v2764
        %3935 = vmatprep.subr.mxu0 0.0
        %3936 = vmatpush2.msra.mxu0 %v2763
        %3937 = vmatprep.subr.mxu0 0.0
        %3938 = vmatpush2.msra.mxu0 %v2762
        %3939 = vmatprep.subr.mxu0 0.0
        %3940 = vmatpush2.msra.mxu0 %v2761
        %3941 = vmatprep.subr.mxu0 0.0
        %3942 = vmatpush2.msra.mxu0 %v2760
        %3943 = vmatprep.subr.mxu0 0.0
        %3944 = vmatpush2.msra.mxu0 %v2759
        %3945 = vmatprep.mubr.f32.mxu0 %v568
        %3946 = vmatmul.mubr.f32.gmra.mxu0 %v567
        %v3947 = vpop.f32.mrf.mxu0
        %v3948 = vadd.f32 %v3878, %v3947
        %v3949 = vpop.f32.mrf.mxu0
        %3950 = vdwg.mxu0
        %v3951 = vld [vmem:[%s8] sm:$0xff]
        %v3952 = vld [vmem:[%s8 + $0x8] sm:$0xff]
        %v3953 = vld [vmem:[%s8 + $0x10] sm:$0xff]
        %v3954 = vld [vmem:[%s8 + $0x18] sm:$0xff]
        %v3955 = vld [vmem:[%s8 + $0x20] sm:$0xff]
        %v3956 = vld [vmem:[%s8 + $0x28] sm:$0xff]
        %v3957 = vld [vmem:[%s8 + $0x30] sm:$0xff]
        %v3958 = vld [vmem:[%s8 + $0x38] sm:$0xff]
        %v3959 = vld [vmem:[%s8 + $0x40] sm:$0xff]
        %v3960 = vld [vmem:[%s8 + $0x48] sm:$0xff]
        %v3961 = vld [vmem:[%s8 + $0x50] sm:$0xff]
        %v3962 = vld [vmem:[%s8 + $0x58] sm:$0xff]
        %v3963 = vld [vmem:[%s8 + $0x60] sm:$0xff]
        %v3964 = vld [vmem:[%s8 + $0x68] sm:$0xff]
        %v3965 = vld [vmem:[%s8 + $0x70] sm:$0xff]
        %v3966 = vld [vmem:[%s8 + $0x78] sm:$0xff]
        %v3967 = vld [vmem:[%s8 + $0x80] sm:$0xff]
        %v3968 = vld [vmem:[%s8 + $0x88] sm:$0xff]
        %v3969 = vld [vmem:[%s8 + $0x90] sm:$0xff]
        %v3970 = vld [vmem:[%s8 + $0x98] sm:$0xff]
        %v3971 = vld [vmem:[%s8 + $0xa0] sm:$0xff]
        %v3972 = vld [vmem:[%s8 + $0xa8] sm:$0xff]
        %v3973 = vld [vmem:[%s8 + $0xb0] sm:$0xff]
        %v3974 = vld [vmem:[%s8 + $0xb8] sm:$0xff]
        %v3975 = vld [vmem:[%s8 + $0xc0] sm:$0xff]
        %v3976 = vld [vmem:[%s8 + $0xc8] sm:$0xff]
        %v3977 = vld [vmem:[%s8 + $0xd0] sm:$0xff]
        %v3978 = vld [vmem:[%s8 + $0xd8] sm:$0xff]
        %v3979 = vld [vmem:[%s8 + $0xe0] sm:$0xff]
        %v3980 = vld [vmem:[%s8 + $0xe8] sm:$0xff]
        %v3981 = vld [vmem:[%s8 + $0xf0] sm:$0xff]
        %v3982 = vld [vmem:[%s8 + $0xf8] sm:$0xff]
        %v3983 = vld [vmem:[%s8 + $0x100] sm:$0xff]
        %v3984 = vld [vmem:[%s8 + $0x108] sm:$0xff]
        %v3985 = vld [vmem:[%s8 + $0x110] sm:$0xff]
        %v3986 = vld [vmem:[%s8 + $0x118] sm:$0xff]
        %v3987 = vld [vmem:[%s8 + $0x120] sm:$0xff]
        %v3988 = vld [vmem:[%s8 + $0x128] sm:$0xff]
        %v3989 = vld [vmem:[%s8 + $0x130] sm:$0xff]
        %v3990 = vld [vmem:[%s8 + $0x138] sm:$0xff]
        %v3991 = vld [vmem:[%s8 + $0x140] sm:$0xff]
        %v3992 = vld [vmem:[%s8 + $0x148] sm:$0xff]
        %v3993 = vld [vmem:[%s8 + $0x150] sm:$0xff]
        %v3994 = vld [vmem:[%s8 + $0x158] sm:$0xff]
        %v3995 = vld [vmem:[%s8 + $0x160] sm:$0xff]
        %v3996 = vld [vmem:[%s8 + $0x168] sm:$0xff]
        %v3997 = vld [vmem:[%s8 + $0x170] sm:$0xff]
        %v3998 = vld [vmem:[%s8 + $0x178] sm:$0xff]
        %v3999 = vld [vmem:[%s8 + $0x180] sm:$0xff]
        %v4000 = vld [vmem:[%s8 + $0x188] sm:$0xff]
        %v4001 = vld [vmem:[%s8 + $0x190] sm:$0xff]
        %v4002 = vld [vmem:[%s8 + $0x198] sm:$0xff]
        %v4003 = vld [vmem:[%s8 + $0x1a0] sm:$0xff]
        %v4004 = vld [vmem:[%s8 + $0x1a8] sm:$0xff]
        %v4005 = vld [vmem:[%s8 + $0x1b0] sm:$0xff]
        %v4006 = vld [vmem:[%s8 + $0x1b8] sm:$0xff]
        %v4007 = vld [vmem:[%s8 + $0x1c0] sm:$0xff]
        %v4008 = vld [vmem:[%s8 + $0x1c8] sm:$0xff]
        %v4009 = vld [vmem:[%s8 + $0x1d0] sm:$0xff]
        %v4010 = vld [vmem:[%s8 + $0x1d8] sm:$0xff]
        %v4011 = vld [vmem:[%s8 + $0x1e0] sm:$0xff]
        %v4012 = vld [vmem:[%s8 + $0x1e8] sm:$0xff]
        %v4013 = vld [vmem:[%s8 + $0x1f0] sm:$0xff]
        %v4014 = vld [vmem:[%s8 + $0x1f8] sm:$0xff]
        %v4015 = vld [vmem:[%s8 + $0x200] sm:$0xff]
        %v4016 = vld [vmem:[%s8 + $0x208] sm:$0xff]
        %v4017 = vld [vmem:[%s8 + $0x210] sm:$0xff]
        %v4018 = vld [vmem:[%s8 + $0x218] sm:$0xff]
        %v4019 = vld [vmem:[%s8 + $0x220] sm:$0xff]
        %v4020 = vld [vmem:[%s8 + $0x228] sm:$0xff]
        %v4021 = vld [vmem:[%s8 + $0x230] sm:$0xff]
        %v4022 = vld [vmem:[%s8 + $0x238] sm:$0xff]
        %v4023 = vld [vmem:[%s8 + $0x240] sm:$0xff]
        %v4024 = vld [vmem:[%s8 + $0x248] sm:$0xff]
        %v4025 = vld [vmem:[%s8 + $0x250] sm:$0xff]
        %v4026 = vld [vmem:[%s8 + $0x258] sm:$0xff]
        %v4027 = vld [vmem:[%s8 + $0x260] sm:$0xff]
        %v4028 = vld [vmem:[%s8 + $0x268] sm:$0xff]
        %v4029 = vld [vmem:[%s8 + $0x270] sm:$0xff]
        %v4030 = vld [vmem:[%s8 + $0x278] sm:$0xff]
        %v4031 = vld [vmem:[%s8 + $0x280] sm:$0xff]
        %v4032 = vld [vmem:[%s8 + $0x288] sm:$0xff]
        %v4033 = vld [vmem:[%s8 + $0x290] sm:$0xff]
        %v4034 = vld [vmem:[%s8 + $0x298] sm:$0xff]
        %v4035 = vld [vmem:[%s8 + $0x2a0] sm:$0xff]
        %v4036 = vld [vmem:[%s8 + $0x2a8] sm:$0xff]
        %v4037 = vld [vmem:[%s8 + $0x2b0] sm:$0xff]
        %v4038 = vld [vmem:[%s8 + $0x2b8] sm:$0xff]
        %v4039 = vld [vmem:[%s8 + $0x2c0] sm:$0xff]
        %v4040 = vld [vmem:[%s8 + $0x2c8] sm:$0xff]
        %v4041 = vld [vmem:[%s8 + $0x2d0] sm:$0xff]
        %v4042 = vld [vmem:[%s8 + $0x2d8] sm:$0xff]
        %v4043 = vld [vmem:[%s8 + $0x2e0] sm:$0xff]
        %v4044 = vld [vmem:[%s8 + $0x2e8] sm:$0xff]
        %v4045 = vld [vmem:[%s8 + $0x2f0] sm:$0xff]
        %v4046 = vld [vmem:[%s8 + $0x2f8] sm:$0xff]
        %v4047 = vld [vmem:[%s8 + $0x300] sm:$0xff]
        %v4048 = vld [vmem:[%s8 + $0x308] sm:$0xff]
        %v4049 = vld [vmem:[%s8 + $0x310] sm:$0xff]
        %v4050 = vld [vmem:[%s8 + $0x318] sm:$0xff]
        %v4051 = vld [vmem:[%s8 + $0x320] sm:$0xff]
        %v4052 = vld [vmem:[%s8 + $0x328] sm:$0xff]
        %v4053 = vld [vmem:[%s8 + $0x330] sm:$0xff]
        %v4054 = vld [vmem:[%s8 + $0x338] sm:$0xff]
        %v4055 = vld [vmem:[%s8 + $0x340] sm:$0xff]
        %v4056 = vld [vmem:[%s8 + $0x348] sm:$0xff]
        %v4057 = vld [vmem:[%s8 + $0x350] sm:$0xff]
        %v4058 = vld [vmem:[%s8 + $0x358] sm:$0xff]
        %v4059 = vld [vmem:[%s8 + $0x360] sm:$0xff]
        %v4060 = vld [vmem:[%s8 + $0x368] sm:$0xff]
        %v4061 = vld [vmem:[%s8 + $0x370] sm:$0xff]
        %v4062 = vld [vmem:[%s8 + $0x378] sm:$0xff]
        %v4063 = vld [vmem:[%s8 + $0x380] sm:$0xff]
        %v4064 = vld [vmem:[%s8 + $0x388] sm:$0xff]
        %v4065 = vld [vmem:[%s8 + $0x390] sm:$0xff]
        %v4066 = vld [vmem:[%s8 + $0x398] sm:$0xff]
        %v4067 = vld [vmem:[%s8 + $0x3a0] sm:$0xff]
        %v4068 = vld [vmem:[%s8 + $0x3a8] sm:$0xff]
        %v4069 = vld [vmem:[%s8 + $0x3b0] sm:$0xff]
        %v4070 = vld [vmem:[%s8 + $0x3b8] sm:$0xff]
        %v4071 = vld [vmem:[%s8 + $0x3c0] sm:$0xff]
        %v4072 = vld [vmem:[%s8 + $0x3c8] sm:$0xff]
        %v4073 = vld [vmem:[%s8 + $0x3d0] sm:$0xff]
        %v4074 = vld [vmem:[%s8 + $0x3d8] sm:$0xff]
        %v4075 = vld [vmem:[%s8 + $0x3e0] sm:$0xff]
        %v4076 = vld [vmem:[%s8 + $0x3e8] sm:$0xff]
        %v4077 = vld [vmem:[%s8 + $0x3f0] sm:$0xff]
        %v4078 = vld [vmem:[%s8 + $0x3f8] sm:$0xff]
        %v4079 = vld [vmem:[%s8 + $0x400] sm:$0xff]
        %v4080 = vld [vmem:[%s8 + $0x408] sm:$0xff]
        %v4081 = vld [vmem:[%s8 + $0x410] sm:$0xff]
        %v4082 = vld [vmem:[%s8 + $0x418] sm:$0xff]
        %v4083 = vld [vmem:[%s8 + $0x420] sm:$0xff]
        %v4084 = vld [vmem:[%s8 + $0x428] sm:$0xff]
        %v4085 = vld [vmem:[%s8 + $0x430] sm:$0xff]
        %v4086 = vld [vmem:[%s8 + $0x438] sm:$0xff]
        %v4087 = vld [vmem:[%s8 + $0x440] sm:$0xff]
        %v4088 = vld [vmem:[%s8 + $0x448] sm:$0xff]
        %v4089 = vld [vmem:[%s8 + $0x450] sm:$0xff]
        %v4090 = vld [vmem:[%s8 + $0x458] sm:$0xff]
        %v4091 = vld [vmem:[%s8 + $0x460] sm:$0xff]
        %v4092 = vld [vmem:[%s8 + $0x468] sm:$0xff]
        %v4093 = vld [vmem:[%s8 + $0x470] sm:$0xff]
        %v4094 = vld [vmem:[%s8 + $0x478] sm:$0xff]
        %v4095 = vld [vmem:[%s8 + $0x480] sm:$0xff]
        %v4096 = vld [vmem:[%s8 + $0x488] sm:$0xff]
        %v4097 = vld [vmem:[%s8 + $0x490] sm:$0xff]
        %v4098 = vld [vmem:[%s8 + $0x498] sm:$0xff]
        %v4099 = vld [vmem:[%s8 + $0x4a0] sm:$0xff]
        %v4100 = vld [vmem:[%s8 + $0x4a8] sm:$0xff]
        %v4101 = vld [vmem:[%s8 + $0x4b0] sm:$0xff]
        %v4102 = vld [vmem:[%s8 + $0x4b8] sm:$0xff]
        %v4103 = vld [vmem:[%s8 + $0x4c0] sm:$0xff]
        %v4104 = vld [vmem:[%s8 + $0x4c8] sm:$0xff]
        %v4105 = vld [vmem:[%s8 + $0x4d0] sm:$0xff]
        %v4106 = vld [vmem:[%s8 + $0x4d8] sm:$0xff]
        %v4107 = vld [vmem:[%s8 + $0x4e0] sm:$0xff]
        %v4108 = vld [vmem:[%s8 + $0x4e8] sm:$0xff]
        %v4109 = vld [vmem:[%s8 + $0x4f0] sm:$0xff]
        %v4110 = vld [vmem:[%s8 + $0x4f8] sm:$0xff]
        %v4111 = vld [vmem:[%s8 + $0x500] sm:$0xff]
        %v4112 = vld [vmem:[%s8 + $0x508] sm:$0xff]
        %v4113 = vld [vmem:[%s8 + $0x510] sm:$0xff]
        %v4114 = vld [vmem:[%s8 + $0x518] sm:$0xff]
        %v4115 = vld [vmem:[%s8 + $0x520] sm:$0xff]
        %v4116 = vld [vmem:[%s8 + $0x528] sm:$0xff]
        %v4117 = vld [vmem:[%s8 + $0x530] sm:$0xff]
        %v4118 = vld [vmem:[%s8 + $0x538] sm:$0xff]
        %v4119 = vld [vmem:[%s8 + $0x540] sm:$0xff]
        %v4120 = vld [vmem:[%s8 + $0x548] sm:$0xff]
        %v4121 = vld [vmem:[%s8 + $0x550] sm:$0xff]
        %v4122 = vld [vmem:[%s8 + $0x558] sm:$0xff]
        %v4123 = vld [vmem:[%s8 + $0x560] sm:$0xff]
        %v4124 = vld [vmem:[%s8 + $0x568] sm:$0xff]
        %v4125 = vld [vmem:[%s8 + $0x570] sm:$0xff]
        %v4126 = vld [vmem:[%s8 + $0x578] sm:$0xff]
        %v4127 = vld [vmem:[%s8 + $0x580] sm:$0xff]
        %v4128 = vld [vmem:[%s8 + $0x588] sm:$0xff]
        %v4129 = vld [vmem:[%s8 + $0x590] sm:$0xff]
        %v4130 = vld [vmem:[%s8 + $0x598] sm:$0xff]
        %v4131 = vld [vmem:[%s8 + $0x5a0] sm:$0xff]
        %v4132 = vld [vmem:[%s8 + $0x5a8] sm:$0xff]
        %v4133 = vld [vmem:[%s8 + $0x5b0] sm:$0xff]
        %v4134 = vld [vmem:[%s8 + $0x5b8] sm:$0xff]
        %v4135 = vld [vmem:[%s8 + $0x5c0] sm:$0xff]
        %v4136 = vld [vmem:[%s8 + $0x5c8] sm:$0xff]
        %v4137 = vld [vmem:[%s8 + $0x5d0] sm:$0xff]
        %v4138 = vld [vmem:[%s8 + $0x5d8] sm:$0xff]
        %v4139 = vld [vmem:[%s8 + $0x5e0] sm:$0xff]
        %v4140 = vld [vmem:[%s8 + $0x5e8] sm:$0xff]
        %v4141 = vld [vmem:[%s8 + $0x5f0] sm:$0xff]
        %v4142 = vld [vmem:[%s8 + $0x5f8] sm:$0xff]
        %v4143 = vld [vmem:[%s8 + $0x600] sm:$0xff]
        %v4144 = vld [vmem:[%s8 + $0x608] sm:$0xff]
        %v4145 = vld [vmem:[%s8 + $0x610] sm:$0xff]
        %v4146 = vld [vmem:[%s8 + $0x618] sm:$0xff]
        %v4147 = vld [vmem:[%s8 + $0x620] sm:$0xff]
        %v4148 = vld [vmem:[%s8 + $0x628] sm:$0xff]
        %v4149 = vld [vmem:[%s8 + $0x630] sm:$0xff]
        %v4150 = vld [vmem:[%s8 + $0x638] sm:$0xff]
        %v4151 = vld [vmem:[%s8 + $0x640] sm:$0xff]
        %v4152 = vld [vmem:[%s8 + $0x648] sm:$0xff]
        %v4153 = vld [vmem:[%s8 + $0x650] sm:$0xff]
        %v4154 = vld [vmem:[%s8 + $0x658] sm:$0xff]
        %v4155 = vld [vmem:[%s8 + $0x660] sm:$0xff]
        %v4156 = vld [vmem:[%s8 + $0x668] sm:$0xff]
        %v4157 = vld [vmem:[%s8 + $0x670] sm:$0xff]
        %v4158 = vld [vmem:[%s8 + $0x678] sm:$0xff]
        %v4159 = vld [vmem:[%s8 + $0x680] sm:$0xff]
        %v4160 = vld [vmem:[%s8 + $0x688] sm:$0xff]
        %v4161 = vld [vmem:[%s8 + $0x690] sm:$0xff]
        %v4162 = vld [vmem:[%s8 + $0x698] sm:$0xff]
        %v4163 = vld [vmem:[%s8 + $0x6a0] sm:$0xff]
        %v4164 = vld [vmem:[%s8 + $0x6a8] sm:$0xff]
        %v4165 = vld [vmem:[%s8 + $0x6b0] sm:$0xff]
        %v4166 = vld [vmem:[%s8 + $0x6b8] sm:$0xff]
        %v4167 = vld [vmem:[%s8 + $0x6c0] sm:$0xff]
        %v4168 = vld [vmem:[%s8 + $0x6c8] sm:$0xff]
        %v4169 = vld [vmem:[%s8 + $0x6d0] sm:$0xff]
        %v4170 = vld [vmem:[%s8 + $0x6d8] sm:$0xff]
        %v4171 = vld [vmem:[%s8 + $0x6e0] sm:$0xff]
        %v4172 = vld [vmem:[%s8 + $0x6e8] sm:$0xff]
        %v4173 = vld [vmem:[%s8 + $0x6f0] sm:$0xff]
        %v4174 = vld [vmem:[%s8 + $0x6f8] sm:$0xff]
        %v4175 = vld [vmem:[%s8 + $0x700] sm:$0xff]
        %v4176 = vld [vmem:[%s8 + $0x708] sm:$0xff]
        %v4177 = vld [vmem:[%s8 + $0x710] sm:$0xff]
        %v4178 = vld [vmem:[%s8 + $0x718] sm:$0xff]
        %v4179 = vld [vmem:[%s8 + $0x720] sm:$0xff]
        %v4180 = vld [vmem:[%s8 + $0x728] sm:$0xff]
        %v4181 = vld [vmem:[%s8 + $0x730] sm:$0xff]
        %v4182 = vld [vmem:[%s8 + $0x738] sm:$0xff]
        %v4183 = vld [vmem:[%s8 + $0x740] sm:$0xff]
        %v4184 = vld [vmem:[%s8 + $0x748] sm:$0xff]
        %v4185 = vld [vmem:[%s8 + $0x750] sm:$0xff]
        %v4186 = vld [vmem:[%s8 + $0x758] sm:$0xff]
        %v4187 = vld [vmem:[%s8 + $0x760] sm:$0xff]
        %v4188 = vld [vmem:[%s8 + $0x768] sm:$0xff]
        %v4189 = vld [vmem:[%s8 + $0x770] sm:$0xff]
        %v4190 = vld [vmem:[%s8 + $0x778] sm:$0xff]
        %v4191 = vld [vmem:[%s8 + $0x780] sm:$0xff]
        %v4192 = vld [vmem:[%s8 + $0x788] sm:$0xff]
        %v4193 = vld [vmem:[%s8 + $0x790] sm:$0xff]
        %v4194 = vld [vmem:[%s8 + $0x798] sm:$0xff]
        %v4195 = vld [vmem:[%s8 + $0x7a0] sm:$0xff]
        %v4196 = vld [vmem:[%s8 + $0x7a8] sm:$0xff]
        %v4197 = vld [vmem:[%s8 + $0x7b0] sm:$0xff]
        %v4198 = vld [vmem:[%s8 + $0x7b8] sm:$0xff]
        %v4199 = vld [vmem:[%s8 + $0x7c0] sm:$0xff]
        %v4200 = vld [vmem:[%s8 + $0x7c8] sm:$0xff]
        %v4201 = vld [vmem:[%s8 + $0x7d0] sm:$0xff]
        %v4202 = vld [vmem:[%s8 + $0x7d8] sm:$0xff]
        %v4203 = vld [vmem:[%s8 + $0x7e0] sm:$0xff]
        %v4204 = vld [vmem:[%s8 + $0x7e8] sm:$0xff]
        %v4205 = vld [vmem:[%s8 + $0x7f0] sm:$0xff]
        %v4206 = vld [vmem:[%s8 + $0x7f8] sm:$0xff]
        %v4207 = vld [vmem:[%s8 + $0x800] sm:$0xff]
        %v4208 = vld [vmem:[%s8 + $0x808] sm:$0xff]
        %v4209 = vld [vmem:[%s8 + $0x810] sm:$0xff]
        %v4210 = vld [vmem:[%s8 + $0x818] sm:$0xff]
        %v4211 = vld [vmem:[%s8 + $0x820] sm:$0xff]
        %v4212 = vld [vmem:[%s8 + $0x828] sm:$0xff]
        %v4213 = vld [vmem:[%s8 + $0x830] sm:$0xff]
        %v4214 = vld [vmem:[%s8 + $0x838] sm:$0xff]
        %v4215 = vld [vmem:[%s8 + $0x840] sm:$0xff]
        %v4216 = vld [vmem:[%s8 + $0x848] sm:$0xff]
        %v4217 = vld [vmem:[%s8 + $0x850] sm:$0xff]
        %v4218 = vld [vmem:[%s8 + $0x858] sm:$0xff]
        %v4219 = vld [vmem:[%s8 + $0x860] sm:$0xff]
        %v4220 = vld [vmem:[%s8 + $0x868] sm:$0xff]
        %v4221 = vld [vmem:[%s8 + $0x870] sm:$0xff]
        %v4222 = vld [vmem:[%s8 + $0x878] sm:$0xff]
        %v4223 = vld [vmem:[%s8 + $0x880] sm:$0xff]
        %v4224 = vld [vmem:[%s8 + $0x888] sm:$0xff]
        %v4225 = vld [vmem:[%s8 + $0x890] sm:$0xff]
        %v4226 = vld [vmem:[%s8 + $0x898] sm:$0xff]
        %v4227 = vld [vmem:[%s8 + $0x8a0] sm:$0xff]
        %v4228 = vld [vmem:[%s8 + $0x8a8] sm:$0xff]
        %v4229 = vld [vmem:[%s8 + $0x8b0] sm:$0xff]
        %v4230 = vld [vmem:[%s8 + $0x8b8] sm:$0xff]
        %v4231 = vld [vmem:[%s8 + $0x8c0] sm:$0xff]
        %v4232 = vld [vmem:[%s8 + $0x8c8] sm:$0xff]
        %v4233 = vld [vmem:[%s8 + $0x8d0] sm:$0xff]
        %v4234 = vld [vmem:[%s8 + $0x8d8] sm:$0xff]
        %v4235 = vld [vmem:[%s8 + $0x8e0] sm:$0xff]
        %v4236 = vld [vmem:[%s8 + $0x8e8] sm:$0xff]
        %v4237 = vld [vmem:[%s8 + $0x8f0] sm:$0xff]
        %v4238 = vld [vmem:[%s8 + $0x8f8] sm:$0xff]
        %v4239 = vld [vmem:[%s8 + $0x900] sm:$0xff]
        %v4240 = vld [vmem:[%s8 + $0x908] sm:$0xff]
        %v4241 = vld [vmem:[%s8 + $0x910] sm:$0xff]
        %v4242 = vld [vmem:[%s8 + $0x918] sm:$0xff]
        %v4243 = vld [vmem:[%s8 + $0x920] sm:$0xff]
        %v4244 = vld [vmem:[%s8 + $0x928] sm:$0xff]
        %v4245 = vld [vmem:[%s8 + $0x930] sm:$0xff]
        %v4246 = vld [vmem:[%s8 + $0x938] sm:$0xff]
        %v4247 = vld [vmem:[%s8 + $0x940] sm:$0xff]
        %v4248 = vld [vmem:[%s8 + $0x948] sm:$0xff]
        %v4249 = vld [vmem:[%s8 + $0x950] sm:$0xff]
        %v4250 = vld [vmem:[%s8 + $0x958] sm:$0xff]
        %v4251 = vld [vmem:[%s8 + $0x960] sm:$0xff]
        %v4252 = vld [vmem:[%s8 + $0x968] sm:$0xff]
        %v4253 = vld [vmem:[%s8 + $0x970] sm:$0xff]
        %v4254 = vld [vmem:[%s8 + $0x978] sm:$0xff]
        %v4255 = vld [vmem:[%s8 + $0x980] sm:$0xff]
        %v4256 = vld [vmem:[%s8 + $0x988] sm:$0xff]
        %v4257 = vld [vmem:[%s8 + $0x990] sm:$0xff]
        %v4258 = vld [vmem:[%s8 + $0x998] sm:$0xff]
        %v4259 = vld [vmem:[%s8 + $0x9a0] sm:$0xff]
        %v4260 = vld [vmem:[%s8 + $0x9a8] sm:$0xff]
        %v4261 = vld [vmem:[%s8 + $0x9b0] sm:$0xff]
        %v4262 = vld [vmem:[%s8 + $0x9b8] sm:$0xff]
        %v4263 = vld [vmem:[%s8 + $0x9c0] sm:$0xff]
        %v4264 = vld [vmem:[%s8 + $0x9c8] sm:$0xff]
        %v4265 = vld [vmem:[%s8 + $0x9d0] sm:$0xff]
        %v4266 = vld [vmem:[%s8 + $0x9d8] sm:$0xff]
        %v4267 = vld [vmem:[%s8 + $0x9e0] sm:$0xff]
        %v4268 = vld [vmem:[%s8 + $0x9e8] sm:$0xff]
        %v4269 = vld [vmem:[%s8 + $0x9f0] sm:$0xff]
        %v4270 = vld [vmem:[%s8 + $0x9f8] sm:$0xff]
        %v4271 = vld [vmem:[%s8 + $0xa00] sm:$0xff]
        %v4272 = vld [vmem:[%s8 + $0xa08] sm:$0xff]
        %v4273 = vld [vmem:[%s8 + $0xa10] sm:$0xff]
        %v4274 = vld [vmem:[%s8 + $0xa18] sm:$0xff]
        %v4275 = vld [vmem:[%s8 + $0xa20] sm:$0xff]
        %v4276 = vld [vmem:[%s8 + $0xa28] sm:$0xff]
        %v4277 = vld [vmem:[%s8 + $0xa30] sm:$0xff]
        %v4278 = vld [vmem:[%s8 + $0xa38] sm:$0xff]
        %v4279 = vld [vmem:[%s8 + $0xa40] sm:$0xff]
        %v4280 = vld [vmem:[%s8 + $0xa48] sm:$0xff]
        %v4281 = vld [vmem:[%s8 + $0xa50] sm:$0xff]
        %v4282 = vld [vmem:[%s8 + $0xa58] sm:$0xff]
        %v4283 = vld [vmem:[%s8 + $0xa60] sm:$0xff]
        %v4284 = vld [vmem:[%s8 + $0xa68] sm:$0xff]
        %v4285 = vld [vmem:[%s8 + $0xa70] sm:$0xff]
        %v4286 = vld [vmem:[%s8 + $0xa78] sm:$0xff]
        %v4287 = vld [vmem:[%s8 + $0xa80] sm:$0xff]
        %v4288 = vld [vmem:[%s8 + $0xa88] sm:$0xff]
        %v4289 = vld [vmem:[%s8 + $0xa90] sm:$0xff]
        %v4290 = vld [vmem:[%s8 + $0xa98] sm:$0xff]
        %v4291 = vld [vmem:[%s8 + $0xaa0] sm:$0xff]
        %v4292 = vld [vmem:[%s8 + $0xaa8] sm:$0xff]
        %v4293 = vld [vmem:[%s8 + $0xab0] sm:$0xff]
        %v4294 = vld [vmem:[%s8 + $0xab8] sm:$0xff]
        %v4295 = vld [vmem:[%s8 + $0xac0] sm:$0xff]
        %v4296 = vld [vmem:[%s8 + $0xac8] sm:$0xff]
        %v4297 = vld [vmem:[%s8 + $0xad0] sm:$0xff]
        %v4298 = vld [vmem:[%s8 + $0xad8] sm:$0xff]
        %v4299 = vld [vmem:[%s8 + $0xae0] sm:$0xff]
        %v4300 = vld [vmem:[%s8 + $0xae8] sm:$0xff]
        %v4301 = vld [vmem:[%s8 + $0xaf0] sm:$0xff]
        %v4302 = vld [vmem:[%s8 + $0xaf8] sm:$0xff]
        %v4303 = vld [vmem:[%s8 + $0xb00] sm:$0xff]
        %v4304 = vld [vmem:[%s8 + $0xb08] sm:$0xff]
        %v4305 = vld [vmem:[%s8 + $0xb10] sm:$0xff]
        %v4306 = vld [vmem:[%s8 + $0xb18] sm:$0xff]
        %v4307 = vld [vmem:[%s8 + $0xb20] sm:$0xff]
        %v4308 = vld [vmem:[%s8 + $0xb28] sm:$0xff]
        %v4309 = vld [vmem:[%s8 + $0xb30] sm:$0xff]
        %v4310 = vld [vmem:[%s8 + $0xb38] sm:$0xff]
        %v4311 = vld [vmem:[%s8 + $0xb40] sm:$0xff]
        %v4312 = vld [vmem:[%s8 + $0xb48] sm:$0xff]
        %v4313 = vld [vmem:[%s8 + $0xb50] sm:$0xff]
        %v4314 = vld [vmem:[%s8 + $0xb58] sm:$0xff]
        %v4315 = vld [vmem:[%s8 + $0xb60] sm:$0xff]
        %v4316 = vld [vmem:[%s8 + $0xb68] sm:$0xff]
        %v4317 = vld [vmem:[%s8 + $0xb70] sm:$0xff]
        %v4318 = vld [vmem:[%s8 + $0xb78] sm:$0xff]
        %v4319 = vld [vmem:[%s8 + $0xb80] sm:$0xff]
        %v4320 = vld [vmem:[%s8 + $0xb88] sm:$0xff]
        %v4321 = vld [vmem:[%s8 + $0xb90] sm:$0xff]
        %v4322 = vld [vmem:[%s8 + $0xb98] sm:$0xff]
        %v4323 = vld [vmem:[%s8 + $0xba0] sm:$0xff]
        %v4324 = vld [vmem:[%s8 + $0xba8] sm:$0xff]
        %v4325 = vld [vmem:[%s8 + $0xbb0] sm:$0xff]
        %v4326 = vld [vmem:[%s8 + $0xbb8] sm:$0xff]
        %v4327 = vld [vmem:[%s8 + $0xbc0] sm:$0xff]
        %v4328 = vld [vmem:[%s8 + $0xbc8] sm:$0xff]
        %v4329 = vld [vmem:[%s8 + $0xbd0] sm:$0xff]
        %v4330 = vld [vmem:[%s8 + $0xbd8] sm:$0xff]
        %v4331 = vld [vmem:[%s8 + $0xbe0] sm:$0xff]
        %v4332 = vld [vmem:[%s8 + $0xbe8] sm:$0xff]
        %v4333 = vld [vmem:[%s8 + $0xbf0] sm:$0xff]
        %v4334 = vld [vmem:[%s8 + $0xbf8] sm:$0xff]
        %v4335 = vld [vmem:[%s8 + $0xc00] sm:$0xff]
        %v4336 = vld [vmem:[%s8 + $0xc08] sm:$0xff]
        %v4337 = vld [vmem:[%s8 + $0xc10] sm:$0xff]
        %v4338 = vld [vmem:[%s8 + $0xc18] sm:$0xff]
        %v4339 = vld [vmem:[%s8 + $0xc20] sm:$0xff]
        %v4340 = vld [vmem:[%s8 + $0xc28] sm:$0xff]
        %v4341 = vld [vmem:[%s8 + $0xc30] sm:$0xff]
        %v4342 = vld [vmem:[%s8 + $0xc38] sm:$0xff]
        %v4343 = vld [vmem:[%s8 + $0xc40] sm:$0xff]
        %v4344 = vld [vmem:[%s8 + $0xc48] sm:$0xff]
        %v4345 = vld [vmem:[%s8 + $0xc50] sm:$0xff]
        %v4346 = vld [vmem:[%s8 + $0xc58] sm:$0xff]
        %v4347 = vld [vmem:[%s8 + $0xc60] sm:$0xff]
        %v4348 = vld [vmem:[%s8 + $0xc68] sm:$0xff]
        %v4349 = vld [vmem:[%s8 + $0xc70] sm:$0xff]
        %v4350 = vld [vmem:[%s8 + $0xc78] sm:$0xff]
        %v4351 = vld [vmem:[%s8 + $0xc80] sm:$0xff]
        %v4352 = vld [vmem:[%s8 + $0xc88] sm:$0xff]
        %v4353 = vld [vmem:[%s8 + $0xc90] sm:$0xff]
        %v4354 = vld [vmem:[%s8 + $0xc98] sm:$0xff]
        %v4355 = vld [vmem:[%s8 + $0xca0] sm:$0xff]
        %v4356 = vld [vmem:[%s8 + $0xca8] sm:$0xff]
        %v4357 = vld [vmem:[%s8 + $0xcb0] sm:$0xff]
        %v4358 = vld [vmem:[%s8 + $0xcb8] sm:$0xff]
        %v4359 = vld [vmem:[%s8 + $0xcc0] sm:$0xff]
        %v4360 = vld [vmem:[%s8 + $0xcc8] sm:$0xff]
        %v4361 = vld [vmem:[%s8 + $0xcd0] sm:$0xff]
        %v4362 = vld [vmem:[%s8 + $0xcd8] sm:$0xff]
        %v4363 = vld [vmem:[%s8 + $0xce0] sm:$0xff]
        %v4364 = vld [vmem:[%s8 + $0xce8] sm:$0xff]
        %v4365 = vld [vmem:[%s8 + $0xcf0] sm:$0xff]
        %v4366 = vld [vmem:[%s8 + $0xcf8] sm:$0xff]
        %v4367 = vld [vmem:[%s8 + $0xd00] sm:$0xff]
        %v4368 = vld [vmem:[%s8 + $0xd08] sm:$0xff]
        %v4369 = vld [vmem:[%s8 + $0xd10] sm:$0xff]
        %v4370 = vld [vmem:[%s8 + $0xd18] sm:$0xff]
        %v4371 = vld [vmem:[%s8 + $0xd20] sm:$0xff]
        %v4372 = vld [vmem:[%s8 + $0xd28] sm:$0xff]
        %v4373 = vld [vmem:[%s8 + $0xd30] sm:$0xff]
        %v4374 = vld [vmem:[%s8 + $0xd38] sm:$0xff]
        %v4375 = vld [vmem:[%s8 + $0xd40] sm:$0xff]
        %v4376 = vld [vmem:[%s8 + $0xd48] sm:$0xff]
        %v4377 = vld [vmem:[%s8 + $0xd50] sm:$0xff]
        %v4378 = vld [vmem:[%s8 + $0xd58] sm:$0xff]
        %v4379 = vld [vmem:[%s8 + $0xd60] sm:$0xff]
        %v4380 = vld [vmem:[%s8 + $0xd68] sm:$0xff]
        %v4381 = vld [vmem:[%s8 + $0xd70] sm:$0xff]
        %v4382 = vld [vmem:[%s8 + $0xd78] sm:$0xff]
        %v4383 = vld [vmem:[%s8 + $0xd80] sm:$0xff]
        %v4384 = vld [vmem:[%s8 + $0xd88] sm:$0xff]
        %v4385 = vld [vmem:[%s8 + $0xd90] sm:$0xff]
        %v4386 = vld [vmem:[%s8 + $0xd98] sm:$0xff]
        %v4387 = vld [vmem:[%s8 + $0xda0] sm:$0xff]
        %v4388 = vld [vmem:[%s8 + $0xda8] sm:$0xff]
        %v4389 = vld [vmem:[%s8 + $0xdb0] sm:$0xff]
        %v4390 = vld [vmem:[%s8 + $0xdb8] sm:$0xff]
        %v4391 = vld [vmem:[%s8 + $0xdc0] sm:$0xff]
        %v4392 = vld [vmem:[%s8 + $0xdc8] sm:$0xff]
        %v4393 = vld [vmem:[%s8 + $0xdd0] sm:$0xff]
        %v4394 = vld [vmem:[%s8 + $0xdd8] sm:$0xff]
        %v4395 = vld [vmem:[%s8 + $0xde0] sm:$0xff]
        %v4396 = vld [vmem:[%s8 + $0xde8] sm:$0xff]
        %v4397 = vld [vmem:[%s8 + $0xdf0] sm:$0xff]
        %v4398 = vld [vmem:[%s8 + $0xdf8] sm:$0xff]
        %v4399 = vld [vmem:[%s8 + $0xe00] sm:$0xff]
        %v4400 = vld [vmem:[%s8 + $0xe08] sm:$0xff]
        %v4401 = vld [vmem:[%s8 + $0xe10] sm:$0xff]
        %v4402 = vld [vmem:[%s8 + $0xe18] sm:$0xff]
        %v4403 = vld [vmem:[%s8 + $0xe20] sm:$0xff]
        %v4404 = vld [vmem:[%s8 + $0xe28] sm:$0xff]
        %v4405 = vld [vmem:[%s8 + $0xe30] sm:$0xff]
        %v4406 = vld [vmem:[%s8 + $0xe38] sm:$0xff]
        %v4407 = vld [vmem:[%s8 + $0xe40] sm:$0xff]
        %v4408 = vld [vmem:[%s8 + $0xe48] sm:$0xff]
        %v4409 = vld [vmem:[%s8 + $0xe50] sm:$0xff]
        %v4410 = vld [vmem:[%s8 + $0xe58] sm:$0xff]
        %v4411 = vld [vmem:[%s8 + $0xe60] sm:$0xff]
        %v4412 = vld [vmem:[%s8 + $0xe68] sm:$0xff]
        %v4413 = vld [vmem:[%s8 + $0xe70] sm:$0xff]
        %v4414 = vld [vmem:[%s8 + $0xe78] sm:$0xff]
        %v4415 = vld [vmem:[%s8 + $0xe80] sm:$0xff]
        %v4416 = vld [vmem:[%s8 + $0xe88] sm:$0xff]
        %v4417 = vld [vmem:[%s8 + $0xe90] sm:$0xff]
        %v4418 = vld [vmem:[%s8 + $0xe98] sm:$0xff]
        %v4419 = vld [vmem:[%s8 + $0xea0] sm:$0xff]
        %v4420 = vld [vmem:[%s8 + $0xea8] sm:$0xff]
        %v4421 = vld [vmem:[%s8 + $0xeb0] sm:$0xff]
        %v4422 = vld [vmem:[%s8 + $0xeb8] sm:$0xff]
        %v4423 = vld [vmem:[%s8 + $0xec0] sm:$0xff]
        %v4424 = vld [vmem:[%s8 + $0xec8] sm:$0xff]
        %v4425 = vld [vmem:[%s8 + $0xed0] sm:$0xff]
        %v4426 = vld [vmem:[%s8 + $0xed8] sm:$0xff]
        %v4427 = vld [vmem:[%s8 + $0xee0] sm:$0xff]
        %v4428 = vld [vmem:[%s8 + $0xee8] sm:$0xff]
        %v4429 = vld [vmem:[%s8 + $0xef0] sm:$0xff]
        %v4430 = vld [vmem:[%s8 + $0xef8] sm:$0xff]
        %v4431 = vld [vmem:[%s8 + $0xf00] sm:$0xff]
        %v4432 = vld [vmem:[%s8 + $0xf08] sm:$0xff]
        %v4433 = vld [vmem:[%s8 + $0xf10] sm:$0xff]
        %v4434 = vld [vmem:[%s8 + $0xf18] sm:$0xff]
        %v4435 = vld [vmem:[%s8 + $0xf20] sm:$0xff]
        %v4436 = vld [vmem:[%s8 + $0xf28] sm:$0xff]
        %v4437 = vld [vmem:[%s8 + $0xf30] sm:$0xff]
        %v4438 = vld [vmem:[%s8 + $0xf38] sm:$0xff]
        %v4439 = vld [vmem:[%s8 + $0xf40] sm:$0xff]
        %v4440 = vld [vmem:[%s8 + $0xf48] sm:$0xff]
        %v4441 = vld [vmem:[%s8 + $0xf50] sm:$0xff]
        %v4442 = vld [vmem:[%s8 + $0xf58] sm:$0xff]
        %v4443 = vld [vmem:[%s8 + $0xf60] sm:$0xff]
        %v4444 = vld [vmem:[%s8 + $0xf68] sm:$0xff]
        %v4445 = vld [vmem:[%s8 + $0xf70] sm:$0xff]
        %v4446 = vld [vmem:[%s8 + $0xf78] sm:$0xff]
        %v4447 = vld [vmem:[%s8 + $0xf80] sm:$0xff]
        %v4448 = vld [vmem:[%s8 + $0xf88] sm:$0xff]
        %v4449 = vld [vmem:[%s8 + $0xf90] sm:$0xff]
        %v4450 = vld [vmem:[%s8 + $0xf98] sm:$0xff]
        %v4451 = vld [vmem:[%s8 + $0xfa0] sm:$0xff]
        %v4452 = vld [vmem:[%s8 + $0xfa8] sm:$0xff]
        %v4453 = vld [vmem:[%s8 + $0xfb0] sm:$0xff]
        %v4454 = vld [vmem:[%s8 + $0xfb8] sm:$0xff]
        %v4455 = vld [vmem:[%s8 + $0xfc0] sm:$0xff]
        %v4456 = vld [vmem:[%s8 + $0xfc8] sm:$0xff]
        %v4457 = vld [vmem:[%s8 + $0xfd0] sm:$0xff]
        %v4458 = vld [vmem:[%s8 + $0xfd8] sm:$0xff]
        %v4459 = vld [vmem:[%s8 + $0xfe0] sm:$0xff]
        %v4460 = vld [vmem:[%s8 + $0xfe8] sm:$0xff]
        %v4461 = vld [vmem:[%s8 + $0xff0] sm:$0xff]
        %v4462 = vld [vmem:[%s8 + $0xff8] sm:$0xff]
        %v4463 = vld [vmem:[%s9] sm:$0x1]
        %v4464 = vld [vmem:[%s9 + $0x1] sm:$0x1]
        %v4465 = vld [vmem:[%s9 + $0x2] sm:$0x1]
        %v4466 = vld [vmem:[%s9 + $0x3] sm:$0x1]
        %v4467 = vld [vmem:[%s9 + $0x4] sm:$0x1]
        %v4468 = vld [vmem:[%s9 + $0x5] sm:$0x1]
        %v4469 = vld [vmem:[%s9 + $0x6] sm:$0x1]
        %v4470 = vld [vmem:[%s9 + $0x7] sm:$0x1]
        %v4479 = vlaneseq
        %v4480 = vshrl.u32 %v4479, 7
        %v4481 = vsub.s32 0, %v4480
        %v4482 = vrot.slane %v4463, %v4481
        %v4483 = vlaneseq
        %v4484 = vshrl.u32 %v4483, 7
        %v4485 = vsub.s32 0, %v4484
        %v4486 = vrot.slane %v4464, %v4485
        %v4487 = vlaneseq
        %v4488 = vshrl.u32 %v4487, 7
        %v4489 = vsub.s32 0, %v4488
        %v4490 = vrot.slane %v4465, %v4489
        %v4491 = vlaneseq
        %v4492 = vshrl.u32 %v4491, 7
        %v4493 = vsub.s32 0, %v4492
        %v4494 = vrot.slane %v4466, %v4493
        %v4495 = vlaneseq
        %v4496 = vshrl.u32 %v4495, 7
        %v4497 = vsub.s32 0, %v4496
        %v4498 = vrot.slane %v4467, %v4497
        %v4499 = vlaneseq
        %v4500 = vshrl.u32 %v4499, 7
        %v4501 = vsub.s32 0, %v4500
        %v4502 = vrot.slane %v4468, %v4501
        %v4503 = vlaneseq
        %v4504 = vshrl.u32 %v4503, 7
        %v4505 = vsub.s32 0, %v4504
        %v4506 = vrot.slane %v4469, %v4505
        %v4507 = vlaneseq
        %v4508 = vshrl.u32 %v4507, 7
        %v4509 = vsub.s32 0, %v4508
        %v4510 = vrot.slane %v4470, %v4509
        %4519 = vmatprep.subr.mxu0 0.0
        %4520 = vmatpush1.msra.mxu0 %v3966
        %4521 = vmatprep.subr.mxu0 0.0
        %4522 = vmatpush1.msra.mxu0 %v3965
        %4523 = vmatprep.subr.mxu0 0.0
        %4524 = vmatpush1.msra.mxu0 %v3964
        %4525 = vmatprep.subr.mxu0 0.0
        %4526 = vmatpush1.msra.mxu0 %v3963
        %4527 = vmatprep.subr.mxu0 0.0
        %4528 = vmatpush1.msra.mxu0 %v3962
        %4529 = vmatprep.subr.mxu0 0.0
        %4530 = vmatpush1.msra.mxu0 %v3961
        %4531 = vmatprep.subr.mxu0 0.0
        %4532 = vmatpush1.msra.mxu0 %v3960
        %4533 = vmatprep.subr.mxu0 0.0
        %4534 = vmatpush1.msra.mxu0 %v3959
        %4535 = vmatprep.subr.mxu0 0.0
        %4536 = vmatpush1.msra.mxu0 %v3958
        %4537 = vmatprep.subr.mxu0 0.0
        %4538 = vmatpush1.msra.mxu0 %v3957
        %4539 = vmatprep.subr.mxu0 0.0
        %4540 = vmatpush1.msra.mxu0 %v3956
        %4541 = vmatprep.subr.mxu0 0.0
        %4542 = vmatpush1.msra.mxu0 %v3955
        %4543 = vmatprep.subr.mxu0 0.0
        %4544 = vmatpush1.msra.mxu0 %v3954
        %4545 = vmatprep.subr.mxu0 0.0
        %4546 = vmatpush1.msra.mxu0 %v3953
        %4547 = vmatprep.subr.mxu0 0.0
        %4548 = vmatpush1.msra.mxu0 %v3952
        %4549 = vmatprep.subr.mxu0 0.0
        %4550 = vmatpush1.msra.mxu0 %v3951
        %4551 = vmatprep.subr.mxu0 0.0
        %4552 = vmatpush2.msra.mxu0 %v3982
        %4553 = vmatprep.subr.mxu0 0.0
        %4554 = vmatpush2.msra.mxu0 %v3981
        %4555 = vmatprep.subr.mxu0 0.0
        %4556 = vmatpush2.msra.mxu0 %v3980
        %4557 = vmatprep.subr.mxu0 0.0
        %4558 = vmatpush2.msra.mxu0 %v3979
        %4559 = vmatprep.subr.mxu0 0.0
        %4560 = vmatpush2.msra.mxu0 %v3978
        %4561 = vmatprep.subr.mxu0 0.0
        %4562 = vmatpush2.msra.mxu0 %v3977
        %4563 = vmatprep.subr.mxu0 0.0
        %4564 = vmatpush2.msra.mxu0 %v3976
        %4565 = vmatprep.subr.mxu0 0.0
        %4566 = vmatpush2.msra.mxu0 %v3975
        %4567 = vmatprep.subr.mxu0 0.0
        %4568 = vmatpush2.msra.mxu0 %v3974
        %4569 = vmatprep.subr.mxu0 0.0
        %4570 = vmatpush2.msra.mxu0 %v3973
        %4571 = vmatprep.subr.mxu0 0.0
        %4572 = vmatpush2.msra.mxu0 %v3972
        %4573 = vmatprep.subr.mxu0 0.0
        %4574 = vmatpush2.msra.mxu0 %v3971
        %4575 = vmatprep.subr.mxu0 0.0
        %4576 = vmatpush2.msra.mxu0 %v3970
        %4577 = vmatprep.subr.mxu0 0.0
        %4578 = vmatpush2.msra.mxu0 %v3969
        %4579 = vmatprep.subr.mxu0 0.0
        %4580 = vmatpush2.msra.mxu0 %v3968
        %4581 = vmatprep.subr.mxu0 0.0
        %4582 = vmatpush2.msra.mxu0 %v3967
        %4583 = vmatprep.mubr.f32.mxu0 %v570
        %4584 = vmatmul.mubr.f32.gmra.mxu0 %v569
        %v4585 = vpop.f32.mrf.mxu0
        %v4586 = vadd.f32 %v4482, %v4585
        %v4587 = vpop.f32.mrf.mxu0
        %4588 = vdwg.mxu0
        %4589 = vmatprep.subr.mxu0 0.0
        %4590 = vmatpush1.msra.mxu0 %v3998
        %4591 = vmatprep.subr.mxu0 0.0
        %4592 = vmatpush1.msra.mxu0 %v3997
        %4593 = vmatprep.subr.mxu0 0.0
        %4594 = vmatpush1.msra.mxu0 %v3996
        %4595 = vmatprep.subr.mxu0 0.0
        %4596 = vmatpush1.msra.mxu0 %v3995
        %4597 = vmatprep.subr.mxu0 0.0
        %4598 = vmatpush1.msra.mxu0 %v3994
        %4599 = vmatprep.subr.mxu0 0.0
        %4600 = vmatpush1.msra.mxu0 %v3993
        %4601 = vmatprep.subr.mxu0 0.0
        %4602 = vmatpush1.msra.mxu0 %v3992
        %4603 = vmatprep.subr.mxu0 0.0
        %4604 = vmatpush1.msra.mxu0 %v3991
        %4605 = vmatprep.subr.mxu0 0.0
        %4606 = vmatpush1.msra.mxu0 %v3990
        %4607 = vmatprep.subr.mxu0 0.0
        %4608 = vmatpush1.msra.mxu0 %v3989
        %4609 = vmatprep.subr.mxu0 0.0
        %4610 = vmatpush1.msra.mxu0 %v3988
        %4611 = vmatprep.subr.mxu0 0.0
        %4612 = vmatpush1.msra.mxu0 %v3987
        %4613 = vmatprep.subr.mxu0 0.0
        %4614 = vmatpush1.msra.mxu0 %v3986
        %4615 = vmatprep.subr.mxu0 0.0
        %4616 = vmatpush1.msra.mxu0 %v3985
        %4617 = vmatprep.subr.mxu0 0.0
        %4618 = vmatpush1.msra.mxu0 %v3984
        %4619 = vmatprep.subr.mxu0 0.0
        %4620 = vmatpush1.msra.mxu0 %v3983
        %4621 = vmatprep.subr.mxu0 0.0
        %4622 = vmatpush2.msra.mxu0 %v4014
        %4623 = vmatprep.subr.mxu0 0.0
        %4624 = vmatpush2.msra.mxu0 %v4013
        %4625 = vmatprep.subr.mxu0 0.0
        %4626 = vmatpush2.msra.mxu0 %v4012
        %4627 = vmatprep.subr.mxu0 0.0
        %4628 = vmatpush2.msra.mxu0 %v4011
        %4629 = vmatprep.subr.mxu0 0.0
        %4630 = vmatpush2.msra.mxu0 %v4010
        %4631 = vmatprep.subr.mxu0 0.0
        %4632 = vmatpush2.msra.mxu0 %v4009
        %4633 = vmatprep.subr.mxu0 0.0
        %4634 = vmatpush2.msra.mxu0 %v4008
        %4635 = vmatprep.subr.mxu0 0.0
        %4636 = vmatpush2.msra.mxu0 %v4007
        %4637 = vmatprep.subr.mxu0 0.0
        %4638 = vmatpush2.msra.mxu0 %v4006
        %4639 = vmatprep.subr.mxu0 0.0
        %4640 = vmatpush2.msra.mxu0 %v4005
        %4641 = vmatprep.subr.mxu0 0.0
        %4642 = vmatpush2.msra.mxu0 %v4004
        %4643 = vmatprep.subr.mxu0 0.0
        %4644 = vmatpush2.msra.mxu0 %v4003
        %4645 = vmatprep.subr.mxu0 0.0
        %4646 = vmatpush2.msra.mxu0 %v4002
        %4647 = vmatprep.subr.mxu0 0.0
        %4648 = vmatpush2.msra.mxu0 %v4001
        %4649 = vmatprep.subr.mxu0 0.0
        %4650 = vmatpush2.msra.mxu0 %v4000
        %4651 = vmatprep.subr.mxu0 0.0
        %4652 = vmatpush2.msra.mxu0 %v3999
        %4653 = vmatprep.mubr.f32.mxu0 %v572
        %4654 = vmatmul.mubr.f32.gmra.mxu0 %v571
        %v4655 = vpop.f32.mrf.mxu0
        %v4656 = vadd.f32 %v4586, %v4655
        %v4657 = vpop.f32.mrf.mxu0
        %4658 = vdwg.mxu0
        %4659 = vmatprep.subr.mxu0 0.0
        %4660 = vmatpush1.msra.mxu0 %v4030
        %4661 = vmatprep.subr.mxu0 0.0
        %4662 = vmatpush1.msra.mxu0 %v4029
        %4663 = vmatprep.subr.mxu0 0.0
        %4664 = vmatpush1.msra.mxu0 %v4028
        %4665 = vmatprep.subr.mxu0 0.0
        %4666 = vmatpush1.msra.mxu0 %v4027
        %4667 = vmatprep.subr.mxu0 0.0
        %4668 = vmatpush1.msra.mxu0 %v4026
        %4669 = vmatprep.subr.mxu0 0.0
        %4670 = vmatpush1.msra.mxu0 %v4025
        %4671 = vmatprep.subr.mxu0 0.0
        %4672 = vmatpush1.msra.mxu0 %v4024
        %4673 = vmatprep.subr.mxu0 0.0
        %4674 = vmatpush1.msra.mxu0 %v4023
        %4675 = vmatprep.subr.mxu0 0.0
        %4676 = vmatpush1.msra.mxu0 %v4022
        %4677 = vmatprep.subr.mxu0 0.0
        %4678 = vmatpush1.msra.mxu0 %v4021
        %4679 = vmatprep.subr.mxu0 0.0
        %4680 = vmatpush1.msra.mxu0 %v4020
        %4681 = vmatprep.subr.mxu0 0.0
        %4682 = vmatpush1.msra.mxu0 %v4019
        %4683 = vmatprep.subr.mxu0 0.0
        %4684 = vmatpush1.msra.mxu0 %v4018
        %4685 = vmatprep.subr.mxu0 0.0
        %4686 = vmatpush1.msra.mxu0 %v4017
        %4687 = vmatprep.subr.mxu0 0.0
        %4688 = vmatpush1.msra.mxu0 %v4016
        %4689 = vmatprep.subr.mxu0 0.0
        %4690 = vmatpush1.msra.mxu0 %v4015
        %4691 = vmatprep.subr.mxu0 0.0
        %4692 = vmatpush2.msra.mxu0 %v4046
        %4693 = vmatprep.subr.mxu0 0.0
        %4694 = vmatpush2.msra.mxu0 %v4045
        %4695 = vmatprep.subr.mxu0 0.0
        %4696 = vmatpush2.msra.mxu0 %v4044
        %4697 = vmatprep.subr.mxu0 0.0
        %4698 = vmatpush2.msra.mxu0 %v4043
        %4699 = vmatprep.subr.mxu0 0.0
        %4700 = vmatpush2.msra.mxu0 %v4042
        %4701 = vmatprep.subr.mxu0 0.0
        %4702 = vmatpush2.msra.mxu0 %v4041
        %4703 = vmatprep.subr.mxu0 0.0
        %4704 = vmatpush2.msra.mxu0 %v4040
        %4705 = vmatprep.subr.mxu0 0.0
        %4706 = vmatpush2.msra.mxu0 %v4039
        %4707 = vmatprep.subr.mxu0 0.0
        %4708 = vmatpush2.msra.mxu0 %v4038
        %4709 = vmatprep.subr.mxu0 0.0
        %4710 = vmatpush2.msra.mxu0 %v4037
        %4711 = vmatprep.subr.mxu0 0.0
        %4712 = vmatpush2.msra.mxu0 %v4036
        %4713 = vmatprep.subr.mxu0 0.0
        %4714 = vmatpush2.msra.mxu0 %v4035
        %4715 = vmatprep.subr.mxu0 0.0
        %4716 = vmatpush2.msra.mxu0 %v4034
        %4717 = vmatprep.subr.mxu0 0.0
        %4718 = vmatpush2.msra.mxu0 %v4033
        %4719 = vmatprep.subr.mxu0 0.0
        %4720 = vmatpush2.msra.mxu0 %v4032
        %4721 = vmatprep.subr.mxu0 0.0
        %4722 = vmatpush2.msra.mxu0 %v4031
        %4723 = vmatprep.mubr.f32.mxu0 %v570
        %4724 = vmatmul.mubr.f32.gmra.mxu0 %v569
        %v4725 = vpop.f32.mrf.mxu0
        %v4726 = vadd.f32 %v4486, %v4725
        %v4727 = vpop.f32.mrf.mxu0
        %4728 = vdwg.mxu0
        %4729 = vmatprep.subr.mxu0 0.0
        %4730 = vmatpush1.msra.mxu0 %v4062
        %4731 = vmatprep.subr.mxu0 0.0
        %4732 = vmatpush1.msra.mxu0 %v4061
        %4733 = vmatprep.subr.mxu0 0.0
        %4734 = vmatpush1.msra.mxu0 %v4060
        %4735 = vmatprep.subr.mxu0 0.0
        %4736 = vmatpush1.msra.mxu0 %v4059
        %4737 = vmatprep.subr.mxu0 0.0
        %4738 = vmatpush1.msra.mxu0 %v4058
        %4739 = vmatprep.subr.mxu0 0.0
        %4740 = vmatpush1.msra.mxu0 %v4057
        %4741 = vmatprep.subr.mxu0 0.0
        %4742 = vmatpush1.msra.mxu0 %v4056
        %4743 = vmatprep.subr.mxu0 0.0
        %4744 = vmatpush1.msra.mxu0 %v4055
        %4745 = vmatprep.subr.mxu0 0.0
        %4746 = vmatpush1.msra.mxu0 %v4054
        %4747 = vmatprep.subr.mxu0 0.0
        %4748 = vmatpush1.msra.mxu0 %v4053
        %4749 = vmatprep.subr.mxu0 0.0
        %4750 = vmatpush1.msra.mxu0 %v4052
        %4751 = vmatprep.subr.mxu0 0.0
        %4752 = vmatpush1.msra.mxu0 %v4051
        %4753 = vmatprep.subr.mxu0 0.0
        %4754 = vmatpush1.msra.mxu0 %v4050
        %4755 = vmatprep.subr.mxu0 0.0
        %4756 = vmatpush1.msra.mxu0 %v4049
        %4757 = vmatprep.subr.mxu0 0.0
        %4758 = vmatpush1.msra.mxu0 %v4048
        %4759 = vmatprep.subr.mxu0 0.0
        %4760 = vmatpush1.msra.mxu0 %v4047
        %4761 = vmatprep.subr.mxu0 0.0
        %4762 = vmatpush2.msra.mxu0 %v4078
        %4763 = vmatprep.subr.mxu0 0.0
        %4764 = vmatpush2.msra.mxu0 %v4077
        %4765 = vmatprep.subr.mxu0 0.0
        %4766 = vmatpush2.msra.mxu0 %v4076
        %4767 = vmatprep.subr.mxu0 0.0
        %4768 = vmatpush2.msra.mxu0 %v4075
        %4769 = vmatprep.subr.mxu0 0.0
        %4770 = vmatpush2.msra.mxu0 %v4074
        %4771 = vmatprep.subr.mxu0 0.0
        %4772 = vmatpush2.msra.mxu0 %v4073
        %4773 = vmatprep.subr.mxu0 0.0
        %4774 = vmatpush2.msra.mxu0 %v4072
        %4775 = vmatprep.subr.mxu0 0.0
        %4776 = vmatpush2.msra.mxu0 %v4071
        %4777 = vmatprep.subr.mxu0 0.0
        %4778 = vmatpush2.msra.mxu0 %v4070
        %4779 = vmatprep.subr.mxu0 0.0
        %4780 = vmatpush2.msra.mxu0 %v4069
        %4781 = vmatprep.subr.mxu0 0.0
        %4782 = vmatpush2.msra.mxu0 %v4068
        %4783 = vmatprep.subr.mxu0 0.0
        %4784 = vmatpush2.msra.mxu0 %v4067
        %4785 = vmatprep.subr.mxu0 0.0
        %4786 = vmatpush2.msra.mxu0 %v4066
        %4787 = vmatprep.subr.mxu0 0.0
        %4788 = vmatpush2.msra.mxu0 %v4065
        %4789 = vmatprep.subr.mxu0 0.0
        %4790 = vmatpush2.msra.mxu0 %v4064
        %4791 = vmatprep.subr.mxu0 0.0
        %4792 = vmatpush2.msra.mxu0 %v4063
        %4793 = vmatprep.mubr.f32.mxu0 %v572
        %4794 = vmatmul.mubr.f32.gmra.mxu0 %v571
        %v4795 = vpop.f32.mrf.mxu0
        %v4796 = vadd.f32 %v4726, %v4795
        %v4797 = vpop.f32.mrf.mxu0
        %4798 = vdwg.mxu0
        %4799 = vmatprep.subr.mxu0 0.0
        %4800 = vmatpush1.msra.mxu0 %v4094
        %4801 = vmatprep.subr.mxu0 0.0
        %4802 = vmatpush1.msra.mxu0 %v4093
        %4803 = vmatprep.subr.mxu0 0.0
        %4804 = vmatpush1.msra.mxu0 %v4092
        %4805 = vmatprep.subr.mxu0 0.0
        %4806 = vmatpush1.msra.mxu0 %v4091
        %4807 = vmatprep.subr.mxu0 0.0
        %4808 = vmatpush1.msra.mxu0 %v4090
        %4809 = vmatprep.subr.mxu0 0.0
        %4810 = vmatpush1.msra.mxu0 %v4089
        %4811 = vmatprep.subr.mxu0 0.0
        %4812 = vmatpush1.msra.mxu0 %v4088
        %4813 = vmatprep.subr.mxu0 0.0
        %4814 = vmatpush1.msra.mxu0 %v4087
        %4815 = vmatprep.subr.mxu0 0.0
        %4816 = vmatpush1.msra.mxu0 %v4086
        %4817 = vmatprep.subr.mxu0 0.0
        %4818 = vmatpush1.msra.mxu0 %v4085
        %4819 = vmatprep.subr.mxu0 0.0
        %4820 = vmatpush1.msra.mxu0 %v4084
        %4821 = vmatprep.subr.mxu0 0.0
        %4822 = vmatpush1.msra.mxu0 %v4083
        %4823 = vmatprep.subr.mxu0 0.0
        %4824 = vmatpush1.msra.mxu0 %v4082
        %4825 = vmatprep.subr.mxu0 0.0
        %4826 = vmatpush1.msra.mxu0 %v4081
        %4827 = vmatprep.subr.mxu0 0.0
        %4828 = vmatpush1.msra.mxu0 %v4080
        %4829 = vmatprep.subr.mxu0 0.0
        %4830 = vmatpush1.msra.mxu0 %v4079
        %4831 = vmatprep.subr.mxu0 0.0
        %4832 = vmatpush2.msra.mxu0 %v4110
        %4833 = vmatprep.subr.mxu0 0.0
        %4834 = vmatpush2.msra.mxu0 %v4109
        %4835 = vmatprep.subr.mxu0 0.0
        %4836 = vmatpush2.msra.mxu0 %v4108
        %4837 = vmatprep.subr.mxu0 0.0
        %4838 = vmatpush2.msra.mxu0 %v4107
        %4839 = vmatprep.subr.mxu0 0.0
        %4840 = vmatpush2.msra.mxu0 %v4106
        %4841 = vmatprep.subr.mxu0 0.0
        %4842 = vmatpush2.msra.mxu0 %v4105
        %4843 = vmatprep.subr.mxu0 0.0
        %4844 = vmatpush2.msra.mxu0 %v4104
        %4845 = vmatprep.subr.mxu0 0.0
        %4846 = vmatpush2.msra.mxu0 %v4103
        %4847 = vmatprep.subr.mxu0 0.0
        %4848 = vmatpush2.msra.mxu0 %v4102
        %4849 = vmatprep.subr.mxu0 0.0
        %4850 = vmatpush2.msra.mxu0 %v4101
        %4851 = vmatprep.subr.mxu0 0.0
        %4852 = vmatpush2.msra.mxu0 %v4100
        %4853 = vmatprep.subr.mxu0 0.0
        %4854 = vmatpush2.msra.mxu0 %v4099
        %4855 = vmatprep.subr.mxu0 0.0
        %4856 = vmatpush2.msra.mxu0 %v4098
        %4857 = vmatprep.subr.mxu0 0.0
        %4858 = vmatpush2.msra.mxu0 %v4097
        %4859 = vmatprep.subr.mxu0 0.0
        %4860 = vmatpush2.msra.mxu0 %v4096
        %4861 = vmatprep.subr.mxu0 0.0
        %4862 = vmatpush2.msra.mxu0 %v4095
        %4863 = vmatprep.mubr.f32.mxu0 %v570
        %4864 = vmatmul.mubr.f32.gmra.mxu0 %v569
        %v4865 = vpop.f32.mrf.mxu0
        %v4866 = vadd.f32 %v4490, %v4865
        %v4867 = vpop.f32.mrf.mxu0
        %4868 = vdwg.mxu0
        %4869 = vmatprep.subr.mxu0 0.0
        %4870 = vmatpush1.msra.mxu0 %v4126
        %4871 = vmatprep.subr.mxu0 0.0
        %4872 = vmatpush1.msra.mxu0 %v4125
        %4873 = vmatprep.subr.mxu0 0.0
        %4874 = vmatpush1.msra.mxu0 %v4124
        %4875 = vmatprep.subr.mxu0 0.0
        %4876 = vmatpush1.msra.mxu0 %v4123
        %4877 = vmatprep.subr.mxu0 0.0
        %4878 = vmatpush1.msra.mxu0 %v4122
        %4879 = vmatprep.subr.mxu0 0.0
        %4880 = vmatpush1.msra.mxu0 %v4121
        %4881 = vmatprep.subr.mxu0 0.0
        %4882 = vmatpush1.msra.mxu0 %v4120
        %4883 = vmatprep.subr.mxu0 0.0
        %4884 = vmatpush1.msra.mxu0 %v4119
        %4885 = vmatprep.subr.mxu0 0.0
        %4886 = vmatpush1.msra.mxu0 %v4118
        %4887 = vmatprep.subr.mxu0 0.0
        %4888 = vmatpush1.msra.mxu0 %v4117
        %4889 = vmatprep.subr.mxu0 0.0
        %4890 = vmatpush1.msra.mxu0 %v4116
        %4891 = vmatprep.subr.mxu0 0.0
        %4892 = vmatpush1.msra.mxu0 %v4115
        %4893 = vmatprep.subr.mxu0 0.0
        %4894 = vmatpush1.msra.mxu0 %v4114
        %4895 = vmatprep.subr.mxu0 0.0
        %4896 = vmatpush1.msra.mxu0 %v4113
        %4897 = vmatprep.subr.mxu0 0.0
        %4898 = vmatpush1.msra.mxu0 %v4112
        %4899 = vmatprep.subr.mxu0 0.0
        %4900 = vmatpush1.msra.mxu0 %v4111
        %4901 = vmatprep.subr.mxu0 0.0
        %4902 = vmatpush2.msra.mxu0 %v4142
        %4903 = vmatprep.subr.mxu0 0.0
        %4904 = vmatpush2.msra.mxu0 %v4141
        %4905 = vmatprep.subr.mxu0 0.0
        %4906 = vmatpush2.msra.mxu0 %v4140
        %4907 = vmatprep.subr.mxu0 0.0
        %4908 = vmatpush2.msra.mxu0 %v4139
        %4909 = vmatprep.subr.mxu0 0.0
        %4910 = vmatpush2.msra.mxu0 %v4138
        %4911 = vmatprep.subr.mxu0 0.0
        %4912 = vmatpush2.msra.mxu0 %v4137
        %4913 = vmatprep.subr.mxu0 0.0
        %4914 = vmatpush2.msra.mxu0 %v4136
        %4915 = vmatprep.subr.mxu0 0.0
        %4916 = vmatpush2.msra.mxu0 %v4135
        %4917 = vmatprep.subr.mxu0 0.0
        %4918 = vmatpush2.msra.mxu0 %v4134
        %4919 = vmatprep.subr.mxu0 0.0
        %4920 = vmatpush2.msra.mxu0 %v4133
        %4921 = vmatprep.subr.mxu0 0.0
        %4922 = vmatpush2.msra.mxu0 %v4132
        %4923 = vmatprep.subr.mxu0 0.0
        %4924 = vmatpush2.msra.mxu0 %v4131
        %4925 = vmatprep.subr.mxu0 0.0
        %4926 = vmatpush2.msra.mxu0 %v4130
        %4927 = vmatprep.subr.mxu0 0.0
        %4928 = vmatpush2.msra.mxu0 %v4129
        %4929 = vmatprep.subr.mxu0 0.0
        %4930 = vmatpush2.msra.mxu0 %v4128
        %4931 = vmatprep.subr.mxu0 0.0
        %4932 = vmatpush2.msra.mxu0 %v4127
        %4933 = vmatprep.mubr.f32.mxu0 %v572
        %4934 = vmatmul.mubr.f32.gmra.mxu0 %v571
        %v4935 = vpop.f32.mrf.mxu0
        %v4936 = vadd.f32 %v4866, %v4935
        %v4937 = vpop.f32.mrf.mxu0
        %4938 = vdwg.mxu0
        %4939 = vmatprep.subr.mxu0 0.0
        %4940 = vmatpush1.msra.mxu0 %v4158
        %4941 = vmatprep.subr.mxu0 0.0
        %4942 = vmatpush1.msra.mxu0 %v4157
        %4943 = vmatprep.subr.mxu0 0.0
        %4944 = vmatpush1.msra.mxu0 %v4156
        %4945 = vmatprep.subr.mxu0 0.0
        %4946 = vmatpush1.msra.mxu0 %v4155
        %4947 = vmatprep.subr.mxu0 0.0
        %4948 = vmatpush1.msra.mxu0 %v4154
        %4949 = vmatprep.subr.mxu0 0.0
        %4950 = vmatpush1.msra.mxu0 %v4153
        %4951 = vmatprep.subr.mxu0 0.0
        %4952 = vmatpush1.msra.mxu0 %v4152
        %4953 = vmatprep.subr.mxu0 0.0
        %4954 = vmatpush1.msra.mxu0 %v4151
        %4955 = vmatprep.subr.mxu0 0.0
        %4956 = vmatpush1.msra.mxu0 %v4150
        %4957 = vmatprep.subr.mxu0 0.0
        %4958 = vmatpush1.msra.mxu0 %v4149
        %4959 = vmatprep.subr.mxu0 0.0
        %4960 = vmatpush1.msra.mxu0 %v4148
        %4961 = vmatprep.subr.mxu0 0.0
        %4962 = vmatpush1.msra.mxu0 %v4147
        %4963 = vmatprep.subr.mxu0 0.0
        %4964 = vmatpush1.msra.mxu0 %v4146
        %4965 = vmatprep.subr.mxu0 0.0
        %4966 = vmatpush1.msra.mxu0 %v4145
        %4967 = vmatprep.subr.mxu0 0.0
        %4968 = vmatpush1.msra.mxu0 %v4144
        %4969 = vmatprep.subr.mxu0 0.0
        %4970 = vmatpush1.msra.mxu0 %v4143
        %4971 = vmatprep.subr.mxu0 0.0
        %4972 = vmatpush2.msra.mxu0 %v4174
        %4973 = vmatprep.subr.mxu0 0.0
        %4974 = vmatpush2.msra.mxu0 %v4173
        %4975 = vmatprep.subr.mxu0 0.0
        %4976 = vmatpush2.msra.mxu0 %v4172
        %4977 = vmatprep.subr.mxu0 0.0
        %4978 = vmatpush2.msra.mxu0 %v4171
        %4979 = vmatprep.subr.mxu0 0.0
        %4980 = vmatpush2.msra.mxu0 %v4170
        %4981 = vmatprep.subr.mxu0 0.0
        %4982 = vmatpush2.msra.mxu0 %v4169
        %4983 = vmatprep.subr.mxu0 0.0
        %4984 = vmatpush2.msra.mxu0 %v4168
        %4985 = vmatprep.subr.mxu0 0.0
        %4986 = vmatpush2.msra.mxu0 %v4167
        %4987 = vmatprep.subr.mxu0 0.0
        %4988 = vmatpush2.msra.mxu0 %v4166
        %4989 = vmatprep.subr.mxu0 0.0
        %4990 = vmatpush2.msra.mxu0 %v4165
        %4991 = vmatprep.subr.mxu0 0.0
        %4992 = vmatpush2.msra.mxu0 %v4164
        %4993 = vmatprep.subr.mxu0 0.0
        %4994 = vmatpush2.msra.mxu0 %v4163
        %4995 = vmatprep.subr.mxu0 0.0
        %4996 = vmatpush2.msra.mxu0 %v4162
        %4997 = vmatprep.subr.mxu0 0.0
        %4998 = vmatpush2.msra.mxu0 %v4161
        %4999 = vmatprep.subr.mxu0 0.0
        %5000 = vmatpush2.msra.mxu0 %v4160
        %5001 = vmatprep.subr.mxu0 0.0
        %5002 = vmatpush2.msra.mxu0 %v4159
        %5003 = vmatprep.mubr.f32.mxu0 %v570
        %5004 = vmatmul.mubr.f32.gmra.mxu0 %v569
        %v5005 = vpop.f32.mrf.mxu0
        %v5006 = vadd.f32 %v4494, %v5005
        %v5007 = vpop.f32.mrf.mxu0
        %5008 = vdwg.mxu0
        %5009 = vmatprep.subr.mxu0 0.0
        %5010 = vmatpush1.msra.mxu0 %v4190
        %5011 = vmatprep.subr.mxu0 0.0
        %5012 = vmatpush1.msra.mxu0 %v4189
        %5013 = vmatprep.subr.mxu0 0.0
        %5014 = vmatpush1.msra.mxu0 %v4188
        %5015 = vmatprep.subr.mxu0 0.0
        %5016 = vmatpush1.msra.mxu0 %v4187
        %5017 = vmatprep.subr.mxu0 0.0
        %5018 = vmatpush1.msra.mxu0 %v4186
        %5019 = vmatprep.subr.mxu0 0.0
        %5020 = vmatpush1.msra.mxu0 %v4185
        %5021 = vmatprep.subr.mxu0 0.0
        %5022 = vmatpush1.msra.mxu0 %v4184
        %5023 = vmatprep.subr.mxu0 0.0
        %5024 = vmatpush1.msra.mxu0 %v4183
        %5025 = vmatprep.subr.mxu0 0.0
        %5026 = vmatpush1.msra.mxu0 %v4182
        %5027 = vmatprep.subr.mxu0 0.0
        %5028 = vmatpush1.msra.mxu0 %v4181
        %5029 = vmatprep.subr.mxu0 0.0
        %5030 = vmatpush1.msra.mxu0 %v4180
        %5031 = vmatprep.subr.mxu0 0.0
        %5032 = vmatpush1.msra.mxu0 %v4179
        %5033 = vmatprep.subr.mxu0 0.0
        %5034 = vmatpush1.msra.mxu0 %v4178
        %5035 = vmatprep.subr.mxu0 0.0
        %5036 = vmatpush1.msra.mxu0 %v4177
        %5037 = vmatprep.subr.mxu0 0.0
        %5038 = vmatpush1.msra.mxu0 %v4176
        %5039 = vmatprep.subr.mxu0 0.0
        %5040 = vmatpush1.msra.mxu0 %v4175
        %5041 = vmatprep.subr.mxu0 0.0
        %5042 = vmatpush2.msra.mxu0 %v4206
        %5043 = vmatprep.subr.mxu0 0.0
        %5044 = vmatpush2.msra.mxu0 %v4205
        %5045 = vmatprep.subr.mxu0 0.0
        %5046 = vmatpush2.msra.mxu0 %v4204
        %5047 = vmatprep.subr.mxu0 0.0
        %5048 = vmatpush2.msra.mxu0 %v4203
        %5049 = vmatprep.subr.mxu0 0.0
        %5050 = vmatpush2.msra.mxu0 %v4202
        %5051 = vmatprep.subr.mxu0 0.0
        %5052 = vmatpush2.msra.mxu0 %v4201
        %5053 = vmatprep.subr.mxu0 0.0
        %5054 = vmatpush2.msra.mxu0 %v4200
        %5055 = vmatprep.subr.mxu0 0.0
        %5056 = vmatpush2.msra.mxu0 %v4199
        %5057 = vmatprep.subr.mxu0 0.0
        %5058 = vmatpush2.msra.mxu0 %v4198
        %5059 = vmatprep.subr.mxu0 0.0
        %5060 = vmatpush2.msra.mxu0 %v4197
        %5061 = vmatprep.subr.mxu0 0.0
        %5062 = vmatpush2.msra.mxu0 %v4196
        %5063 = vmatprep.subr.mxu0 0.0
        %5064 = vmatpush2.msra.mxu0 %v4195
        %5065 = vmatprep.subr.mxu0 0.0
        %5066 = vmatpush2.msra.mxu0 %v4194
        %5067 = vmatprep.subr.mxu0 0.0
        %5068 = vmatpush2.msra.mxu0 %v4193
        %5069 = vmatprep.subr.mxu0 0.0
        %5070 = vmatpush2.msra.mxu0 %v4192
        %5071 = vmatprep.subr.mxu0 0.0
        %5072 = vmatpush2.msra.mxu0 %v4191
        %5073 = vmatprep.mubr.f32.mxu0 %v572
        %5074 = vmatmul.mubr.f32.gmra.mxu0 %v571
        %v5075 = vpop.f32.mrf.mxu0
        %v5076 = vadd.f32 %v5006, %v5075
        %v5077 = vpop.f32.mrf.mxu0
        %5078 = vdwg.mxu0
        %5079 = vmatprep.subr.mxu0 0.0
        %5080 = vmatpush1.msra.mxu0 %v4222
        %5081 = vmatprep.subr.mxu0 0.0
        %5082 = vmatpush1.msra.mxu0 %v4221
        %5083 = vmatprep.subr.mxu0 0.0
        %5084 = vmatpush1.msra.mxu0 %v4220
        %5085 = vmatprep.subr.mxu0 0.0
        %5086 = vmatpush1.msra.mxu0 %v4219
        %5087 = vmatprep.subr.mxu0 0.0
        %5088 = vmatpush1.msra.mxu0 %v4218
        %5089 = vmatprep.subr.mxu0 0.0
        %5090 = vmatpush1.msra.mxu0 %v4217
        %5091 = vmatprep.subr.mxu0 0.0
        %5092 = vmatpush1.msra.mxu0 %v4216
        %5093 = vmatprep.subr.mxu0 0.0
        %5094 = vmatpush1.msra.mxu0 %v4215
        %5095 = vmatprep.subr.mxu0 0.0
        %5096 = vmatpush1.msra.mxu0 %v4214
        %5097 = vmatprep.subr.mxu0 0.0
        %5098 = vmatpush1.msra.mxu0 %v4213
        %5099 = vmatprep.subr.mxu0 0.0
        %5100 = vmatpush1.msra.mxu0 %v4212
        %5101 = vmatprep.subr.mxu0 0.0
        %5102 = vmatpush1.msra.mxu0 %v4211
        %5103 = vmatprep.subr.mxu0 0.0
        %5104 = vmatpush1.msra.mxu0 %v4210
        %5105 = vmatprep.subr.mxu0 0.0
        %5106 = vmatpush1.msra.mxu0 %v4209
        %5107 = vmatprep.subr.mxu0 0.0
        %5108 = vmatpush1.msra.mxu0 %v4208
        %5109 = vmatprep.subr.mxu0 0.0
        %5110 = vmatpush1.msra.mxu0 %v4207
        %5111 = vmatprep.subr.mxu0 0.0
        %5112 = vmatpush2.msra.mxu0 %v4238
        %5113 = vmatprep.subr.mxu0 0.0
        %5114 = vmatpush2.msra.mxu0 %v4237
        %5115 = vmatprep.subr.mxu0 0.0
        %5116 = vmatpush2.msra.mxu0 %v4236
        %5117 = vmatprep.subr.mxu0 0.0
        %5118 = vmatpush2.msra.mxu0 %v4235
        %5119 = vmatprep.subr.mxu0 0.0
        %5120 = vmatpush2.msra.mxu0 %v4234
        %5121 = vmatprep.subr.mxu0 0.0
        %5122 = vmatpush2.msra.mxu0 %v4233
        %5123 = vmatprep.subr.mxu0 0.0
        %5124 = vmatpush2.msra.mxu0 %v4232
        %5125 = vmatprep.subr.mxu0 0.0
        %5126 = vmatpush2.msra.mxu0 %v4231
        %5127 = vmatprep.subr.mxu0 0.0
        %5128 = vmatpush2.msra.mxu0 %v4230
        %5129 = vmatprep.subr.mxu0 0.0
        %5130 = vmatpush2.msra.mxu0 %v4229
        %5131 = vmatprep.subr.mxu0 0.0
        %5132 = vmatpush2.msra.mxu0 %v4228
        %5133 = vmatprep.subr.mxu0 0.0
        %5134 = vmatpush2.msra.mxu0 %v4227
        %5135 = vmatprep.subr.mxu0 0.0
        %5136 = vmatpush2.msra.mxu0 %v4226
        %5137 = vmatprep.subr.mxu0 0.0
        %5138 = vmatpush2.msra.mxu0 %v4225
        %5139 = vmatprep.subr.mxu0 0.0
        %5140 = vmatpush2.msra.mxu0 %v4224
        %5141 = vmatprep.subr.mxu0 0.0
        %5142 = vmatpush2.msra.mxu0 %v4223
        %5143 = vmatprep.mubr.f32.mxu0 %v570
        %5144 = vmatmul.mubr.f32.gmra.mxu0 %v569
        %v5145 = vpop.f32.mrf.mxu0
        %v5146 = vadd.f32 %v4498, %v5145
        %v5147 = vpop.f32.mrf.mxu0
        %5148 = vdwg.mxu0
        %5149 = vmatprep.subr.mxu0 0.0
        %5150 = vmatpush1.msra.mxu0 %v4254
        %5151 = vmatprep.subr.mxu0 0.0
        %5152 = vmatpush1.msra.mxu0 %v4253
        %5153 = vmatprep.subr.mxu0 0.0
        %5154 = vmatpush1.msra.mxu0 %v4252
        %5155 = vmatprep.subr.mxu0 0.0
        %5156 = vmatpush1.msra.mxu0 %v4251
        %5157 = vmatprep.subr.mxu0 0.0
        %5158 = vmatpush1.msra.mxu0 %v4250
        %5159 = vmatprep.subr.mxu0 0.0
        %5160 = vmatpush1.msra.mxu0 %v4249
        %5161 = vmatprep.subr.mxu0 0.0
        %5162 = vmatpush1.msra.mxu0 %v4248
        %5163 = vmatprep.subr.mxu0 0.0
        %5164 = vmatpush1.msra.mxu0 %v4247
        %5165 = vmatprep.subr.mxu0 0.0
        %5166 = vmatpush1.msra.mxu0 %v4246
        %5167 = vmatprep.subr.mxu0 0.0
        %5168 = vmatpush1.msra.mxu0 %v4245
        %5169 = vmatprep.subr.mxu0 0.0
        %5170 = vmatpush1.msra.mxu0 %v4244
        %5171 = vmatprep.subr.mxu0 0.0
        %5172 = vmatpush1.msra.mxu0 %v4243
        %5173 = vmatprep.subr.mxu0 0.0
        %5174 = vmatpush1.msra.mxu0 %v4242
        %5175 = vmatprep.subr.mxu0 0.0
        %5176 = vmatpush1.msra.mxu0 %v4241
        %5177 = vmatprep.subr.mxu0 0.0
        %5178 = vmatpush1.msra.mxu0 %v4240
        %5179 = vmatprep.subr.mxu0 0.0
        %5180 = vmatpush1.msra.mxu0 %v4239
        %5181 = vmatprep.subr.mxu0 0.0
        %5182 = vmatpush2.msra.mxu0 %v4270
        %5183 = vmatprep.subr.mxu0 0.0
        %5184 = vmatpush2.msra.mxu0 %v4269
        %5185 = vmatprep.subr.mxu0 0.0
        %5186 = vmatpush2.msra.mxu0 %v4268
        %5187 = vmatprep.subr.mxu0 0.0
        %5188 = vmatpush2.msra.mxu0 %v4267
        %5189 = vmatprep.subr.mxu0 0.0
        %5190 = vmatpush2.msra.mxu0 %v4266
        %5191 = vmatprep.subr.mxu0 0.0
        %5192 = vmatpush2.msra.mxu0 %v4265
        %5193 = vmatprep.subr.mxu0 0.0
        %5194 = vmatpush2.msra.mxu0 %v4264
        %5195 = vmatprep.subr.mxu0 0.0
        %5196 = vmatpush2.msra.mxu0 %v4263
        %5197 = vmatprep.subr.mxu0 0.0
        %5198 = vmatpush2.msra.mxu0 %v4262
        %5199 = vmatprep.subr.mxu0 0.0
        %5200 = vmatpush2.msra.mxu0 %v4261
        %5201 = vmatprep.subr.mxu0 0.0
        %5202 = vmatpush2.msra.mxu0 %v4260
        %5203 = vmatprep.subr.mxu0 0.0
        %5204 = vmatpush2.msra.mxu0 %v4259
        %5205 = vmatprep.subr.mxu0 0.0
        %5206 = vmatpush2.msra.mxu0 %v4258
        %5207 = vmatprep.subr.mxu0 0.0
        %5208 = vmatpush2.msra.mxu0 %v4257
        %5209 = vmatprep.subr.mxu0 0.0
        %5210 = vmatpush2.msra.mxu0 %v4256
        %5211 = vmatprep.subr.mxu0 0.0
        %5212 = vmatpush2.msra.mxu0 %v4255
        %5213 = vmatprep.mubr.f32.mxu0 %v572
        %5214 = vmatmul.mubr.f32.gmra.mxu0 %v571
        %v5215 = vpop.f32.mrf.mxu0
        %v5216 = vadd.f32 %v5146, %v5215
        %v5217 = vpop.f32.mrf.mxu0
        %5218 = vdwg.mxu0
        %5219 = vmatprep.subr.mxu0 0.0
        %5220 = vmatpush1.msra.mxu0 %v4286
        %5221 = vmatprep.subr.mxu0 0.0
        %5222 = vmatpush1.msra.mxu0 %v4285
        %5223 = vmatprep.subr.mxu0 0.0
        %5224 = vmatpush1.msra.mxu0 %v4284
        %5225 = vmatprep.subr.mxu0 0.0
        %5226 = vmatpush1.msra.mxu0 %v4283
        %5227 = vmatprep.subr.mxu0 0.0
        %5228 = vmatpush1.msra.mxu0 %v4282
        %5229 = vmatprep.subr.mxu0 0.0
        %5230 = vmatpush1.msra.mxu0 %v4281
        %5231 = vmatprep.subr.mxu0 0.0
        %5232 = vmatpush1.msra.mxu0 %v4280
        %5233 = vmatprep.subr.mxu0 0.0
        %5234 = vmatpush1.msra.mxu0 %v4279
        %5235 = vmatprep.subr.mxu0 0.0
        %5236 = vmatpush1.msra.mxu0 %v4278
        %5237 = vmatprep.subr.mxu0 0.0
        %5238 = vmatpush1.msra.mxu0 %v4277
        %5239 = vmatprep.subr.mxu0 0.0
        %5240 = vmatpush1.msra.mxu0 %v4276
        %5241 = vmatprep.subr.mxu0 0.0
        %5242 = vmatpush1.msra.mxu0 %v4275
        %5243 = vmatprep.subr.mxu0 0.0
        %5244 = vmatpush1.msra.mxu0 %v4274
        %5245 = vmatprep.subr.mxu0 0.0
        %5246 = vmatpush1.msra.mxu0 %v4273
        %5247 = vmatprep.subr.mxu0 0.0
        %5248 = vmatpush1.msra.mxu0 %v4272
        %5249 = vmatprep.subr.mxu0 0.0
        %5250 = vmatpush1.msra.mxu0 %v4271
        %5251 = vmatprep.subr.mxu0 0.0
        %5252 = vmatpush2.msra.mxu0 %v4302
        %5253 = vmatprep.subr.mxu0 0.0
        %5254 = vmatpush2.msra.mxu0 %v4301
        %5255 = vmatprep.subr.mxu0 0.0
        %5256 = vmatpush2.msra.mxu0 %v4300
        %5257 = vmatprep.subr.mxu0 0.0
        %5258 = vmatpush2.msra.mxu0 %v4299
        %5259 = vmatprep.subr.mxu0 0.0
        %5260 = vmatpush2.msra.mxu0 %v4298
        %5261 = vmatprep.subr.mxu0 0.0
        %5262 = vmatpush2.msra.mxu0 %v4297
        %5263 = vmatprep.subr.mxu0 0.0
        %5264 = vmatpush2.msra.mxu0 %v4296
        %5265 = vmatprep.subr.mxu0 0.0
        %5266 = vmatpush2.msra.mxu0 %v4295
        %5267 = vmatprep.subr.mxu0 0.0
        %5268 = vmatpush2.msra.mxu0 %v4294
        %5269 = vmatprep.subr.mxu0 0.0
        %5270 = vmatpush2.msra.mxu0 %v4293
        %5271 = vmatprep.subr.mxu0 0.0
        %5272 = vmatpush2.msra.mxu0 %v4292
        %5273 = vmatprep.subr.mxu0 0.0
        %5274 = vmatpush2.msra.mxu0 %v4291
        %5275 = vmatprep.subr.mxu0 0.0
        %5276 = vmatpush2.msra.mxu0 %v4290
        %5277 = vmatprep.subr.mxu0 0.0
        %5278 = vmatpush2.msra.mxu0 %v4289
        %5279 = vmatprep.subr.mxu0 0.0
        %5280 = vmatpush2.msra.mxu0 %v4288
        %5281 = vmatprep.subr.mxu0 0.0
        %5282 = vmatpush2.msra.mxu0 %v4287
        %5283 = vmatprep.mubr.f32.mxu0 %v570
        %5284 = vmatmul.mubr.f32.gmra.mxu0 %v569
        %v5285 = vpop.f32.mrf.mxu0
        %v5286 = vadd.f32 %v4502, %v5285
        %v5287 = vpop.f32.mrf.mxu0
        %5288 = vdwg.mxu0
        %5289 = vmatprep.subr.mxu0 0.0
        %5290 = vmatpush1.msra.mxu0 %v4318
        %5291 = vmatprep.subr.mxu0 0.0
        %5292 = vmatpush1.msra.mxu0 %v4317
        %5293 = vmatprep.subr.mxu0 0.0
        %5294 = vmatpush1.msra.mxu0 %v4316
        %5295 = vmatprep.subr.mxu0 0.0
        %5296 = vmatpush1.msra.mxu0 %v4315
        %5297 = vmatprep.subr.mxu0 0.0
        %5298 = vmatpush1.msra.mxu0 %v4314
        %5299 = vmatprep.subr.mxu0 0.0
        %5300 = vmatpush1.msra.mxu0 %v4313
        %5301 = vmatprep.subr.mxu0 0.0
        %5302 = vmatpush1.msra.mxu0 %v4312
        %5303 = vmatprep.subr.mxu0 0.0
        %5304 = vmatpush1.msra.mxu0 %v4311
        %5305 = vmatprep.subr.mxu0 0.0
        %5306 = vmatpush1.msra.mxu0 %v4310
        %5307 = vmatprep.subr.mxu0 0.0
        %5308 = vmatpush1.msra.mxu0 %v4309
        %5309 = vmatprep.subr.mxu0 0.0
        %5310 = vmatpush1.msra.mxu0 %v4308
        %5311 = vmatprep.subr.mxu0 0.0
        %5312 = vmatpush1.msra.mxu0 %v4307
        %5313 = vmatprep.subr.mxu0 0.0
        %5314 = vmatpush1.msra.mxu0 %v4306
        %5315 = vmatprep.subr.mxu0 0.0
        %5316 = vmatpush1.msra.mxu0 %v4305
        %5317 = vmatprep.subr.mxu0 0.0
        %5318 = vmatpush1.msra.mxu0 %v4304
        %5319 = vmatprep.subr.mxu0 0.0
        %5320 = vmatpush1.msra.mxu0 %v4303
        %5321 = vmatprep.subr.mxu0 0.0
        %5322 = vmatpush2.msra.mxu0 %v4334
        %5323 = vmatprep.subr.mxu0 0.0
        %5324 = vmatpush2.msra.mxu0 %v4333
        %5325 = vmatprep.subr.mxu0 0.0
        %5326 = vmatpush2.msra.mxu0 %v4332
        %5327 = vmatprep.subr.mxu0 0.0
        %5328 = vmatpush2.msra.mxu0 %v4331
        %5329 = vmatprep.subr.mxu0 0.0
        %5330 = vmatpush2.msra.mxu0 %v4330
        %5331 = vmatprep.subr.mxu0 0.0
        %5332 = vmatpush2.msra.mxu0 %v4329
        %5333 = vmatprep.subr.mxu0 0.0
        %5334 = vmatpush2.msra.mxu0 %v4328
        %5335 = vmatprep.subr.mxu0 0.0
        %5336 = vmatpush2.msra.mxu0 %v4327
        %5337 = vmatprep.subr.mxu0 0.0
        %5338 = vmatpush2.msra.mxu0 %v4326
        %5339 = vmatprep.subr.mxu0 0.0
        %5340 = vmatpush2.msra.mxu0 %v4325
        %5341 = vmatprep.subr.mxu0 0.0
        %5342 = vmatpush2.msra.mxu0 %v4324
        %5343 = vmatprep.subr.mxu0 0.0
        %5344 = vmatpush2.msra.mxu0 %v4323
        %5345 = vmatprep.subr.mxu0 0.0
        %5346 = vmatpush2.msra.mxu0 %v4322
        %5347 = vmatprep.subr.mxu0 0.0
        %5348 = vmatpush2.msra.mxu0 %v4321
        %5349 = vmatprep.subr.mxu0 0.0
        %5350 = vmatpush2.msra.mxu0 %v4320
        %5351 = vmatprep.subr.mxu0 0.0
        %5352 = vmatpush2.msra.mxu0 %v4319
        %5353 = vmatprep.mubr.f32.mxu0 %v572
        %5354 = vmatmul.mubr.f32.gmra.mxu0 %v571
        %v5355 = vpop.f32.mrf.mxu0
        %v5356 = vadd.f32 %v5286, %v5355
        %v5357 = vpop.f32.mrf.mxu0
        %5358 = vdwg.mxu0
        %5359 = vmatprep.subr.mxu0 0.0
        %5360 = vmatpush1.msra.mxu0 %v4350
        %5361 = vmatprep.subr.mxu0 0.0
        %5362 = vmatpush1.msra.mxu0 %v4349
        %5363 = vmatprep.subr.mxu0 0.0
        %5364 = vmatpush1.msra.mxu0 %v4348
        %5365 = vmatprep.subr.mxu0 0.0
        %5366 = vmatpush1.msra.mxu0 %v4347
        %5367 = vmatprep.subr.mxu0 0.0
        %5368 = vmatpush1.msra.mxu0 %v4346
        %5369 = vmatprep.subr.mxu0 0.0
        %5370 = vmatpush1.msra.mxu0 %v4345
        %5371 = vmatprep.subr.mxu0 0.0
        %5372 = vmatpush1.msra.mxu0 %v4344
        %5373 = vmatprep.subr.mxu0 0.0
        %5374 = vmatpush1.msra.mxu0 %v4343
        %5375 = vmatprep.subr.mxu0 0.0
        %5376 = vmatpush1.msra.mxu0 %v4342
        %5377 = vmatprep.subr.mxu0 0.0
        %5378 = vmatpush1.msra.mxu0 %v4341
        %5379 = vmatprep.subr.mxu0 0.0
        %5380 = vmatpush1.msra.mxu0 %v4340
        %5381 = vmatprep.subr.mxu0 0.0
        %5382 = vmatpush1.msra.mxu0 %v4339
        %5383 = vmatprep.subr.mxu0 0.0
        %5384 = vmatpush1.msra.mxu0 %v4338
        %5385 = vmatprep.subr.mxu0 0.0
        %5386 = vmatpush1.msra.mxu0 %v4337
        %5387 = vmatprep.subr.mxu0 0.0
        %5388 = vmatpush1.msra.mxu0 %v4336
        %5389 = vmatprep.subr.mxu0 0.0
        %5390 = vmatpush1.msra.mxu0 %v4335
        %5391 = vmatprep.subr.mxu0 0.0
        %5392 = vmatpush2.msra.mxu0 %v4366
        %5393 = vmatprep.subr.mxu0 0.0
        %5394 = vmatpush2.msra.mxu0 %v4365
        %5395 = vmatprep.subr.mxu0 0.0
        %5396 = vmatpush2.msra.mxu0 %v4364
        %5397 = vmatprep.subr.mxu0 0.0
        %5398 = vmatpush2.msra.mxu0 %v4363
        %5399 = vmatprep.subr.mxu0 0.0
        %5400 = vmatpush2.msra.mxu0 %v4362
        %5401 = vmatprep.subr.mxu0 0.0
        %5402 = vmatpush2.msra.mxu0 %v4361
        %5403 = vmatprep.subr.mxu0 0.0
        %5404 = vmatpush2.msra.mxu0 %v4360
        %5405 = vmatprep.subr.mxu0 0.0
        %5406 = vmatpush2.msra.mxu0 %v4359
        %5407 = vmatprep.subr.mxu0 0.0
        %5408 = vmatpush2.msra.mxu0 %v4358
        %5409 = vmatprep.subr.mxu0 0.0
        %5410 = vmatpush2.msra.mxu0 %v4357
        %5411 = vmatprep.subr.mxu0 0.0
        %5412 = vmatpush2.msra.mxu0 %v4356
        %5413 = vmatprep.subr.mxu0 0.0
        %5414 = vmatpush2.msra.mxu0 %v4355
        %5415 = vmatprep.subr.mxu0 0.0
        %5416 = vmatpush2.msra.mxu0 %v4354
        %5417 = vmatprep.subr.mxu0 0.0
        %5418 = vmatpush2.msra.mxu0 %v4353
        %5419 = vmatprep.subr.mxu0 0.0
        %5420 = vmatpush2.msra.mxu0 %v4352
        %5421 = vmatprep.subr.mxu0 0.0
        %5422 = vmatpush2.msra.mxu0 %v4351
        %5423 = vmatprep.mubr.f32.mxu0 %v570
        %5424 = vmatmul.mubr.f32.gmra.mxu0 %v569
        %v5425 = vpop.f32.mrf.mxu0
        %v5426 = vadd.f32 %v4506, %v5425
        %v5427 = vpop.f32.mrf.mxu0
        %5428 = vdwg.mxu0
        %5429 = vmatprep.subr.mxu0 0.0
        %5430 = vmatpush1.msra.mxu0 %v4382
        %5431 = vmatprep.subr.mxu0 0.0
        %5432 = vmatpush1.msra.mxu0 %v4381
        %5433 = vmatprep.subr.mxu0 0.0
        %5434 = vmatpush1.msra.mxu0 %v4380
        %5435 = vmatprep.subr.mxu0 0.0
        %5436 = vmatpush1.msra.mxu0 %v4379
        %5437 = vmatprep.subr.mxu0 0.0
        %5438 = vmatpush1.msra.mxu0 %v4378
        %5439 = vmatprep.subr.mxu0 0.0
        %5440 = vmatpush1.msra.mxu0 %v4377
        %5441 = vmatprep.subr.mxu0 0.0
        %5442 = vmatpush1.msra.mxu0 %v4376
        %5443 = vmatprep.subr.mxu0 0.0
        %5444 = vmatpush1.msra.mxu0 %v4375
        %5445 = vmatprep.subr.mxu0 0.0
        %5446 = vmatpush1.msra.mxu0 %v4374
        %5447 = vmatprep.subr.mxu0 0.0
        %5448 = vmatpush1.msra.mxu0 %v4373
        %5449 = vmatprep.subr.mxu0 0.0
        %5450 = vmatpush1.msra.mxu0 %v4372
        %5451 = vmatprep.subr.mxu0 0.0
        %5452 = vmatpush1.msra.mxu0 %v4371
        %5453 = vmatprep.subr.mxu0 0.0
        %5454 = vmatpush1.msra.mxu0 %v4370
        %5455 = vmatprep.subr.mxu0 0.0
        %5456 = vmatpush1.msra.mxu0 %v4369
        %5457 = vmatprep.subr.mxu0 0.0
        %5458 = vmatpush1.msra.mxu0 %v4368
        %5459 = vmatprep.subr.mxu0 0.0
        %5460 = vmatpush1.msra.mxu0 %v4367
        %5461 = vmatprep.subr.mxu0 0.0
        %5462 = vmatpush2.msra.mxu0 %v4398
        %5463 = vmatprep.subr.mxu0 0.0
        %5464 = vmatpush2.msra.mxu0 %v4397
        %5465 = vmatprep.subr.mxu0 0.0
        %5466 = vmatpush2.msra.mxu0 %v4396
        %5467 = vmatprep.subr.mxu0 0.0
        %5468 = vmatpush2.msra.mxu0 %v4395
        %5469 = vmatprep.subr.mxu0 0.0
        %5470 = vmatpush2.msra.mxu0 %v4394
        %5471 = vmatprep.subr.mxu0 0.0
        %5472 = vmatpush2.msra.mxu0 %v4393
        %5473 = vmatprep.subr.mxu0 0.0
        %5474 = vmatpush2.msra.mxu0 %v4392
        %5475 = vmatprep.subr.mxu0 0.0
        %5476 = vmatpush2.msra.mxu0 %v4391
        %5477 = vmatprep.subr.mxu0 0.0
        %5478 = vmatpush2.msra.mxu0 %v4390
        %5479 = vmatprep.subr.mxu0 0.0
        %5480 = vmatpush2.msra.mxu0 %v4389
        %5481 = vmatprep.subr.mxu0 0.0
        %5482 = vmatpush2.msra.mxu0 %v4388
        %5483 = vmatprep.subr.mxu0 0.0
        %5484 = vmatpush2.msra.mxu0 %v4387
        %5485 = vmatprep.subr.mxu0 0.0
        %5486 = vmatpush2.msra.mxu0 %v4386
        %5487 = vmatprep.subr.mxu0 0.0
        %5488 = vmatpush2.msra.mxu0 %v4385
        %5489 = vmatprep.subr.mxu0 0.0
        %5490 = vmatpush2.msra.mxu0 %v4384
        %5491 = vmatprep.subr.mxu0 0.0
        %5492 = vmatpush2.msra.mxu0 %v4383
        %5493 = vmatprep.mubr.f32.mxu0 %v572
        %5494 = vmatmul.mubr.f32.gmra.mxu0 %v571
        %v5495 = vpop.f32.mrf.mxu0
        %v5496 = vadd.f32 %v5426, %v5495
        %v5497 = vpop.f32.mrf.mxu0
        %5498 = vdwg.mxu0
        %5499 = vmatprep.subr.mxu0 0.0
        %5500 = vmatpush1.msra.mxu0 %v4414
        %5501 = vmatprep.subr.mxu0 0.0
        %5502 = vmatpush1.msra.mxu0 %v4413
        %5503 = vmatprep.subr.mxu0 0.0
        %5504 = vmatpush1.msra.mxu0 %v4412
        %5505 = vmatprep.subr.mxu0 0.0
        %5506 = vmatpush1.msra.mxu0 %v4411
        %5507 = vmatprep.subr.mxu0 0.0
        %5508 = vmatpush1.msra.mxu0 %v4410
        %5509 = vmatprep.subr.mxu0 0.0
        %5510 = vmatpush1.msra.mxu0 %v4409
        %5511 = vmatprep.subr.mxu0 0.0
        %5512 = vmatpush1.msra.mxu0 %v4408
        %5513 = vmatprep.subr.mxu0 0.0
        %5514 = vmatpush1.msra.mxu0 %v4407
        %5515 = vmatprep.subr.mxu0 0.0
        %5516 = vmatpush1.msra.mxu0 %v4406
        %5517 = vmatprep.subr.mxu0 0.0
        %5518 = vmatpush1.msra.mxu0 %v4405
        %5519 = vmatprep.subr.mxu0 0.0
        %5520 = vmatpush1.msra.mxu0 %v4404
        %5521 = vmatprep.subr.mxu0 0.0
        %5522 = vmatpush1.msra.mxu0 %v4403
        %5523 = vmatprep.subr.mxu0 0.0
        %5524 = vmatpush1.msra.mxu0 %v4402
        %5525 = vmatprep.subr.mxu0 0.0
        %5526 = vmatpush1.msra.mxu0 %v4401
        %5527 = vmatprep.subr.mxu0 0.0
        %5528 = vmatpush1.msra.mxu0 %v4400
        %5529 = vmatprep.subr.mxu0 0.0
        %5530 = vmatpush1.msra.mxu0 %v4399
        %5531 = vmatprep.subr.mxu0 0.0
        %5532 = vmatpush2.msra.mxu0 %v4430
        %5533 = vmatprep.subr.mxu0 0.0
        %5534 = vmatpush2.msra.mxu0 %v4429
        %5535 = vmatprep.subr.mxu0 0.0
        %5536 = vmatpush2.msra.mxu0 %v4428
        %5537 = vmatprep.subr.mxu0 0.0
        %5538 = vmatpush2.msra.mxu0 %v4427
        %5539 = vmatprep.subr.mxu0 0.0
        %5540 = vmatpush2.msra.mxu0 %v4426
        %5541 = vmatprep.subr.mxu0 0.0
        %5542 = vmatpush2.msra.mxu0 %v4425
        %5543 = vmatprep.subr.mxu0 0.0
        %5544 = vmatpush2.msra.mxu0 %v4424
        %5545 = vmatprep.subr.mxu0 0.0
        %5546 = vmatpush2.msra.mxu0 %v4423
        %5547 = vmatprep.subr.mxu0 0.0
        %5548 = vmatpush2.msra.mxu0 %v4422
        %5549 = vmatprep.subr.mxu0 0.0
        %5550 = vmatpush2.msra.mxu0 %v4421
        %5551 = vmatprep.subr.mxu0 0.0
        %5552 = vmatpush2.msra.mxu0 %v4420
        %5553 = vmatprep.subr.mxu0 0.0
        %5554 = vmatpush2.msra.mxu0 %v4419
        %5555 = vmatprep.subr.mxu0 0.0
        %5556 = vmatpush2.msra.mxu0 %v4418
        %5557 = vmatprep.subr.mxu0 0.0
        %5558 = vmatpush2.msra.mxu0 %v4417
        %5559 = vmatprep.subr.mxu0 0.0
        %5560 = vmatpush2.msra.mxu0 %v4416
        %5561 = vmatprep.subr.mxu0 0.0
        %5562 = vmatpush2.msra.mxu0 %v4415
        %5563 = vmatprep.mubr.f32.mxu0 %v570
        %5564 = vmatmul.mubr.f32.gmra.mxu0 %v569
        %v5565 = vpop.f32.mrf.mxu0
        %v5566 = vadd.f32 %v4510, %v5565
        %v5567 = vpop.f32.mrf.mxu0
        %5568 = vdwg.mxu0
        %5569 = vmatprep.subr.mxu0 0.0
        %5570 = vmatpush1.msra.mxu0 %v4446
        %5571 = vmatprep.subr.mxu0 0.0
        %5572 = vmatpush1.msra.mxu0 %v4445
        %5573 = vmatprep.subr.mxu0 0.0
        %5574 = vmatpush1.msra.mxu0 %v4444
        %5575 = vmatprep.subr.mxu0 0.0
        %5576 = vmatpush1.msra.mxu0 %v4443
        %5577 = vmatprep.subr.mxu0 0.0
        %5578 = vmatpush1.msra.mxu0 %v4442
        %5579 = vmatprep.subr.mxu0 0.0
        %5580 = vmatpush1.msra.mxu0 %v4441
        %5581 = vmatprep.subr.mxu0 0.0
        %5582 = vmatpush1.msra.mxu0 %v4440
        %5583 = vmatprep.subr.mxu0 0.0
        %5584 = vmatpush1.msra.mxu0 %v4439
        %5585 = vmatprep.subr.mxu0 0.0
        %5586 = vmatpush1.msra.mxu0 %v4438
        %5587 = vmatprep.subr.mxu0 0.0
        %5588 = vmatpush1.msra.mxu0 %v4437
        %5589 = vmatprep.subr.mxu0 0.0
        %5590 = vmatpush1.msra.mxu0 %v4436
        %5591 = vmatprep.subr.mxu0 0.0
        %5592 = vmatpush1.msra.mxu0 %v4435
        %5593 = vmatprep.subr.mxu0 0.0
        %5594 = vmatpush1.msra.mxu0 %v4434
        %5595 = vmatprep.subr.mxu0 0.0
        %5596 = vmatpush1.msra.mxu0 %v4433
        %5597 = vmatprep.subr.mxu0 0.0
        %5598 = vmatpush1.msra.mxu0 %v4432
        %5599 = vmatprep.subr.mxu0 0.0
        %5600 = vmatpush1.msra.mxu0 %v4431
        %5601 = vmatprep.subr.mxu0 0.0
        %5602 = vmatpush2.msra.mxu0 %v4462
        %5603 = vmatprep.subr.mxu0 0.0
        %5604 = vmatpush2.msra.mxu0 %v4461
        %5605 = vmatprep.subr.mxu0 0.0
        %5606 = vmatpush2.msra.mxu0 %v4460
        %5607 = vmatprep.subr.mxu0 0.0
        %5608 = vmatpush2.msra.mxu0 %v4459
        %5609 = vmatprep.subr.mxu0 0.0
        %5610 = vmatpush2.msra.mxu0 %v4458
        %5611 = vmatprep.subr.mxu0 0.0
        %5612 = vmatpush2.msra.mxu0 %v4457
        %5613 = vmatprep.subr.mxu0 0.0
        %5614 = vmatpush2.msra.mxu0 %v4456
        %5615 = vmatprep.subr.mxu0 0.0
        %5616 = vmatpush2.msra.mxu0 %v4455
        %5617 = vmatprep.subr.mxu0 0.0
        %5618 = vmatpush2.msra.mxu0 %v4454
        %5619 = vmatprep.subr.mxu0 0.0
        %5620 = vmatpush2.msra.mxu0 %v4453
        %5621 = vmatprep.subr.mxu0 0.0
        %5622 = vmatpush2.msra.mxu0 %v4452
        %5623 = vmatprep.subr.mxu0 0.0
        %5624 = vmatpush2.msra.mxu0 %v4451
        %5625 = vmatprep.subr.mxu0 0.0
        %5626 = vmatpush2.msra.mxu0 %v4450
        %5627 = vmatprep.subr.mxu0 0.0
        %5628 = vmatpush2.msra.mxu0 %v4449
        %5629 = vmatprep.subr.mxu0 0.0
        %5630 = vmatpush2.msra.mxu0 %v4448
        %5631 = vmatprep.subr.mxu0 0.0
        %5632 = vmatpush2.msra.mxu0 %v4447
        %5633 = vmatprep.mubr.f32.mxu0 %v572
        %5634 = vmatmul.mubr.f32.gmra.mxu0 %v571
        %v5635 = vpop.f32.mrf.mxu0
        %v5636 = vadd.f32 %v5566, %v5635
        %v5637 = vpop.f32.mrf.mxu0
        %5638 = vdwg.mxu0
        %vm5639 = vcmask 523264
        %v5641 = vsel %vm5639, %v1280, 0
        %v5644 = vsel %vm5639, %v2968, 0
        %5646 = vmatprep.subr.mxu0 0.0
        %5647 = vmatpush1.xpose.msra.mxu0 0.0
        %5648 = vmatprep.subr.mxu0 0.0
        %5649 = vmatpush1.xpose.msra.mxu0 0.0
        %5650 = vmatprep.subr.mxu0 0.0
        %5651 = vmatpush1.xpose.msra.mxu0 0.0
        %5652 = vmatprep.subr.mxu0 0.0
        %5653 = vmatpush1.xpose.msra.mxu0 0.0
        %5654 = vmatprep.subr.mxu0 0.0
        %5655 = vmatpush1.xpose.msra.mxu0 0.0
        %5656 = vmatprep.subr.mxu0 0.0
        %5657 = vmatpush1.xpose.msra.mxu0 0.0
        %5658 = vmatprep.subr.mxu0 0.0
        %5659 = vmatpush1.xpose.msra.mxu0 0.0
        %5660 = vmatprep.subr.mxu0 0.0
        %5661 = vmatpush1.xpose.msra.mxu0 0.0
        %5662 = vmatprep.subr.mxu0 0.0
        %5663 = vmatpush1.xpose.msra.mxu0 0.0
        %5664 = vmatprep.subr.mxu0 0.0
        %5665 = vmatpush1.xpose.msra.mxu0 0.0
        %5666 = vmatprep.subr.mxu0 0.0
        %5667 = vmatpush1.xpose.msra.mxu0 0.0
        %5668 = vmatprep.subr.mxu0 0.0
        %5669 = vmatpush1.xpose.msra.mxu0 0.0
        %5670 = vmatprep.subr.mxu0 0.0
        %5671 = vmatpush1.xpose.msra.mxu0 0.0
        %5672 = vmatprep.subr.mxu0 0.0
        %5673 = vmatpush1.xpose.msra.mxu0 0.0
        %5674 = vmatprep.subr.mxu0 0.0
        %5675 = vmatpush1.xpose.msra.mxu0 0.0
        %5676 = vmatprep.subr.mxu0 0.0
        %5677 = vmatpush1.xpose.msra.mxu0 %v5644
        %5678 = vmatprep.subr.mxu0 0.0
        %5679 = vmatpush2.xpose.msra.mxu0 0.0
        %5680 = vmatprep.subr.mxu0 0.0
        %5681 = vmatpush2.xpose.msra.mxu0 0.0
        %5682 = vmatprep.subr.mxu0 0.0
        %5683 = vmatpush2.xpose.msra.mxu0 0.0
        %5684 = vmatprep.subr.mxu0 0.0
        %5685 = vmatpush2.xpose.msra.mxu0 0.0
        %5686 = vmatprep.subr.mxu0 0.0
        %5687 = vmatpush2.xpose.msra.mxu0 0.0
        %5688 = vmatprep.subr.mxu0 0.0
        %5689 = vmatpush2.xpose.msra.mxu0 0.0
        %5690 = vmatprep.subr.mxu0 0.0
        %5691 = vmatpush2.xpose.msra.mxu0 0.0
        %5692 = vmatprep.subr.mxu0 0.0
        %5693 = vmatpush2.xpose.msra.mxu0 0.0
        %5694 = vmatprep.subr.mxu0 0.0
        %5695 = vmatpush2.xpose.msra.mxu0 0.0
        %5696 = vmatprep.subr.mxu0 0.0
        %5697 = vmatpush2.xpose.msra.mxu0 0.0
        %5698 = vmatprep.subr.mxu0 0.0
        %5699 = vmatpush2.xpose.msra.mxu0 0.0
        %5700 = vmatprep.subr.mxu0 0.0
        %5701 = vmatpush2.xpose.msra.mxu0 0.0
        %5702 = vmatprep.subr.mxu0 0.0
        %5703 = vmatpush2.xpose.msra.mxu0 0.0
        %5704 = vmatprep.subr.mxu0 0.0
        %5705 = vmatpush2.xpose.msra.mxu0 0.0
        %5706 = vmatprep.subr.mxu0 0.0
        %5707 = vmatpush2.xpose.msra.mxu0 0.0
        %5708 = vmatprep.subr.mxu0 0.0
        %5709 = vmatpush2.xpose.msra.mxu0 0.0
        %5710 = vmatprep.mubr.f32.mxu0 0.0
        %5711 = vmatmul.mubr.f32.gmra.mxu0 %v5641
        %v5712 = vpop.f32.mrf.mxu0
        %v5713 = vadd.f32 0.0, %v5712
        %v5714 = vpop.f32.mrf.mxu0
        %5715 = vdwg.mxu0
        %v5717 = vsel %vm5639, %v1420, 0
        %v5720 = vsel %vm5639, %v3108, 0
        %5722 = vmatprep.subr.mxu0 0.0
        %5723 = vmatpush1.xpose.msra.mxu0 0.0
        %5724 = vmatprep.subr.mxu0 0.0
        %5725 = vmatpush1.xpose.msra.mxu0 0.0
        %5726 = vmatprep.subr.mxu0 0.0
        %5727 = vmatpush1.xpose.msra.mxu0 0.0
        %5728 = vmatprep.subr.mxu0 0.0
        %5729 = vmatpush1.xpose.msra.mxu0 0.0
        %5730 = vmatprep.subr.mxu0 0.0
        %5731 = vmatpush1.xpose.msra.mxu0 0.0
        %5732 = vmatprep.subr.mxu0 0.0
        %5733 = vmatpush1.xpose.msra.mxu0 0.0
        %5734 = vmatprep.subr.mxu0 0.0
        %5735 = vmatpush1.xpose.msra.mxu0 0.0
        %5736 = vmatprep.subr.mxu0 0.0
        %5737 = vmatpush1.xpose.msra.mxu0 0.0
        %5738 = vmatprep.subr.mxu0 0.0
        %5739 = vmatpush1.xpose.msra.mxu0 0.0
        %5740 = vmatprep.subr.mxu0 0.0
        %5741 = vmatpush1.xpose.msra.mxu0 0.0
        %5742 = vmatprep.subr.mxu0 0.0
        %5743 = vmatpush1.xpose.msra.mxu0 0.0
        %5744 = vmatprep.subr.mxu0 0.0
        %5745 = vmatpush1.xpose.msra.mxu0 0.0
        %5746 = vmatprep.subr.mxu0 0.0
        %5747 = vmatpush1.xpose.msra.mxu0 0.0
        %5748 = vmatprep.subr.mxu0 0.0
        %5749 = vmatpush1.xpose.msra.mxu0 0.0
        %5750 = vmatprep.subr.mxu0 0.0
        %5751 = vmatpush1.xpose.msra.mxu0 0.0
        %5752 = vmatprep.subr.mxu0 0.0
        %5753 = vmatpush1.xpose.msra.mxu0 %v5720
        %5754 = vmatprep.subr.mxu0 0.0
        %5755 = vmatpush2.xpose.msra.mxu0 0.0
        %5756 = vmatprep.subr.mxu0 0.0
        %5757 = vmatpush2.xpose.msra.mxu0 0.0
        %5758 = vmatprep.subr.mxu0 0.0
        %5759 = vmatpush2.xpose.msra.mxu0 0.0
        %5760 = vmatprep.subr.mxu0 0.0
        %5761 = vmatpush2.xpose.msra.mxu0 0.0
        %5762 = vmatprep.subr.mxu0 0.0
        %5763 = vmatpush2.xpose.msra.mxu0 0.0
        %5764 = vmatprep.subr.mxu0 0.0
        %5765 = vmatpush2.xpose.msra.mxu0 0.0
        %5766 = vmatprep.subr.mxu0 0.0
        %5767 = vmatpush2.xpose.msra.mxu0 0.0
        %5768 = vmatprep.subr.mxu0 0.0
        %5769 = vmatpush2.xpose.msra.mxu0 0.0
        %5770 = vmatprep.subr.mxu0 0.0
        %5771 = vmatpush2.xpose.msra.mxu0 0.0
        %5772 = vmatprep.subr.mxu0 0.0
        %5773 = vmatpush2.xpose.msra.mxu0 0.0
        %5774 = vmatprep.subr.mxu0 0.0
        %5775 = vmatpush2.xpose.msra.mxu0 0.0
        %5776 = vmatprep.subr.mxu0 0.0
        %5777 = vmatpush2.xpose.msra.mxu0 0.0
        %5778 = vmatprep.subr.mxu0 0.0
        %5779 = vmatpush2.xpose.msra.mxu0 0.0
        %5780 = vmatprep.subr.mxu0 0.0
        %5781 = vmatpush2.xpose.msra.mxu0 0.0
        %5782 = vmatprep.subr.mxu0 0.0
        %5783 = vmatpush2.xpose.msra.mxu0 0.0
        %5784 = vmatprep.subr.mxu0 0.0
        %5785 = vmatpush2.xpose.msra.mxu0 0.0
        %5786 = vmatprep.mubr.f32.mxu0 0.0
        %5787 = vmatmul.mubr.f32.gmra.mxu0 %v5717
        %v5788 = vpop.f32.mrf.mxu0
        %v5789 = vadd.f32 0.0, %v5788
        %v5790 = vpop.f32.mrf.mxu0
        %5791 = vdwg.mxu0
        %v5793 = vsel %vm5639, %v1560, 0
        %v5796 = vsel %vm5639, %v3248, 0
        %5798 = vmatprep.subr.mxu0 0.0
        %5799 = vmatpush1.xpose.msra.mxu0 0.0
        %5800 = vmatprep.subr.mxu0 0.0
        %5801 = vmatpush1.xpose.msra.mxu0 0.0
        %5802 = vmatprep.subr.mxu0 0.0
        %5803 = vmatpush1.xpose.msra.mxu0 0.0
        %5804 = vmatprep.subr.mxu0 0.0
        %5805 = vmatpush1.xpose.msra.mxu0 0.0
        %5806 = vmatprep.subr.mxu0 0.0
        %5807 = vmatpush1.xpose.msra.mxu0 0.0
        %5808 = vmatprep.subr.mxu0 0.0
        %5809 = vmatpush1.xpose.msra.mxu0 0.0
        %5810 = vmatprep.subr.mxu0 0.0
        %5811 = vmatpush1.xpose.msra.mxu0 0.0
        %5812 = vmatprep.subr.mxu0 0.0
        %5813 = vmatpush1.xpose.msra.mxu0 0.0
        %5814 = vmatprep.subr.mxu0 0.0
        %5815 = vmatpush1.xpose.msra.mxu0 0.0
        %5816 = vmatprep.subr.mxu0 0.0
        %5817 = vmatpush1.xpose.msra.mxu0 0.0
        %5818 = vmatprep.subr.mxu0 0.0
        %5819 = vmatpush1.xpose.msra.mxu0 0.0
        %5820 = vmatprep.subr.mxu0 0.0
        %5821 = vmatpush1.xpose.msra.mxu0 0.0
        %5822 = vmatprep.subr.mxu0 0.0
        %5823 = vmatpush1.xpose.msra.mxu0 0.0
        %5824 = vmatprep.subr.mxu0 0.0
        %5825 = vmatpush1.xpose.msra.mxu0 0.0
        %5826 = vmatprep.subr.mxu0 0.0
        %5827 = vmatpush1.xpose.msra.mxu0 0.0
        %5828 = vmatprep.subr.mxu0 0.0
        %5829 = vmatpush1.xpose.msra.mxu0 %v5796
        %5830 = vmatprep.subr.mxu0 0.0
        %5831 = vmatpush2.xpose.msra.mxu0 0.0
        %5832 = vmatprep.subr.mxu0 0.0
        %5833 = vmatpush2.xpose.msra.mxu0 0.0
        %5834 = vmatprep.subr.mxu0 0.0
        %5835 = vmatpush2.xpose.msra.mxu0 0.0
        %5836 = vmatprep.subr.mxu0 0.0
        %5837 = vmatpush2.xpose.msra.mxu0 0.0
        %5838 = vmatprep.subr.mxu0 0.0
        %5839 = vmatpush2.xpose.msra.mxu0 0.0
        %5840 = vmatprep.subr.mxu0 0.0
        %5841 = vmatpush2.xpose.msra.mxu0 0.0
        %5842 = vmatprep.subr.mxu0 0.0
        %5843 = vmatpush2.xpose.msra.mxu0 0.0
        %5844 = vmatprep.subr.mxu0 0.0
        %5845 = vmatpush2.xpose.msra.mxu0 0.0
        %5846 = vmatprep.subr.mxu0 0.0
        %5847 = vmatpush2.xpose.msra.mxu0 0.0
        %5848 = vmatprep.subr.mxu0 0.0
        %5849 = vmatpush2.xpose.msra.mxu0 0.0
        %5850 = vmatprep.subr.mxu0 0.0
        %5851 = vmatpush2.xpose.msra.mxu0 0.0
        %5852 = vmatprep.subr.mxu0 0.0
        %5853 = vmatpush2.xpose.msra.mxu0 0.0
        %5854 = vmatprep.subr.mxu0 0.0
        %5855 = vmatpush2.xpose.msra.mxu0 0.0
        %5856 = vmatprep.subr.mxu0 0.0
        %5857 = vmatpush2.xpose.msra.mxu0 0.0
        %5858 = vmatprep.subr.mxu0 0.0
        %5859 = vmatpush2.xpose.msra.mxu0 0.0
        %5860 = vmatprep.subr.mxu0 0.0
        %5861 = vmatpush2.xpose.msra.mxu0 0.0
        %5862 = vmatprep.mubr.f32.mxu0 0.0
        %5863 = vmatmul.mubr.f32.gmra.mxu0 %v5793
        %v5864 = vpop.f32.mrf.mxu0
        %v5865 = vadd.f32 0.0, %v5864
        %v5866 = vpop.f32.mrf.mxu0
        %5867 = vdwg.mxu0
        %v5869 = vsel %vm5639, %v1700, 0
        %v5872 = vsel %vm5639, %v3388, 0
        %5874 = vmatprep.subr.mxu0 0.0
        %5875 = vmatpush1.xpose.msra.mxu0 0.0
        %5876 = vmatprep.subr.mxu0 0.0
        %5877 = vmatpush1.xpose.msra.mxu0 0.0
        %5878 = vmatprep.subr.mxu0 0.0
        %5879 = vmatpush1.xpose.msra.mxu0 0.0
        %5880 = vmatprep.subr.mxu0 0.0
        %5881 = vmatpush1.xpose.msra.mxu0 0.0
        %5882 = vmatprep.subr.mxu0 0.0
        %5883 = vmatpush1.xpose.msra.mxu0 0.0
        %5884 = vmatprep.subr.mxu0 0.0
        %5885 = vmatpush1.xpose.msra.mxu0 0.0
        %5886 = vmatprep.subr.mxu0 0.0
        %5887 = vmatpush1.xpose.msra.mxu0 0.0
        %5888 = vmatprep.subr.mxu0 0.0
        %5889 = vmatpush1.xpose.msra.mxu0 0.0
        %5890 = vmatprep.subr.mxu0 0.0
        %5891 = vmatpush1.xpose.msra.mxu0 0.0
        %5892 = vmatprep.subr.mxu0 0.0
        %5893 = vmatpush1.xpose.msra.mxu0 0.0
        %5894 = vmatprep.subr.mxu0 0.0
        %5895 = vmatpush1.xpose.msra.mxu0 0.0
        %5896 = vmatprep.subr.mxu0 0.0
        %5897 = vmatpush1.xpose.msra.mxu0 0.0
        %5898 = vmatprep.subr.mxu0 0.0
        %5899 = vmatpush1.xpose.msra.mxu0 0.0
        %5900 = vmatprep.subr.mxu0 0.0
        %5901 = vmatpush1.xpose.msra.mxu0 0.0
        %5902 = vmatprep.subr.mxu0 0.0
        %5903 = vmatpush1.xpose.msra.mxu0 0.0
        %5904 = vmatprep.subr.mxu0 0.0
        %5905 = vmatpush1.xpose.msra.mxu0 %v5872
        %5906 = vmatprep.subr.mxu0 0.0
        %5907 = vmatpush2.xpose.msra.mxu0 0.0
        %5908 = vmatprep.subr.mxu0 0.0
        %5909 = vmatpush2.xpose.msra.mxu0 0.0
        %5910 = vmatprep.subr.mxu0 0.0
        %5911 = vmatpush2.xpose.msra.mxu0 0.0
        %5912 = vmatprep.subr.mxu0 0.0
        %5913 = vmatpush2.xpose.msra.mxu0 0.0
        %5914 = vmatprep.subr.mxu0 0.0
        %5915 = vmatpush2.xpose.msra.mxu0 0.0
        %5916 = vmatprep.subr.mxu0 0.0
        %5917 = vmatpush2.xpose.msra.mxu0 0.0
        %5918 = vmatprep.subr.mxu0 0.0
        %5919 = vmatpush2.xpose.msra.mxu0 0.0
        %5920 = vmatprep.subr.mxu0 0.0
        %5921 = vmatpush2.xpose.msra.mxu0 0.0
        %5922 = vmatprep.subr.mxu0 0.0
        %5923 = vmatpush2.xpose.msra.mxu0 0.0
        %5924 = vmatprep.subr.mxu0 0.0
        %5925 = vmatpush2.xpose.msra.mxu0 0.0
        %5926 = vmatprep.subr.mxu0 0.0
        %5927 = vmatpush2.xpose.msra.mxu0 0.0
        %5928 = vmatprep.subr.mxu0 0.0
        %5929 = vmatpush2.xpose.msra.mxu0 0.0
        %5930 = vmatprep.subr.mxu0 0.0
        %5931 = vmatpush2.xpose.msra.mxu0 0.0
        %5932 = vmatprep.subr.mxu0 0.0
        %5933 = vmatpush2.xpose.msra.mxu0 0.0
        %5934 = vmatprep.subr.mxu0 0.0
        %5935 = vmatpush2.xpose.msra.mxu0 0.0
        %5936 = vmatprep.subr.mxu0 0.0
        %5937 = vmatpush2.xpose.msra.mxu0 0.0
        %5938 = vmatprep.mubr.f32.mxu0 0.0
        %5939 = vmatmul.mubr.f32.gmra.mxu0 %v5869
        %v5940 = vpop.f32.mrf.mxu0
        %v5941 = vadd.f32 0.0, %v5940
        %v5942 = vpop.f32.mrf.mxu0
        %5943 = vdwg.mxu0
        %v5945 = vsel %vm5639, %v1840, 0
        %v5948 = vsel %vm5639, %v3528, 0
        %5950 = vmatprep.subr.mxu0 0.0
        %5951 = vmatpush1.xpose.msra.mxu0 0.0
        %5952 = vmatprep.subr.mxu0 0.0
        %5953 = vmatpush1.xpose.msra.mxu0 0.0
        %5954 = vmatprep.subr.mxu0 0.0
        %5955 = vmatpush1.xpose.msra.mxu0 0.0
        %5956 = vmatprep.subr.mxu0 0.0
        %5957 = vmatpush1.xpose.msra.mxu0 0.0
        %5958 = vmatprep.subr.mxu0 0.0
        %5959 = vmatpush1.xpose.msra.mxu0 0.0
        %5960 = vmatprep.subr.mxu0 0.0
        %5961 = vmatpush1.xpose.msra.mxu0 0.0
        %5962 = vmatprep.subr.mxu0 0.0
        %5963 = vmatpush1.xpose.msra.mxu0 0.0
        %5964 = vmatprep.subr.mxu0 0.0
        %5965 = vmatpush1.xpose.msra.mxu0 0.0
        %5966 = vmatprep.subr.mxu0 0.0
        %5967 = vmatpush1.xpose.msra.mxu0 0.0
        %5968 = vmatprep.subr.mxu0 0.0
        %5969 = vmatpush1.xpose.msra.mxu0 0.0
        %5970 = vmatprep.subr.mxu0 0.0
        %5971 = vmatpush1.xpose.msra.mxu0 0.0
        %5972 = vmatprep.subr.mxu0 0.0
        %5973 = vmatpush1.xpose.msra.mxu0 0.0
        %5974 = vmatprep.subr.mxu0 0.0
        %5975 = vmatpush1.xpose.msra.mxu0 0.0
        %5976 = vmatprep.subr.mxu0 0.0
        %5977 = vmatpush1.xpose.msra.mxu0 0.0
        %5978 = vmatprep.subr.mxu0 0.0
        %5979 = vmatpush1.xpose.msra.mxu0 0.0
        %5980 = vmatprep.subr.mxu0 0.0
        %5981 = vmatpush1.xpose.msra.mxu0 %v5948
        %5982 = vmatprep.subr.mxu0 0.0
        %5983 = vmatpush2.xpose.msra.mxu0 0.0
        %5984 = vmatprep.subr.mxu0 0.0
        %5985 = vmatpush2.xpose.msra.mxu0 0.0
        %5986 = vmatprep.subr.mxu0 0.0
        %5987 = vmatpush2.xpose.msra.mxu0 0.0
        %5988 = vmatprep.subr.mxu0 0.0
        %5989 = vmatpush2.xpose.msra.mxu0 0.0
        %5990 = vmatprep.subr.mxu0 0.0
        %5991 = vmatpush2.xpose.msra.mxu0 0.0
        %5992 = vmatprep.subr.mxu0 0.0
        %5993 = vmatpush2.xpose.msra.mxu0 0.0
        %5994 = vmatprep.subr.mxu0 0.0
        %5995 = vmatpush2.xpose.msra.mxu0 0.0
        %5996 = vmatprep.subr.mxu0 0.0
        %5997 = vmatpush2.xpose.msra.mxu0 0.0
        %5998 = vmatprep.subr.mxu0 0.0
        %5999 = vmatpush2.xpose.msra.mxu0 0.0
        %6000 = vmatprep.subr.mxu0 0.0
        %6001 = vmatpush2.xpose.msra.mxu0 0.0
        %6002 = vmatprep.subr.mxu0 0.0
        %6003 = vmatpush2.xpose.msra.mxu0 0.0
        %6004 = vmatprep.subr.mxu0 0.0
        %6005 = vmatpush2.xpose.msra.mxu0 0.0
        %6006 = vmatprep.subr.mxu0 0.0
        %6007 = vmatpush2.xpose.msra.mxu0 0.0
        %6008 = vmatprep.subr.mxu0 0.0
        %6009 = vmatpush2.xpose.msra.mxu0 0.0
        %6010 = vmatprep.subr.mxu0 0.0
        %6011 = vmatpush2.xpose.msra.mxu0 0.0
        %6012 = vmatprep.subr.mxu0 0.0
        %6013 = vmatpush2.xpose.msra.mxu0 0.0
        %6014 = vmatprep.mubr.f32.mxu0 0.0
        %6015 = vmatmul.mubr.f32.gmra.mxu0 %v5945
        %v6016 = vpop.f32.mrf.mxu0
        %v6017 = vadd.f32 0.0, %v6016
        %v6018 = vpop.f32.mrf.mxu0
        %6019 = vdwg.mxu0
        %v6021 = vsel %vm5639, %v1980, 0
        %v6024 = vsel %vm5639, %v3668, 0
        %6026 = vmatprep.subr.mxu0 0.0
        %6027 = vmatpush1.xpose.msra.mxu0 0.0
        %6028 = vmatprep.subr.mxu0 0.0
        %6029 = vmatpush1.xpose.msra.mxu0 0.0
        %6030 = vmatprep.subr.mxu0 0.0
        %6031 = vmatpush1.xpose.msra.mxu0 0.0
        %6032 = vmatprep.subr.mxu0 0.0
        %6033 = vmatpush1.xpose.msra.mxu0 0.0
        %6034 = vmatprep.subr.mxu0 0.0
        %6035 = vmatpush1.xpose.msra.mxu0 0.0
        %6036 = vmatprep.subr.mxu0 0.0
        %6037 = vmatpush1.xpose.msra.mxu0 0.0
        %6038 = vmatprep.subr.mxu0 0.0
        %6039 = vmatpush1.xpose.msra.mxu0 0.0
        %6040 = vmatprep.subr.mxu0 0.0
        %6041 = vmatpush1.xpose.msra.mxu0 0.0
        %6042 = vmatprep.subr.mxu0 0.0
        %6043 = vmatpush1.xpose.msra.mxu0 0.0
        %6044 = vmatprep.subr.mxu0 0.0
        %6045 = vmatpush1.xpose.msra.mxu0 0.0
        %6046 = vmatprep.subr.mxu0 0.0
        %6047 = vmatpush1.xpose.msra.mxu0 0.0
        %6048 = vmatprep.subr.mxu0 0.0
        %6049 = vmatpush1.xpose.msra.mxu0 0.0
        %6050 = vmatprep.subr.mxu0 0.0
        %6051 = vmatpush1.xpose.msra.mxu0 0.0
        %6052 = vmatprep.subr.mxu0 0.0
        %6053 = vmatpush1.xpose.msra.mxu0 0.0
        %6054 = vmatprep.subr.mxu0 0.0
        %6055 = vmatpush1.xpose.msra.mxu0 0.0
        %6056 = vmatprep.subr.mxu0 0.0
        %6057 = vmatpush1.xpose.msra.mxu0 %v6024
        %6058 = vmatprep.subr.mxu0 0.0
        %6059 = vmatpush2.xpose.msra.mxu0 0.0
        %6060 = vmatprep.subr.mxu0 0.0
        %6061 = vmatpush2.xpose.msra.mxu0 0.0
        %6062 = vmatprep.subr.mxu0 0.0
        %6063 = vmatpush2.xpose.msra.mxu0 0.0
        %6064 = vmatprep.subr.mxu0 0.0
        %6065 = vmatpush2.xpose.msra.mxu0 0.0
        %6066 = vmatprep.subr.mxu0 0.0
        %6067 = vmatpush2.xpose.msra.mxu0 0.0
        %6068 = vmatprep.subr.mxu0 0.0
        %6069 = vmatpush2.xpose.msra.mxu0 0.0
        %6070 = vmatprep.subr.mxu0 0.0
        %6071 = vmatpush2.xpose.msra.mxu0 0.0
        %6072 = vmatprep.subr.mxu0 0.0
        %6073 = vmatpush2.xpose.msra.mxu0 0.0
        %6074 = vmatprep.subr.mxu0 0.0
        %6075 = vmatpush2.xpose.msra.mxu0 0.0
        %6076 = vmatprep.subr.mxu0 0.0
        %6077 = vmatpush2.xpose.msra.mxu0 0.0
        %6078 = vmatprep.subr.mxu0 0.0
        %6079 = vmatpush2.xpose.msra.mxu0 0.0
        %6080 = vmatprep.subr.mxu0 0.0
        %6081 = vmatpush2.xpose.msra.mxu0 0.0
        %6082 = vmatprep.subr.mxu0 0.0
        %6083 = vmatpush2.xpose.msra.mxu0 0.0
        %6084 = vmatprep.subr.mxu0 0.0
        %6085 = vmatpush2.xpose.msra.mxu0 0.0
        %6086 = vmatprep.subr.mxu0 0.0
        %6087 = vmatpush2.xpose.msra.mxu0 0.0
        %6088 = vmatprep.subr.mxu0 0.0
        %6089 = vmatpush2.xpose.msra.mxu0 0.0
        %6090 = vmatprep.mubr.f32.mxu0 0.0
        %6091 = vmatmul.mubr.f32.gmra.mxu0 %v6021
        %v6092 = vpop.f32.mrf.mxu0
        %v6093 = vadd.f32 0.0, %v6092
        %v6094 = vpop.f32.mrf.mxu0
        %6095 = vdwg.mxu0
        %v6097 = vsel %vm5639, %v2120, 0
        %v6100 = vsel %vm5639, %v3808, 0
        %6102 = vmatprep.subr.mxu0 0.0
        %6103 = vmatpush1.xpose.msra.mxu0 0.0
        %6104 = vmatprep.subr.mxu0 0.0
        %6105 = vmatpush1.xpose.msra.mxu0 0.0
        %6106 = vmatprep.subr.mxu0 0.0
        %6107 = vmatpush1.xpose.msra.mxu0 0.0
        %6108 = vmatprep.subr.mxu0 0.0
        %6109 = vmatpush1.xpose.msra.mxu0 0.0
        %6110 = vmatprep.subr.mxu0 0.0
        %6111 = vmatpush1.xpose.msra.mxu0 0.0
        %6112 = vmatprep.subr.mxu0 0.0
        %6113 = vmatpush1.xpose.msra.mxu0 0.0
        %6114 = vmatprep.subr.mxu0 0.0
        %6115 = vmatpush1.xpose.msra.mxu0 0.0
        %6116 = vmatprep.subr.mxu0 0.0
        %6117 = vmatpush1.xpose.msra.mxu0 0.0
        %6118 = vmatprep.subr.mxu0 0.0
        %6119 = vmatpush1.xpose.msra.mxu0 0.0
        %6120 = vmatprep.subr.mxu0 0.0
        %6121 = vmatpush1.xpose.msra.mxu0 0.0
        %6122 = vmatprep.subr.mxu0 0.0
        %6123 = vmatpush1.xpose.msra.mxu0 0.0
        %6124 = vmatprep.subr.mxu0 0.0
        %6125 = vmatpush1.xpose.msra.mxu0 0.0
        %6126 = vmatprep.subr.mxu0 0.0
        %6127 = vmatpush1.xpose.msra.mxu0 0.0
        %6128 = vmatprep.subr.mxu0 0.0
        %6129 = vmatpush1.xpose.msra.mxu0 0.0
        %6130 = vmatprep.subr.mxu0 0.0
        %6131 = vmatpush1.xpose.msra.mxu0 0.0
        %6132 = vmatprep.subr.mxu0 0.0
        %6133 = vmatpush1.xpose.msra.mxu0 %v6100
        %6134 = vmatprep.subr.mxu0 0.0
        %6135 = vmatpush2.xpose.msra.mxu0 0.0
        %6136 = vmatprep.subr.mxu0 0.0
        %6137 = vmatpush2.xpose.msra.mxu0 0.0
        %6138 = vmatprep.subr.mxu0 0.0
        %6139 = vmatpush2.xpose.msra.mxu0 0.0
        %6140 = vmatprep.subr.mxu0 0.0
        %6141 = vmatpush2.xpose.msra.mxu0 0.0
        %6142 = vmatprep.subr.mxu0 0.0
        %6143 = vmatpush2.xpose.msra.mxu0 0.0
        %6144 = vmatprep.subr.mxu0 0.0
        %6145 = vmatpush2.xpose.msra.mxu0 0.0
        %6146 = vmatprep.subr.mxu0 0.0
        %6147 = vmatpush2.xpose.msra.mxu0 0.0
        %6148 = vmatprep.subr.mxu0 0.0
        %6149 = vmatpush2.xpose.msra.mxu0 0.0
        %6150 = vmatprep.subr.mxu0 0.0
        %6151 = vmatpush2.xpose.msra.mxu0 0.0
        %6152 = vmatprep.subr.mxu0 0.0
        %6153 = vmatpush2.xpose.msra.mxu0 0.0
        %6154 = vmatprep.subr.mxu0 0.0
        %6155 = vmatpush2.xpose.msra.mxu0 0.0
        %6156 = vmatprep.subr.mxu0 0.0
        %6157 = vmatpush2.xpose.msra.mxu0 0.0
        %6158 = vmatprep.subr.mxu0 0.0
        %6159 = vmatpush2.xpose.msra.mxu0 0.0
        %6160 = vmatprep.subr.mxu0 0.0
        %6161 = vmatpush2.xpose.msra.mxu0 0.0
        %6162 = vmatprep.subr.mxu0 0.0
        %6163 = vmatpush2.xpose.msra.mxu0 0.0
        %6164 = vmatprep.subr.mxu0 0.0
        %6165 = vmatpush2.xpose.msra.mxu0 0.0
        %6166 = vmatprep.mubr.f32.mxu0 0.0
        %6167 = vmatmul.mubr.f32.gmra.mxu0 %v6097
        %v6168 = vpop.f32.mrf.mxu0
        %v6169 = vadd.f32 0.0, %v6168
        %v6170 = vpop.f32.mrf.mxu0
        %6171 = vdwg.mxu0
        %v6173 = vsel %vm5639, %v2260, 0
        %v6176 = vsel %vm5639, %v3948, 0
        %6178 = vmatprep.subr.mxu0 0.0
        %6179 = vmatpush1.xpose.msra.mxu0 0.0
        %6180 = vmatprep.subr.mxu0 0.0
        %6181 = vmatpush1.xpose.msra.mxu0 0.0
        %6182 = vmatprep.subr.mxu0 0.0
        %6183 = vmatpush1.xpose.msra.mxu0 0.0
        %6184 = vmatprep.subr.mxu0 0.0
        %6185 = vmatpush1.xpose.msra.mxu0 0.0
        %6186 = vmatprep.subr.mxu0 0.0
        %6187 = vmatpush1.xpose.msra.mxu0 0.0
        %6188 = vmatprep.subr.mxu0 0.0
        %6189 = vmatpush1.xpose.msra.mxu0 0.0
        %6190 = vmatprep.subr.mxu0 0.0
        %6191 = vmatpush1.xpose.msra.mxu0 0.0
        %6192 = vmatprep.subr.mxu0 0.0
        %6193 = vmatpush1.xpose.msra.mxu0 0.0
        %6194 = vmatprep.subr.mxu0 0.0
        %6195 = vmatpush1.xpose.msra.mxu0 0.0
        %6196 = vmatprep.subr.mxu0 0.0
        %6197 = vmatpush1.xpose.msra.mxu0 0.0
        %6198 = vmatprep.subr.mxu0 0.0
        %6199 = vmatpush1.xpose.msra.mxu0 0.0
        %6200 = vmatprep.subr.mxu0 0.0
        %6201 = vmatpush1.xpose.msra.mxu0 0.0
        %6202 = vmatprep.subr.mxu0 0.0
        %6203 = vmatpush1.xpose.msra.mxu0 0.0
        %6204 = vmatprep.subr.mxu0 0.0
        %6205 = vmatpush1.xpose.msra.mxu0 0.0
        %6206 = vmatprep.subr.mxu0 0.0
        %6207 = vmatpush1.xpose.msra.mxu0 0.0
        %6208 = vmatprep.subr.mxu0 0.0
        %6209 = vmatpush1.xpose.msra.mxu0 %v6176
        %6210 = vmatprep.subr.mxu0 0.0
        %6211 = vmatpush2.xpose.msra.mxu0 0.0
        %6212 = vmatprep.subr.mxu0 0.0
        %6213 = vmatpush2.xpose.msra.mxu0 0.0
        %6214 = vmatprep.subr.mxu0 0.0
        %6215 = vmatpush2.xpose.msra.mxu0 0.0
        %6216 = vmatprep.subr.mxu0 0.0
        %6217 = vmatpush2.xpose.msra.mxu0 0.0
        %6218 = vmatprep.subr.mxu0 0.0
        %6219 = vmatpush2.xpose.msra.mxu0 0.0
        %6220 = vmatprep.subr.mxu0 0.0
        %6221 = vmatpush2.xpose.msra.mxu0 0.0
        %6222 = vmatprep.subr.mxu0 0.0
        %6223 = vmatpush2.xpose.msra.mxu0 0.0
        %6224 = vmatprep.subr.mxu0 0.0
        %6225 = vmatpush2.xpose.msra.mxu0 0.0
        %6226 = vmatprep.subr.mxu0 0.0
        %6227 = vmatpush2.xpose.msra.mxu0 0.0
        %6228 = vmatprep.subr.mxu0 0.0
        %6229 = vmatpush2.xpose.msra.mxu0 0.0
        %6230 = vmatprep.subr.mxu0 0.0
        %6231 = vmatpush2.xpose.msra.mxu0 0.0
        %6232 = vmatprep.subr.mxu0 0.0
        %6233 = vmatpush2.xpose.msra.mxu0 0.0
        %6234 = vmatprep.subr.mxu0 0.0
        %6235 = vmatpush2.xpose.msra.mxu0 0.0
        %6236 = vmatprep.subr.mxu0 0.0
        %6237 = vmatpush2.xpose.msra.mxu0 0.0
        %6238 = vmatprep.subr.mxu0 0.0
        %6239 = vmatpush2.xpose.msra.mxu0 0.0
        %6240 = vmatprep.subr.mxu0 0.0
        %6241 = vmatpush2.xpose.msra.mxu0 0.0
        %6242 = vmatprep.mubr.f32.mxu0 0.0
        %6243 = vmatmul.mubr.f32.gmra.mxu0 %v6173
        %v6244 = vpop.f32.mrf.mxu0
        %v6245 = vadd.f32 0.0, %v6244
        %v6246 = vpop.f32.mrf.mxu0
        %6247 = vdwg.mxu0
        %v6248 = vmul.f32 %v5713, 0.125
        %v6249 = vmul.f32 %v5789, 0.125
        %v6250 = vmul.f32 %v5865, 0.125
        %v6251 = vmul.f32 %v5941, 0.125
        %v6252 = vmul.f32 %v6017, 0.125
        %v6253 = vmul.f32 %v6093, 0.125
        %v6254 = vmul.f32 %v6169, 0.125
        %v6255 = vmul.f32 %v6245, 0.125
        %v6256 = vsel %vm574, 1, 0
        %vm6257 = vcmp.eq.s32.totalorder %v6256, 1
        %v6258 = vsel %vm6257, -1e+09, %v6248
        %v6259 = vsel %vm6257, -1e+09, %v6249
        %v6260 = vsel %vm6257, -1e+09, %v6250
        %v6261 = vsel %vm6257, -1e+09, %v6251
        %v6262 = vsel %vm6257, -1e+09, %v6252
        %v6263 = vsel %vm6257, -1e+09, %v6253
        %v6264 = vsel %vm6257, -1e+09, %v6254
        %v6265 = vsel %vm6257, -1e+09, %v6255
        %vm6266 = vcmask 64512
        %v6267 = vsel %vm6266, %v6258, -inf
        %6268 = vmax.xlane.f32.xlu0 %v6267
        %v6269 = vpop.xlane.xlu0 %6268
        %v6270 = vsel %vm6266, %v6259, -inf
        %6271 = vmax.xlane.f32.xlu0 %v6270
        %v6272 = vpop.xlane.xlu0 %6271
        %v6273 = vsel %vm6266, %v6260, -inf
        %6274 = vmax.xlane.f32.xlu0 %v6273
        %v6275 = vpop.xlane.xlu0 %6274
        %v6276 = vsel %vm6266, %v6261, -inf
        %6277 = vmax.xlane.f32.xlu0 %v6276
        %v6278 = vpop.xlane.xlu0 %6277
        %v6279 = vsel %vm6266, %v6262, -inf
        %6280 = vmax.xlane.f32.xlu0 %v6279
        %v6281 = vpop.xlane.xlu0 %6280
        %v6282 = vsel %vm6266, %v6263, -inf
        %6283 = vmax.xlane.f32.xlu0 %v6282
        %v6284 = vpop.xlane.xlu0 %6283
        %v6285 = vsel %vm6266, %v6264, -inf
        %6286 = vmax.xlane.f32.xlu0 %v6285
        %v6287 = vpop.xlane.xlu0 %6286
        %v6288 = vsel %vm6266, %v6265, -inf
        %6289 = vmax.xlane.f32.xlu0 %v6288
        %v6290 = vpop.xlane.xlu0 %6289
        %v6291 = vsub.f32 %v6258, %v6269
        %v6292 = vsub.f32 %v6259, %v6272
        %v6293 = vsub.f32 %v6260, %v6275
        %v6294 = vsub.f32 %v6261, %v6278
        %v6295 = vsub.f32 %v6262, %v6281
        %v6296 = vsub.f32 %v6263, %v6284
        %v6297 = vsub.f32 %v6264, %v6287
        %v6298 = vsub.f32 %v6265, %v6290
        %v6299 = vmul.f32 %v6291, 1.442695
        %v6300 = vpow.pop %v6299
        %v6301 = vmul.f32 %v6292, 1.442695
        %v6302 = vpow.pop %v6301
        %v6303 = vmul.f32 %v6293, 1.442695
        %v6304 = vpow.pop %v6303
        %v6305 = vmul.f32 %v6294, 1.442695
        %v6306 = vpow.pop %v6305
        %v6307 = vmul.f32 %v6295, 1.442695
        %v6308 = vpow.pop %v6307
        %v6309 = vmul.f32 %v6296, 1.442695
        %v6310 = vpow.pop %v6309
        %v6311 = vmul.f32 %v6297, 1.442695
        %v6312 = vpow.pop %v6311
        %v6313 = vmul.f32 %v6298, 1.442695
        %v6314 = vpow.pop %v6313
        %v6315 = vsel %vm6266, %v6300, 0.0
        %6316 = vadd.xlane.f32.xlu0 %v6315
        %v6317 = vpop.xlane.xlu0 %6316
        %v6318 = vsel %vm6266, %v6302, 0.0
        %6319 = vadd.xlane.f32.xlu0 %v6318
        %v6320 = vpop.xlane.xlu0 %6319
        %v6321 = vsel %vm6266, %v6304, 0.0
        %6322 = vadd.xlane.f32.xlu0 %v6321
        %v6323 = vpop.xlane.xlu0 %6322
        %v6324 = vsel %vm6266, %v6306, 0.0
        %6325 = vadd.xlane.f32.xlu0 %v6324
        %v6326 = vpop.xlane.xlu0 %6325
        %v6327 = vsel %vm6266, %v6308, 0.0
        %6328 = vadd.xlane.f32.xlu0 %v6327
        %v6329 = vpop.xlane.xlu0 %6328
        %v6330 = vsel %vm6266, %v6310, 0.0
        %6331 = vadd.xlane.f32.xlu0 %v6330
        %v6332 = vpop.xlane.xlu0 %6331
        %v6333 = vsel %vm6266, %v6312, 0.0
        %6334 = vadd.xlane.f32.xlu0 %v6333
        %v6335 = vpop.xlane.xlu0 %6334
        %v6336 = vsel %vm6266, %v6314, 0.0
        %6337 = vadd.xlane.f32.xlu0 %v6336
        %v6338 = vpop.xlane.xlu0 %6337
        %v6339 = vrcp.pop %v6317
        %v6340 = vmul.f32 %v6300, %v6339
        %v6341 = vrcp.pop %v6320
        %v6342 = vmul.f32 %v6302, %v6341
        %v6343 = vrcp.pop %v6323
        %v6344 = vmul.f32 %v6304, %v6343
        %v6345 = vrcp.pop %v6326
        %v6346 = vmul.f32 %v6306, %v6345
        %v6347 = vrcp.pop %v6329
        %v6348 = vmul.f32 %v6308, %v6347
        %v6349 = vrcp.pop %v6332
        %v6350 = vmul.f32 %v6310, %v6349
        %v6351 = vrcp.pop %v6335
        %v6352 = vmul.f32 %v6312, %v6351
        %v6353 = vrcp.pop %v6338
        %v6354 = vmul.f32 %v6314, %v6353
        %v6356 = vsel %vm6266, %v6340, 0
        %6358 = vmatprep.subr.mxu0 0.0
        %6359 = vmatpush1.msra.mxu0 0.0
        %6360 = vmatprep.subr.mxu0 0.0
        %6361 = vmatpush1.msra.mxu0 0.0
        %6362 = vmatprep.subr.mxu0 0.0
        %6363 = vmatpush1.msra.mxu0 0.0
        %6364 = vmatprep.subr.mxu0 0.0
        %6365 = vmatpush1.msra.mxu0 0.0
        %6366 = vmatprep.subr.mxu0 0.0
        %6367 = vmatpush1.msra.mxu0 0.0
        %6368 = vmatprep.subr.mxu0 0.0
        %6369 = vmatpush1.msra.mxu0 0.0
        %6370 = vmatprep.subr.mxu0 0.0
        %6371 = vmatpush1.msra.mxu0 0.0
        %6372 = vmatprep.subr.mxu0 0.0
        %6373 = vmatpush1.msra.mxu0 0.0
        %6374 = vmatprep.subr.mxu0 0.0
        %6375 = vmatpush1.msra.mxu0 0.0
        %6376 = vmatprep.subr.mxu0 0.0
        %6377 = vmatpush1.msra.mxu0 0.0
        %6378 = vmatprep.subr.mxu0 0.0
        %6379 = vmatpush1.msra.mxu0 0.0
        %6380 = vmatprep.subr.mxu0 0.0
        %6381 = vmatpush1.msra.mxu0 0.0
        %6382 = vmatprep.subr.mxu0 0.0
        %6383 = vmatpush1.msra.mxu0 0.0
        %6384 = vmatprep.subr.mxu0 0.0
        %6385 = vmatpush1.msra.mxu0 0.0
        %6386 = vmatprep.subr.mxu0 0.0
        %6387 = vmatpush1.msra.mxu0 0.0
        %6388 = vmatprep.subr.mxu0 0.0
        %6389 = vmatpush1.msra.mxu0 %v4656
        %6390 = vmatprep.subr.mxu0 0.0
        %6391 = vmatpush2.msra.mxu0 0.0
        %6392 = vmatprep.subr.mxu0 0.0
        %6393 = vmatpush2.msra.mxu0 0.0
        %6394 = vmatprep.subr.mxu0 0.0
        %6395 = vmatpush2.msra.mxu0 0.0
        %6396 = vmatprep.subr.mxu0 0.0
        %6397 = vmatpush2.msra.mxu0 0.0
        %6398 = vmatprep.subr.mxu0 0.0
        %6399 = vmatpush2.msra.mxu0 0.0
        %6400 = vmatprep.subr.mxu0 0.0
        %6401 = vmatpush2.msra.mxu0 0.0
        %6402 = vmatprep.subr.mxu0 0.0
        %6403 = vmatpush2.msra.mxu0 0.0
        %6404 = vmatprep.subr.mxu0 0.0
        %6405 = vmatpush2.msra.mxu0 0.0
        %6406 = vmatprep.subr.mxu0 0.0
        %6407 = vmatpush2.msra.mxu0 0.0
        %6408 = vmatprep.subr.mxu0 0.0
        %6409 = vmatpush2.msra.mxu0 0.0
        %6410 = vmatprep.subr.mxu0 0.0
        %6411 = vmatpush2.msra.mxu0 0.0
        %6412 = vmatprep.subr.mxu0 0.0
        %6413 = vmatpush2.msra.mxu0 0.0
        %6414 = vmatprep.subr.mxu0 0.0
        %6415 = vmatpush2.msra.mxu0 0.0
        %6416 = vmatprep.subr.mxu0 0.0
        %6417 = vmatpush2.msra.mxu0 0.0
        %6418 = vmatprep.subr.mxu0 0.0
        %6419 = vmatpush2.msra.mxu0 0.0
        %6420 = vmatprep.subr.mxu0 0.0
        %6421 = vmatpush2.msra.mxu0 0.0
        %6422 = vmatprep.mubr.f32.mxu0 0.0
        %6423 = vmatmul.mubr.f32.gmra.mxu0 %v6356
        %v6424 = vpop.f32.mrf.mxu0
        %v6425 = vadd.f32 0.0, %v6424
        %v6426 = vpop.f32.mrf.mxu0
        %6427 = vdwg.mxu0
        %v6429 = vsel %vm6266, %v6342, 0
        %6431 = vmatprep.subr.mxu0 0.0
        %6432 = vmatpush1.msra.mxu0 0.0
        %6433 = vmatprep.subr.mxu0 0.0
        %6434 = vmatpush1.msra.mxu0 0.0
        %6435 = vmatprep.subr.mxu0 0.0
        %6436 = vmatpush1.msra.mxu0 0.0
        %6437 = vmatprep.subr.mxu0 0.0
        %6438 = vmatpush1.msra.mxu0 0.0
        %6439 = vmatprep.subr.mxu0 0.0
        %6440 = vmatpush1.msra.mxu0 0.0
        %6441 = vmatprep.subr.mxu0 0.0
        %6442 = vmatpush1.msra.mxu0 0.0
        %6443 = vmatprep.subr.mxu0 0.0
        %6444 = vmatpush1.msra.mxu0 0.0
        %6445 = vmatprep.subr.mxu0 0.0
        %6446 = vmatpush1.msra.mxu0 0.0
        %6447 = vmatprep.subr.mxu0 0.0
        %6448 = vmatpush1.msra.mxu0 0.0
        %6449 = vmatprep.subr.mxu0 0.0
        %6450 = vmatpush1.msra.mxu0 0.0
        %6451 = vmatprep.subr.mxu0 0.0
        %6452 = vmatpush1.msra.mxu0 0.0
        %6453 = vmatprep.subr.mxu0 0.0
        %6454 = vmatpush1.msra.mxu0 0.0
        %6455 = vmatprep.subr.mxu0 0.0
        %6456 = vmatpush1.msra.mxu0 0.0
        %6457 = vmatprep.subr.mxu0 0.0
        %6458 = vmatpush1.msra.mxu0 0.0
        %6459 = vmatprep.subr.mxu0 0.0
        %6460 = vmatpush1.msra.mxu0 0.0
        %6461 = vmatprep.subr.mxu0 0.0
        %6462 = vmatpush1.msra.mxu0 %v4796
        %6463 = vmatprep.subr.mxu0 0.0
        %6464 = vmatpush2.msra.mxu0 0.0
        %6465 = vmatprep.subr.mxu0 0.0
        %6466 = vmatpush2.msra.mxu0 0.0
        %6467 = vmatprep.subr.mxu0 0.0
        %6468 = vmatpush2.msra.mxu0 0.0
        %6469 = vmatprep.subr.mxu0 0.0
        %6470 = vmatpush2.msra.mxu0 0.0
        %6471 = vmatprep.subr.mxu0 0.0
        %6472 = vmatpush2.msra.mxu0 0.0
        %6473 = vmatprep.subr.mxu0 0.0
        %6474 = vmatpush2.msra.mxu0 0.0
        %6475 = vmatprep.subr.mxu0 0.0
        %6476 = vmatpush2.msra.mxu0 0.0
        %6477 = vmatprep.subr.mxu0 0.0
        %6478 = vmatpush2.msra.mxu0 0.0
        %6479 = vmatprep.subr.mxu0 0.0
        %6480 = vmatpush2.msra.mxu0 0.0
        %6481 = vmatprep.subr.mxu0 0.0
        %6482 = vmatpush2.msra.mxu0 0.0
        %6483 = vmatprep.subr.mxu0 0.0
        %6484 = vmatpush2.msra.mxu0 0.0
        %6485 = vmatprep.subr.mxu0 0.0
        %6486 = vmatpush2.msra.mxu0 0.0
        %6487 = vmatprep.subr.mxu0 0.0
        %6488 = vmatpush2.msra.mxu0 0.0
        %6489 = vmatprep.subr.mxu0 0.0
        %6490 = vmatpush2.msra.mxu0 0.0
        %6491 = vmatprep.subr.mxu0 0.0
        %6492 = vmatpush2.msra.mxu0 0.0
        %6493 = vmatprep.subr.mxu0 0.0
        %6494 = vmatpush2.msra.mxu0 0.0
        %6495 = vmatprep.mubr.f32.mxu0 0.0
        %6496 = vmatmul.mubr.f32.gmra.mxu0 %v6429
        %v6497 = vpop.f32.mrf.mxu0
        %v6498 = vadd.f32 0.0, %v6497
        %v6499 = vpop.f32.mrf.mxu0
        %6500 = vdwg.mxu0
        %v6502 = vsel %vm6266, %v6344, 0
        %6504 = vmatprep.subr.mxu0 0.0
        %6505 = vmatpush1.msra.mxu0 0.0
        %6506 = vmatprep.subr.mxu0 0.0
        %6507 = vmatpush1.msra.mxu0 0.0
        %6508 = vmatprep.subr.mxu0 0.0
        %6509 = vmatpush1.msra.mxu0 0.0
        %6510 = vmatprep.subr.mxu0 0.0
        %6511 = vmatpush1.msra.mxu0 0.0
        %6512 = vmatprep.subr.mxu0 0.0
        %6513 = vmatpush1.msra.mxu0 0.0
        %6514 = vmatprep.subr.mxu0 0.0
        %6515 = vmatpush1.msra.mxu0 0.0
        %6516 = vmatprep.subr.mxu0 0.0
        %6517 = vmatpush1.msra.mxu0 0.0
        %6518 = vmatprep.subr.mxu0 0.0
        %6519 = vmatpush1.msra.mxu0 0.0
        %6520 = vmatprep.subr.mxu0 0.0
        %6521 = vmatpush1.msra.mxu0 0.0
        %6522 = vmatprep.subr.mxu0 0.0
        %6523 = vmatpush1.msra.mxu0 0.0
        %6524 = vmatprep.subr.mxu0 0.0
        %6525 = vmatpush1.msra.mxu0 0.0
        %6526 = vmatprep.subr.mxu0 0.0
        %6527 = vmatpush1.msra.mxu0 0.0
        %6528 = vmatprep.subr.mxu0 0.0
        %6529 = vmatpush1.msra.mxu0 0.0
        %6530 = vmatprep.subr.mxu0 0.0
        %6531 = vmatpush1.msra.mxu0 0.0
        %6532 = vmatprep.subr.mxu0 0.0
        %6533 = vmatpush1.msra.mxu0 0.0
        %6534 = vmatprep.subr.mxu0 0.0
        %6535 = vmatpush1.msra.mxu0 %v4936
        %6536 = vmatprep.subr.mxu0 0.0
        %6537 = vmatpush2.msra.mxu0 0.0
        %6538 = vmatprep.subr.mxu0 0.0
        %6539 = vmatpush2.msra.mxu0 0.0
        %6540 = vmatprep.subr.mxu0 0.0
        %6541 = vmatpush2.msra.mxu0 0.0
        %6542 = vmatprep.subr.mxu0 0.0
        %6543 = vmatpush2.msra.mxu0 0.0
        %6544 = vmatprep.subr.mxu0 0.0
        %6545 = vmatpush2.msra.mxu0 0.0
        %6546 = vmatprep.subr.mxu0 0.0
        %6547 = vmatpush2.msra.mxu0 0.0
        %6548 = vmatprep.subr.mxu0 0.0
        %6549 = vmatpush2.msra.mxu0 0.0
        %6550 = vmatprep.subr.mxu0 0.0
        %6551 = vmatpush2.msra.mxu0 0.0
        %6552 = vmatprep.subr.mxu0 0.0
        %6553 = vmatpush2.msra.mxu0 0.0
        %6554 = vmatprep.subr.mxu0 0.0
        %6555 = vmatpush2.msra.mxu0 0.0
        %6556 = vmatprep.subr.mxu0 0.0
        %6557 = vmatpush2.msra.mxu0 0.0
        %6558 = vmatprep.subr.mxu0 0.0
        %6559 = vmatpush2.msra.mxu0 0.0
        %6560 = vmatprep.subr.mxu0 0.0
        %6561 = vmatpush2.msra.mxu0 0.0
        %6562 = vmatprep.subr.mxu0 0.0
        %6563 = vmatpush2.msra.mxu0 0.0
        %6564 = vmatprep.subr.mxu0 0.0
        %6565 = vmatpush2.msra.mxu0 0.0
        %6566 = vmatprep.subr.mxu0 0.0
        %6567 = vmatpush2.msra.mxu0 0.0
        %6568 = vmatprep.mubr.f32.mxu0 0.0
        %6569 = vmatmul.mubr.f32.gmra.mxu0 %v6502
        %v6570 = vpop.f32.mrf.mxu0
        %v6571 = vadd.f32 0.0, %v6570
        %v6572 = vpop.f32.mrf.mxu0
        %6573 = vdwg.mxu0
        %v6575 = vsel %vm6266, %v6346, 0
        %6577 = vmatprep.subr.mxu0 0.0
        %6578 = vmatpush1.msra.mxu0 0.0
        %6579 = vmatprep.subr.mxu0 0.0
        %6580 = vmatpush1.msra.mxu0 0.0
        %6581 = vmatprep.subr.mxu0 0.0
        %6582 = vmatpush1.msra.mxu0 0.0
        %6583 = vmatprep.subr.mxu0 0.0
        %6584 = vmatpush1.msra.mxu0 0.0
        %6585 = vmatprep.subr.mxu0 0.0
        %6586 = vmatpush1.msra.mxu0 0.0
        %6587 = vmatprep.subr.mxu0 0.0
        %6588 = vmatpush1.msra.mxu0 0.0
        %6589 = vmatprep.subr.mxu0 0.0
        %6590 = vmatpush1.msra.mxu0 0.0
        %6591 = vmatprep.subr.mxu0 0.0
        %6592 = vmatpush1.msra.mxu0 0.0
        %6593 = vmatprep.subr.mxu0 0.0
        %6594 = vmatpush1.msra.mxu0 0.0
        %6595 = vmatprep.subr.mxu0 0.0
        %6596 = vmatpush1.msra.mxu0 0.0
        %6597 = vmatprep.subr.mxu0 0.0
        %6598 = vmatpush1.msra.mxu0 0.0
        %6599 = vmatprep.subr.mxu0 0.0
        %6600 = vmatpush1.msra.mxu0 0.0
        %6601 = vmatprep.subr.mxu0 0.0
        %6602 = vmatpush1.msra.mxu0 0.0
        %6603 = vmatprep.subr.mxu0 0.0
        %6604 = vmatpush1.msra.mxu0 0.0
        %6605 = vmatprep.subr.mxu0 0.0
        %6606 = vmatpush1.msra.mxu0 0.0
        %6607 = vmatprep.subr.mxu0 0.0
        %6608 = vmatpush1.msra.mxu0 %v5076
        %6609 = vmatprep.subr.mxu0 0.0
        %6610 = vmatpush2.msra.mxu0 0.0
        %6611 = vmatprep.subr.mxu0 0.0
        %6612 = vmatpush2.msra.mxu0 0.0
        %6613 = vmatprep.subr.mxu0 0.0
        %6614 = vmatpush2.msra.mxu0 0.0
        %6615 = vmatprep.subr.mxu0 0.0
        %6616 = vmatpush2.msra.mxu0 0.0
        %6617 = vmatprep.subr.mxu0 0.0
        %6618 = vmatpush2.msra.mxu0 0.0
        %6619 = vmatprep.subr.mxu0 0.0
        %6620 = vmatpush2.msra.mxu0 0.0
        %6621 = vmatprep.subr.mxu0 0.0
        %6622 = vmatpush2.msra.mxu0 0.0
        %6623 = vmatprep.subr.mxu0 0.0
        %6624 = vmatpush2.msra.mxu0 0.0
        %6625 = vmatprep.subr.mxu0 0.0
        %6626 = vmatpush2.msra.mxu0 0.0
        %6627 = vmatprep.subr.mxu0 0.0
        %6628 = vmatpush2.msra.mxu0 0.0
        %6629 = vmatprep.subr.mxu0 0.0
        %6630 = vmatpush2.msra.mxu0 0.0
        %6631 = vmatprep.subr.mxu0 0.0
        %6632 = vmatpush2.msra.mxu0 0.0
        %6633 = vmatprep.subr.mxu0 0.0
        %6634 = vmatpush2.msra.mxu0 0.0
        %6635 = vmatprep.subr.mxu0 0.0
        %6636 = vmatpush2.msra.mxu0 0.0
        %6637 = vmatprep.subr.mxu0 0.0
        %6638 = vmatpush2.msra.mxu0 0.0
        %6639 = vmatprep.subr.mxu0 0.0
        %6640 = vmatpush2.msra.mxu0 0.0
        %6641 = vmatprep.mubr.f32.mxu0 0.0
        %6642 = vmatmul.mubr.f32.gmra.mxu0 %v6575
        %v6643 = vpop.f32.mrf.mxu0
        %v6644 = vadd.f32 0.0, %v6643
        %v6645 = vpop.f32.mrf.mxu0
        %6646 = vdwg.mxu0
        %v6648 = vsel %vm6266, %v6348, 0
        %6650 = vmatprep.subr.mxu0 0.0
        %6651 = vmatpush1.msra.mxu0 0.0
        %6652 = vmatprep.subr.mxu0 0.0
        %6653 = vmatpush1.msra.mxu0 0.0
        %6654 = vmatprep.subr.mxu0 0.0
        %6655 = vmatpush1.msra.mxu0 0.0
        %6656 = vmatprep.subr.mxu0 0.0
        %6657 = vmatpush1.msra.mxu0 0.0
        %6658 = vmatprep.subr.mxu0 0.0
        %6659 = vmatpush1.msra.mxu0 0.0
        %6660 = vmatprep.subr.mxu0 0.0
        %6661 = vmatpush1.msra.mxu0 0.0
        %6662 = vmatprep.subr.mxu0 0.0
        %6663 = vmatpush1.msra.mxu0 0.0
        %6664 = vmatprep.subr.mxu0 0.0
        %6665 = vmatpush1.msra.mxu0 0.0
        %6666 = vmatprep.subr.mxu0 0.0
        %6667 = vmatpush1.msra.mxu0 0.0
        %6668 = vmatprep.subr.mxu0 0.0
        %6669 = vmatpush1.msra.mxu0 0.0
        %6670 = vmatprep.subr.mxu0 0.0
        %6671 = vmatpush1.msra.mxu0 0.0
        %6672 = vmatprep.subr.mxu0 0.0
        %6673 = vmatpush1.msra.mxu0 0.0
        %6674 = vmatprep.subr.mxu0 0.0
        %6675 = vmatpush1.msra.mxu0 0.0
        %6676 = vmatprep.subr.mxu0 0.0
        %6677 = vmatpush1.msra.mxu0 0.0
        %6678 = vmatprep.subr.mxu0 0.0
        %6679 = vmatpush1.msra.mxu0 0.0
        %6680 = vmatprep.subr.mxu0 0.0
        %6681 = vmatpush1.msra.mxu0 %v5216
        %6682 = vmatprep.subr.mxu0 0.0
        %6683 = vmatpush2.msra.mxu0 0.0
        %6684 = vmatprep.subr.mxu0 0.0
        %6685 = vmatpush2.msra.mxu0 0.0
        %6686 = vmatprep.subr.mxu0 0.0
        %6687 = vmatpush2.msra.mxu0 0.0
        %6688 = vmatprep.subr.mxu0 0.0
        %6689 = vmatpush2.msra.mxu0 0.0
        %6690 = vmatprep.subr.mxu0 0.0
        %6691 = vmatpush2.msra.mxu0 0.0
        %6692 = vmatprep.subr.mxu0 0.0
        %6693 = vmatpush2.msra.mxu0 0.0
        %6694 = vmatprep.subr.mxu0 0.0
        %6695 = vmatpush2.msra.mxu0 0.0
        %6696 = vmatprep.subr.mxu0 0.0
        %6697 = vmatpush2.msra.mxu0 0.0
        %6698 = vmatprep.subr.mxu0 0.0
        %6699 = vmatpush2.msra.mxu0 0.0
        %6700 = vmatprep.subr.mxu0 0.0
        %6701 = vmatpush2.msra.mxu0 0.0
        %6702 = vmatprep.subr.mxu0 0.0
        %6703 = vmatpush2.msra.mxu0 0.0
        %6704 = vmatprep.subr.mxu0 0.0
        %6705 = vmatpush2.msra.mxu0 0.0
        %6706 = vmatprep.subr.mxu0 0.0
        %6707 = vmatpush2.msra.mxu0 0.0
        %6708 = vmatprep.subr.mxu0 0.0
        %6709 = vmatpush2.msra.mxu0 0.0
        %6710 = vmatprep.subr.mxu0 0.0
        %6711 = vmatpush2.msra.mxu0 0.0
        %6712 = vmatprep.subr.mxu0 0.0
        %6713 = vmatpush2.msra.mxu0 0.0
        %6714 = vmatprep.mubr.f32.mxu0 0.0
        %6715 = vmatmul.mubr.f32.gmra.mxu0 %v6648
        %v6716 = vpop.f32.mrf.mxu0
        %v6717 = vadd.f32 0.0, %v6716
        %v6718 = vpop.f32.mrf.mxu0
        %6719 = vdwg.mxu0
        %v6721 = vsel %vm6266, %v6350, 0
        %6723 = vmatprep.subr.mxu0 0.0
        %6724 = vmatpush1.msra.mxu0 0.0
        %6725 = vmatprep.subr.mxu0 0.0
        %6726 = vmatpush1.msra.mxu0 0.0
        %6727 = vmatprep.subr.mxu0 0.0
        %6728 = vmatpush1.msra.mxu0 0.0
        %6729 = vmatprep.subr.mxu0 0.0
        %6730 = vmatpush1.msra.mxu0 0.0
        %6731 = vmatprep.subr.mxu0 0.0
        %6732 = vmatpush1.msra.mxu0 0.0
        %6733 = vmatprep.subr.mxu0 0.0
        %6734 = vmatpush1.msra.mxu0 0.0
        %6735 = vmatprep.subr.mxu0 0.0
        %6736 = vmatpush1.msra.mxu0 0.0
        %6737 = vmatprep.subr.mxu0 0.0
        %6738 = vmatpush1.msra.mxu0 0.0
        %6739 = vmatprep.subr.mxu0 0.0
        %6740 = vmatpush1.msra.mxu0 0.0
        %6741 = vmatprep.subr.mxu0 0.0
        %6742 = vmatpush1.msra.mxu0 0.0
        %6743 = vmatprep.subr.mxu0 0.0
        %6744 = vmatpush1.msra.mxu0 0.0
        %6745 = vmatprep.subr.mxu0 0.0
        %6746 = vmatpush1.msra.mxu0 0.0
        %6747 = vmatprep.subr.mxu0 0.0
        %6748 = vmatpush1.msra.mxu0 0.0
        %6749 = vmatprep.subr.mxu0 0.0
        %6750 = vmatpush1.msra.mxu0 0.0
        %6751 = vmatprep.subr.mxu0 0.0
        %6752 = vmatpush1.msra.mxu0 0.0
        %6753 = vmatprep.subr.mxu0 0.0
        %6754 = vmatpush1.msra.mxu0 %v5356
        %6755 = vmatprep.subr.mxu0 0.0
        %6756 = vmatpush2.msra.mxu0 0.0
        %6757 = vmatprep.subr.mxu0 0.0
        %6758 = vmatpush2.msra.mxu0 0.0
        %6759 = vmatprep.subr.mxu0 0.0
        %6760 = vmatpush2.msra.mxu0 0.0
        %6761 = vmatprep.subr.mxu0 0.0
        %6762 = vmatpush2.msra.mxu0 0.0
        %6763 = vmatprep.subr.mxu0 0.0
        %6764 = vmatpush2.msra.mxu0 0.0
        %6765 = vmatprep.subr.mxu0 0.0
        %6766 = vmatpush2.msra.mxu0 0.0
        %6767 = vmatprep.subr.mxu0 0.0
        %6768 = vmatpush2.msra.mxu0 0.0
        %6769 = vmatprep.subr.mxu0 0.0
        %6770 = vmatpush2.msra.mxu0 0.0
        %6771 = vmatprep.subr.mxu0 0.0
        %6772 = vmatpush2.msra.mxu0 0.0
        %6773 = vmatprep.subr.mxu0 0.0
        %6774 = vmatpush2.msra.mxu0 0.0
        %6775 = vmatprep.subr.mxu0 0.0
        %6776 = vmatpush2.msra.mxu0 0.0
        %6777 = vmatprep.subr.mxu0 0.0
        %6778 = vmatpush2.msra.mxu0 0.0
        %6779 = vmatprep.subr.mxu0 0.0
        %6780 = vmatpush2.msra.mxu0 0.0
        %6781 = vmatprep.subr.mxu0 0.0
        %6782 = vmatpush2.msra.mxu0 0.0
        %6783 = vmatprep.subr.mxu0 0.0
        %6784 = vmatpush2.msra.mxu0 0.0
        %6785 = vmatprep.subr.mxu0 0.0
        %6786 = vmatpush2.msra.mxu0 0.0
        %6787 = vmatprep.mubr.f32.mxu0 0.0
        %6788 = vmatmul.mubr.f32.gmra.mxu0 %v6721
        %v6789 = vpop.f32.mrf.mxu0
        %v6790 = vadd.f32 0.0, %v6789
        %v6791 = vpop.f32.mrf.mxu0
        %6792 = vdwg.mxu0
        %v6794 = vsel %vm6266, %v6352, 0
        %6796 = vmatprep.subr.mxu0 0.0
        %6797 = vmatpush1.msra.mxu0 0.0
        %6798 = vmatprep.subr.mxu0 0.0
        %6799 = vmatpush1.msra.mxu0 0.0
        %6800 = vmatprep.subr.mxu0 0.0
        %6801 = vmatpush1.msra.mxu0 0.0
        %6802 = vmatprep.subr.mxu0 0.0
        %6803 = vmatpush1.msra.mxu0 0.0
        %6804 = vmatprep.subr.mxu0 0.0
        %6805 = vmatpush1.msra.mxu0 0.0
        %6806 = vmatprep.subr.mxu0 0.0
        %6807 = vmatpush1.msra.mxu0 0.0
        %6808 = vmatprep.subr.mxu0 0.0
        %6809 = vmatpush1.msra.mxu0 0.0
        %6810 = vmatprep.subr.mxu0 0.0
        %6811 = vmatpush1.msra.mxu0 0.0
        %6812 = vmatprep.subr.mxu0 0.0
        %6813 = vmatpush1.msra.mxu0 0.0
        %6814 = vmatprep.subr.mxu0 0.0
        %6815 = vmatpush1.msra.mxu0 0.0
        %6816 = vmatprep.subr.mxu0 0.0
        %6817 = vmatpush1.msra.mxu0 0.0
        %6818 = vmatprep.subr.mxu0 0.0
        %6819 = vmatpush1.msra.mxu0 0.0
        %6820 = vmatprep.subr.mxu0 0.0
        %6821 = vmatpush1.msra.mxu0 0.0
        %6822 = vmatprep.subr.mxu0 0.0
        %6823 = vmatpush1.msra.mxu0 0.0
        %6824 = vmatprep.subr.mxu0 0.0
        %6825 = vmatpush1.msra.mxu0 0.0
        %6826 = vmatprep.subr.mxu0 0.0
        %6827 = vmatpush1.msra.mxu0 %v5496
        %6828 = vmatprep.subr.mxu0 0.0
        %6829 = vmatpush2.msra.mxu0 0.0
        %6830 = vmatprep.subr.mxu0 0.0
        %6831 = vmatpush2.msra.mxu0 0.0
        %6832 = vmatprep.subr.mxu0 0.0
        %6833 = vmatpush2.msra.mxu0 0.0
        %6834 = vmatprep.subr.mxu0 0.0
        %6835 = vmatpush2.msra.mxu0 0.0
        %6836 = vmatprep.subr.mxu0 0.0
        %6837 = vmatpush2.msra.mxu0 0.0
        %6838 = vmatprep.subr.mxu0 0.0
        %6839 = vmatpush2.msra.mxu0 0.0
        %6840 = vmatprep.subr.mxu0 0.0
        %6841 = vmatpush2.msra.mxu0 0.0
        %6842 = vmatprep.subr.mxu0 0.0
        %6843 = vmatpush2.msra.mxu0 0.0
        %6844 = vmatprep.subr.mxu0 0.0
        %6845 = vmatpush2.msra.mxu0 0.0
        %6846 = vmatprep.subr.mxu0 0.0
        %6847 = vmatpush2.msra.mxu0 0.0
        %6848 = vmatprep.subr.mxu0 0.0
        %6849 = vmatpush2.msra.mxu0 0.0
        %6850 = vmatprep.subr.mxu0 0.0
        %6851 = vmatpush2.msra.mxu0 0.0
        %6852 = vmatprep.subr.mxu0 0.0
        %6853 = vmatpush2.msra.mxu0 0.0
        %6854 = vmatprep.subr.mxu0 0.0
        %6855 = vmatpush2.msra.mxu0 0.0
        %6856 = vmatprep.subr.mxu0 0.0
        %6857 = vmatpush2.msra.mxu0 0.0
        %6858 = vmatprep.subr.mxu0 0.0
        %6859 = vmatpush2.msra.mxu0 0.0
        %6860 = vmatprep.mubr.f32.mxu0 0.0
        %6861 = vmatmul.mubr.f32.gmra.mxu0 %v6794
        %v6862 = vpop.f32.mrf.mxu0
        %v6863 = vadd.f32 0.0, %v6862
        %v6864 = vpop.f32.mrf.mxu0
        %6865 = vdwg.mxu0
        %v6867 = vsel %vm6266, %v6354, 0
        %6869 = vmatprep.subr.mxu0 0.0
        %6870 = vmatpush1.msra.mxu0 0.0
        %6871 = vmatprep.subr.mxu0 0.0
        %6872 = vmatpush1.msra.mxu0 0.0
        %6873 = vmatprep.subr.mxu0 0.0
        %6874 = vmatpush1.msra.mxu0 0.0
        %6875 = vmatprep.subr.mxu0 0.0
        %6876 = vmatpush1.msra.mxu0 0.0
        %6877 = vmatprep.subr.mxu0 0.0
        %6878 = vmatpush1.msra.mxu0 0.0
        %6879 = vmatprep.subr.mxu0 0.0
        %6880 = vmatpush1.msra.mxu0 0.0
        %6881 = vmatprep.subr.mxu0 0.0
        %6882 = vmatpush1.msra.mxu0 0.0
        %6883 = vmatprep.subr.mxu0 0.0
        %6884 = vmatpush1.msra.mxu0 0.0
        %6885 = vmatprep.subr.mxu0 0.0
        %6886 = vmatpush1.msra.mxu0 0.0
        %6887 = vmatprep.subr.mxu0 0.0
        %6888 = vmatpush1.msra.mxu0 0.0
        %6889 = vmatprep.subr.mxu0 0.0
        %6890 = vmatpush1.msra.mxu0 0.0
        %6891 = vmatprep.subr.mxu0 0.0
        %6892 = vmatpush1.msra.mxu0 0.0
        %6893 = vmatprep.subr.mxu0 0.0
        %6894 = vmatpush1.msra.mxu0 0.0
        %6895 = vmatprep.subr.mxu0 0.0
        %6896 = vmatpush1.msra.mxu0 0.0
        %6897 = vmatprep.subr.mxu0 0.0
        %6898 = vmatpush1.msra.mxu0 0.0
        %6899 = vmatprep.subr.mxu0 0.0
        %6900 = vmatpush1.msra.mxu0 %v5636
        %6901 = vmatprep.subr.mxu0 0.0
        %6902 = vmatpush2.msra.mxu0 0.0
        %6903 = vmatprep.subr.mxu0 0.0
        %6904 = vmatpush2.msra.mxu0 0.0
        %6905 = vmatprep.subr.mxu0 0.0
        %6906 = vmatpush2.msra.mxu0 0.0
        %6907 = vmatprep.subr.mxu0 0.0
        %6908 = vmatpush2.msra.mxu0 0.0
        %6909 = vmatprep.subr.mxu0 0.0
        %6910 = vmatpush2.msra.mxu0 0.0
        %6911 = vmatprep.subr.mxu0 0.0
        %6912 = vmatpush2.msra.mxu0 0.0
        %6913 = vmatprep.subr.mxu0 0.0
        %6914 = vmatpush2.msra.mxu0 0.0
        %6915 = vmatprep.subr.mxu0 0.0
        %6916 = vmatpush2.msra.mxu0 0.0
        %6917 = vmatprep.subr.mxu0 0.0
        %6918 = vmatpush2.msra.mxu0 0.0
        %6919 = vmatprep.subr.mxu0 0.0
        %6920 = vmatpush2.msra.mxu0 0.0
        %6921 = vmatprep.subr.mxu0 0.0
        %6922 = vmatpush2.msra.mxu0 0.0
        %6923 = vmatprep.subr.mxu0 0.0
        %6924 = vmatpush2.msra.mxu0 0.0
        %6925 = vmatprep.subr.mxu0 0.0
        %6926 = vmatpush2.msra.mxu0 0.0
        %6927 = vmatprep.subr.mxu0 0.0
        %6928 = vmatpush2.msra.mxu0 0.0
        %6929 = vmatprep.subr.mxu0 0.0
        %6930 = vmatpush2.msra.mxu0 0.0
        %6931 = vmatprep.subr.mxu0 0.0
        %6932 = vmatpush2.msra.mxu0 0.0
        %6933 = vmatprep.mubr.f32.mxu0 0.0
        %6934 = vmatmul.mubr.f32.gmra.mxu0 %v6867
        %v6935 = vpop.f32.mrf.mxu0
        %v6936 = vadd.f32 0.0, %v6935
        %v6937 = vpop.f32.mrf.mxu0
        %6938 = vdwg.mxu0
        %v6939 = vld [vmem:[%s11] sm:$0xf]
        %v6941 = vlaneseq
        %v6942 = vshrl.u32 %v6941, 7
        %v6943 = vsub.s32 0, %v6942
        %v6944 = vrot.slane %v6939, %v6943
        %v6945 = vlaneseq
        %v6946 = vshrl.u32 %v6945, 7
        %v6947 = vsub.s32 1, %v6946
        %v6948 = vrot.slane %v6939, %v6947
        %v6949 = vlaneseq
        %v6950 = vshrl.u32 %v6949, 7
        %v6951 = vsub.s32 2, %v6950
        %v6952 = vrot.slane %v6939, %v6951
        %v6953 = vlaneseq
        %v6954 = vshrl.u32 %v6953, 7
        %v6955 = vsub.s32 3, %v6954
        %v6956 = vrot.slane %v6939, %v6955
        %v6961 = vadd.f32 %v561, %v6944
        %v6962 = vadd.f32 %v562, %v6948
        %v6963 = vadd.f32 %v563, %v6952
        %v6964 = vadd.f32 %v564, %v6956
        %v6965 = vld [vmem:[%s10] sm:$0xff]
        %v6966 = vld [vmem:[%s10 + $0x8] sm:$0xff]
        %v6967 = vld [vmem:[%s10 + $0x10] sm:$0xff]
        %v6968 = vld [vmem:[%s10 + $0x18] sm:$0xff]
        %v6969 = vld [vmem:[%s10 + $0x20] sm:$0xff]
        %v6970 = vld [vmem:[%s10 + $0x28] sm:$0xff]
        %v6971 = vld [vmem:[%s10 + $0x30] sm:$0xff]
        %v6972 = vld [vmem:[%s10 + $0x38] sm:$0xff]
        %v6973 = vld [vmem:[%s10 + $0x40] sm:$0xff]
        %v6974 = vld [vmem:[%s10 + $0x48] sm:$0xff]
        %v6975 = vld [vmem:[%s10 + $0x50] sm:$0xff]
        %v6976 = vld [vmem:[%s10 + $0x58] sm:$0xff]
        %v6977 = vld [vmem:[%s10 + $0x60] sm:$0xff]
        %v6978 = vld [vmem:[%s10 + $0x68] sm:$0xff]
        %v6979 = vld [vmem:[%s10 + $0x70] sm:$0xff]
        %v6980 = vld [vmem:[%s10 + $0x78] sm:$0xff]
        %v6981 = vld [vmem:[%s10 + $0x80] sm:$0xff]
        %v6982 = vld [vmem:[%s10 + $0x88] sm:$0xff]
        %v6983 = vld [vmem:[%s10 + $0x90] sm:$0xff]
        %v6984 = vld [vmem:[%s10 + $0x98] sm:$0xff]
        %v6985 = vld [vmem:[%s10 + $0xa0] sm:$0xff]
        %v6986 = vld [vmem:[%s10 + $0xa8] sm:$0xff]
        %v6987 = vld [vmem:[%s10 + $0xb0] sm:$0xff]
        %v6988 = vld [vmem:[%s10 + $0xb8] sm:$0xff]
        %v6989 = vld [vmem:[%s10 + $0xc0] sm:$0xff]
        %v6990 = vld [vmem:[%s10 + $0xc8] sm:$0xff]
        %v6991 = vld [vmem:[%s10 + $0xd0] sm:$0xff]
        %v6992 = vld [vmem:[%s10 + $0xd8] sm:$0xff]
        %v6993 = vld [vmem:[%s10 + $0xe0] sm:$0xff]
        %v6994 = vld [vmem:[%s10 + $0xe8] sm:$0xff]
        %v6995 = vld [vmem:[%s10 + $0xf0] sm:$0xff]
        %v6996 = vld [vmem:[%s10 + $0xf8] sm:$0xff]
        %v6998 = vsel %vm5639, %v6425, 0
        %7000 = vmatprep.subr.mxu0 0.0
        %7001 = vmatpush1.msra.mxu0 0.0
        %7002 = vmatprep.subr.mxu0 0.0
        %7003 = vmatpush1.msra.mxu0 0.0
        %7004 = vmatprep.subr.mxu0 0.0
        %7005 = vmatpush1.msra.mxu0 0.0
        %7006 = vmatprep.subr.mxu0 0.0
        %7007 = vmatpush1.msra.mxu0 0.0
        %7008 = vmatprep.subr.mxu0 0.0
        %7009 = vmatpush1.msra.mxu0 0.0
        %7010 = vmatprep.subr.mxu0 0.0
        %7011 = vmatpush1.msra.mxu0 0.0
        %7012 = vmatprep.subr.mxu0 0.0
        %7013 = vmatpush1.msra.mxu0 0.0
        %7014 = vmatprep.subr.mxu0 0.0
        %7015 = vmatpush1.msra.mxu0 0.0
        %7016 = vmatprep.subr.mxu0 %v6994
        %7017 = vmatpush1.msra.mxu0 %v6993
        %7018 = vmatprep.subr.mxu0 %v6990
        %7019 = vmatpush1.msra.mxu0 %v6989
        %7020 = vmatprep.subr.mxu0 %v6986
        %7021 = vmatpush1.msra.mxu0 %v6985
        %7022 = vmatprep.subr.mxu0 %v6982
        %7023 = vmatpush1.msra.mxu0 %v6981
        %7024 = vmatprep.subr.mxu0 %v6978
        %7025 = vmatpush1.msra.mxu0 %v6977
        %7026 = vmatprep.subr.mxu0 %v6974
        %7027 = vmatpush1.msra.mxu0 %v6973
        %7028 = vmatprep.subr.mxu0 %v6970
        %7029 = vmatpush1.msra.mxu0 %v6969
        %7030 = vmatprep.subr.mxu0 %v6966
        %7031 = vmatpush1.msra.mxu0 %v6965
        %7032 = vmatprep.subr.mxu0 0.0
        %7033 = vmatpush2.msra.mxu0 0.0
        %7034 = vmatprep.subr.mxu0 0.0
        %7035 = vmatpush2.msra.mxu0 0.0
        %7036 = vmatprep.subr.mxu0 0.0
        %7037 = vmatpush2.msra.mxu0 0.0
        %7038 = vmatprep.subr.mxu0 0.0
        %7039 = vmatpush2.msra.mxu0 0.0
        %7040 = vmatprep.subr.mxu0 0.0
        %7041 = vmatpush2.msra.mxu0 0.0
        %7042 = vmatprep.subr.mxu0 0.0
        %7043 = vmatpush2.msra.mxu0 0.0
        %7044 = vmatprep.subr.mxu0 0.0
        %7045 = vmatpush2.msra.mxu0 0.0
        %7046 = vmatprep.subr.mxu0 0.0
        %7047 = vmatpush2.msra.mxu0 0.0
        %7048 = vmatprep.subr.mxu0 0.0
        %7049 = vmatpush2.msra.mxu0 0.0
        %7050 = vmatprep.subr.mxu0 0.0
        %7051 = vmatpush2.msra.mxu0 0.0
        %7052 = vmatprep.subr.mxu0 0.0
        %7053 = vmatpush2.msra.mxu0 0.0
        %7054 = vmatprep.subr.mxu0 0.0
        %7055 = vmatpush2.msra.mxu0 0.0
        %7056 = vmatprep.subr.mxu0 0.0
        %7057 = vmatpush2.msra.mxu0 0.0
        %7058 = vmatprep.subr.mxu0 0.0
        %7059 = vmatpush2.msra.mxu0 0.0
        %7060 = vmatprep.subr.mxu0 0.0
        %7061 = vmatpush2.msra.mxu0 0.0
        %7062 = vmatprep.subr.mxu0 0.0
        %7063 = vmatpush2.msra.mxu0 0.0
        %7064 = vmatprep.mubr.f32.mxu0 0.0
        %7065 = vmatmul.mubr.f32.gmra.mxu0 %v6998
        %v7066 = vpop.f32.mrf.mxu0
        %v7067 = vadd.f32 0.0, %v7066
        %v7068 = vpop.f32.mrf.mxu0
        %v7069 = vadd.f32 0.0, %v7068
        %7070 = vdwg.mxu0
        %7071 = vmatprep.subr.mxu0 0.0
        %7072 = vmatpush1.msra.mxu0 0.0
        %7073 = vmatprep.subr.mxu0 0.0
        %7074 = vmatpush1.msra.mxu0 0.0
        %7075 = vmatprep.subr.mxu0 0.0
        %7076 = vmatpush1.msra.mxu0 0.0
        %7077 = vmatprep.subr.mxu0 0.0
        %7078 = vmatpush1.msra.mxu0 0.0
        %7079 = vmatprep.subr.mxu0 0.0
        %7080 = vmatpush1.msra.mxu0 0.0
        %7081 = vmatprep.subr.mxu0 0.0
        %7082 = vmatpush1.msra.mxu0 0.0
        %7083 = vmatprep.subr.mxu0 0.0
        %7084 = vmatpush1.msra.mxu0 0.0
        %7085 = vmatprep.subr.mxu0 0.0
        %7086 = vmatpush1.msra.mxu0 0.0
        %7087 = vmatprep.subr.mxu0 %v6996
        %7088 = vmatpush1.msra.mxu0 %v6995
        %7089 = vmatprep.subr.mxu0 %v6992
        %7090 = vmatpush1.msra.mxu0 %v6991
        %7091 = vmatprep.subr.mxu0 %v6988
        %7092 = vmatpush1.msra.mxu0 %v6987
        %7093 = vmatprep.subr.mxu0 %v6984
        %7094 = vmatpush1.msra.mxu0 %v6983
        %7095 = vmatprep.subr.mxu0 %v6980
        %7096 = vmatpush1.msra.mxu0 %v6979
        %7097 = vmatprep.subr.mxu0 %v6976
        %7098 = vmatpush1.msra.mxu0 %v6975
        %7099 = vmatprep.subr.mxu0 %v6972
        %7100 = vmatpush1.msra.mxu0 %v6971
        %7101 = vmatprep.subr.mxu0 %v6968
        %7102 = vmatpush1.msra.mxu0 %v6967
        %7103 = vmatprep.subr.mxu0 0.0
        %7104 = vmatpush2.msra.mxu0 0.0
        %7105 = vmatprep.subr.mxu0 0.0
        %7106 = vmatpush2.msra.mxu0 0.0
        %7107 = vmatprep.subr.mxu0 0.0
        %7108 = vmatpush2.msra.mxu0 0.0
        %7109 = vmatprep.subr.mxu0 0.0
        %7110 = vmatpush2.msra.mxu0 0.0
        %7111 = vmatprep.subr.mxu0 0.0
        %7112 = vmatpush2.msra.mxu0 0.0
        %7113 = vmatprep.subr.mxu0 0.0
        %7114 = vmatpush2.msra.mxu0 0.0
        %7115 = vmatprep.subr.mxu0 0.0
        %7116 = vmatpush2.msra.mxu0 0.0
        %7117 = vmatprep.subr.mxu0 0.0
        %7118 = vmatpush2.msra.mxu0 0.0
        %7119 = vmatprep.subr.mxu0 0.0
        %7120 = vmatpush2.msra.mxu0 0.0
        %7121 = vmatprep.subr.mxu0 0.0
        %7122 = vmatpush2.msra.mxu0 0.0
        %7123 = vmatprep.subr.mxu0 0.0
        %7124 = vmatpush2.msra.mxu0 0.0
        %7125 = vmatprep.subr.mxu0 0.0
        %7126 = vmatpush2.msra.mxu0 0.0
        %7127 = vmatprep.subr.mxu0 0.0
        %7128 = vmatpush2.msra.mxu0 0.0
        %7129 = vmatprep.subr.mxu0 0.0
        %7130 = vmatpush2.msra.mxu0 0.0
        %7131 = vmatprep.subr.mxu0 0.0
        %7132 = vmatpush2.msra.mxu0 0.0
        %7133 = vmatprep.subr.mxu0 0.0
        %7134 = vmatpush2.msra.mxu0 0.0
        %7135 = vmatprep.mubr.f32.mxu0 0.0
        %7136 = vmatmul.mubr.f32.gmra.mxu0 %v6998
        %v7137 = vpop.f32.mrf.mxu0
        %v7138 = vadd.f32 0.0, %v7137
        %v7139 = vpop.f32.mrf.mxu0
        %v7140 = vadd.f32 0.0, %v7139
        %7141 = vdwg.mxu0
        %v7142 = vadd.f32 %v6961, %v7067
        %v7143 = vadd.f32 %v6962, %v7069
        %v7144 = vadd.f32 %v6963, %v7138
        %v7145 = vadd.f32 %v6964, %v7140
        %s7146 = scalar_lea.vmem %s10, 256
        %v7147 = vld [vmem:[%s7146] sm:$0xff]
        %v7148 = vld [vmem:[%s7146 + $0x8] sm:$0xff]
        %v7149 = vld [vmem:[%s7146 + $0x10] sm:$0xff]
        %v7150 = vld [vmem:[%s7146 + $0x18] sm:$0xff]
        %v7151 = vld [vmem:[%s7146 + $0x20] sm:$0xff]
        %v7152 = vld [vmem:[%s7146 + $0x28] sm:$0xff]
        %v7153 = vld [vmem:[%s7146 + $0x30] sm:$0xff]
        %v7154 = vld [vmem:[%s7146 + $0x38] sm:$0xff]
        %v7155 = vld [vmem:[%s7146 + $0x40] sm:$0xff]
        %v7156 = vld [vmem:[%s7146 + $0x48] sm:$0xff]
        %v7157 = vld [vmem:[%s7146 + $0x50] sm:$0xff]
        %v7158 = vld [vmem:[%s7146 + $0x58] sm:$0xff]
        %v7159 = vld [vmem:[%s7146 + $0x60] sm:$0xff]
        %v7160 = vld [vmem:[%s7146 + $0x68] sm:$0xff]
        %v7161 = vld [vmem:[%s7146 + $0x70] sm:$0xff]
        %v7162 = vld [vmem:[%s7146 + $0x78] sm:$0xff]
        %v7163 = vld [vmem:[%s7146 + $0x80] sm:$0xff]
        %v7164 = vld [vmem:[%s7146 + $0x88] sm:$0xff]
        %v7165 = vld [vmem:[%s7146 + $0x90] sm:$0xff]
        %v7166 = vld [vmem:[%s7146 + $0x98] sm:$0xff]
        %v7167 = vld [vmem:[%s7146 + $0xa0] sm:$0xff]
        %v7168 = vld [vmem:[%s7146 + $0xa8] sm:$0xff]
        %v7169 = vld [vmem:[%s7146 + $0xb0] sm:$0xff]
        %v7170 = vld [vmem:[%s7146 + $0xb8] sm:$0xff]
        %v7171 = vld [vmem:[%s7146 + $0xc0] sm:$0xff]
        %v7172 = vld [vmem:[%s7146 + $0xc8] sm:$0xff]
        %v7173 = vld [vmem:[%s7146 + $0xd0] sm:$0xff]
        %v7174 = vld [vmem:[%s7146 + $0xd8] sm:$0xff]
        %v7175 = vld [vmem:[%s7146 + $0xe0] sm:$0xff]
        %v7176 = vld [vmem:[%s7146 + $0xe8] sm:$0xff]
        %v7177 = vld [vmem:[%s7146 + $0xf0] sm:$0xff]
        %v7178 = vld [vmem:[%s7146 + $0xf8] sm:$0xff]
        %v7180 = vsel %vm5639, %v6498, 0
        %7182 = vmatprep.subr.mxu0 0.0
        %7183 = vmatpush1.msra.mxu0 0.0
        %7184 = vmatprep.subr.mxu0 0.0
        %7185 = vmatpush1.msra.mxu0 0.0
        %7186 = vmatprep.subr.mxu0 0.0
        %7187 = vmatpush1.msra.mxu0 0.0
        %7188 = vmatprep.subr.mxu0 0.0
        %7189 = vmatpush1.msra.mxu0 0.0
        %7190 = vmatprep.subr.mxu0 0.0
        %7191 = vmatpush1.msra.mxu0 0.0
        %7192 = vmatprep.subr.mxu0 0.0
        %7193 = vmatpush1.msra.mxu0 0.0
        %7194 = vmatprep.subr.mxu0 0.0
        %7195 = vmatpush1.msra.mxu0 0.0
        %7196 = vmatprep.subr.mxu0 0.0
        %7197 = vmatpush1.msra.mxu0 0.0
        %7198 = vmatprep.subr.mxu0 %v7176
        %7199 = vmatpush1.msra.mxu0 %v7175
        %7200 = vmatprep.subr.mxu0 %v7172
        %7201 = vmatpush1.msra.mxu0 %v7171
        %7202 = vmatprep.subr.mxu0 %v7168
        %7203 = vmatpush1.msra.mxu0 %v7167
        %7204 = vmatprep.subr.mxu0 %v7164
        %7205 = vmatpush1.msra.mxu0 %v7163
        %7206 = vmatprep.subr.mxu0 %v7160
        %7207 = vmatpush1.msra.mxu0 %v7159
        %7208 = vmatprep.subr.mxu0 %v7156
        %7209 = vmatpush1.msra.mxu0 %v7155
        %7210 = vmatprep.subr.mxu0 %v7152
        %7211 = vmatpush1.msra.mxu0 %v7151
        %7212 = vmatprep.subr.mxu0 %v7148
        %7213 = vmatpush1.msra.mxu0 %v7147
        %7214 = vmatprep.subr.mxu0 0.0
        %7215 = vmatpush2.msra.mxu0 0.0
        %7216 = vmatprep.subr.mxu0 0.0
        %7217 = vmatpush2.msra.mxu0 0.0
        %7218 = vmatprep.subr.mxu0 0.0
        %7219 = vmatpush2.msra.mxu0 0.0
        %7220 = vmatprep.subr.mxu0 0.0
        %7221 = vmatpush2.msra.mxu0 0.0
        %7222 = vmatprep.subr.mxu0 0.0
        %7223 = vmatpush2.msra.mxu0 0.0
        %7224 = vmatprep.subr.mxu0 0.0
        %7225 = vmatpush2.msra.mxu0 0.0
        %7226 = vmatprep.subr.mxu0 0.0
        %7227 = vmatpush2.msra.mxu0 0.0
        %7228 = vmatprep.subr.mxu0 0.0
        %7229 = vmatpush2.msra.mxu0 0.0
        %7230 = vmatprep.subr.mxu0 0.0
        %7231 = vmatpush2.msra.mxu0 0.0
        %7232 = vmatprep.subr.mxu0 0.0
        %7233 = vmatpush2.msra.mxu0 0.0
        %7234 = vmatprep.subr.mxu0 0.0
        %7235 = vmatpush2.msra.mxu0 0.0
        %7236 = vmatprep.subr.mxu0 0.0
        %7237 = vmatpush2.msra.mxu0 0.0
        %7238 = vmatprep.subr.mxu0 0.0
        %7239 = vmatpush2.msra.mxu0 0.0
        %7240 = vmatprep.subr.mxu0 0.0
        %7241 = vmatpush2.msra.mxu0 0.0
        %7242 = vmatprep.subr.mxu0 0.0
        %7243 = vmatpush2.msra.mxu0 0.0
        %7244 = vmatprep.subr.mxu0 0.0
        %7245 = vmatpush2.msra.mxu0 0.0
        %7246 = vmatprep.mubr.f32.mxu0 0.0
        %7247 = vmatmul.mubr.f32.gmra.mxu0 %v7180
        %v7248 = vpop.f32.mrf.mxu0
        %v7249 = vadd.f32 0.0, %v7248
        %v7250 = vpop.f32.mrf.mxu0
        %v7251 = vadd.f32 0.0, %v7250
        %7252 = vdwg.mxu0
        %7253 = vmatprep.subr.mxu0 0.0
        %7254 = vmatpush1.msra.mxu0 0.0
        %7255 = vmatprep.subr.mxu0 0.0
        %7256 = vmatpush1.msra.mxu0 0.0
        %7257 = vmatprep.subr.mxu0 0.0
        %7258 = vmatpush1.msra.mxu0 0.0
        %7259 = vmatprep.subr.mxu0 0.0
        %7260 = vmatpush1.msra.mxu0 0.0
        %7261 = vmatprep.subr.mxu0 0.0
        %7262 = vmatpush1.msra.mxu0 0.0
        %7263 = vmatprep.subr.mxu0 0.0
        %7264 = vmatpush1.msra.mxu0 0.0
        %7265 = vmatprep.subr.mxu0 0.0
        %7266 = vmatpush1.msra.mxu0 0.0
        %7267 = vmatprep.subr.mxu0 0.0
        %7268 = vmatpush1.msra.mxu0 0.0
        %7269 = vmatprep.subr.mxu0 %v7178
        %7270 = vmatpush1.msra.mxu0 %v7177
        %7271 = vmatprep.subr.mxu0 %v7174
        %7272 = vmatpush1.msra.mxu0 %v7173
        %7273 = vmatprep.subr.mxu0 %v7170
        %7274 = vmatpush1.msra.mxu0 %v7169
        %7275 = vmatprep.subr.mxu0 %v7166
        %7276 = vmatpush1.msra.mxu0 %v7165
        %7277 = vmatprep.subr.mxu0 %v7162
        %7278 = vmatpush1.msra.mxu0 %v7161
        %7279 = vmatprep.subr.mxu0 %v7158
        %7280 = vmatpush1.msra.mxu0 %v7157
        %7281 = vmatprep.subr.mxu0 %v7154
        %7282 = vmatpush1.msra.mxu0 %v7153
        %7283 = vmatprep.subr.mxu0 %v7150
        %7284 = vmatpush1.msra.mxu0 %v7149
        %7285 = vmatprep.subr.mxu0 0.0
        %7286 = vmatpush2.msra.mxu0 0.0
        %7287 = vmatprep.subr.mxu0 0.0
        %7288 = vmatpush2.msra.mxu0 0.0
        %7289 = vmatprep.subr.mxu0 0.0
        %7290 = vmatpush2.msra.mxu0 0.0
        %7291 = vmatprep.subr.mxu0 0.0
        %7292 = vmatpush2.msra.mxu0 0.0
        %7293 = vmatprep.subr.mxu0 0.0
        %7294 = vmatpush2.msra.mxu0 0.0
        %7295 = vmatprep.subr.mxu0 0.0
        %7296 = vmatpush2.msra.mxu0 0.0
        %7297 = vmatprep.subr.mxu0 0.0
        %7298 = vmatpush2.msra.mxu0 0.0
        %7299 = vmatprep.subr.mxu0 0.0
        %7300 = vmatpush2.msra.mxu0 0.0
        %7301 = vmatprep.subr.mxu0 0.0
        %7302 = vmatpush2.msra.mxu0 0.0
        %7303 = vmatprep.subr.mxu0 0.0
        %7304 = vmatpush2.msra.mxu0 0.0
        %7305 = vmatprep.subr.mxu0 0.0
        %7306 = vmatpush2.msra.mxu0 0.0
        %7307 = vmatprep.subr.mxu0 0.0
        %7308 = vmatpush2.msra.mxu0 0.0
        %7309 = vmatprep.subr.mxu0 0.0
        %7310 = vmatpush2.msra.mxu0 0.0
        %7311 = vmatprep.subr.mxu0 0.0
        %7312 = vmatpush2.msra.mxu0 0.0
        %7313 = vmatprep.subr.mxu0 0.0
        %7314 = vmatpush2.msra.mxu0 0.0
        %7315 = vmatprep.subr.mxu0 0.0
        %7316 = vmatpush2.msra.mxu0 0.0
        %7317 = vmatprep.mubr.f32.mxu0 0.0
        %7318 = vmatmul.mubr.f32.gmra.mxu0 %v7180
        %v7319 = vpop.f32.mrf.mxu0
        %v7320 = vadd.f32 0.0, %v7319
        %v7321 = vpop.f32.mrf.mxu0
        %v7322 = vadd.f32 0.0, %v7321
        %7323 = vdwg.mxu0
        %v7324 = vadd.f32 %v7142, %v7249
        %v7325 = vadd.f32 %v7143, %v7251
        %v7326 = vadd.f32 %v7144, %v7320
        %v7327 = vadd.f32 %v7145, %v7322
        %s7328 = scalar_lea.vmem %s10, 512
        %v7329 = vld [vmem:[%s7328] sm:$0xff]
        %v7330 = vld [vmem:[%s7328 + $0x8] sm:$0xff]
        %v7331 = vld [vmem:[%s7328 + $0x10] sm:$0xff]
        %v7332 = vld [vmem:[%s7328 + $0x18] sm:$0xff]
        %v7333 = vld [vmem:[%s7328 + $0x20] sm:$0xff]
        %v7334 = vld [vmem:[%s7328 + $0x28] sm:$0xff]
        %v7335 = vld [vmem:[%s7328 + $0x30] sm:$0xff]
        %v7336 = vld [vmem:[%s7328 + $0x38] sm:$0xff]
        %v7337 = vld [vmem:[%s7328 + $0x40] sm:$0xff]
        %v7338 = vld [vmem:[%s7328 + $0x48] sm:$0xff]
        %v7339 = vld [vmem:[%s7328 + $0x50] sm:$0xff]
        %v7340 = vld [vmem:[%s7328 + $0x58] sm:$0xff]
        %v7341 = vld [vmem:[%s7328 + $0x60] sm:$0xff]
        %v7342 = vld [vmem:[%s7328 + $0x68] sm:$0xff]
        %v7343 = vld [vmem:[%s7328 + $0x70] sm:$0xff]
        %v7344 = vld [vmem:[%s7328 + $0x78] sm:$0xff]
        %v7345 = vld [vmem:[%s7328 + $0x80] sm:$0xff]
        %v7346 = vld [vmem:[%s7328 + $0x88] sm:$0xff]
        %v7347 = vld [vmem:[%s7328 + $0x90] sm:$0xff]
        %v7348 = vld [vmem:[%s7328 + $0x98] sm:$0xff]
        %v7349 = vld [vmem:[%s7328 + $0xa0] sm:$0xff]
        %v7350 = vld [vmem:[%s7328 + $0xa8] sm:$0xff]
        %v7351 = vld [vmem:[%s7328 + $0xb0] sm:$0xff]
        %v7352 = vld [vmem:[%s7328 + $0xb8] sm:$0xff]
        %v7353 = vld [vmem:[%s7328 + $0xc0] sm:$0xff]
        %v7354 = vld [vmem:[%s7328 + $0xc8] sm:$0xff]
        %v7355 = vld [vmem:[%s7328 + $0xd0] sm:$0xff]
        %v7356 = vld [vmem:[%s7328 + $0xd8] sm:$0xff]
        %v7357 = vld [vmem:[%s7328 + $0xe0] sm:$0xff]
        %v7358 = vld [vmem:[%s7328 + $0xe8] sm:$0xff]
        %v7359 = vld [vmem:[%s7328 + $0xf0] sm:$0xff]
        %v7360 = vld [vmem:[%s7328 + $0xf8] sm:$0xff]
        %v7362 = vsel %vm5639, %v6571, 0
        %7364 = vmatprep.subr.mxu0 0.0
        %7365 = vmatpush1.msra.mxu0 0.0
        %7366 = vmatprep.subr.mxu0 0.0
        %7367 = vmatpush1.msra.mxu0 0.0
        %7368 = vmatprep.subr.mxu0 0.0
        %7369 = vmatpush1.msra.mxu0 0.0
        %7370 = vmatprep.subr.mxu0 0.0
        %7371 = vmatpush1.msra.mxu0 0.0
        %7372 = vmatprep.subr.mxu0 0.0
        %7373 = vmatpush1.msra.mxu0 0.0
        %7374 = vmatprep.subr.mxu0 0.0
        %7375 = vmatpush1.msra.mxu0 0.0
        %7376 = vmatprep.subr.mxu0 0.0
        %7377 = vmatpush1.msra.mxu0 0.0
        %7378 = vmatprep.subr.mxu0 0.0
        %7379 = vmatpush1.msra.mxu0 0.0
        %7380 = vmatprep.subr.mxu0 %v7358
        %7381 = vmatpush1.msra.mxu0 %v7357
        %7382 = vmatprep.subr.mxu0 %v7354
        %7383 = vmatpush1.msra.mxu0 %v7353
        %7384 = vmatprep.subr.mxu0 %v7350
        %7385 = vmatpush1.msra.mxu0 %v7349
        %7386 = vmatprep.subr.mxu0 %v7346
        %7387 = vmatpush1.msra.mxu0 %v7345
        %7388 = vmatprep.subr.mxu0 %v7342
        %7389 = vmatpush1.msra.mxu0 %v7341
        %7390 = vmatprep.subr.mxu0 %v7338
        %7391 = vmatpush1.msra.mxu0 %v7337
        %7392 = vmatprep.subr.mxu0 %v7334
        %7393 = vmatpush1.msra.mxu0 %v7333
        %7394 = vmatprep.subr.mxu0 %v7330
        %7395 = vmatpush1.msra.mxu0 %v7329
        %7396 = vmatprep.subr.mxu0 0.0
        %7397 = vmatpush2.msra.mxu0 0.0
        %7398 = vmatprep.subr.mxu0 0.0
        %7399 = vmatpush2.msra.mxu0 0.0
        %7400 = vmatprep.subr.mxu0 0.0
        %7401 = vmatpush2.msra.mxu0 0.0
        %7402 = vmatprep.subr.mxu0 0.0
        %7403 = vmatpush2.msra.mxu0 0.0
        %7404 = vmatprep.subr.mxu0 0.0
        %7405 = vmatpush2.msra.mxu0 0.0
        %7406 = vmatprep.subr.mxu0 0.0
        %7407 = vmatpush2.msra.mxu0 0.0
        %7408 = vmatprep.subr.mxu0 0.0
        %7409 = vmatpush2.msra.mxu0 0.0
        %7410 = vmatprep.subr.mxu0 0.0
        %7411 = vmatpush2.msra.mxu0 0.0
        %7412 = vmatprep.subr.mxu0 0.0
        %7413 = vmatpush2.msra.mxu0 0.0
        %7414 = vmatprep.subr.mxu0 0.0
        %7415 = vmatpush2.msra.mxu0 0.0
        %7416 = vmatprep.subr.mxu0 0.0
        %7417 = vmatpush2.msra.mxu0 0.0
        %7418 = vmatprep.subr.mxu0 0.0
        %7419 = vmatpush2.msra.mxu0 0.0
        %7420 = vmatprep.subr.mxu0 0.0
        %7421 = vmatpush2.msra.mxu0 0.0
        %7422 = vmatprep.subr.mxu0 0.0
        %7423 = vmatpush2.msra.mxu0 0.0
        %7424 = vmatprep.subr.mxu0 0.0
        %7425 = vmatpush2.msra.mxu0 0.0
        %7426 = vmatprep.subr.mxu0 0.0
        %7427 = vmatpush2.msra.mxu0 0.0
        %7428 = vmatprep.mubr.f32.mxu0 0.0
        %7429 = vmatmul.mubr.f32.gmra.mxu0 %v7362
        %v7430 = vpop.f32.mrf.mxu0
        %v7431 = vadd.f32 0.0, %v7430
        %v7432 = vpop.f32.mrf.mxu0
        %v7433 = vadd.f32 0.0, %v7432
        %7434 = vdwg.mxu0
        %7435 = vmatprep.subr.mxu0 0.0
        %7436 = vmatpush1.msra.mxu0 0.0
        %7437 = vmatprep.subr.mxu0 0.0
        %7438 = vmatpush1.msra.mxu0 0.0
        %7439 = vmatprep.subr.mxu0 0.0
        %7440 = vmatpush1.msra.mxu0 0.0
        %7441 = vmatprep.subr.mxu0 0.0
        %7442 = vmatpush1.msra.mxu0 0.0
        %7443 = vmatprep.subr.mxu0 0.0
        %7444 = vmatpush1.msra.mxu0 0.0
        %7445 = vmatprep.subr.mxu0 0.0
        %7446 = vmatpush1.msra.mxu0 0.0
        %7447 = vmatprep.subr.mxu0 0.0
        %7448 = vmatpush1.msra.mxu0 0.0
        %7449 = vmatprep.subr.mxu0 0.0
        %7450 = vmatpush1.msra.mxu0 0.0
        %7451 = vmatprep.subr.mxu0 %v7360
        %7452 = vmatpush1.msra.mxu0 %v7359
        %7453 = vmatprep.subr.mxu0 %v7356
        %7454 = vmatpush1.msra.mxu0 %v7355
        %7455 = vmatprep.subr.mxu0 %v7352
        %7456 = vmatpush1.msra.mxu0 %v7351
        %7457 = vmatprep.subr.mxu0 %v7348
        %7458 = vmatpush1.msra.mxu0 %v7347
        %7459 = vmatprep.subr.mxu0 %v7344
        %7460 = vmatpush1.msra.mxu0 %v7343
        %7461 = vmatprep.subr.mxu0 %v7340
        %7462 = vmatpush1.msra.mxu0 %v7339
        %7463 = vmatprep.subr.mxu0 %v7336
        %7464 = vmatpush1.msra.mxu0 %v7335
        %7465 = vmatprep.subr.mxu0 %v7332
        %7466 = vmatpush1.msra.mxu0 %v7331
        %7467 = vmatprep.subr.mxu0 0.0
        %7468 = vmatpush2.msra.mxu0 0.0
        %7469 = vmatprep.subr.mxu0 0.0
        %7470 = vmatpush2.msra.mxu0 0.0
        %7471 = vmatprep.subr.mxu0 0.0
        %7472 = vmatpush2.msra.mxu0 0.0
        %7473 = vmatprep.subr.mxu0 0.0
        %7474 = vmatpush2.msra.mxu0 0.0
        %7475 = vmatprep.subr.mxu0 0.0
        %7476 = vmatpush2.msra.mxu0 0.0
        %7477 = vmatprep.subr.mxu0 0.0
        %7478 = vmatpush2.msra.mxu0 0.0
        %7479 = vmatprep.subr.mxu0 0.0
        %7480 = vmatpush2.msra.mxu0 0.0
        %7481 = vmatprep.subr.mxu0 0.0
        %7482 = vmatpush2.msra.mxu0 0.0
        %7483 = vmatprep.subr.mxu0 0.0
        %7484 = vmatpush2.msra.mxu0 0.0
        %7485 = vmatprep.subr.mxu0 0.0
        %7486 = vmatpush2.msra.mxu0 0.0
        %7487 = vmatprep.subr.mxu0 0.0
        %7488 = vmatpush2.msra.mxu0 0.0
        %7489 = vmatprep.subr.mxu0 0.0
        %7490 = vmatpush2.msra.mxu0 0.0
        %7491 = vmatprep.subr.mxu0 0.0
        %7492 = vmatpush2.msra.mxu0 0.0
        %7493 = vmatprep.subr.mxu0 0.0
        %7494 = vmatpush2.msra.mxu0 0.0
        %7495 = vmatprep.subr.mxu0 0.0
        %7496 = vmatpush2.msra.mxu0 0.0
        %7497 = vmatprep.subr.mxu0 0.0
        %7498 = vmatpush2.msra.mxu0 0.0
        %7499 = vmatprep.mubr.f32.mxu0 0.0
        %7500 = vmatmul.mubr.f32.gmra.mxu0 %v7362
        %v7501 = vpop.f32.mrf.mxu0
        %v7502 = vadd.f32 0.0, %v7501
        %v7503 = vpop.f32.mrf.mxu0
        %v7504 = vadd.f32 0.0, %v7503
        %7505 = vdwg.mxu0
        %v7506 = vadd.f32 %v7324, %v7431
        %v7507 = vadd.f32 %v7325, %v7433
        %v7508 = vadd.f32 %v7326, %v7502
        %v7509 = vadd.f32 %v7327, %v7504
        %s7510 = scalar_lea.vmem %s10, 768
        %v7511 = vld [vmem:[%s7510] sm:$0xff]
        %v7512 = vld [vmem:[%s7510 + $0x8] sm:$0xff]
        %v7513 = vld [vmem:[%s7510 + $0x10] sm:$0xff]
        %v7514 = vld [vmem:[%s7510 + $0x18] sm:$0xff]
        %v7515 = vld [vmem:[%s7510 + $0x20] sm:$0xff]
        %v7516 = vld [vmem:[%s7510 + $0x28] sm:$0xff]
        %v7517 = vld [vmem:[%s7510 + $0x30] sm:$0xff]
        %v7518 = vld [vmem:[%s7510 + $0x38] sm:$0xff]
        %v7519 = vld [vmem:[%s7510 + $0x40] sm:$0xff]
        %v7520 = vld [vmem:[%s7510 + $0x48] sm:$0xff]
        %v7521 = vld [vmem:[%s7510 + $0x50] sm:$0xff]
        %v7522 = vld [vmem:[%s7510 + $0x58] sm:$0xff]
        %v7523 = vld [vmem:[%s7510 + $0x60] sm:$0xff]
        %v7524 = vld [vmem:[%s7510 + $0x68] sm:$0xff]
        %v7525 = vld [vmem:[%s7510 + $0x70] sm:$0xff]
        %v7526 = vld [vmem:[%s7510 + $0x78] sm:$0xff]
        %v7527 = vld [vmem:[%s7510 + $0x80] sm:$0xff]
        %v7528 = vld [vmem:[%s7510 + $0x88] sm:$0xff]
        %v7529 = vld [vmem:[%s7510 + $0x90] sm:$0xff]
        %v7530 = vld [vmem:[%s7510 + $0x98] sm:$0xff]
        %v7531 = vld [vmem:[%s7510 + $0xa0] sm:$0xff]
        %v7532 = vld [vmem:[%s7510 + $0xa8] sm:$0xff]
        %v7533 = vld [vmem:[%s7510 + $0xb0] sm:$0xff]
        %v7534 = vld [vmem:[%s7510 + $0xb8] sm:$0xff]
        %v7535 = vld [vmem:[%s7510 + $0xc0] sm:$0xff]
        %v7536 = vld [vmem:[%s7510 + $0xc8] sm:$0xff]
        %v7537 = vld [vmem:[%s7510 + $0xd0] sm:$0xff]
        %v7538 = vld [vmem:[%s7510 + $0xd8] sm:$0xff]
        %v7539 = vld [vmem:[%s7510 + $0xe0] sm:$0xff]
        %v7540 = vld [vmem:[%s7510 + $0xe8] sm:$0xff]
        %v7541 = vld [vmem:[%s7510 + $0xf0] sm:$0xff]
        %v7542 = vld [vmem:[%s7510 + $0xf8] sm:$0xff]
        %v7544 = vsel %vm5639, %v6644, 0
        %7546 = vmatprep.subr.mxu0 0.0
        %7547 = vmatpush1.msra.mxu0 0.0
        %7548 = vmatprep.subr.mxu0 0.0
        %7549 = vmatpush1.msra.mxu0 0.0
        %7550 = vmatprep.subr.mxu0 0.0
        %7551 = vmatpush1.msra.mxu0 0.0
        %7552 = vmatprep.subr.mxu0 0.0
        %7553 = vmatpush1.msra.mxu0 0.0
        %7554 = vmatprep.subr.mxu0 0.0
        %7555 = vmatpush1.msra.mxu0 0.0
        %7556 = vmatprep.subr.mxu0 0.0
        %7557 = vmatpush1.msra.mxu0 0.0
        %7558 = vmatprep.subr.mxu0 0.0
        %7559 = vmatpush1.msra.mxu0 0.0
        %7560 = vmatprep.subr.mxu0 0.0
        %7561 = vmatpush1.msra.mxu0 0.0
        %7562 = vmatprep.subr.mxu0 %v7540
        %7563 = vmatpush1.msra.mxu0 %v7539
        %7564 = vmatprep.subr.mxu0 %v7536
        %7565 = vmatpush1.msra.mxu0 %v7535
        %7566 = vmatprep.subr.mxu0 %v7532
        %7567 = vmatpush1.msra.mxu0 %v7531
        %7568 = vmatprep.subr.mxu0 %v7528
        %7569 = vmatpush1.msra.mxu0 %v7527
        %7570 = vmatprep.subr.mxu0 %v7524
        %7571 = vmatpush1.msra.mxu0 %v7523
        %7572 = vmatprep.subr.mxu0 %v7520
        %7573 = vmatpush1.msra.mxu0 %v7519
        %7574 = vmatprep.subr.mxu0 %v7516
        %7575 = vmatpush1.msra.mxu0 %v7515
        %7576 = vmatprep.subr.mxu0 %v7512
        %7577 = vmatpush1.msra.mxu0 %v7511
        %7578 = vmatprep.subr.mxu0 0.0
        %7579 = vmatpush2.msra.mxu0 0.0
        %7580 = vmatprep.subr.mxu0 0.0
        %7581 = vmatpush2.msra.mxu0 0.0
        %7582 = vmatprep.subr.mxu0 0.0
        %7583 = vmatpush2.msra.mxu0 0.0
        %7584 = vmatprep.subr.mxu0 0.0
        %7585 = vmatpush2.msra.mxu0 0.0
        %7586 = vmatprep.subr.mxu0 0.0
        %7587 = vmatpush2.msra.mxu0 0.0
        %7588 = vmatprep.subr.mxu0 0.0
        %7589 = vmatpush2.msra.mxu0 0.0
        %7590 = vmatprep.subr.mxu0 0.0
        %7591 = vmatpush2.msra.mxu0 0.0
        %7592 = vmatprep.subr.mxu0 0.0
        %7593 = vmatpush2.msra.mxu0 0.0
        %7594 = vmatprep.subr.mxu0 0.0
        %7595 = vmatpush2.msra.mxu0 0.0
        %7596 = vmatprep.subr.mxu0 0.0
        %7597 = vmatpush2.msra.mxu0 0.0
        %7598 = vmatprep.subr.mxu0 0.0
        %7599 = vmatpush2.msra.mxu0 0.0
        %7600 = vmatprep.subr.mxu0 0.0
        %7601 = vmatpush2.msra.mxu0 0.0
        %7602 = vmatprep.subr.mxu0 0.0
        %7603 = vmatpush2.msra.mxu0 0.0
        %7604 = vmatprep.subr.mxu0 0.0
        %7605 = vmatpush2.msra.mxu0 0.0
        %7606 = vmatprep.subr.mxu0 0.0
        %7607 = vmatpush2.msra.mxu0 0.0
        %7608 = vmatprep.subr.mxu0 0.0
        %7609 = vmatpush2.msra.mxu0 0.0
        %7610 = vmatprep.mubr.f32.mxu0 0.0
        %7611 = vmatmul.mubr.f32.gmra.mxu0 %v7544
        %v7612 = vpop.f32.mrf.mxu0
        %v7613 = vadd.f32 0.0, %v7612
        %v7614 = vpop.f32.mrf.mxu0
        %v7615 = vadd.f32 0.0, %v7614
        %7616 = vdwg.mxu0
        %7617 = vmatprep.subr.mxu0 0.0
        %7618 = vmatpush1.msra.mxu0 0.0
        %7619 = vmatprep.subr.mxu0 0.0
        %7620 = vmatpush1.msra.mxu0 0.0
        %7621 = vmatprep.subr.mxu0 0.0
        %7622 = vmatpush1.msra.mxu0 0.0
        %7623 = vmatprep.subr.mxu0 0.0
        %7624 = vmatpush1.msra.mxu0 0.0
        %7625 = vmatprep.subr.mxu0 0.0
        %7626 = vmatpush1.msra.mxu0 0.0
        %7627 = vmatprep.subr.mxu0 0.0
        %7628 = vmatpush1.msra.mxu0 0.0
        %7629 = vmatprep.subr.mxu0 0.0
        %7630 = vmatpush1.msra.mxu0 0.0
        %7631 = vmatprep.subr.mxu0 0.0
        %7632 = vmatpush1.msra.mxu0 0.0
        %7633 = vmatprep.subr.mxu0 %v7542
        %7634 = vmatpush1.msra.mxu0 %v7541
        %7635 = vmatprep.subr.mxu0 %v7538
        %7636 = vmatpush1.msra.mxu0 %v7537
        %7637 = vmatprep.subr.mxu0 %v7534
        %7638 = vmatpush1.msra.mxu0 %v7533
        %7639 = vmatprep.subr.mxu0 %v7530
        %7640 = vmatpush1.msra.mxu0 %v7529
        %7641 = vmatprep.subr.mxu0 %v7526
        %7642 = vmatpush1.msra.mxu0 %v7525
        %7643 = vmatprep.subr.mxu0 %v7522
        %7644 = vmatpush1.msra.mxu0 %v7521
        %7645 = vmatprep.subr.mxu0 %v7518
        %7646 = vmatpush1.msra.mxu0 %v7517
        %7647 = vmatprep.subr.mxu0 %v7514
        %7648 = vmatpush1.msra.mxu0 %v7513
        %7649 = vmatprep.subr.mxu0 0.0
        %7650 = vmatpush2.msra.mxu0 0.0
        %7651 = vmatprep.subr.mxu0 0.0
        %7652 = vmatpush2.msra.mxu0 0.0
        %7653 = vmatprep.subr.mxu0 0.0
        %7654 = vmatpush2.msra.mxu0 0.0
        %7655 = vmatprep.subr.mxu0 0.0
        %7656 = vmatpush2.msra.mxu0 0.0
        %7657 = vmatprep.subr.mxu0 0.0
        %7658 = vmatpush2.msra.mxu0 0.0
        %7659 = vmatprep.subr.mxu0 0.0
        %7660 = vmatpush2.msra.mxu0 0.0
        %7661 = vmatprep.subr.mxu0 0.0
        %7662 = vmatpush2.msra.mxu0 0.0
        %7663 = vmatprep.subr.mxu0 0.0
        %7664 = vmatpush2.msra.mxu0 0.0
        %7665 = vmatprep.subr.mxu0 0.0
        %7666 = vmatpush2.msra.mxu0 0.0
        %7667 = vmatprep.subr.mxu0 0.0
        %7668 = vmatpush2.msra.mxu0 0.0
        %7669 = vmatprep.subr.mxu0 0.0
        %7670 = vmatpush2.msra.mxu0 0.0
        %7671 = vmatprep.subr.mxu0 0.0
        %7672 = vmatpush2.msra.mxu0 0.0
        %7673 = vmatprep.subr.mxu0 0.0
        %7674 = vmatpush2.msra.mxu0 0.0
        %7675 = vmatprep.subr.mxu0 0.0
        %7676 = vmatpush2.msra.mxu0 0.0
        %7677 = vmatprep.subr.mxu0 0.0
        %7678 = vmatpush2.msra.mxu0 0.0
        %7679 = vmatprep.subr.mxu0 0.0
        %7680 = vmatpush2.msra.mxu0 0.0
        %7681 = vmatprep.mubr.f32.mxu0 0.0
        %7682 = vmatmul.mubr.f32.gmra.mxu0 %v7544
        %v7683 = vpop.f32.mrf.mxu0
        %v7684 = vadd.f32 0.0, %v7683
        %v7685 = vpop.f32.mrf.mxu0
        %v7686 = vadd.f32 0.0, %v7685
        %7687 = vdwg.mxu0
        %v7688 = vadd.f32 %v7506, %v7613
        %v7689 = vadd.f32 %v7507, %v7615
        %v7690 = vadd.f32 %v7508, %v7684
        %v7691 = vadd.f32 %v7509, %v7686
        %s7692 = scalar_lea.vmem %s10, 1024
        %v7693 = vld [vmem:[%s7692] sm:$0xff]
        %v7694 = vld [vmem:[%s7692 + $0x8] sm:$0xff]
        %v7695 = vld [vmem:[%s7692 + $0x10] sm:$0xff]
        %v7696 = vld [vmem:[%s7692 + $0x18] sm:$0xff]
        %v7697 = vld [vmem:[%s7692 + $0x20] sm:$0xff]
        %v7698 = vld [vmem:[%s7692 + $0x28] sm:$0xff]
        %v7699 = vld [vmem:[%s7692 + $0x30] sm:$0xff]
        %v7700 = vld [vmem:[%s7692 + $0x38] sm:$0xff]
        %v7701 = vld [vmem:[%s7692 + $0x40] sm:$0xff]
        %v7702 = vld [vmem:[%s7692 + $0x48] sm:$0xff]
        %v7703 = vld [vmem:[%s7692 + $0x50] sm:$0xff]
        %v7704 = vld [vmem:[%s7692 + $0x58] sm:$0xff]
        %v7705 = vld [vmem:[%s7692 + $0x60] sm:$0xff]
        %v7706 = vld [vmem:[%s7692 + $0x68] sm:$0xff]
        %v7707 = vld [vmem:[%s7692 + $0x70] sm:$0xff]
        %v7708 = vld [vmem:[%s7692 + $0x78] sm:$0xff]
        %v7709 = vld [vmem:[%s7692 + $0x80] sm:$0xff]
        %v7710 = vld [vmem:[%s7692 + $0x88] sm:$0xff]
        %v7711 = vld [vmem:[%s7692 + $0x90] sm:$0xff]
        %v7712 = vld [vmem:[%s7692 + $0x98] sm:$0xff]
        %v7713 = vld [vmem:[%s7692 + $0xa0] sm:$0xff]
        %v7714 = vld [vmem:[%s7692 + $0xa8] sm:$0xff]
        %v7715 = vld [vmem:[%s7692 + $0xb0] sm:$0xff]
        %v7716 = vld [vmem:[%s7692 + $0xb8] sm:$0xff]
        %v7717 = vld [vmem:[%s7692 + $0xc0] sm:$0xff]
        %v7718 = vld [vmem:[%s7692 + $0xc8] sm:$0xff]
        %v7719 = vld [vmem:[%s7692 + $0xd0] sm:$0xff]
        %v7720 = vld [vmem:[%s7692 + $0xd8] sm:$0xff]
        %v7721 = vld [vmem:[%s7692 + $0xe0] sm:$0xff]
        %v7722 = vld [vmem:[%s7692 + $0xe8] sm:$0xff]
        %v7723 = vld [vmem:[%s7692 + $0xf0] sm:$0xff]
        %v7724 = vld [vmem:[%s7692 + $0xf8] sm:$0xff]
        %v7726 = vsel %vm5639, %v6717, 0
        %7728 = vmatprep.subr.mxu0 0.0
        %7729 = vmatpush1.msra.mxu0 0.0
        %7730 = vmatprep.subr.mxu0 0.0
        %7731 = vmatpush1.msra.mxu0 0.0
        %7732 = vmatprep.subr.mxu0 0.0
        %7733 = vmatpush1.msra.mxu0 0.0
        %7734 = vmatprep.subr.mxu0 0.0
        %7735 = vmatpush1.msra.mxu0 0.0
        %7736 = vmatprep.subr.mxu0 0.0
        %7737 = vmatpush1.msra.mxu0 0.0
        %7738 = vmatprep.subr.mxu0 0.0
        %7739 = vmatpush1.msra.mxu0 0.0
        %7740 = vmatprep.subr.mxu0 0.0
        %7741 = vmatpush1.msra.mxu0 0.0
        %7742 = vmatprep.subr.mxu0 0.0
        %7743 = vmatpush1.msra.mxu0 0.0
        %7744 = vmatprep.subr.mxu0 %v7722
        %7745 = vmatpush1.msra.mxu0 %v7721
        %7746 = vmatprep.subr.mxu0 %v7718
        %7747 = vmatpush1.msra.mxu0 %v7717
        %7748 = vmatprep.subr.mxu0 %v7714
        %7749 = vmatpush1.msra.mxu0 %v7713
        %7750 = vmatprep.subr.mxu0 %v7710
        %7751 = vmatpush1.msra.mxu0 %v7709
        %7752 = vmatprep.subr.mxu0 %v7706
        %7753 = vmatpush1.msra.mxu0 %v7705
        %7754 = vmatprep.subr.mxu0 %v7702
        %7755 = vmatpush1.msra.mxu0 %v7701
        %7756 = vmatprep.subr.mxu0 %v7698
        %7757 = vmatpush1.msra.mxu0 %v7697
        %7758 = vmatprep.subr.mxu0 %v7694
        %7759 = vmatpush1.msra.mxu0 %v7693
        %7760 = vmatprep.subr.mxu0 0.0
        %7761 = vmatpush2.msra.mxu0 0.0
        %7762 = vmatprep.subr.mxu0 0.0
        %7763 = vmatpush2.msra.mxu0 0.0
        %7764 = vmatprep.subr.mxu0 0.0
        %7765 = vmatpush2.msra.mxu0 0.0
        %7766 = vmatprep.subr.mxu0 0.0
        %7767 = vmatpush2.msra.mxu0 0.0
        %7768 = vmatprep.subr.mxu0 0.0
        %7769 = vmatpush2.msra.mxu0 0.0
        %7770 = vmatprep.subr.mxu0 0.0
        %7771 = vmatpush2.msra.mxu0 0.0
        %7772 = vmatprep.subr.mxu0 0.0
        %7773 = vmatpush2.msra.mxu0 0.0
        %7774 = vmatprep.subr.mxu0 0.0
        %7775 = vmatpush2.msra.mxu0 0.0
        %7776 = vmatprep.subr.mxu0 0.0
        %7777 = vmatpush2.msra.mxu0 0.0
        %7778 = vmatprep.subr.mxu0 0.0
        %7779 = vmatpush2.msra.mxu0 0.0
        %7780 = vmatprep.subr.mxu0 0.0
        %7781 = vmatpush2.msra.mxu0 0.0
        %7782 = vmatprep.subr.mxu0 0.0
        %7783 = vmatpush2.msra.mxu0 0.0
        %7784 = vmatprep.subr.mxu0 0.0
        %7785 = vmatpush2.msra.mxu0 0.0
        %7786 = vmatprep.subr.mxu0 0.0
        %7787 = vmatpush2.msra.mxu0 0.0
        %7788 = vmatprep.subr.mxu0 0.0
        %7789 = vmatpush2.msra.mxu0 0.0
        %7790 = vmatprep.subr.mxu0 0.0
        %7791 = vmatpush2.msra.mxu0 0.0
        %7792 = vmatprep.mubr.f32.mxu0 0.0
        %7793 = vmatmul.mubr.f32.gmra.mxu0 %v7726
        %v7794 = vpop.f32.mrf.mxu0
        %v7795 = vadd.f32 0.0, %v7794
        %v7796 = vpop.f32.mrf.mxu0
        %v7797 = vadd.f32 0.0, %v7796
        %7798 = vdwg.mxu0
        %7799 = vmatprep.subr.mxu0 0.0
        %7800 = vmatpush1.msra.mxu0 0.0
        %7801 = vmatprep.subr.mxu0 0.0
        %7802 = vmatpush1.msra.mxu0 0.0
        %7803 = vmatprep.subr.mxu0 0.0
        %7804 = vmatpush1.msra.mxu0 0.0
        %7805 = vmatprep.subr.mxu0 0.0
        %7806 = vmatpush1.msra.mxu0 0.0
        %7807 = vmatprep.subr.mxu0 0.0
        %7808 = vmatpush1.msra.mxu0 0.0
        %7809 = vmatprep.subr.mxu0 0.0
        %7810 = vmatpush1.msra.mxu0 0.0
        %7811 = vmatprep.subr.mxu0 0.0
        %7812 = vmatpush1.msra.mxu0 0.0
        %7813 = vmatprep.subr.mxu0 0.0
        %7814 = vmatpush1.msra.mxu0 0.0
        %7815 = vmatprep.subr.mxu0 %v7724
        %7816 = vmatpush1.msra.mxu0 %v7723
        %7817 = vmatprep.subr.mxu0 %v7720
        %7818 = vmatpush1.msra.mxu0 %v7719
        %7819 = vmatprep.subr.mxu0 %v7716
        %7820 = vmatpush1.msra.mxu0 %v7715
        %7821 = vmatprep.subr.mxu0 %v7712
        %7822 = vmatpush1.msra.mxu0 %v7711
        %7823 = vmatprep.subr.mxu0 %v7708
        %7824 = vmatpush1.msra.mxu0 %v7707
        %7825 = vmatprep.subr.mxu0 %v7704
        %7826 = vmatpush1.msra.mxu0 %v7703
        %7827 = vmatprep.subr.mxu0 %v7700
        %7828 = vmatpush1.msra.mxu0 %v7699
        %7829 = vmatprep.subr.mxu0 %v7696
        %7830 = vmatpush1.msra.mxu0 %v7695
        %7831 = vmatprep.subr.mxu0 0.0
        %7832 = vmatpush2.msra.mxu0 0.0
        %7833 = vmatprep.subr.mxu0 0.0
        %7834 = vmatpush2.msra.mxu0 0.0
        %7835 = vmatprep.subr.mxu0 0.0
        %7836 = vmatpush2.msra.mxu0 0.0
        %7837 = vmatprep.subr.mxu0 0.0
        %7838 = vmatpush2.msra.mxu0 0.0
        %7839 = vmatprep.subr.mxu0 0.0
        %7840 = vmatpush2.msra.mxu0 0.0
        %7841 = vmatprep.subr.mxu0 0.0
        %7842 = vmatpush2.msra.mxu0 0.0
        %7843 = vmatprep.subr.mxu0 0.0
        %7844 = vmatpush2.msra.mxu0 0.0
        %7845 = vmatprep.subr.mxu0 0.0
        %7846 = vmatpush2.msra.mxu0 0.0
        %7847 = vmatprep.subr.mxu0 0.0
        %7848 = vmatpush2.msra.mxu0 0.0
        %7849 = vmatprep.subr.mxu0 0.0
        %7850 = vmatpush2.msra.mxu0 0.0
        %7851 = vmatprep.subr.mxu0 0.0
        %7852 = vmatpush2.msra.mxu0 0.0
        %7853 = vmatprep.subr.mxu0 0.0
        %7854 = vmatpush2.msra.mxu0 0.0
        %7855 = vmatprep.subr.mxu0 0.0
        %7856 = vmatpush2.msra.mxu0 0.0
        %7857 = vmatprep.subr.mxu0 0.0
        %7858 = vmatpush2.msra.mxu0 0.0
        %7859 = vmatprep.subr.mxu0 0.0
        %7860 = vmatpush2.msra.mxu0 0.0
        %7861 = vmatprep.subr.mxu0 0.0
        %7862 = vmatpush2.msra.mxu0 0.0
        %7863 = vmatprep.mubr.f32.mxu0 0.0
        %7864 = vmatmul.mubr.f32.gmra.mxu0 %v7726
        %v7865 = vpop.f32.mrf.mxu0
        %v7866 = vadd.f32 0.0, %v7865
        %v7867 = vpop.f32.mrf.mxu0
        %v7868 = vadd.f32 0.0, %v7867
        %7869 = vdwg.mxu0
        %v7870 = vadd.f32 %v7688, %v7795
        %v7871 = vadd.f32 %v7689, %v7797
        %v7872 = vadd.f32 %v7690, %v7866
        %v7873 = vadd.f32 %v7691, %v7868
        %s7874 = scalar_lea.vmem %s10, 1280
        %v7875 = vld [vmem:[%s7874] sm:$0xff]
        %v7876 = vld [vmem:[%s7874 + $0x8] sm:$0xff]
        %v7877 = vld [vmem:[%s7874 + $0x10] sm:$0xff]
        %v7878 = vld [vmem:[%s7874 + $0x18] sm:$0xff]
        %v7879 = vld [vmem:[%s7874 + $0x20] sm:$0xff]
        %v7880 = vld [vmem:[%s7874 + $0x28] sm:$0xff]
        %v7881 = vld [vmem:[%s7874 + $0x30] sm:$0xff]
        %v7882 = vld [vmem:[%s7874 + $0x38] sm:$0xff]
        %v7883 = vld [vmem:[%s7874 + $0x40] sm:$0xff]
        %v7884 = vld [vmem:[%s7874 + $0x48] sm:$0xff]
        %v7885 = vld [vmem:[%s7874 + $0x50] sm:$0xff]
        %v7886 = vld [vmem:[%s7874 + $0x58] sm:$0xff]
        %v7887 = vld [vmem:[%s7874 + $0x60] sm:$0xff]
        %v7888 = vld [vmem:[%s7874 + $0x68] sm:$0xff]
        %v7889 = vld [vmem:[%s7874 + $0x70] sm:$0xff]
        %v7890 = vld [vmem:[%s7874 + $0x78] sm:$0xff]
        %v7891 = vld [vmem:[%s7874 + $0x80] sm:$0xff]
        %v7892 = vld [vmem:[%s7874 + $0x88] sm:$0xff]
        %v7893 = vld [vmem:[%s7874 + $0x90] sm:$0xff]
        %v7894 = vld [vmem:[%s7874 + $0x98] sm:$0xff]
        %v7895 = vld [vmem:[%s7874 + $0xa0] sm:$0xff]
        %v7896 = vld [vmem:[%s7874 + $0xa8] sm:$0xff]
        %v7897 = vld [vmem:[%s7874 + $0xb0] sm:$0xff]
        %v7898 = vld [vmem:[%s7874 + $0xb8] sm:$0xff]
        %v7899 = vld [vmem:[%s7874 + $0xc0] sm:$0xff]
        %v7900 = vld [vmem:[%s7874 + $0xc8] sm:$0xff]
        %v7901 = vld [vmem:[%s7874 + $0xd0] sm:$0xff]
        %v7902 = vld [vmem:[%s7874 + $0xd8] sm:$0xff]
        %v7903 = vld [vmem:[%s7874 + $0xe0] sm:$0xff]
        %v7904 = vld [vmem:[%s7874 + $0xe8] sm:$0xff]
        %v7905 = vld [vmem:[%s7874 + $0xf0] sm:$0xff]
        %v7906 = vld [vmem:[%s7874 + $0xf8] sm:$0xff]
        %v7908 = vsel %vm5639, %v6790, 0
        %7910 = vmatprep.subr.mxu0 0.0
        %7911 = vmatpush1.msra.mxu0 0.0
        %7912 = vmatprep.subr.mxu0 0.0
        %7913 = vmatpush1.msra.mxu0 0.0
        %7914 = vmatprep.subr.mxu0 0.0
        %7915 = vmatpush1.msra.mxu0 0.0
        %7916 = vmatprep.subr.mxu0 0.0
        %7917 = vmatpush1.msra.mxu0 0.0
        %7918 = vmatprep.subr.mxu0 0.0
        %7919 = vmatpush1.msra.mxu0 0.0
        %7920 = vmatprep.subr.mxu0 0.0
        %7921 = vmatpush1.msra.mxu0 0.0
        %7922 = vmatprep.subr.mxu0 0.0
        %7923 = vmatpush1.msra.mxu0 0.0
        %7924 = vmatprep.subr.mxu0 0.0
        %7925 = vmatpush1.msra.mxu0 0.0
        %7926 = vmatprep.subr.mxu0 %v7904
        %7927 = vmatpush1.msra.mxu0 %v7903
        %7928 = vmatprep.subr.mxu0 %v7900
        %7929 = vmatpush1.msra.mxu0 %v7899
        %7930 = vmatprep.subr.mxu0 %v7896
        %7931 = vmatpush1.msra.mxu0 %v7895
        %7932 = vmatprep.subr.mxu0 %v7892
        %7933 = vmatpush1.msra.mxu0 %v7891
        %7934 = vmatprep.subr.mxu0 %v7888
        %7935 = vmatpush1.msra.mxu0 %v7887
        %7936 = vmatprep.subr.mxu0 %v7884
        %7937 = vmatpush1.msra.mxu0 %v7883
        %7938 = vmatprep.subr.mxu0 %v7880
        %7939 = vmatpush1.msra.mxu0 %v7879
        %7940 = vmatprep.subr.mxu0 %v7876
        %7941 = vmatpush1.msra.mxu0 %v7875
        %7942 = vmatprep.subr.mxu0 0.0
        %7943 = vmatpush2.msra.mxu0 0.0
        %7944 = vmatprep.subr.mxu0 0.0
        %7945 = vmatpush2.msra.mxu0 0.0
        %7946 = vmatprep.subr.mxu0 0.0
        %7947 = vmatpush2.msra.mxu0 0.0
        %7948 = vmatprep.subr.mxu0 0.0
        %7949 = vmatpush2.msra.mxu0 0.0
        %7950 = vmatprep.subr.mxu0 0.0
        %7951 = vmatpush2.msra.mxu0 0.0
        %7952 = vmatprep.subr.mxu0 0.0
        %7953 = vmatpush2.msra.mxu0 0.0
        %7954 = vmatprep.subr.mxu0 0.0
        %7955 = vmatpush2.msra.mxu0 0.0
        %7956 = vmatprep.subr.mxu0 0.0
        %7957 = vmatpush2.msra.mxu0 0.0
        %7958 = vmatprep.subr.mxu0 0.0
        %7959 = vmatpush2.msra.mxu0 0.0
        %7960 = vmatprep.subr.mxu0 0.0
        %7961 = vmatpush2.msra.mxu0 0.0
        %7962 = vmatprep.subr.mxu0 0.0
        %7963 = vmatpush2.msra.mxu0 0.0
        %7964 = vmatprep.subr.mxu0 0.0
        %7965 = vmatpush2.msra.mxu0 0.0
        %7966 = vmatprep.subr.mxu0 0.0
        %7967 = vmatpush2.msra.mxu0 0.0
        %7968 = vmatprep.subr.mxu0 0.0
        %7969 = vmatpush2.msra.mxu0 0.0
        %7970 = vmatprep.subr.mxu0 0.0
        %7971 = vmatpush2.msra.mxu0 0.0
        %7972 = vmatprep.subr.mxu0 0.0
        %7973 = vmatpush2.msra.mxu0 0.0
        %7974 = vmatprep.mubr.f32.mxu0 0.0
        %7975 = vmatmul.mubr.f32.gmra.mxu0 %v7908
        %v7976 = vpop.f32.mrf.mxu0
        %v7977 = vadd.f32 0.0, %v7976
        %v7978 = vpop.f32.mrf.mxu0
        %v7979 = vadd.f32 0.0, %v7978
        %7980 = vdwg.mxu0
        %7981 = vmatprep.subr.mxu0 0.0
        %7982 = vmatpush1.msra.mxu0 0.0
        %7983 = vmatprep.subr.mxu0 0.0
        %7984 = vmatpush1.msra.mxu0 0.0
        %7985 = vmatprep.subr.mxu0 0.0
        %7986 = vmatpush1.msra.mxu0 0.0
        %7987 = vmatprep.subr.mxu0 0.0
        %7988 = vmatpush1.msra.mxu0 0.0
        %7989 = vmatprep.subr.mxu0 0.0
        %7990 = vmatpush1.msra.mxu0 0.0
        %7991 = vmatprep.subr.mxu0 0.0
        %7992 = vmatpush1.msra.mxu0 0.0
        %7993 = vmatprep.subr.mxu0 0.0
        %7994 = vmatpush1.msra.mxu0 0.0
        %7995 = vmatprep.subr.mxu0 0.0
        %7996 = vmatpush1.msra.mxu0 0.0
        %7997 = vmatprep.subr.mxu0 %v7906
        %7998 = vmatpush1.msra.mxu0 %v7905
        %7999 = vmatprep.subr.mxu0 %v7902
        %8000 = vmatpush1.msra.mxu0 %v7901
        %8001 = vmatprep.subr.mxu0 %v7898
        %8002 = vmatpush1.msra.mxu0 %v7897
        %8003 = vmatprep.subr.mxu0 %v7894
        %8004 = vmatpush1.msra.mxu0 %v7893
        %8005 = vmatprep.subr.mxu0 %v7890
        %8006 = vmatpush1.msra.mxu0 %v7889
        %8007 = vmatprep.subr.mxu0 %v7886
        %8008 = vmatpush1.msra.mxu0 %v7885
        %8009 = vmatprep.subr.mxu0 %v7882
        %8010 = vmatpush1.msra.mxu0 %v7881
        %8011 = vmatprep.subr.mxu0 %v7878
        %8012 = vmatpush1.msra.mxu0 %v7877
        %8013 = vmatprep.subr.mxu0 0.0
        %8014 = vmatpush2.msra.mxu0 0.0
        %8015 = vmatprep.subr.mxu0 0.0
        %8016 = vmatpush2.msra.mxu0 0.0
        %8017 = vmatprep.subr.mxu0 0.0
        %8018 = vmatpush2.msra.mxu0 0.0
        %8019 = vmatprep.subr.mxu0 0.0
        %8020 = vmatpush2.msra.mxu0 0.0
        %8021 = vmatprep.subr.mxu0 0.0
        %8022 = vmatpush2.msra.mxu0 0.0
        %8023 = vmatprep.subr.mxu0 0.0
        %8024 = vmatpush2.msra.mxu0 0.0
        %8025 = vmatprep.subr.mxu0 0.0
        %8026 = vmatpush2.msra.mxu0 0.0
        %8027 = vmatprep.subr.mxu0 0.0
        %8028 = vmatpush2.msra.mxu0 0.0
        %8029 = vmatprep.subr.mxu0 0.0
        %8030 = vmatpush2.msra.mxu0 0.0
        %8031 = vmatprep.subr.mxu0 0.0
        %8032 = vmatpush2.msra.mxu0 0.0
        %8033 = vmatprep.subr.mxu0 0.0
        %8034 = vmatpush2.msra.mxu0 0.0
        %8035 = vmatprep.subr.mxu0 0.0
        %8036 = vmatpush2.msra.mxu0 0.0
        %8037 = vmatprep.subr.mxu0 0.0
        %8038 = vmatpush2.msra.mxu0 0.0
        %8039 = vmatprep.subr.mxu0 0.0
        %8040 = vmatpush2.msra.mxu0 0.0
        %8041 = vmatprep.subr.mxu0 0.0
        %8042 = vmatpush2.msra.mxu0 0.0
        %8043 = vmatprep.subr.mxu0 0.0
        %8044 = vmatpush2.msra.mxu0 0.0
        %8045 = vmatprep.mubr.f32.mxu0 0.0
        %8046 = vmatmul.mubr.f32.gmra.mxu0 %v7908
        %v8047 = vpop.f32.mrf.mxu0
        %v8048 = vadd.f32 0.0, %v8047
        %v8049 = vpop.f32.mrf.mxu0
        %v8050 = vadd.f32 0.0, %v8049
        %8051 = vdwg.mxu0
        %v8052 = vadd.f32 %v7870, %v7977
        %v8053 = vadd.f32 %v7871, %v7979
        %v8054 = vadd.f32 %v7872, %v8048
        %v8055 = vadd.f32 %v7873, %v8050
        %s8056 = scalar_lea.vmem %s10, 1536
        %v8057 = vld [vmem:[%s8056] sm:$0xff]
        %v8058 = vld [vmem:[%s8056 + $0x8] sm:$0xff]
        %v8059 = vld [vmem:[%s8056 + $0x10] sm:$0xff]
        %v8060 = vld [vmem:[%s8056 + $0x18] sm:$0xff]
        %v8061 = vld [vmem:[%s8056 + $0x20] sm:$0xff]
        %v8062 = vld [vmem:[%s8056 + $0x28] sm:$0xff]
        %v8063 = vld [vmem:[%s8056 + $0x30] sm:$0xff]
        %v8064 = vld [vmem:[%s8056 + $0x38] sm:$0xff]
        %v8065 = vld [vmem:[%s8056 + $0x40] sm:$0xff]
        %v8066 = vld [vmem:[%s8056 + $0x48] sm:$0xff]
        %v8067 = vld [vmem:[%s8056 + $0x50] sm:$0xff]
        %v8068 = vld [vmem:[%s8056 + $0x58] sm:$0xff]
        %v8069 = vld [vmem:[%s8056 + $0x60] sm:$0xff]
        %v8070 = vld [vmem:[%s8056 + $0x68] sm:$0xff]
        %v8071 = vld [vmem:[%s8056 + $0x70] sm:$0xff]
        %v8072 = vld [vmem:[%s8056 + $0x78] sm:$0xff]
        %v8073 = vld [vmem:[%s8056 + $0x80] sm:$0xff]
        %v8074 = vld [vmem:[%s8056 + $0x88] sm:$0xff]
        %v8075 = vld [vmem:[%s8056 + $0x90] sm:$0xff]
        %v8076 = vld [vmem:[%s8056 + $0x98] sm:$0xff]
        %v8077 = vld [vmem:[%s8056 + $0xa0] sm:$0xff]
        %v8078 = vld [vmem:[%s8056 + $0xa8] sm:$0xff]
        %v8079 = vld [vmem:[%s8056 + $0xb0] sm:$0xff]
        %v8080 = vld [vmem:[%s8056 + $0xb8] sm:$0xff]
        %v8081 = vld [vmem:[%s8056 + $0xc0] sm:$0xff]
        %v8082 = vld [vmem:[%s8056 + $0xc8] sm:$0xff]
        %v8083 = vld [vmem:[%s8056 + $0xd0] sm:$0xff]
        %v8084 = vld [vmem:[%s8056 + $0xd8] sm:$0xff]
        %v8085 = vld [vmem:[%s8056 + $0xe0] sm:$0xff]
        %v8086 = vld [vmem:[%s8056 + $0xe8] sm:$0xff]
        %v8087 = vld [vmem:[%s8056 + $0xf0] sm:$0xff]
        %v8088 = vld [vmem:[%s8056 + $0xf8] sm:$0xff]
        %v8090 = vsel %vm5639, %v6863, 0
        %8092 = vmatprep.subr.mxu0 0.0
        %8093 = vmatpush1.msra.mxu0 0.0
        %8094 = vmatprep.subr.mxu0 0.0
        %8095 = vmatpush1.msra.mxu0 0.0
        %8096 = vmatprep.subr.mxu0 0.0
        %8097 = vmatpush1.msra.mxu0 0.0
        %8098 = vmatprep.subr.mxu0 0.0
        %8099 = vmatpush1.msra.mxu0 0.0
        %8100 = vmatprep.subr.mxu0 0.0
        %8101 = vmatpush1.msra.mxu0 0.0
        %8102 = vmatprep.subr.mxu0 0.0
        %8103 = vmatpush1.msra.mxu0 0.0
        %8104 = vmatprep.subr.mxu0 0.0
        %8105 = vmatpush1.msra.mxu0 0.0
        %8106 = vmatprep.subr.mxu0 0.0
        %8107 = vmatpush1.msra.mxu0 0.0
        %8108 = vmatprep.subr.mxu0 %v8086
        %8109 = vmatpush1.msra.mxu0 %v8085
        %8110 = vmatprep.subr.mxu0 %v8082
        %8111 = vmatpush1.msra.mxu0 %v8081
        %8112 = vmatprep.subr.mxu0 %v8078
        %8113 = vmatpush1.msra.mxu0 %v8077
        %8114 = vmatprep.subr.mxu0 %v8074
        %8115 = vmatpush1.msra.mxu0 %v8073
        %8116 = vmatprep.subr.mxu0 %v8070
        %8117 = vmatpush1.msra.mxu0 %v8069
        %8118 = vmatprep.subr.mxu0 %v8066
        %8119 = vmatpush1.msra.mxu0 %v8065
        %8120 = vmatprep.subr.mxu0 %v8062
        %8121 = vmatpush1.msra.mxu0 %v8061
        %8122 = vmatprep.subr.mxu0 %v8058
        %8123 = vmatpush1.msra.mxu0 %v8057
        %8124 = vmatprep.subr.mxu0 0.0
        %8125 = vmatpush2.msra.mxu0 0.0
        %8126 = vmatprep.subr.mxu0 0.0
        %8127 = vmatpush2.msra.mxu0 0.0
        %8128 = vmatprep.subr.mxu0 0.0
        %8129 = vmatpush2.msra.mxu0 0.0
        %8130 = vmatprep.subr.mxu0 0.0
        %8131 = vmatpush2.msra.mxu0 0.0
        %8132 = vmatprep.subr.mxu0 0.0
        %8133 = vmatpush2.msra.mxu0 0.0
        %8134 = vmatprep.subr.mxu0 0.0
        %8135 = vmatpush2.msra.mxu0 0.0
        %8136 = vmatprep.subr.mxu0 0.0
        %8137 = vmatpush2.msra.mxu0 0.0
        %8138 = vmatprep.subr.mxu0 0.0
        %8139 = vmatpush2.msra.mxu0 0.0
        %8140 = vmatprep.subr.mxu0 0.0
        %8141 = vmatpush2.msra.mxu0 0.0
        %8142 = vmatprep.subr.mxu0 0.0
        %8143 = vmatpush2.msra.mxu0 0.0
        %8144 = vmatprep.subr.mxu0 0.0
        %8145 = vmatpush2.msra.mxu0 0.0
        %8146 = vmatprep.subr.mxu0 0.0
        %8147 = vmatpush2.msra.mxu0 0.0
        %8148 = vmatprep.subr.mxu0 0.0
        %8149 = vmatpush2.msra.mxu0 0.0
        %8150 = vmatprep.subr.mxu0 0.0
        %8151 = vmatpush2.msra.mxu0 0.0
        %8152 = vmatprep.subr.mxu0 0.0
        %8153 = vmatpush2.msra.mxu0 0.0
        %8154 = vmatprep.subr.mxu0 0.0
        %8155 = vmatpush2.msra.mxu0 0.0
        %8156 = vmatprep.mubr.f32.mxu0 0.0
        %8157 = vmatmul.mubr.f32.gmra.mxu0 %v8090
        %v8158 = vpop.f32.mrf.mxu0
        %v8159 = vadd.f32 0.0, %v8158
        %v8160 = vpop.f32.mrf.mxu0
        %v8161 = vadd.f32 0.0, %v8160
        %8162 = vdwg.mxu0
        %8163 = vmatprep.subr.mxu0 0.0
        %8164 = vmatpush1.msra.mxu0 0.0
        %8165 = vmatprep.subr.mxu0 0.0
        %8166 = vmatpush1.msra.mxu0 0.0
        %8167 = vmatprep.subr.mxu0 0.0
        %8168 = vmatpush1.msra.mxu0 0.0
        %8169 = vmatprep.subr.mxu0 0.0
        %8170 = vmatpush1.msra.mxu0 0.0
        %8171 = vmatprep.subr.mxu0 0.0
        %8172 = vmatpush1.msra.mxu0 0.0
        %8173 = vmatprep.subr.mxu0 0.0
        %8174 = vmatpush1.msra.mxu0 0.0
        %8175 = vmatprep.subr.mxu0 0.0
        %8176 = vmatpush1.msra.mxu0 0.0
        %8177 = vmatprep.subr.mxu0 0.0
        %8178 = vmatpush1.msra.mxu0 0.0
        %8179 = vmatprep.subr.mxu0 %v8088
        %8180 = vmatpush1.msra.mxu0 %v8087
        %8181 = vmatprep.subr.mxu0 %v8084
        %8182 = vmatpush1.msra.mxu0 %v8083
        %8183 = vmatprep.subr.mxu0 %v8080
        %8184 = vmatpush1.msra.mxu0 %v8079
        %8185 = vmatprep.subr.mxu0 %v8076
        %8186 = vmatpush1.msra.mxu0 %v8075
        %8187 = vmatprep.subr.mxu0 %v8072
        %8188 = vmatpush1.msra.mxu0 %v8071
        %8189 = vmatprep.subr.mxu0 %v8068
        %8190 = vmatpush1.msra.mxu0 %v8067
        %8191 = vmatprep.subr.mxu0 %v8064
        %8192 = vmatpush1.msra.mxu0 %v8063
        %8193 = vmatprep.subr.mxu0 %v8060
        %8194 = vmatpush1.msra.mxu0 %v8059
        %8195 = vmatprep.subr.mxu0 0.0
        %8196 = vmatpush2.msra.mxu0 0.0
        %8197 = vmatprep.subr.mxu0 0.0
        %8198 = vmatpush2.msra.mxu0 0.0
        %8199 = vmatprep.subr.mxu0 0.0
        %8200 = vmatpush2.msra.mxu0 0.0
        %8201 = vmatprep.subr.mxu0 0.0
        %8202 = vmatpush2.msra.mxu0 0.0
        %8203 = vmatprep.subr.mxu0 0.0
        %8204 = vmatpush2.msra.mxu0 0.0
        %8205 = vmatprep.subr.mxu0 0.0
        %8206 = vmatpush2.msra.mxu0 0.0
        %8207 = vmatprep.subr.mxu0 0.0
        %8208 = vmatpush2.msra.mxu0 0.0
        %8209 = vmatprep.subr.mxu0 0.0
        %8210 = vmatpush2.msra.mxu0 0.0
        %8211 = vmatprep.subr.mxu0 0.0
        %8212 = vmatpush2.msra.mxu0 0.0
        %8213 = vmatprep.subr.mxu0 0.0
        %8214 = vmatpush2.msra.mxu0 0.0
        %8215 = vmatprep.subr.mxu0 0.0
        %8216 = vmatpush2.msra.mxu0 0.0
        %8217 = vmatprep.subr.mxu0 0.0
        %8218 = vmatpush2.msra.mxu0 0.0
        %8219 = vmatprep.subr.mxu0 0.0
        %8220 = vmatpush2.msra.mxu0 0.0
        %8221 = vmatprep.subr.mxu0 0.0
        %8222 = vmatpush2.msra.mxu0 0.0
        %8223 = vmatprep.subr.mxu0 0.0
        %8224 = vmatpush2.msra.mxu0 0.0
        %8225 = vmatprep.subr.mxu0 0.0
        %8226 = vmatpush2.msra.mxu0 0.0
        %8227 = vmatprep.mubr.f32.mxu0 0.0
        %8228 = vmatmul.mubr.f32.gmra.mxu0 %v8090
        %v8229 = vpop.f32.mrf.mxu0
        %v8230 = vadd.f32 0.0, %v8229
        %v8231 = vpop.f32.mrf.mxu0
        %v8232 = vadd.f32 0.0, %v8231
        %8233 = vdwg.mxu0
        %v8234 = vadd.f32 %v8052, %v8159
        %v8235 = vadd.f32 %v8053, %v8161
        %v8236 = vadd.f32 %v8054, %v8230
        %v8237 = vadd.f32 %v8055, %v8232
        %s8238 = scalar_lea.vmem %s10, 1792
        %v8239 = vld [vmem:[%s8238] sm:$0xff]
        %v8240 = vld [vmem:[%s8238 + $0x8] sm:$0xff]
        %v8241 = vld [vmem:[%s8238 + $0x10] sm:$0xff]
        %v8242 = vld [vmem:[%s8238 + $0x18] sm:$0xff]
        %v8243 = vld [vmem:[%s8238 + $0x20] sm:$0xff]
        %v8244 = vld [vmem:[%s8238 + $0x28] sm:$0xff]
        %v8245 = vld [vmem:[%s8238 + $0x30] sm:$0xff]
        %v8246 = vld [vmem:[%s8238 + $0x38] sm:$0xff]
        %v8247 = vld [vmem:[%s8238 + $0x40] sm:$0xff]
        %v8248 = vld [vmem:[%s8238 + $0x48] sm:$0xff]
        %v8249 = vld [vmem:[%s8238 + $0x50] sm:$0xff]
        %v8250 = vld [vmem:[%s8238 + $0x58] sm:$0xff]
        %v8251 = vld [vmem:[%s8238 + $0x60] sm:$0xff]
        %v8252 = vld [vmem:[%s8238 + $0x68] sm:$0xff]
        %v8253 = vld [vmem:[%s8238 + $0x70] sm:$0xff]
        %v8254 = vld [vmem:[%s8238 + $0x78] sm:$0xff]
        %v8255 = vld [vmem:[%s8238 + $0x80] sm:$0xff]
        %v8256 = vld [vmem:[%s8238 + $0x88] sm:$0xff]
        %v8257 = vld [vmem:[%s8238 + $0x90] sm:$0xff]
        %v8258 = vld [vmem:[%s8238 + $0x98] sm:$0xff]
        %v8259 = vld [vmem:[%s8238 + $0xa0] sm:$0xff]
        %v8260 = vld [vmem:[%s8238 + $0xa8] sm:$0xff]
        %v8261 = vld [vmem:[%s8238 + $0xb0] sm:$0xff]
        %v8262 = vld [vmem:[%s8238 + $0xb8] sm:$0xff]
        %v8263 = vld [vmem:[%s8238 + $0xc0] sm:$0xff]
        %v8264 = vld [vmem:[%s8238 + $0xc8] sm:$0xff]
        %v8265 = vld [vmem:[%s8238 + $0xd0] sm:$0xff]
        %v8266 = vld [vmem:[%s8238 + $0xd8] sm:$0xff]
        %v8267 = vld [vmem:[%s8238 + $0xe0] sm:$0xff]
        %v8268 = vld [vmem:[%s8238 + $0xe8] sm:$0xff]
        %v8269 = vld [vmem:[%s8238 + $0xf0] sm:$0xff]
        %v8270 = vld [vmem:[%s8238 + $0xf8] sm:$0xff]
        %v8272 = vsel %vm5639, %v6936, 0
        %8274 = vmatprep.subr.mxu0 0.0
        %8275 = vmatpush1.msra.mxu0 0.0
        %8276 = vmatprep.subr.mxu0 0.0
        %8277 = vmatpush1.msra.mxu0 0.0
        %8278 = vmatprep.subr.mxu0 0.0
        %8279 = vmatpush1.msra.mxu0 0.0
        %8280 = vmatprep.subr.mxu0 0.0
        %8281 = vmatpush1.msra.mxu0 0.0
        %8282 = vmatprep.subr.mxu0 0.0
        %8283 = vmatpush1.msra.mxu0 0.0
        %8284 = vmatprep.subr.mxu0 0.0
        %8285 = vmatpush1.msra.mxu0 0.0
        %8286 = vmatprep.subr.mxu0 0.0
        %8287 = vmatpush1.msra.mxu0 0.0
        %8288 = vmatprep.subr.mxu0 0.0
        %8289 = vmatpush1.msra.mxu0 0.0
        %8290 = vmatprep.subr.mxu0 %v8268
        %8291 = vmatpush1.msra.mxu0 %v8267
        %8292 = vmatprep.subr.mxu0 %v8264
        %8293 = vmatpush1.msra.mxu0 %v8263
        %8294 = vmatprep.subr.mxu0 %v8260
        %8295 = vmatpush1.msra.mxu0 %v8259
        %8296 = vmatprep.subr.mxu0 %v8256
        %8297 = vmatpush1.msra.mxu0 %v8255
        %8298 = vmatprep.subr.mxu0 %v8252
        %8299 = vmatpush1.msra.mxu0 %v8251
        %8300 = vmatprep.subr.mxu0 %v8248
        %8301 = vmatpush1.msra.mxu0 %v8247
        %8302 = vmatprep.subr.mxu0 %v8244
        %8303 = vmatpush1.msra.mxu0 %v8243
        %8304 = vmatprep.subr.mxu0 %v8240
        %8305 = vmatpush1.msra.mxu0 %v8239
        %8306 = vmatprep.subr.mxu0 0.0
        %8307 = vmatpush2.msra.mxu0 0.0
        %8308 = vmatprep.subr.mxu0 0.0
        %8309 = vmatpush2.msra.mxu0 0.0
        %8310 = vmatprep.subr.mxu0 0.0
        %8311 = vmatpush2.msra.mxu0 0.0
        %8312 = vmatprep.subr.mxu0 0.0
        %8313 = vmatpush2.msra.mxu0 0.0
        %8314 = vmatprep.subr.mxu0 0.0
        %8315 = vmatpush2.msra.mxu0 0.0
        %8316 = vmatprep.subr.mxu0 0.0
        %8317 = vmatpush2.msra.mxu0 0.0
        %8318 = vmatprep.subr.mxu0 0.0
        %8319 = vmatpush2.msra.mxu0 0.0
        %8320 = vmatprep.subr.mxu0 0.0
        %8321 = vmatpush2.msra.mxu0 0.0
        %8322 = vmatprep.subr.mxu0 0.0
        %8323 = vmatpush2.msra.mxu0 0.0
        %8324 = vmatprep.subr.mxu0 0.0
        %8325 = vmatpush2.msra.mxu0 0.0
        %8326 = vmatprep.subr.mxu0 0.0
        %8327 = vmatpush2.msra.mxu0 0.0
        %8328 = vmatprep.subr.mxu0 0.0
        %8329 = vmatpush2.msra.mxu0 0.0
        %8330 = vmatprep.subr.mxu0 0.0
        %8331 = vmatpush2.msra.mxu0 0.0
        %8332 = vmatprep.subr.mxu0 0.0
        %8333 = vmatpush2.msra.mxu0 0.0
        %8334 = vmatprep.subr.mxu0 0.0
        %8335 = vmatpush2.msra.mxu0 0.0
        %8336 = vmatprep.subr.mxu0 0.0
        %8337 = vmatpush2.msra.mxu0 0.0
        %8338 = vmatprep.mubr.f32.mxu0 0.0
        %8339 = vmatmul.mubr.f32.gmra.mxu0 %v8272
        %v8340 = vpop.f32.mrf.mxu0
        %v8341 = vadd.f32 0.0, %v8340
        %v8342 = vpop.f32.mrf.mxu0
        %v8343 = vadd.f32 0.0, %v8342
        %8344 = vdwg.mxu0
        %8345 = vmatprep.subr.mxu0 0.0
        %8346 = vmatpush1.msra.mxu0 0.0
        %8347 = vmatprep.subr.mxu0 0.0
        %8348 = vmatpush1.msra.mxu0 0.0
        %8349 = vmatprep.subr.mxu0 0.0
        %8350 = vmatpush1.msra.mxu0 0.0
        %8351 = vmatprep.subr.mxu0 0.0
        %8352 = vmatpush1.msra.mxu0 0.0
        %8353 = vmatprep.subr.mxu0 0.0
        %8354 = vmatpush1.msra.mxu0 0.0
        %8355 = vmatprep.subr.mxu0 0.0
        %8356 = vmatpush1.msra.mxu0 0.0
        %8357 = vmatprep.subr.mxu0 0.0
        %8358 = vmatpush1.msra.mxu0 0.0
        %8359 = vmatprep.subr.mxu0 0.0
        %8360 = vmatpush1.msra.mxu0 0.0
        %8361 = vmatprep.subr.mxu0 %v8270
        %8362 = vmatpush1.msra.mxu0 %v8269
        %8363 = vmatprep.subr.mxu0 %v8266
        %8364 = vmatpush1.msra.mxu0 %v8265
        %8365 = vmatprep.subr.mxu0 %v8262
        %8366 = vmatpush1.msra.mxu0 %v8261
        %8367 = vmatprep.subr.mxu0 %v8258
        %8368 = vmatpush1.msra.mxu0 %v8257
        %8369 = vmatprep.subr.mxu0 %v8254
        %8370 = vmatpush1.msra.mxu0 %v8253
        %8371 = vmatprep.subr.mxu0 %v8250
        %8372 = vmatpush1.msra.mxu0 %v8249
        %8373 = vmatprep.subr.mxu0 %v8246
        %8374 = vmatpush1.msra.mxu0 %v8245
        %8375 = vmatprep.subr.mxu0 %v8242
        %8376 = vmatpush1.msra.mxu0 %v8241
        %8377 = vmatprep.subr.mxu0 0.0
        %8378 = vmatpush2.msra.mxu0 0.0
        %8379 = vmatprep.subr.mxu0 0.0
        %8380 = vmatpush2.msra.mxu0 0.0
        %8381 = vmatprep.subr.mxu0 0.0
        %8382 = vmatpush2.msra.mxu0 0.0
        %8383 = vmatprep.subr.mxu0 0.0
        %8384 = vmatpush2.msra.mxu0 0.0
        %8385 = vmatprep.subr.mxu0 0.0
        %8386 = vmatpush2.msra.mxu0 0.0
        %8387 = vmatprep.subr.mxu0 0.0
        %8388 = vmatpush2.msra.mxu0 0.0
        %8389 = vmatprep.subr.mxu0 0.0
        %8390 = vmatpush2.msra.mxu0 0.0
        %8391 = vmatprep.subr.mxu0 0.0
        %8392 = vmatpush2.msra.mxu0 0.0
        %8393 = vmatprep.subr.mxu0 0.0
        %8394 = vmatpush2.msra.mxu0 0.0
        %8395 = vmatprep.subr.mxu0 0.0
        %8396 = vmatpush2.msra.mxu0 0.0
        %8397 = vmatprep.subr.mxu0 0.0
        %8398 = vmatpush2.msra.mxu0 0.0
        %8399 = vmatprep.subr.mxu0 0.0
        %8400 = vmatpush2.msra.mxu0 0.0
        %8401 = vmatprep.subr.mxu0 0.0
        %8402 = vmatpush2.msra.mxu0 0.0
        %8403 = vmatprep.subr.mxu0 0.0
        %8404 = vmatpush2.msra.mxu0 0.0
        %8405 = vmatprep.subr.mxu0 0.0
        %8406 = vmatpush2.msra.mxu0 0.0
        %8407 = vmatprep.subr.mxu0 0.0
        %8408 = vmatpush2.msra.mxu0 0.0
        %8409 = vmatprep.mubr.f32.mxu0 0.0
        %8410 = vmatmul.mubr.f32.gmra.mxu0 %v8272
        %v8411 = vpop.f32.mrf.mxu0
        %v8412 = vadd.f32 0.0, %v8411
        %v8413 = vpop.f32.mrf.mxu0
        %v8414 = vadd.f32 0.0, %v8413
        %8415 = vdwg.mxu0
        %v8416 = vadd.f32 %v8234, %v8341
        %v8417 = vadd.f32 %v8235, %v8343
        %v8418 = vadd.f32 %v8236, %v8412
        %v8419 = vadd.f32 %v8237, %v8414
        %v8420 = vadd.f32 %v8416, %v8417
        %v8421 = vadd.f32 %v8420, %v8418
        %v8422 = vadd.f32 %v8421, %v8419
        %8423 = vadd.xlane.f32.xlu0 %v8422
        %v8424 = vpop.xlane.xlu0 %8423
        %v8425 = vrcp.pop 512.0
        %v8426 = vmul.f32 %v8424, %v8425
        %v8427 = vsub.f32 %v8416, %v8426
        %v8428 = vsub.f32 %v8417, %v8426
        %v8429 = vsub.f32 %v8418, %v8426
        %v8430 = vsub.f32 %v8419, %v8426
        %v8431 = vmul.f32 %v8427, %v8427
        %v8432 = vmul.f32 %v8428, %v8428
        %v8433 = vmul.f32 %v8429, %v8429
        %v8434 = vmul.f32 %v8430, %v8430
        %v8435 = vadd.f32 %v8431, %v8432
        %v8436 = vadd.f32 %v8435, %v8433
        %v8437 = vadd.f32 %v8436, %v8434
        %8438 = vadd.xlane.f32.xlu0 %v8437
        %v8439 = vpop.xlane.xlu0 %8438
        %v8440 = vmul.f32 %v8439, %v8425
        %v8441 = vadd.f32 %v8440, 1e-05
        %v8442 = vrsqrt.pop %v8441
        %v8443 = vmul.f32 %v8427, %v8442
        %v8444 = vmul.f32 %v8428, %v8442
        %v8445 = vmul.f32 %v8429, %v8442
        %v8446 = vmul.f32 %v8430, %v8442
        %v8447 = vld [vmem:[%s12] sm:$0xf]
        %v8449 = vlaneseq
        %v8450 = vshrl.u32 %v8449, 7
        %v8451 = vsub.s32 0, %v8450
        %v8452 = vrot.slane %v8447, %v8451
        %v8453 = vlaneseq
        %v8454 = vshrl.u32 %v8453, 7
        %v8455 = vsub.s32 1, %v8454
        %v8456 = vrot.slane %v8447, %v8455
        %v8457 = vlaneseq
        %v8458 = vshrl.u32 %v8457, 7
        %v8459 = vsub.s32 2, %v8458
        %v8460 = vrot.slane %v8447, %v8459
        %v8461 = vlaneseq
        %v8462 = vshrl.u32 %v8461, 7
        %v8463 = vsub.s32 3, %v8462
        %v8464 = vrot.slane %v8447, %v8463
        %v8469 = vmul.f32 %v8443, %v8452
        %v8470 = vmul.f32 %v8444, %v8456
        %v8471 = vmul.f32 %v8445, %v8460
        %v8472 = vmul.f32 %v8446, %v8464
        %v8473 = vld [vmem:[%s13] sm:$0xf]
        %v8475 = vlaneseq
        %v8476 = vshrl.u32 %v8475, 7
        %v8477 = vsub.s32 0, %v8476
        %v8478 = vrot.slane %v8473, %v8477
        %v8479 = vlaneseq
        %v8480 = vshrl.u32 %v8479, 7
        %v8481 = vsub.s32 1, %v8480
        %v8482 = vrot.slane %v8473, %v8481
        %v8483 = vlaneseq
        %v8484 = vshrl.u32 %v8483, 7
        %v8485 = vsub.s32 2, %v8484
        %v8486 = vrot.slane %v8473, %v8485
        %v8487 = vlaneseq
        %v8488 = vshrl.u32 %v8487, 7
        %v8489 = vsub.s32 3, %v8488
        %v8490 = vrot.slane %v8473, %v8489
        %v8495 = vadd.f32 %v8469, %v8478
        %v8496 = vadd.f32 %v8470, %v8482
        %v8497 = vadd.f32 %v8471, %v8486
        %v8498 = vadd.f32 %v8472, %v8490
        %8499 = vst [vmem:[%s534] sm:$0xff] %v8495
        %8500 = vst [vmem:[%s534 + $0x8] sm:$0xff] %v8496
        %8501 = vst [vmem:[%s534 + $0x10] sm:$0xff] %v8497
        %8502 = vst [vmem:[%s534 + $0x18] sm:$0xff] %v8498
        %8503 = vst.msk [vmem:[%s541] sm:$0xff] %vm6266, %v6340
        %8504 = vst.msk [vmem:[%s541 + $0x8] sm:$0xff] %vm6266, %v6342
        %8505 = vst.msk [vmem:[%s541 + $0x10] sm:$0xff] %vm6266, %v6344
        %8506 = vst.msk [vmem:[%s541 + $0x18] sm:$0xff] %vm6266, %v6346
        %8507 = vst.msk [vmem:[%s541 + $0x20] sm:$0xff] %vm6266, %v6348
        %8508 = vst.msk [vmem:[%s541 + $0x28] sm:$0xff] %vm6266, %v6350
        %8509 = vst.msk [vmem:[%s541 + $0x30] sm:$0xff] %vm6266, %v6352
        %8510 = vst.msk [vmem:[%s541 + $0x38] sm:$0xff] %vm6266, %v6354
        %s8511 = sand.u32 %s355, 1
        %s8512 = scalar_lea.sflag [#allocation3], %s8511
        %s8513 = sand.u32 %s355, 1
        %s8514 = smul.addr %s8513, 32
        %s8515 = scalar_lea.vmem [#allocation2], %s8514
        %s8516 = sand.u32 %s381, 1
        %s8517 = scalar_lea.sflag [#allocation5], %s8516
        %s8518 = sand.u32 %s381, 1
        %s8519 = smul.addr %s8518, 64
        %s8520 = scalar_lea.vmem [#allocation4], %s8519
        // Predicated region
        $region77: #{tpu_custom_call.1} parent=75 // pred_check
          %p8521 = pneg %p365
        $region78: #{tpu_custom_call.1} parent=75 // pred_check_branch
          %8523 = sbr.rel (%p8521) target = $region80
        $region79: #{tpu_custom_call.1} parent=75 // pred_region
          %s8525 = ssub.s32 512, 512
          %8526 = vsyncadd %s8512, %s8525
          %s8527 = smul.addr %s33, 4
          %s8528 = smul.addr %s8527, 128
          %s8529 = scalar_lea.hbm %s14, %s8528
          %s8531 = sshll.u32 %s8515, 4
          %s8532 = int_to_ptr.vmem [resolvable:$true] %s8531
          %8534 = dma.vmem_to_hbm [thread:$0]  %s8532, 512, %s8529, %s8512
        $region80: #{tpu_custom_call.1} parent=75 // pred_fallthru
          _
        // Predicated region
        $region81: #{tpu_custom_call.1} parent=75 // pred_check
          %p8535 = pneg %p391
        $region82: #{tpu_custom_call.1} parent=75 // pred_check_branch
          %8537 = sbr.rel (%p8535) target = $region84
        $region83: #{tpu_custom_call.1} parent=75 // pred_region
          %s8539 = ssub.s32 1024, 1024
          %8540 = vsyncadd %s8517, %s8539
          %s8541 = smul.addr %s33, 8
          %s8542 = smul.addr %s8541, 128
          %s8543 = scalar_lea.hbm %s15, %s8542
          %s8544 = sshll.u32 %s8520, 4
          %s8545 = int_to_ptr.vmem [resolvable:$true] %s8544
          %8550 = dma.vmem_to_hbm [thread:$0]  %s8545, 1024, %s8543, %s8517, 128, 128, 8
        $region84: #{tpu_custom_call.1} parent=75 // pred_fallthru
          _
      $region76: #{tpu_custom_call.1} parent=5 // pred_fallthru
        _
      %p8551 = scmp.le.s32.totalorder 2, %s28
      // Predicated region
      $region85: #{tpu_custom_call.1} parent=5 // pred_check
        %p8552 = pneg %p8551
      $region86: #{tpu_custom_call.1} parent=5 // pred_check_branch
        %8554 = sbr.rel (%p8552) target = $region88
      $region87: #{tpu_custom_call.1} parent=5 // pred_region
        %s8555 = ssub.s32 %s28, 2
        // Predicated region
        $region89: #{tpu_custom_call.1} parent=87 // pred_check
          %p8556 = pneg %p371
        $region90: #{tpu_custom_call.1} parent=87 // pred_check_branch
          %8558 = sbr.rel (%p8556) target = $region92
        $region91: #{tpu_custom_call.1} parent=87 // pred_region
          %s8559 = sand.u32 %s356, 1
          %s8560 = scalar_lea.sflag [#allocation3], %s8559
          %s8561 = sand.u32 %s356, 1
          %s8562 = smul.addr %s8561, 32
          %s8563 = scalar_lea.vmem [#allocation2], %s8562
          %8564 = dma.done %s8560, 512
        $region92: #{tpu_custom_call.1} parent=87 // pred_fallthru
          _
        // Predicated region
        $region93: #{tpu_custom_call.1} parent=87 // pred_check
          %p8565 = pneg %p397
        $region94: #{tpu_custom_call.1} parent=87 // pred_check_branch
          %8567 = sbr.rel (%p8565) target = $region96
        $region95: #{tpu_custom_call.1} parent=87 // pred_region
          %s8568 = sand.u32 %s382, 1
          %s8569 = scalar_lea.sflag [#allocation5], %s8568
          %s8570 = sand.u32 %s382, 1
          %s8571 = smul.addr %s8570, 64
          %s8572 = scalar_lea.vmem [#allocation4], %s8571
          %8573 = dma.done %s8569, 1024
        $region96: #{tpu_custom_call.1} parent=87 // pred_fallthru
          _
      $region88: #{tpu_custom_call.1} parent=5 // pred_fallthru
        _
    $region6: #{tpu_custom_call.1} parent=1 // loop_footer
      %s32 = sadd.s32 1, %s28
    $region7: #{tpu_custom_call.1} parent=1 // loop_footer_branch
      %27 = sbr.rel target = $region3
    $region8: #{tpu_custom_call.1} parent=1 // loop_exit
      _
    %8574 = vsyncpa [#allocation3], 1
    %s8575 = scalar_lea.sflag [#allocation3], 1
    %8576 = vsyncpa %s8575, 1
    %8577 = vsyncpa [#allocation5], 1
    %s8578 = scalar_lea.sflag [#allocation5], 1
    %8579 = vsyncpa %s8578, 1

</llo_original>
